<compile_context>
chip_gen: v7x
topology: tpu7x:2x2x1
jax: 0.10.0
libtpu: 0.0.40
codegen_flags: <defaults>
</compile_context>

<pallas_src>
import functools

import jax
import jax.numpy as jnp
from jax import lax
from jax.experimental import pallas as pl
from jax.experimental.pallas import tpu as pltpu


def _pick_tile(n, cap):
    """Largest tile <= cap that divides n and is a multiple of 8 (or n itself)."""
    if n <= cap:
        return n
    t = cap - (cap % 8)
    while t >= 8:
        if n % t == 0:
            return t
        t -= 8
    return n


# ---------------------------------------------------------------------------
# Kernel 1: three-nearest-neighbour inverse-distance interpolation
# ---------------------------------------------------------------------------
def _three_nn_interp_kernel(xyz1_ref, xyz2t_ref, pts2_ref, out_ref):
    # xyz1_ref:  [1, TN, 8]  query points   (coords zero-padded 3 -> 8)
    # xyz2t_ref: [1, 8, S]   source points  (coords zero-padded 3 -> 8)
    # pts2_ref:  [1, S, D]   source features (bf16)
    # out_ref:   [1, TN, D]  interpolated features (bf16)
    x1 = xyz1_ref[0]      # [TN, 8] f32
    x2t = xyz2t_ref[0]    # [8, S]  f32
    p2 = pts2_ref[0]      # [S, D]  bf16
    TN = x1.shape[0]
    S = x2t.shape[1]

    # Squared pairwise distances via |x1|^2 + |x2|^2 - 2*(x1 @ x2t).
    # The contraction goes to the MXU; only two broadcast-adds stay on the VPU.
    n1 = jnp.sum(x1 * x1, axis=1, keepdims=True)                   # [TN, 1]
    n2 = jnp.sum(x2t * x2t, axis=0, keepdims=True)                 # [1, S]
    cross = jnp.dot(x1, x2t, preferred_element_type=jnp.float32)   # [TN, S]
    d = n1 + n2 - 2.0 * cross

    # Top-3 nearest neighbours -> sparse inverse-distance weights W[TN, S].
    # The normalization is NOT done over the [TN,S] plane: we accumulate the
    # weight sum as a [TN,1] vector and scale the matmul output instead.
    iota = lax.broadcasted_iota(jnp.int32, (TN, S), 1)
    cur = d
    W = jnp.zeros((TN, S), jnp.float32)
    wsum = jnp.zeros((TN, 1), jnp.float32)
    for _ in range(3):
        dmin = jnp.min(cur, axis=1, keepdims=True)                               # [TN,1]
        idx = jnp.min(jnp.where(cur == dmin, iota, S), axis=1, keepdims=True)    # [TN,1]
        onehot = iota == idx
        recip = pl.reciprocal(dmin + 1e-8, approx=True)                          # EUP slot
        W = W + jnp.where(onehot, recip, 0.0)
        wsum = wsum + recip
        cur = jnp.where(onehot, jnp.inf, cur)

    # Weighted gather-sum as a bf16 MXU matmul, f32 accumulation.
    acc = jnp.dot(W.astype(jnp.bfloat16), p2, preferred_element_type=jnp.float32)
    out_ref[0] = (acc * pl.reciprocal(wsum, approx=True)).astype(out_ref.dtype)


def three_nn_interpolate(xyz1_pad, xyz2_pad, pts2):
    # xyz1_pad: [B, N, 8], xyz2_pad: [B, 8, S], pts2: [B, S, D] bf16 -> [B, N, D] bf16
    B, N, _ = xyz1_pad.shape
    S = xyz2_pad.shape[2]
    D = pts2.shape[2]
    TN = _pick_tile(N, 256)
    return pl.pallas_call(
        _three_nn_interp_kernel,
        out_shape=jax.ShapeDtypeStruct((B, N, D), jnp.bfloat16),
        grid=(B, N // TN),
        in_specs=[
            pl.BlockSpec((1, TN, 8), lambda b, n: (b, n, 0)),
            pl.BlockSpec((1, 8, S), lambda b, n: (b, 0, 0)),   # resident across N tiles
            pl.BlockSpec((1, S, D), lambda b, n: (b, 0, 0)),   # resident across N tiles
        ],
        out_specs=pl.BlockSpec((1, TN, D), lambda b, n: (b, n, 0)),
        compiler_params=pltpu.CompilerParams(
            dimension_semantics=("parallel", "parallel")),
    )(xyz1_pad, xyz2_pad, pts2)


# ---------------------------------------------------------------------------
# Kernels 2-4: fused 1x1 Conv1d + BatchNorm1d (batch stats) + ReLU chain
# ---------------------------------------------------------------------------
def _accumulate_stats(st_ref, z):
    # st_ref: resident [2, Cout] accumulator (row 0: sum, row 1: sum of squares).
    @pl.when(pl.program_id(0) == 0)
    def _():
        st_ref[...] = jnp.zeros_like(st_ref)
    st_ref[0:1, :] += jnp.sum(z, axis=0, keepdims=True)
    st_ref[1:2, :] += jnp.sum(z * z, axis=0, keepdims=True)


def _first_matmul_stats2_kernel(p1_ref, it_ref, wa_ref, wb_ref, z_ref, st_ref):
    # Concat-free first layer: z = p1 @ w[:D1] + interp @ w[D1:]  (all bf16 -> f32 acc)
    z = (jnp.dot(p1_ref[...], wa_ref[...], preferred_element_type=jnp.float32)
         + jnp.dot(it_ref[...], wb_ref[...], preferred_element_type=jnp.float32))
    z_ref[...] = z
    _accumulate_stats(st_ref, z)


def _first_matmul_stats1_kernel(it_ref, w_ref, z_ref, st_ref):
    z = jnp.dot(it_ref[...], w_ref[...], preferred_element_type=jnp.float32)
    z_ref[...] = z
    _accumulate_stats(st_ref, z)


def _bn_relu_matmul_stats_kernel(zp_ref, stp_ref, g_ref, b_ref, w_ref,
                                 z_ref, st_ref, *, inv_m):
    # Normalize+ReLU the previous layer (using its full-M batch stats), then matmul.
    mean = stp_ref[0:1, :] * inv_m
    var = stp_ref[1:2, :] * inv_m - mean * mean
    a = (zp_ref[...] - mean) * lax.rsqrt(var + 1e-5) * g_ref[...] + b_ref[...]
    a = jnp.maximum(a, 0.0).astype(jnp.bfloat16)
    z = jnp.dot(a, w_ref[...], preferred_element_type=jnp.float32)
    z_ref[...] = z
    _accumulate_stats(st_ref, z)


def _bn_relu_kernel(z_ref, st_ref, g_ref, b_ref, o_ref, *, inv_m):
    mean = st_ref[0:1, :] * inv_m
    var = st_ref[1:2, :] * inv_m - mean * mean
    y = (z_ref[...] - mean) * lax.rsqrt(var + 1e-5) * g_ref[...] + b_ref[...]
    o_ref[...] = jnp.maximum(y, 0.0)


def _matmul_stats_call(kernel, args, in_specs, M, TM, cout):
    return pl.pallas_call(
        kernel,
        out_shape=(jax.ShapeDtypeStruct((M, cout), jnp.float32),
                   jax.ShapeDtypeStruct((2, cout), jnp.float32)),
        grid=(M // TM,),
        in_specs=in_specs,
        out_specs=(pl.BlockSpec((TM, cout), lambda m: (m, 0)),
                   pl.BlockSpec((2, cout), lambda m: (0, 0))),   # resident accumulator
        compiler_params=pltpu.CompilerParams(dimension_semantics=("arbitrary",)),
    )(*args)


def run_mlp(pieces, layers, M):
    # pieces: 1 or 2 arrays [M, Dk] (bf16); layers: list of {"w","gamma","beta"}.
    TM = _pick_tile(M, 256)

    def full(a):
        return pl.BlockSpec(a.shape, lambda m: (0, 0))

    def tile(a):
        return pl.BlockSpec((TM, a.shape[1]), lambda m: (m, 0))

    lay0 = layers[0]
    c0 = lay0["gamma"].shape[1]
    w0 = lay0["w"]
    if len(pieces) == 2:
        d1 = pieces[0].shape[1]
        wa, wb = w0[:d1, :], w0[d1:, :]
        z, st = _matmul_stats_call(
            _first_matmul_stats2_kernel,
            (pieces[0], pieces[1], wa, wb),
            [tile(pieces[0]), tile(pieces[1]), full(wa), full(wb)],
            M, TM, c0)
    else:
        z, st = _matmul_stats_call(
            _first_matmul_stats1_kernel,
            (pieces[0], w0),
            [tile(pieces[0]), full(w0)],
            M, TM, c0)

    inv_m = 1.0 / float(M)
    prev_g, prev_b = lay0["gamma"], lay0["beta"]
    for lay in layers[1:]:
        cout = lay["gamma"].shape[1]
        z, st = _matmul_stats_call(
            functools.partial(_bn_relu_matmul_stats_kernel, inv_m=inv_m),
            (z, st, prev_g, prev_b, lay["w"]),
            [tile(z), full(st), full(prev_g), full(prev_b), full(lay["w"])],
            M, TM, cout)
        prev_g, prev_b = lay["gamma"], lay["beta"]

    clast = prev_g.shape[1]
    return pl.pallas_call(
        functools.partial(_bn_relu_kernel, inv_m=inv_m),
        out_shape=jax.ShapeDtypeStruct((M, clast), jnp.float32),
        grid=(M // TM,),
        in_specs=[tile(z), full(st), full(prev_g), full(prev_b)],
        out_specs=pl.BlockSpec((TM, clast), lambda m: (m, 0)),
        compiler_params=pltpu.CompilerParams(dimension_semantics=("parallel",)),
    )(z, st, prev_g, prev_b)


# ---------------------------------------------------------------------------
# PointNetFeaturePropagation (plain-JAX glue around the kernels above)
# ---------------------------------------------------------------------------
def feature_propagation(xyz1, xyz2, points1_nlc, points2_nlc, stage_params):
    # xyz1: [B,3,N], xyz2: [B,3,S] (channel-first, PyTorch layout)
    # points1_nlc: [B,N,D1] channel-last or None; points2_nlc: [B,S,D2] channel-last
    # returns new features channel-last [B, N, Cout]
    # TODO(synk): the S == 1 "repeat" branch of the reference is not implemented
    #             (all decoder stages here have S >= 3).
    B, _, N = xyz1.shape
    x1 = jnp.transpose(xyz1, (0, 2, 1))              # [B, N, 3]
    x1 = jnp.pad(x1, ((0, 0), (0, 0), (0, 5)))       # [B, N, 8]  (zero-pad coords)
    x2 = jnp.pad(xyz2, ((0, 0), (0, 5), (0, 0)))     # [B, 8, S]
    interp = three_nn_interpolate(x1, x2, points2_nlc.astype(jnp.bfloat16))  # [B,N,D2] bf16
    M = B * N
    pieces = []
    if points1_nlc is not None:
        pieces.append(points1_nlc.reshape(M, -1).astype(jnp.bfloat16))
    pieces.append(interp.reshape(M, -1))
    y = run_mlp(pieces, stage_params, M)             # [M, Cout] f32
    return y.reshape(B, N, -1)


def pointnet2_decoder_without_cls_head(params, l0_xyz, l0_points, l1_xyz, l1_points,
                                       l2_xyz, l2_points, l3_xyz, l3_points,
                                       l4_xyz, l4_points):
    def nlc(p):   # channel-first [B,C,N] -> channel-last [B,N,C] (done once per input)
        return jnp.transpose(p, (0, 2, 1))

    l3p = feature_propagation(l3_xyz, l4_xyz, nlc(l3_points), nlc(l4_points), params["fp4"])
    l2p = feature_propagation(l2_xyz, l3_xyz, nlc(l2_points), l3p, params["fp3"])
    l1p = feature_propagation(l1_xyz, l2_xyz, nlc(l1_points), l2p, params["fp2"])
    l0p = feature_propagation(l0_xyz, l1_xyz, None, l1p, params["fp1"])
    return jnp.transpose(l0p, (0, 2, 1))             # [B, 128, N0] channel-first


# ---------------------------------------------------------------------------
# Deterministic parameter init (shapes from the module __init__)
# ---------------------------------------------------------------------------
def init_fp_params(key, in_channel, mlp):
    raw = []
    last = in_channel
    for out_ch in mlp:
        key, kw, kb = jax.random.split(key, 3)
        bound = 1.0 / (last ** 0.5)
        w = jax.random.uniform(kw, (out_ch, last), jnp.float32, -bound, bound)  # Conv1d [Cout,Cin]
        b = jax.random.uniform(kb, (out_ch,), jnp.float32, -bound, bound)        # Conv1d bias
        gamma = jnp.ones((out_ch,), jnp.float32)     # BatchNorm1d weight (default init)
        beta = jnp.zeros((out_ch,), jnp.float32)     # BatchNorm1d bias   (default init)
        raw.append((w, b, gamma, beta))
        last = out_ch
    return raw, key


def prepare_stage(raw_layers):
    # NOTE: the conv bias is mathematically cancelled by the batch-stat BatchNorm
    # mean subtraction and is intentionally not passed to the kernels.
    layers = []
    for (w, _b, gamma, beta) in raw_layers:
        layers.append({
            "w": jnp.transpose(w).astype(jnp.bfloat16),      # [Cin, Cout] bf16 (MXU-native)
            "gamma": gamma[None, :].astype(jnp.float32),     # [1, Cout]
            "beta": beta[None, :].astype(jnp.float32),       # [1, Cout]
        })
    return layers


if __name__ == "__main__":
    key = jax.random.PRNGKey(0)
    raw_fp4, key = init_fp_params(key, 768, [256, 256])
    raw_fp3, key = init_fp_params(key, 384, [256, 256])
    raw_fp2, key = init_fp_params(key, 320, [256, 128])
    raw_fp1, key = init_fp_params(key, 128, [128, 128, 128])
    params = {
        "fp4": prepare_stage(raw_fp4),
        "fp3": prepare_stage(raw_fp3),
        "fp2": prepare_stage(raw_fp2),
        "fp1": prepare_stage(raw_fp1),
    }

    B = 2
    N0, N1, N2, N3, N4 = 64, 32, 16, 8, 4
    ks = jax.random.split(jax.random.PRNGKey(0), 10)
    l0_xyz = jax.random.normal(ks[0], (B, 3, N0), jnp.float32)
    l0_points = jax.random.normal(ks[1], (B, 9, N0), jnp.float32)   # unused (fp1 points1=None)
    l1_xyz = jax.random.normal(ks[2], (B, 3, N1), jnp.float32)
    l1_points = jax.random.normal(ks[3], (B, 64, N1), jnp.float32)
    l2_xyz = jax.random.normal(ks[4], (B, 3, N2), jnp.float32)
    l2_points = jax.random.normal(ks[5], (B, 128, N2), jnp.float32)
    l3_xyz = jax.random.normal(ks[6], (B, 3, N3), jnp.float32)
    l3_points = jax.random.normal(ks[7], (B, 256, N3), jnp.float32)
    l4_xyz = jax.random.normal(ks[8], (B, 3, N4), jnp.float32)
    l4_points = jax.random.normal(ks[9], (B, 512, N4), jnp.float32)

    out = jax.jit(pointnet2_decoder_without_cls_head)(
        params, l0_xyz, l0_points, l1_xyz, l1_points,
        l2_xyz, l2_points, l3_xyz, l3_points, l4_xyz, l4_points)
    out = jax.block_until_ready(out)
    assert out.shape == (B, 128, N0), out.shape
    assert out.dtype == jnp.float32
    print("KERNEL_OK")
</pallas_src>

<mosaic_0001>
module attributes {stable_mosaic.version = 11 : i64} {
  func.func @_three_nn_interp_kernel(%arg0: i32, %arg1: i32, %arg2: memref<1x8x8xf32, #tpu.memory_space<vmem>>, %arg3: memref<1x8x4xf32, #tpu.memory_space<vmem>>, %arg4: memref<1x4x512xbf16, #tpu.memory_space<vmem>>, %arg5: memref<1x8x512xbf16, #tpu.memory_space<vmem>>) attributes {dimension_semantics = [#tpu.dimension_semantics<parallel>, #tpu.dimension_semantics<parallel>], iteration_bounds = array<i64: 2, 1>, scalar_prefetch = 0 : i64, scratch_operands = 0 : i64, tpu.core_type = #tpu.core_type<tc>, window_params = [{transform_indices = @transform_0, window_bounds = array<i64: 1, 8, 8>}, {transform_indices = @transform_1, window_bounds = array<i64: 1, 8, 4>}, {transform_indices = @transform_2, window_bounds = array<i64: 1, 4, 512>}, {transform_indices = @transform_3, window_bounds = array<i64: 1, 8, 512>}]} {
    %c0 = arith.constant 0 : index
    %c0_0 = arith.constant 0 : index
    %c0_1 = arith.constant 0 : index
    %0 = vector.load %arg2[%c0, %c0_0, %c0_1] : memref<1x8x8xf32, #tpu.memory_space<vmem>>, vector<1x8x8xf32>
    %1 = vector.shape_cast %0 : vector<1x8x8xf32> to vector<8x8xf32>
    %c0_2 = arith.constant 0 : index
    %c0_3 = arith.constant 0 : index
    %c0_4 = arith.constant 0 : index
    %2 = vector.load %arg3[%c0_2, %c0_3, %c0_4] : memref<1x8x4xf32, #tpu.memory_space<vmem>>, vector<1x8x4xf32>
    %3 = vector.shape_cast %2 : vector<1x8x4xf32> to vector<8x4xf32>
    %c0_5 = arith.constant 0 : index
    %c0_6 = arith.constant 0 : index
    %c0_7 = arith.constant 0 : index
    %4 = vector.load %arg4[%c0_5, %c0_6, %c0_7] : memref<1x4x512xbf16, #tpu.memory_space<vmem>>, vector<1x4x512xbf16>
    %5 = vector.shape_cast %4 : vector<1x4x512xbf16> to vector<4x512xbf16>
    %6 = arith.mulf %1, %1 : vector<8x8xf32>
    %cst = arith.constant dense<0.000000e+00> : vector<8xf32>
    %7 = vector.multi_reduction <add>, %6, %cst [1] : vector<8x8xf32> to vector<8xf32>
    %8 = vector.shape_cast %7 : vector<8xf32> to vector<8x1xf32>
    %9 = arith.mulf %3, %3 : vector<8x4xf32>
    %cst_8 = arith.constant dense<0.000000e+00> : vector<4xf32>
    %10 = vector.multi_reduction <add>, %9, %cst_8 [0] : vector<8x4xf32> to vector<4xf32>
    %11 = vector.shape_cast %10 : vector<4xf32> to vector<1x4xf32>
    %cst_9 = arith.constant dense<0.000000e+00> : vector<8x4xf32>
    %12 = tpu.matmul %1, %3, %cst_9 {dimension_numbers = #tpu.dot_dimension_numbers<[1], [0], [0], [1], [0, 0, 1, 1], [], []>} : vector<8x8xf32>, vector<8x4xf32>, vector<8x4xf32> -> vector<8x4xf32>
    %13 = vector.broadcast %8 : vector<8x1xf32> to vector<8x4xf32>
    %14 = vector.broadcast %11 : vector<1x4xf32> to vector<8x4xf32>
    %15 = arith.addf %13, %14 : vector<8x4xf32>
    %cst_10 = arith.constant 2.000000e+00 : f32
    %16 = vector.broadcast %cst_10 : f32 to vector<8x4xf32>
    %17 = arith.mulf %16, %12 : vector<8x4xf32>
    %18 = arith.subf %15, %17 : vector<8x4xf32>
    %19 = tpu.iota {dimensions = array<i32: 1>} : vector<8x4xi32>
    %cst_11 = arith.constant 0.000000e+00 : f32
    %20 = vector.broadcast %cst_11 : f32 to vector<8x4xf32>
    %cst_12 = arith.constant 0.000000e+00 : f32
    %21 = vector.broadcast %cst_12 : f32 to vector<8x1xf32>
    %cst_13 = arith.constant dense<0x7F800000> : vector<8xf32>
    %22 = vector.multi_reduction <minimumf>, %18, %cst_13 [1] : vector<8x4xf32> to vector<8xf32>
    %23 = vector.shape_cast %22 : vector<8xf32> to vector<8x1xf32>
    %24 = vector.broadcast %23 : vector<8x1xf32> to vector<8x4xf32>
    %25 = arith.cmpf oeq, %18, %24 : vector<8x4xf32>
    %c4_i32 = arith.constant 4 : i32
    %26 = vector.broadcast %c4_i32 : i32 to vector<8x4xi32>
    %27 = arith.select %25, %19, %26 : vector<8x4xi1>, vector<8x4xi32>
    %cst_14 = arith.constant dense<2147483647> : vector<8xi32>
    %28 = vector.multi_reduction <minsi>, %27, %cst_14 [1] : vector<8x4xi32> to vector<8xi32>
    %29 = vector.shape_cast %28 : vector<8xi32> to vector<8x1xi32>
    %30 = vector.broadcast %29 : vector<8x1xi32> to vector<8x4xi32>
    %31 = arith.cmpi eq, %19, %30 : vector<8x4xi32>
    %cst_15 = arith.constant 9.99999993E-9 : f32
    %32 = vector.broadcast %cst_15 : f32 to vector<8x1xf32>
    %33 = arith.addf %23, %32 : vector<8x1xf32>
    %34 = tpu.reciprocal %33 {approx = true} : vector<8x1xf32> -> vector<8x1xf32>
    %cst_16 = arith.constant 0.000000e+00 : f32
    %35 = vector.shape_cast %34 : vector<8x1xf32> to vector<8x1xf32>
    %36 = vector.broadcast %35 : vector<8x1xf32> to vector<8x4xf32>
    %37 = vector.broadcast %cst_16 : f32 to vector<8x4xf32>
    %38 = arith.select %31, %36, %37 : vector<8x4xi1>, vector<8x4xf32>
    %39 = arith.addf %20, %38 : vector<8x4xf32>
    %40 = arith.addf %21, %34 : vector<8x1xf32>
    %cst_17 = arith.constant 0x7F800000 : f32
    %41 = vector.broadcast %cst_17 : f32 to vector<8x4xf32>
    %42 = arith.select %31, %41, %18 : vector<8x4xi1>, vector<8x4xf32>
    %cst_18 = arith.constant dense<0x7F800000> : vector<8xf32>
    %43 = vector.multi_reduction <minimumf>, %42, %cst_18 [1] : vector<8x4xf32> to vector<8xf32>
    %44 = vector.shape_cast %43 : vector<8xf32> to vector<8x1xf32>
    %45 = vector.broadcast %44 : vector<8x1xf32> to vector<8x4xf32>
    %46 = arith.cmpf oeq, %42, %45 : vector<8x4xf32>
    %c4_i32_19 = arith.constant 4 : i32
    %47 = vector.broadcast %c4_i32_19 : i32 to vector<8x4xi32>
    %48 = arith.select %46, %19, %47 : vector<8x4xi1>, vector<8x4xi32>
    %cst_20 = arith.constant dense<2147483647> : vector<8xi32>
    %49 = vector.multi_reduction <minsi>, %48, %cst_20 [1] : vector<8x4xi32> to vector<8xi32>
    %50 = vector.shape_cast %49 : vector<8xi32> to vector<8x1xi32>
    %51 = vector.broadcast %50 : vector<8x1xi32> to vector<8x4xi32>
    %52 = arith.cmpi eq, %19, %51 : vector<8x4xi32>
    %cst_21 = arith.constant 9.99999993E-9 : f32
    %53 = vector.broadcast %cst_21 : f32 to vector<8x1xf32>
    %54 = arith.addf %44, %53 : vector<8x1xf32>
    %55 = tpu.reciprocal %54 {approx = true} : vector<8x1xf32> -> vector<8x1xf32>
    %cst_22 = arith.constant 0.000000e+00 : f32
    %56 = vector.shape_cast %55 : vector<8x1xf32> to vector<8x1xf32>
    %57 = vector.broadcast %56 : vector<8x1xf32> to vector<8x4xf32>
    %58 = vector.broadcast %cst_22 : f32 to vector<8x4xf32>
    %59 = arith.select %52, %57, %58 : vector<8x4xi1>, vector<8x4xf32>
    %60 = arith.addf %39, %59 : vector<8x4xf32>
    %61 = arith.addf %40, %55 : vector<8x1xf32>
    %cst_23 = arith.constant 0x7F800000 : f32
    %62 = vector.broadcast %cst_23 : f32 to vector<8x4xf32>
    %63 = arith.select %52, %62, %42 : vector<8x4xi1>, vector<8x4xf32>
    %cst_24 = arith.constant dense<0x7F800000> : vector<8xf32>
    %64 = vector.multi_reduction <minimumf>, %63, %cst_24 [1] : vector<8x4xf32> to vector<8xf32>
    %65 = vector.shape_cast %64 : vector<8xf32> to vector<8x1xf32>
    %66 = vector.broadcast %65 : vector<8x1xf32> to vector<8x4xf32>
    %67 = arith.cmpf oeq, %63, %66 : vector<8x4xf32>
    %c4_i32_25 = arith.constant 4 : i32
    %68 = vector.broadcast %c4_i32_25 : i32 to vector<8x4xi32>
    %69 = arith.select %67, %19, %68 : vector<8x4xi1>, vector<8x4xi32>
    %cst_26 = arith.constant dense<2147483647> : vector<8xi32>
    %70 = vector.multi_reduction <minsi>, %69, %cst_26 [1] : vector<8x4xi32> to vector<8xi32>
    %71 = vector.shape_cast %70 : vector<8xi32> to vector<8x1xi32>
    %72 = vector.broadcast %71 : vector<8x1xi32> to vector<8x4xi32>
    %73 = arith.cmpi eq, %19, %72 : vector<8x4xi32>
    %cst_27 = arith.constant 9.99999993E-9 : f32
    %74 = vector.broadcast %cst_27 : f32 to vector<8x1xf32>
    %75 = arith.addf %65, %74 : vector<8x1xf32>
    %76 = tpu.reciprocal %75 {approx = true} : vector<8x1xf32> -> vector<8x1xf32>
    %cst_28 = arith.constant 0.000000e+00 : f32
    %77 = vector.shape_cast %76 : vector<8x1xf32> to vector<8x1xf32>
    %78 = vector.broadcast %77 : vector<8x1xf32> to vector<8x4xf32>
    %79 = vector.broadcast %cst_28 : f32 to vector<8x4xf32>
    %80 = arith.select %73, %78, %79 : vector<8x4xi1>, vector<8x4xf32>
    %81 = arith.addf %60, %80 : vector<8x4xf32>
    %82 = arith.addf %61, %76 : vector<8x1xf32>
    %83 = arith.truncf %81 : vector<8x4xf32> to vector<8x4xbf16>
    %cst_29 = arith.constant dense<0.000000e+00> : vector<8x512xf32>
    %84 = tpu.matmul %83, %5, %cst_29 {dimension_numbers = #tpu.dot_dimension_numbers<[1], [0], [0], [1], [0, 0, 1, 1], [], []>} : vector<8x4xbf16>, vector<4x512xbf16>, vector<8x512xf32> -> vector<8x512xf32>
    %85 = tpu.reciprocal %82 {approx = true} : vector<8x1xf32> -> vector<8x1xf32>
    %86 = vector.broadcast %85 : vector<8x1xf32> to vector<8x512xf32>
    %87 = arith.mulf %84, %86 : vector<8x512xf32>
    %88 = arith.truncf %87 : vector<8x512xf32> to vector<8x512xbf16>
    %c0_30 = arith.constant 0 : index
    %c0_31 = arith.constant 0 : index
    %c0_32 = arith.constant 0 : index
    %89 = vector.load %arg5[%c0_30, %c0_31, %c0_32] : memref<1x8x512xbf16, #tpu.memory_space<vmem>>, vector<1x8x512xbf16>
    %90 = vector.shape_cast %89 : vector<1x8x512xbf16> to vector<8x512xbf16>
    %91 = vector.shape_cast %88 : vector<8x512xbf16> to vector<1x8x512xbf16>
    tpu.vector_store %arg5[%c0_30, %c0_31, %c0_32], %91 {strides = array<i32>} : memref<1x8x512xbf16, #tpu.memory_space<vmem>>, vector<1x8x512xbf16>,
    return
  }
  func.func @transform_0(%arg0: i32, %arg1: i32) -> (i32, i32, i32) {
    %c0_i32 = arith.constant 0 : i32
    %c0_i32_0 = arith.constant 0 : i32
    return %arg0, %arg1, %c0_i32 : i32, i32, i32
  }
  func.func @transform_1(%arg0: i32, %arg1: i32) -> (i32, i32, i32) {
    %c0_i32 = arith.constant 0 : i32
    %c0_i32_0 = arith.constant 0 : i32
    %c0_i32_1 = arith.constant 0 : i32
    return %arg0, %c0_i32, %c0_i32_0 : i32, i32, i32
  }
  func.func @transform_2(%arg0: i32, %arg1: i32) -> (i32, i32, i32) {
    %c0_i32 = arith.constant 0 : i32
    %c0_i32_0 = arith.constant 0 : i32
    %c0_i32_1 = arith.constant 0 : i32
    return %arg0, %c0_i32, %c0_i32_0 : i32, i32, i32
  }
  func.func @transform_3(%arg0: i32, %arg1: i32) -> (i32, i32, i32) {
    %c0_i32 = arith.constant 0 : i32
    %c0_i32_0 = arith.constant 0 : i32
    return %arg0, %arg1, %c0_i32 : i32, i32, i32
  }
}

module attributes {stable_mosaic.version = 11 : i64} {
  func.func @_first_matmul_stats2_kernel(%arg0: i32, %arg1: memref<16x256xbf16, #tpu.memory_space<vmem>>, %arg2: memref<16x512xbf16, #tpu.memory_space<vmem>>, %arg3: memref<256x256xbf16, #tpu.memory_space<vmem>>, %arg4: memref<512x256xbf16, #tpu.memory_space<vmem>>, %arg5: memref<16x256xf32, #tpu.memory_space<vmem>>, %arg6: memref<2x256xf32, #tpu.memory_space<vmem>>) attributes {dimension_semantics = [#tpu.dimension_semantics<arbitrary>], iteration_bounds = array<i64: 1>, scalar_prefetch = 0 : i64, scratch_operands = 0 : i64, tpu.core_type = #tpu.core_type<tc>, window_params = [{transform_indices = @transform_0, window_bounds = array<i64: 16, 256>}, {transform_indices = @transform_1, window_bounds = array<i64: 16, 512>}, {pipeline_mode = #tpu.pipeline_mode<synchronous>, transform_indices = @transform_2, window_bounds = array<i64: 256, 256>}, {pipeline_mode = #tpu.pipeline_mode<synchronous>, transform_indices = @transform_3, window_bounds = array<i64: 512, 256>}, {transform_indices = @transform_4, window_bounds = array<i64: 16, 256>}, {pipeline_mode = #tpu.pipeline_mode<synchronous>, transform_indices = @transform_5, window_bounds = array<i64: 2, 256>}]} {
    %c0 = arith.constant 0 : index
    %c0_0 = arith.constant 0 : index
    %0 = vector.load %arg1[%c0, %c0_0] : memref<16x256xbf16, #tpu.memory_space<vmem>>, vector<16x256xbf16>
    %c0_1 = arith.constant 0 : index
    %c0_2 = arith.constant 0 : index
    %1 = vector.load %arg3[%c0_1, %c0_2] : memref<256x256xbf16, #tpu.memory_space<vmem>>, vector<256x256xbf16>
    %cst = arith.constant dense<0.000000e+00> : vector<16x256xf32>
    %2 = tpu.matmul %0, %1, %cst {dimension_numbers = #tpu.dot_dimension_numbers<[1], [0], [0], [1], [0, 0, 1, 1], [], []>} : vector<16x256xbf16>, vector<256x256xbf16>, vector<16x256xf32> -> vector<16x256xf32>
    %c0_3 = arith.constant 0 : index
    %c0_4 = arith.constant 0 : index
    %3 = vector.load %arg2[%c0_3, %c0_4] : memref<16x512xbf16, #tpu.memory_space<vmem>>, vector<16x512xbf16>
    %c0_5 = arith.constant 0 : index
    %c0_6 = arith.constant 0 : index
    %4 = vector.load %arg4[%c0_5, %c0_6] : memref<512x256xbf16, #tpu.memory_space<vmem>>, vector<512x256xbf16>
    %cst_7 = arith.constant dense<0.000000e+00> : vector<16x256xf32>
    %5 = tpu.matmul %3, %4, %cst_7 {dimension_numbers = #tpu.dot_dimension_numbers<[1], [0], [0], [1], [0, 0, 1, 1], [], []>} : vector<16x512xbf16>, vector<512x256xbf16>, vector<16x256xf32> -> vector<16x256xf32>
    %6 = arith.addf %2, %5 : vector<16x256xf32>
    %c0_8 = arith.constant 0 : index
    %c0_9 = arith.constant 0 : index
    %7 = vector.load %arg5[%c0_8, %c0_9] : memref<16x256xf32, #tpu.memory_space<vmem>>, vector<16x256xf32>
    tpu.vector_store %arg5[%c0_8, %c0_9], %6 {strides = array<i32>} : memref<16x256xf32, #tpu.memory_space<vmem>>, vector<16x256xf32>,
    %c0_i32 = arith.constant 0 : i32
    %8 = arith.cmpi eq, %arg0, %c0_i32 : i32
    %9 = arith.extui %8 : i1 to i32
    %c0_i32_10 = arith.constant 0 : i32
    %10 = arith.cmpi ne, %9, %c0_i32_10 : i32
    scf.if %10 {
      %cst_20 = arith.constant 0.000000e+00 : f32
      %22 = vector.broadcast %cst_20 : f32 to vector<2x256xf32>
      %c0_21 = arith.constant 0 : index
      %c0_22 = arith.constant 0 : index
      %23 = vector.load %arg6[%c0_21, %c0_22] : memref<2x256xf32, #tpu.memory_space<vmem>>, vector<2x256xf32>
      tpu.vector_store %arg6[%c0_21, %c0_22], %22 {strides = array<i32>} : memref<2x256xf32, #tpu.memory_space<vmem>>, vector<2x256xf32>,
    } else {
    }
    %c0_11 = arith.constant 0 : index
    %c0_12 = arith.constant 0 : index
    %11 = vector.load %arg6[%c0_11, %c0_12] : memref<2x256xf32, #tpu.memory_space<vmem>>, vector<1x256xf32>
    %cst_13 = arith.constant dense<0.000000e+00> : vector<256xf32>
    %12 = vector.multi_reduction <add>, %6, %cst_13 [0] : vector<16x256xf32> to vector<256xf32>
    %13 = vector.shape_cast %12 : vector<256xf32> to vector<1x256xf32>
    %14 = arith.addf %11, %13 : vector<1x256xf32>
    %c0_14 = arith.constant 0 : index
    %c0_15 = arith.constant 0 : index
    %15 = vector.load %arg6[%c0_14, %c0_15] : memref<2x256xf32, #tpu.memory_space<vmem>>, vector<1x256xf32>
    tpu.vector_store %arg6[%c0_14, %c0_15], %14 {strides = array<i32>} : memref<2x256xf32, #tpu.memory_space<vmem>>, vector<1x256xf32>,
    %c1 = arith.constant 1 : index
    %c0_16 = arith.constant 0 : index
    %16 = vector.load %arg6[%c1, %c0_16] : memref<2x256xf32, #tpu.memory_space<vmem>>, vector<1x256xf32>
    %17 = arith.mulf %6, %6 : vector<16x256xf32>
    %cst_17 = arith.constant dense<0.000000e+00> : vector<256xf32>
    %18 = vector.multi_reduction <add>, %17, %cst_17 [0] : vector<16x256xf32> to vector<256xf32>
    %19 = vector.shape_cast %18 : vector<256xf32> to vector<1x256xf32>
    %20 = arith.addf %16, %19 : vector<1x256xf32>
    %c1_18 = arith.constant 1 : index
    %c0_19 = arith.constant 0 : index
    %21 = vector.load %arg6[%c1_18, %c0_19] : memref<2x256xf32, #tpu.memory_space<vmem>>, vector<1x256xf32>
    tpu.vector_store %arg6[%c1_18, %c0_19], %20 {strides = array<i32>} : memref<2x256xf32, #tpu.memory_space<vmem>>, vector<1x256xf32>,
    return
  }
  func.func @transform_0(%arg0: i32) -> (i32, i32) {
    %c0_i32 = arith.constant 0 : i32
    %c0_i32_0 = arith.constant 0 : i32
    return %arg0, %c0_i32 : i32, i32
  }
  func.func @transform_1(%arg0: i32) -> (i32, i32) {
    %c0_i32 = arith.constant 0 : i32
    %c0_i32_0 = arith.constant 0 : i32
    return %arg0, %c0_i32 : i32, i32
  }
  func.func @transform_2(%arg0: i32) -> (i32, i32) {
    %c0_i32 = arith.constant 0 : i32
    %c0_i32_0 = arith.constant 0 : i32
    %c0_i32_1 = arith.constant 0 : i32
    return %c0_i32, %c0_i32_0 : i32, i32
  }
  func.func @transform_3(%arg0: i32) -> (i32, i32) {
    %c0_i32 = arith.constant 0 : i32
    %c0_i32_0 = arith.constant 0 : i32
    %c0_i32_1 = arith.constant 0 : i32
    return %c0_i32, %c0_i32_0 : i32, i32
  }
  func.func @transform_4(%arg0: i32) -> (i32, i32) {
    %c0_i32 = arith.constant 0 : i32
    %c0_i32_0 = arith.constant 0 : i32
    return %arg0, %c0_i32 : i32, i32
  }
  func.func @transform_5(%arg0: i32) -> (i32, i32) {
    %c0_i32 = arith.constant 0 : i32
    %c0_i32_0 = arith.constant 0 : i32
    %c0_i32_1 = arith.constant 0 : i32
    return %c0_i32, %c0_i32_0 : i32, i32
  }
}

module attributes {stable_mosaic.version = 11 : i64} {
  func.func @_bn_relu_kernel(%arg0: i32, %arg1: memref<16x256xf32, #tpu.memory_space<vmem>>, %arg2: memref<2x256xf32, #tpu.memory_space<vmem>>, %arg3: memref<1x256xf32, #tpu.memory_space<vmem>>, %arg4: memref<1x256xf32, #tpu.memory_space<vmem>>, %arg5: memref<16x256xf32, #tpu.memory_space<vmem>>) attributes {dimension_semantics = [#tpu.dimension_semantics<parallel>], iteration_bounds = array<i64: 1>, scalar_prefetch = 0 : i64, scratch_operands = 0 : i64, tpu.core_type = #tpu.core_type<tc>, window_params = [{transform_indices = @transform_0, window_bounds = array<i64: 16, 256>}, {pipeline_mode = #tpu.pipeline_mode<synchronous>, transform_indices = @transform_1, window_bounds = array<i64: 2, 256>}, {pipeline_mode = #tpu.pipeline_mode<synchronous>, transform_indices = @transform_2, window_bounds = array<i64: 1, 256>}, {pipeline_mode = #tpu.pipeline_mode<synchronous>, transform_indices = @transform_3, window_bounds = array<i64: 1, 256>}, {transform_indices = @transform_4, window_bounds = array<i64: 16, 256>}]} {
    %c0 = arith.constant 0 : index
    %c0_0 = arith.constant 0 : index
    %0 = vector.load %arg2[%c0, %c0_0] : memref<2x256xf32, #tpu.memory_space<vmem>>, vector<1x256xf32>
    %cst = arith.constant 6.250000e-02 : f32
    %1 = vector.broadcast %cst : f32 to vector<1x256xf32>
    %2 = arith.mulf %0, %1 : vector<1x256xf32>
    %c1 = arith.constant 1 : index
    %c0_1 = arith.constant 0 : index
    %3 = vector.load %arg2[%c1, %c0_1] : memref<2x256xf32, #tpu.memory_space<vmem>>, vector<1x256xf32>
    %cst_2 = arith.constant 6.250000e-02 : f32
    %4 = vector.broadcast %cst_2 : f32 to vector<1x256xf32>
    %5 = arith.mulf %3, %4 : vector<1x256xf32>
    %6 = arith.mulf %2, %2 : vector<1x256xf32>
    %7 = arith.subf %5, %6 : vector<1x256xf32>
    %c0_3 = arith.constant 0 : index
    %c0_4 = arith.constant 0 : index
    %8 = vector.load %arg1[%c0_3, %c0_4] : memref<16x256xf32, #tpu.memory_space<vmem>>, vector<16x256xf32>
    %9 = vector.broadcast %2 : vector<1x256xf32> to vector<16x256xf32>
    %10 = arith.subf %8, %9 : vector<16x256xf32>
    %cst_5 = arith.constant 9.99999974E-6 : f32
    %11 = vector.broadcast %cst_5 : f32 to vector<1x256xf32>
    %12 = arith.addf %7, %11 : vector<1x256xf32>
    %13 = math.rsqrt %12 : vector<1x256xf32>
    %14 = vector.broadcast %13 : vector<1x256xf32> to vector<16x256xf32>
    %15 = arith.mulf %10, %14 : vector<16x256xf32>
    %c0_6 = arith.constant 0 : index
    %c0_7 = arith.constant 0 : index
    %16 = vector.load %arg3[%c0_6, %c0_7] : memref<1x256xf32, #tpu.memory_space<vmem>>, vector<1x256xf32>
    %17 = vector.broadcast %16 : vector<1x256xf32> to vector<16x256xf32>
    %18 = arith.mulf %15, %17 : vector<16x256xf32>
    %c0_8 = arith.constant 0 : index
    %c0_9 = arith.constant 0 : index
    %19 = vector.load %arg4[%c0_8, %c0_9] : memref<1x256xf32, #tpu.memory_space<vmem>>, vector<1x256xf32>
    %20 = vector.broadcast %19 : vector<1x256xf32> to vector<16x256xf32>
    %21 = arith.addf %18, %20 : vector<16x256xf32>
    %cst_10 = arith.constant 0.000000e+00 : f32
    %22 = vector.broadcast %cst_10 : f32 to vector<16x256xf32>
    %23 = arith.maximumf %21, %22 : vector<16x256xf32>
    %c0_11 = arith.constant 0 : index
    %c0_12 = arith.constant 0 : index
    %24 = vector.load %arg5[%c0_11, %c0_12] : memref<16x256xf32, #tpu.memory_space<vmem>>, vector<16x256xf32>
    tpu.vector_store %arg5[%c0_11, %c0_12], %23 {strides = array<i32>} : memref<16x256xf32, #tpu.memory_space<vmem>>, vector<16x256xf32>,
    return
  }
  func.func @transform_0(%arg0: i32) -> (i32, i32) {
    %c0_i32 = arith.constant 0 : i32
    %c0_i32_0 = arith.constant 0 : i32
    return %arg0, %c0_i32 : i32, i32
  }
  func.func @transform_1(%arg0: i32) -> (i32, i32) {
    %c0_i32 = arith.constant 0 : i32
    %c0_i32_0 = arith.constant 0 : i32
    %c0_i32_1 = arith.constant 0 : i32
    return %c0_i32, %c0_i32_0 : i32, i32
  }
  func.func @transform_2(%arg0: i32) -> (i32, i32) {
    %c0_i32 = arith.constant 0 : i32
    %c0_i32_0 = arith.constant 0 : i32
    %c0_i32_1 = arith.constant 0 : i32
    return %c0_i32, %c0_i32_0 : i32, i32
  }
  func.func @transform_3(%arg0: i32) -> (i32, i32) {
    %c0_i32 = arith.constant 0 : i32
    %c0_i32_0 = arith.constant 0 : i32
    %c0_i32_1 = arith.constant 0 : i32
    return %c0_i32, %c0_i32_0 : i32, i32
  }
  func.func @transform_4(%arg0: i32) -> (i32, i32) {
    %c0_i32 = arith.constant 0 : i32
    %c0_i32_0 = arith.constant 0 : i32
    return %arg0, %c0_i32 : i32, i32
  }
}

module attributes {stable_mosaic.version = 11 : i64} {
  func.func @_bn_relu_matmul_stats_kernel(%arg0: i32, %arg1: memref<16x256xf32, #tpu.memory_space<vmem>>, %arg2: memref<2x256xf32, #tpu.memory_space<vmem>>, %arg3: memref<1x256xf32, #tpu.memory_space<vmem>>, %arg4: memref<1x256xf32, #tpu.memory_space<vmem>>, %arg5: memref<256x256xbf16, #tpu.memory_space<vmem>>, %arg6: memref<16x256xf32, #tpu.memory_space<vmem>>, %arg7: memref<2x256xf32, #tpu.memory_space<vmem>>) attributes {dimension_semantics = [#tpu.dimension_semantics<arbitrary>], iteration_bounds = array<i64: 1>, scalar_prefetch = 0 : i64, scratch_operands = 0 : i64, tpu.core_type = #tpu.core_type<tc>, window_params = [{transform_indices = @transform_0, window_bounds = array<i64: 16, 256>}, {pipeline_mode = #tpu.pipeline_mode<synchronous>, transform_indices = @transform_1, window_bounds = array<i64: 2, 256>}, {pipeline_mode = #tpu.pipeline_mode<synchronous>, transform_indices = @transform_2, window_bounds = array<i64: 1, 256>}, {pipeline_mode = #tpu.pipeline_mode<synchronous>, transform_indices = @transform_3, window_bounds = array<i64: 1, 256>}, {pipeline_mode = #tpu.pipeline_mode<synchronous>, transform_indices = @transform_4, window_bounds = array<i64: 256, 256>}, {transform_indices = @transform_5, window_bounds = array<i64: 16, 256>}, {pipeline_mode = #tpu.pipeline_mode<synchronous>, transform_indices = @transform_6, window_bounds = array<i64: 2, 256>}]} {
    %c0 = arith.constant 0 : index
    %c0_0 = arith.constant 0 : index
    %0 = vector.load %arg2[%c0, %c0_0] : memref<2x256xf32, #tpu.memory_space<vmem>>, vector<1x256xf32>
    %cst = arith.constant 6.250000e-02 : f32
    %1 = vector.broadcast %cst : f32 to vector<1x256xf32>
    %2 = arith.mulf %0, %1 : vector<1x256xf32>
    %c1 = arith.constant 1 : index
    %c0_1 = arith.constant 0 : index
    %3 = vector.load %arg2[%c1, %c0_1] : memref<2x256xf32, #tpu.memory_space<vmem>>, vector<1x256xf32>
    %cst_2 = arith.constant 6.250000e-02 : f32
    %4 = vector.broadcast %cst_2 : f32 to vector<1x256xf32>
    %5 = arith.mulf %3, %4 : vector<1x256xf32>
    %6 = arith.mulf %2, %2 : vector<1x256xf32>
    %7 = arith.subf %5, %6 : vector<1x256xf32>
    %c0_3 = arith.constant 0 : index
    %c0_4 = arith.constant 0 : index
    %8 = vector.load %arg1[%c0_3, %c0_4] : memref<16x256xf32, #tpu.memory_space<vmem>>, vector<16x256xf32>
    %9 = vector.broadcast %2 : vector<1x256xf32> to vector<16x256xf32>
    %10 = arith.subf %8, %9 : vector<16x256xf32>
    %cst_5 = arith.constant 9.99999974E-6 : f32
    %11 = vector.broadcast %cst_5 : f32 to vector<1x256xf32>
    %12 = arith.addf %7, %11 : vector<1x256xf32>
    %13 = math.rsqrt %12 : vector<1x256xf32>
    %14 = vector.broadcast %13 : vector<1x256xf32> to vector<16x256xf32>
    %15 = arith.mulf %10, %14 : vector<16x256xf32>
    %c0_6 = arith.constant 0 : index
    %c0_7 = arith.constant 0 : index
    %16 = vector.load %arg3[%c0_6, %c0_7] : memref<1x256xf32, #tpu.memory_space<vmem>>, vector<1x256xf32>
    %17 = vector.broadcast %16 : vector<1x256xf32> to vector<16x256xf32>
    %18 = arith.mulf %15, %17 : vector<16x256xf32>
    %c0_8 = arith.constant 0 : index
    %c0_9 = arith.constant 0 : index
    %19 = vector.load %arg4[%c0_8, %c0_9] : memref<1x256xf32, #tpu.memory_space<vmem>>, vector<1x256xf32>
    %20 = vector.broadcast %19 : vector<1x256xf32> to vector<16x256xf32>
    %21 = arith.addf %18, %20 : vector<16x256xf32>
    %cst_10 = arith.constant 0.000000e+00 : f32
    %22 = vector.broadcast %cst_10 : f32 to vector<16x256xf32>
    %23 = arith.maximumf %21, %22 : vector<16x256xf32>
    %24 = arith.truncf %23 : vector<16x256xf32> to vector<16x256xbf16>
    %c0_11 = arith.constant 0 : index
    %c0_12 = arith.constant 0 : index
    %25 = vector.load %arg5[%c0_11, %c0_12] : memref<256x256xbf16, #tpu.memory_space<vmem>>, vector<256x256xbf16>
    %cst_13 = arith.constant dense<0.000000e+00> : vector<16x256xf32>
    %26 = tpu.matmul %24, %25, %cst_13 {dimension_numbers = #tpu.dot_dimension_numbers<[1], [0], [0], [1], [0, 0, 1, 1], [], []>} : vector<16x256xbf16>, vector<256x256xbf16>, vector<16x256xf32> -> vector<16x256xf32>
    %c0_14 = arith.constant 0 : index
    %c0_15 = arith.constant 0 : index
    %27 = vector.load %arg6[%c0_14, %c0_15] : memref<16x256xf32, #tpu.memory_space<vmem>>, vector<16x256xf32>
    tpu.vector_store %arg6[%c0_14, %c0_15], %26 {strides = array<i32>} : memref<16x256xf32, #tpu.memory_space<vmem>>, vector<16x256xf32>,
    %c0_i32 = arith.constant 0 : i32
    %28 = arith.cmpi eq, %arg0, %c0_i32 : i32
    %29 = arith.extui %28 : i1 to i32
    %c0_i32_16 = arith.constant 0 : i32
    %30 = arith.cmpi ne, %29, %c0_i32_16 : i32
    scf.if %30 {
      %cst_27 = arith.constant 0.000000e+00 : f32
      %42 = vector.broadcast %cst_27 : f32 to vector<2x256xf32>
      %c0_28 = arith.constant 0 : index
      %c0_29 = arith.constant 0 : index
      %43 = vector.load %arg7[%c0_28, %c0_29] : memref<2x256xf32, #tpu.memory_space<vmem>>, vector<2x256xf32>
      tpu.vector_store %arg7[%c0_28, %c0_29], %42 {strides = array<i32>} : memref<2x256xf32, #tpu.memory_space<vmem>>, vector<2x256xf32>,
    } else {
    }
    %c0_17 = arith.constant 0 : index
    %c0_18 = arith.constant 0 : index
    %31 = vector.load %arg7[%c0_17, %c0_18] : memref<2x256xf32, #tpu.memory_space<vmem>>, vector<1x256xf32>
    %cst_19 = arith.constant dense<0.000000e+00> : vector<256xf32>
    %32 = vector.multi_reduction <add>, %26, %cst_19 [0] : vector<16x256xf32> to vector<256xf32>
    %33 = vector.shape_cast %32 : vector<256xf32> to vector<1x256xf32>
    %34 = arith.addf %31, %33 : vector<1x256xf32>
    %c0_20 = arith.constant 0 : index
    %c0_21 = arith.constant 0 : index
    %35 = vector.load %arg7[%c0_20, %c0_21] : memref<2x256xf32, #tpu.memory_space<vmem>>, vector<1x256xf32>
    tpu.vector_store %arg7[%c0_20, %c0_21], %34 {strides = array<i32>} : memref<2x256xf32, #tpu.memory_space<vmem>>, vector<1x256xf32>,
    %c1_22 = arith.constant 1 : index
    %c0_23 = arith.constant 0 : index
    %36 = vector.load %arg7[%c1_22, %c0_23] : memref<2x256xf32, #tpu.memory_space<vmem>>, vector<1x256xf32>
    %37 = arith.mulf %26, %26 : vector<16x256xf32>
    %cst_24 = arith.constant dense<0.000000e+00> : vector<256xf32>
    %38 = vector.multi_reduction <add>, %37, %cst_24 [0] : vector<16x256xf32> to vector<256xf32>
    %39 = vector.shape_cast %38 : vector<256xf32> to vector<1x256xf32>
    %40 = arith.addf %36, %39 : vector<1x256xf32>
    %c1_25 = arith.constant 1 : index
    %c0_26 = arith.constant 0 : index
    %41 = vector.load %arg7[%c1_25, %c0_26] : memref<2x256xf32, #tpu.memory_space<vmem>>, vector<1x256xf32>
    tpu.vector_store %arg7[%c1_25, %c0_26], %40 {strides = array<i32>} : memref<2x256xf32, #tpu.memory_space<vmem>>, vector<1x256xf32>,
    return
  }
  func.func @transform_0(%arg0: i32) -> (i32, i32) {
    %c0_i32 = arith.constant 0 : i32
    %c0_i32_0 = arith.constant 0 : i32
    return %arg0, %c0_i32 : i32, i32
  }
  func.func @transform_1(%arg0: i32) -> (i32, i32) {
    %c0_i32 = arith.constant 0 : i32
    %c0_i32_0 = arith.constant 0 : i32
    %c0_i32_1 = arith.constant 0 : i32
    return %c0_i32, %c0_i32_0 : i32, i32
  }
  func.func @transform_2(%arg0: i32) -> (i32, i32) {
    %c0_i32 = arith.constant 0 : i32
    %c0_i32_0 = arith.constant 0 : i32
    %c0_i32_1 = arith.constant 0 : i32
    return %c0_i32, %c0_i32_0 : i32, i32
  }
  func.func @transform_3(%arg0: i32) -> (i32, i32) {
    %c0_i32 = arith.constant 0 : i32
    %c0_i32_0 = arith.constant 0 : i32
    %c0_i32_1 = arith.constant 0 : i32
    return %c0_i32, %c0_i32_0 : i32, i32
  }
  func.func @transform_4(%arg0: i32) -> (i32, i32) {
    %c0_i32 = arith.constant 0 : i32
    %c0_i32_0 = arith.constant 0 : i32
    %c0_i32_1 = arith.constant 0 : i32
    return %c0_i32, %c0_i32_0 : i32, i32
  }
  func.func @transform_5(%arg0: i32) -> (i32, i32) {
    %c0_i32 = arith.constant 0 : i32
    %c0_i32_0 = arith.constant 0 : i32
    return %arg0, %c0_i32 : i32, i32
  }
  func.func @transform_6(%arg0: i32) -> (i32, i32) {
    %c0_i32 = arith.constant 0 : i32
    %c0_i32_0 = arith.constant 0 : i32
    %c0_i32_1 = arith.constant 0 : i32
    return %c0_i32, %c0_i32_0 : i32, i32
  }
}

module attributes {stable_mosaic.version = 11 : i64} {
  func.func @_three_nn_interp_kernel(%arg0: i32, %arg1: i32, %arg2: memref<1x16x8xf32, #tpu.memory_space<vmem>>, %arg3: memref<1x8x8xf32, #tpu.memory_space<vmem>>, %arg4: memref<1x8x256xbf16, #tpu.memory_space<vmem>>, %arg5: memref<1x16x256xbf16, #tpu.memory_space<vmem>>) attributes {dimension_semantics = [#tpu.dimension_semantics<parallel>, #tpu.dimension_semantics<parallel>], iteration_bounds = array<i64: 2, 1>, scalar_prefetch = 0 : i64, scratch_operands = 0 : i64, tpu.core_type = #tpu.core_type<tc>, window_params = [{transform_indices = @transform_0, window_bounds = array<i64: 1, 16, 8>}, {transform_indices = @transform_1, window_bounds = array<i64: 1, 8, 8>}, {transform_indices = @transform_2, window_bounds = array<i64: 1, 8, 256>}, {transform_indices = @transform_3, window_bounds = array<i64: 1, 16, 256>}]} {
    %c0 = arith.constant 0 : index
    %c0_0 = arith.constant 0 : index
    %c0_1 = arith.constant 0 : index
    %0 = vector.load %arg2[%c0, %c0_0, %c0_1] : memref<1x16x8xf32, #tpu.memory_space<vmem>>, vector<1x16x8xf32>
    %1 = vector.shape_cast %0 : vector<1x16x8xf32> to vector<16x8xf32>
    %c0_2 = arith.constant 0 : index
    %c0_3 = arith.constant 0 : index
    %c0_4 = arith.constant 0 : index
    %2 = vector.load %arg3[%c0_2, %c0_3, %c0_4] : memref<1x8x8xf32, #tpu.memory_space<vmem>>, vector<1x8x8xf32>
    %3 = vector.shape_cast %2 : vector<1x8x8xf32> to vector<8x8xf32>
    %c0_5 = arith.constant 0 : index
    %c0_6 = arith.constant 0 : index
    %c0_7 = arith.constant 0 : index
    %4 = vector.load %arg4[%c0_5, %c0_6, %c0_7] : memref<1x8x256xbf16, #tpu.memory_space<vmem>>, vector<1x8x256xbf16>
    %5 = vector.shape_cast %4 : vector<1x8x256xbf16> to vector<8x256xbf16>
    %6 = arith.mulf %1, %1 : vector<16x8xf32>
    %cst = arith.constant dense<0.000000e+00> : vector<16xf32>
    %7 = vector.multi_reduction <add>, %6, %cst [1] : vector<16x8xf32> to vector<16xf32>
    %8 = vector.shape_cast %7 : vector<16xf32> to vector<16x1xf32>
    %9 = arith.mulf %3, %3 : vector<8x8xf32>
    %cst_8 = arith.constant dense<0.000000e+00> : vector<8xf32>
    %10 = vector.multi_reduction <add>, %9, %cst_8 [0] : vector<8x8xf32> to vector<8xf32>
    %11 = vector.shape_cast %10 : vector<8xf32> to vector<1x8xf32>
    %cst_9 = arith.constant dense<0.000000e+00> : vector<16x8xf32>
    %12 = tpu.matmul %1, %3, %cst_9 {dimension_numbers = #tpu.dot_dimension_numbers<[1], [0], [0], [1], [0, 0, 1, 1], [], []>} : vector<16x8xf32>, vector<8x8xf32>, vector<16x8xf32> -> vector<16x8xf32>
    %13 = vector.broadcast %8 : vector<16x1xf32> to vector<16x8xf32>
    %14 = vector.broadcast %11 : vector<1x8xf32> to vector<16x8xf32>
    %15 = arith.addf %13, %14 : vector<16x8xf32>
    %cst_10 = arith.constant 2.000000e+00 : f32
    %16 = vector.broadcast %cst_10 : f32 to vector<16x8xf32>
    %17 = arith.mulf %16, %12 : vector<16x8xf32>
    %18 = arith.subf %15, %17 : vector<16x8xf32>
    %19 = tpu.iota {dimensions = array<i32: 1>} : vector<16x8xi32>
    %cst_11 = arith.constant 0.000000e+00 : f32
    %20 = vector.broadcast %cst_11 : f32 to vector<16x8xf32>
    %cst_12 = arith.constant 0.000000e+00 : f32
    %21 = vector.broadcast %cst_12 : f32 to vector<16x1xf32>
    %cst_13 = arith.constant dense<0x7F800000> : vector<16xf32>
    %22 = vector.multi_reduction <minimumf>, %18, %cst_13 [1] : vector<16x8xf32> to vector<16xf32>
    %23 = vector.shape_cast %22 : vector<16xf32> to vector<16x1xf32>
    %24 = vector.broadcast %23 : vector<16x1xf32> to vector<16x8xf32>
    %25 = arith.cmpf oeq, %18, %24 : vector<16x8xf32>
    %c8_i32 = arith.constant 8 : i32
    %26 = vector.broadcast %c8_i32 : i32 to vector<16x8xi32>
    %27 = arith.select %25, %19, %26 : vector<16x8xi1>, vector<16x8xi32>
    %cst_14 = arith.constant dense<2147483647> : vector<16xi32>
    %28 = vector.multi_reduction <minsi>, %27, %cst_14 [1] : vector<16x8xi32> to vector<16xi32>
    %29 = vector.shape_cast %28 : vector<16xi32> to vector<16x1xi32>
    %30 = vector.broadcast %29 : vector<16x1xi32> to vector<16x8xi32>
    %31 = arith.cmpi eq, %19, %30 : vector<16x8xi32>
    %cst_15 = arith.constant 9.99999993E-9 : f32
    %32 = vector.broadcast %cst_15 : f32 to vector<16x1xf32>
    %33 = arith.addf %23, %32 : vector<16x1xf32>
    %34 = tpu.reciprocal %33 {approx = true} : vector<16x1xf32> -> vector<16x1xf32>
    %cst_16 = arith.constant 0.000000e+00 : f32
    %35 = vector.shape_cast %34 : vector<16x1xf32> to vector<16x1xf32>
    %36 = vector.broadcast %35 : vector<16x1xf32> to vector<16x8xf32>
    %37 = vector.broadcast %cst_16 : f32 to vector<16x8xf32>
    %38 = arith.select %31, %36, %37 : vector<16x8xi1>, vector<16x8xf32>
    %39 = arith.addf %20, %38 : vector<16x8xf32>
    %40 = arith.addf %21, %34 : vector<16x1xf32>
    %cst_17 = arith.constant 0x7F800000 : f32
    %41 = vector.broadcast %cst_17 : f32 to vector<16x8xf32>
    %42 = arith.select %31, %41, %18 : vector<16x8xi1>, vector<16x8xf32>
    %cst_18 = arith.constant dense<0x7F800000> : vector<16xf32>
    %43 = vector.multi_reduction <minimumf>, %42, %cst_18 [1] : vector<16x8xf32> to vector<16xf32>
    %44 = vector.shape_cast %43 : vector<16xf32> to vector<16x1xf32>
    %45 = vector.broadcast %44 : vector<16x1xf32> to vector<16x8xf32>
    %46 = arith.cmpf oeq, %42, %45 : vector<16x8xf32>
    %c8_i32_19 = arith.constant 8 : i32
    %47 = vector.broadcast %c8_i32_19 : i32 to vector<16x8xi32>
    %48 = arith.select %46, %19, %47 : vector<16x8xi1>, vector<16x8xi32>
    %cst_20 = arith.constant dense<2147483647> : vector<16xi32>
    %49 = vector.multi_reduction <minsi>, %48, %cst_20 [1] : vector<16x8xi32> to vector<16xi32>
    %50 = vector.shape_cast %49 : vector<16xi32> to vector<16x1xi32>
    %51 = vector.broadcast %50 : vector<16x1xi32> to vector<16x8xi32>
    %52 = arith.cmpi eq, %19, %51 : vector<16x8xi32>
    %cst_21 = arith.constant 9.99999993E-9 : f32
    %53 = vector.broadcast %cst_21 : f32 to vector<16x1xf32>
    %54 = arith.addf %44, %53 : vector<16x1xf32>
    %55 = tpu.reciprocal %54 {approx = true} : vector<16x1xf32> -> vector<16x1xf32>
    %cst_22 = arith.constant 0.000000e+00 : f32
    %56 = vector.shape_cast %55 : vector<16x1xf32> to vector<16x1xf32>
    %57 = vector.broadcast %56 : vector<16x1xf32> to vector<16x8xf32>
    %58 = vector.broadcast %cst_22 : f32 to vector<16x8xf32>
    %59 = arith.select %52, %57, %58 : vector<16x8xi1>, vector<16x8xf32>
    %60 = arith.addf %39, %59 : vector<16x8xf32>
    %61 = arith.addf %40, %55 : vector<16x1xf32>
    %cst_23 = arith.constant 0x7F800000 : f32
    %62 = vector.broadcast %cst_23 : f32 to vector<16x8xf32>
    %63 = arith.select %52, %62, %42 : vector<16x8xi1>, vector<16x8xf32>
    %cst_24 = arith.constant dense<0x7F800000> : vector<16xf32>
    %64 = vector.multi_reduction <minimumf>, %63, %cst_24 [1] : vector<16x8xf32> to vector<16xf32>
    %65 = vector.shape_cast %64 : vector<16xf32> to vector<16x1xf32>
    %66 = vector.broadcast %65 : vector<16x1xf32> to vector<16x8xf32>
    %67 = arith.cmpf oeq, %63, %66 : vector<16x8xf32>
    %c8_i32_25 = arith.constant 8 : i32
    %68 = vector.broadcast %c8_i32_25 : i32 to vector<16x8xi32>
    %69 = arith.select %67, %19, %68 : vector<16x8xi1>, vector<16x8xi32>
    %cst_26 = arith.constant dense<2147483647> : vector<16xi32>
    %70 = vector.multi_reduction <minsi>, %69, %cst_26 [1] : vector<16x8xi32> to vector<16xi32>
    %71 = vector.shape_cast %70 : vector<16xi32> to vector<16x1xi32>
    %72 = vector.broadcast %71 : vector<16x1xi32> to vector<16x8xi32>
    %73 = arith.cmpi eq, %19, %72 : vector<16x8xi32>
    %cst_27 = arith.constant 9.99999993E-9 : f32
    %74 = vector.broadcast %cst_27 : f32 to vector<16x1xf32>
    %75 = arith.addf %65, %74 : vector<16x1xf32>
    %76 = tpu.reciprocal %75 {approx = true} : vector<16x1xf32> -> vector<16x1xf32>
    %cst_28 = arith.constant 0.000000e+00 : f32
    %77 = vector.shape_cast %76 : vector<16x1xf32> to vector<16x1xf32>
    %78 = vector.broadcast %77 : vector<16x1xf32> to vector<16x8xf32>
    %79 = vector.broadcast %cst_28 : f32 to vector<16x8xf32>
    %80 = arith.select %73, %78, %79 : vector<16x8xi1>, vector<16x8xf32>
    %81 = arith.addf %60, %80 : vector<16x8xf32>
    %82 = arith.addf %61, %76 : vector<16x1xf32>
    %83 = arith.truncf %81 : vector<16x8xf32> to vector<16x8xbf16>
    %cst_29 = arith.constant dense<0.000000e+00> : vector<16x256xf32>
    %84 = tpu.matmul %83, %5, %cst_29 {dimension_numbers = #tpu.dot_dimension_numbers<[1], [0], [0], [1], [0, 0, 1, 1], [], []>} : vector<16x8xbf16>, vector<8x256xbf16>, vector<16x256xf32> -> vector<16x256xf32>
    %85 = tpu.reciprocal %82 {approx = true} : vector<16x1xf32> -> vector<16x1xf32>
    %86 = vector.broadcast %85 : vector<16x1xf32> to vector<16x256xf32>
    %87 = arith.mulf %84, %86 : vector<16x256xf32>
    %88 = arith.truncf %87 : vector<16x256xf32> to vector<16x256xbf16>
    %c0_30 = arith.constant 0 : index
    %c0_31 = arith.constant 0 : index
    %c0_32 = arith.constant 0 : index
    %89 = vector.load %arg5[%c0_30, %c0_31, %c0_32] : memref<1x16x256xbf16, #tpu.memory_space<vmem>>, vector<1x16x256xbf16>
    %90 = vector.shape_cast %89 : vector<1x16x256xbf16> to vector<16x256xbf16>
    %91 = vector.shape_cast %88 : vector<16x256xbf16> to vector<1x16x256xbf16>
    tpu.vector_store %arg5[%c0_30, %c0_31, %c0_32], %91 {strides = array<i32>} : memref<1x16x256xbf16, #tpu.memory_space<vmem>>, vector<1x16x256xbf16>,
    return
  }
  func.func @transform_0(%arg0: i32, %arg1: i32) -> (i32, i32, i32) {
    %c0_i32 = arith.constant 0 : i32
    %c0_i32_0 = arith.constant 0 : i32
    return %arg0, %arg1, %c0_i32 : i32, i32, i32
  }
  func.func @transform_1(%arg0: i32, %arg1: i32) -> (i32, i32, i32) {
    %c0_i32 = arith.constant 0 : i32
    %c0_i32_0 = arith.constant 0 : i32
    %c0_i32_1 = arith.constant 0 : i32
    return %arg0, %c0_i32, %c0_i32_0 : i32, i32, i32
  }
  func.func @transform_2(%arg0: i32, %arg1: i32) -> (i32, i32, i32) {
    %c0_i32 = arith.constant 0 : i32
    %c0_i32_0 = arith.constant 0 : i32
    %c0_i32_1 = arith.constant 0 : i32
    return %arg0, %c0_i32, %c0_i32_0 : i32, i32, i32
  }
  func.func @transform_3(%arg0: i32, %arg1: i32) -> (i32, i32, i32) {
    %c0_i32 = arith.constant 0 : i32
    %c0_i32_0 = arith.constant 0 : i32
    return %arg0, %arg1, %c0_i32 : i32, i32, i32
  }
}

module attributes {stable_mosaic.version = 11 : i64} {
  func.func @_first_matmul_stats2_kernel(%arg0: i32, %arg1: memref<32x128xbf16, #tpu.memory_space<vmem>>, %arg2: memref<32x256xbf16, #tpu.memory_space<vmem>>, %arg3: memref<128x256xbf16, #tpu.memory_space<vmem>>, %arg4: memref<256x256xbf16, #tpu.memory_space<vmem>>, %arg5: memref<32x256xf32, #tpu.memory_space<vmem>>, %arg6: memref<2x256xf32, #tpu.memory_space<vmem>>) attributes {dimension_semantics = [#tpu.dimension_semantics<arbitrary>], iteration_bounds = array<i64: 1>, scalar_prefetch = 0 : i64, scratch_operands = 0 : i64, tpu.core_type = #tpu.core_type<tc>, window_params = [{transform_indices = @transform_0, window_bounds = array<i64: 32, 128>}, {transform_indices = @transform_1, window_bounds = array<i64: 32, 256>}, {pipeline_mode = #tpu.pipeline_mode<synchronous>, transform_indices = @transform_2, window_bounds = array<i64: 128, 256>}, {pipeline_mode = #tpu.pipeline_mode<synchronous>, transform_indices = @transform_3, window_bounds = array<i64: 256, 256>}, {transform_indices = @transform_4, window_bounds = array<i64: 32, 256>}, {pipeline_mode = #tpu.pipeline_mode<synchronous>, transform_indices = @transform_5, window_bounds = array<i64: 2, 256>}]} {
    %c0 = arith.constant 0 : index
    %c0_0 = arith.constant 0 : index
    %0 = vector.load %arg1[%c0, %c0_0] : memref<32x128xbf16, #tpu.memory_space<vmem>>, vector<32x128xbf16>
    %c0_1 = arith.constant 0 : index
    %c0_2 = arith.constant 0 : index
    %1 = vector.load %arg3[%c0_1, %c0_2] : memref<128x256xbf16, #tpu.memory_space<vmem>>, vector<128x256xbf16>
    %cst = arith.constant dense<0.000000e+00> : vector<32x256xf32>
    %2 = tpu.matmul %0, %1, %cst {dimension_numbers = #tpu.dot_dimension_numbers<[1], [0], [0], [1], [0, 0, 1, 1], [], []>} : vector<32x128xbf16>, vector<128x256xbf16>, vector<32x256xf32> -> vector<32x256xf32>
    %c0_3 = arith.constant 0 : index
    %c0_4 = arith.constant 0 : index
    %3 = vector.load %arg2[%c0_3, %c0_4] : memref<32x256xbf16, #tpu.memory_space<vmem>>, vector<32x256xbf16>
    %c0_5 = arith.constant 0 : index
    %c0_6 = arith.constant 0 : index
    %4 = vector.load %arg4[%c0_5, %c0_6] : memref<256x256xbf16, #tpu.memory_space<vmem>>, vector<256x256xbf16>
    %cst_7 = arith.constant dense<0.000000e+00> : vector<32x256xf32>
    %5 = tpu.matmul %3, %4, %cst_7 {dimension_numbers = #tpu.dot_dimension_numbers<[1], [0], [0], [1], [0, 0, 1, 1], [], []>} : vector<32x256xbf16>, vector<256x256xbf16>, vector<32x256xf32> -> vector<32x256xf32>
    %6 = arith.addf %2, %5 : vector<32x256xf32>
    %c0_8 = arith.constant 0 : index
    %c0_9 = arith.constant 0 : index
    %7 = vector.load %arg5[%c0_8, %c0_9] : memref<32x256xf32, #tpu.memory_space<vmem>>, vector<32x256xf32>
    tpu.vector_store %arg5[%c0_8, %c0_9], %6 {strides = array<i32>} : memref<32x256xf32, #tpu.memory_space<vmem>>, vector<32x256xf32>,
    %c0_i32 = arith.constant 0 : i32
    %8 = arith.cmpi eq, %arg0, %c0_i32 : i32
    %9 = arith.extui %8 : i1 to i32
    %c0_i32_10 = arith.constant 0 : i32
    %10 = arith.cmpi ne, %9, %c0_i32_10 : i32
    scf.if %10 {
      %cst_20 = arith.constant 0.000000e+00 : f32
      %22 = vector.broadcast %cst_20 : f32 to vector<2x256xf32>
      %c0_21 = arith.constant 0 : index
      %c0_22 = arith.constant 0 : index
      %23 = vector.load %arg6[%c0_21, %c0_22] : memref<2x256xf32, #tpu.memory_space<vmem>>, vector<2x256xf32>
      tpu.vector_store %arg6[%c0_21, %c0_22], %22 {strides = array<i32>} : memref<2x256xf32, #tpu.memory_space<vmem>>, vector<2x256xf32>,
    } else {
    }
    %c0_11 = arith.constant 0 : index
    %c0_12 = arith.constant 0 : index
    %11 = vector.load %arg6[%c0_11, %c0_12] : memref<2x256xf32, #tpu.memory_space<vmem>>, vector<1x256xf32>
    %cst_13 = arith.constant dense<0.000000e+00> : vector<256xf32>
    %12 = vector.multi_reduction <add>, %6, %cst_13 [0] : vector<32x256xf32> to vector<256xf32>
    %13 = vector.shape_cast %12 : vector<256xf32> to vector<1x256xf32>
    %14 = arith.addf %11, %13 : vector<1x256xf32>
    %c0_14 = arith.constant 0 : index
    %c0_15 = arith.constant 0 : index
    %15 = vector.load %arg6[%c0_14, %c0_15] : memref<2x256xf32, #tpu.memory_space<vmem>>, vector<1x256xf32>
    tpu.vector_store %arg6[%c0_14, %c0_15], %14 {strides = array<i32>} : memref<2x256xf32, #tpu.memory_space<vmem>>, vector<1x256xf32>,
    %c1 = arith.constant 1 : index
    %c0_16 = arith.constant 0 : index
    %16 = vector.load %arg6[%c1, %c0_16] : memref<2x256xf32, #tpu.memory_space<vmem>>, vector<1x256xf32>
    %17 = arith.mulf %6, %6 : vector<32x256xf32>
    %cst_17 = arith.constant dense<0.000000e+00> : vector<256xf32>
    %18 = vector.multi_reduction <add>, %17, %cst_17 [0] : vector<32x256xf32> to vector<256xf32>
    %19 = vector.shape_cast %18 : vector<256xf32> to vector<1x256xf32>
    %20 = arith.addf %16, %19 : vector<1x256xf32>
    %c1_18 = arith.constant 1 : index
    %c0_19 = arith.constant 0 : index
    %21 = vector.load %arg6[%c1_18, %c0_19] : memref<2x256xf32, #tpu.memory_space<vmem>>, vector<1x256xf32>
    tpu.vector_store %arg6[%c1_18, %c0_19], %20 {strides = array<i32>} : memref<2x256xf32, #tpu.memory_space<vmem>>, vector<1x256xf32>,
    return
  }
  func.func @transform_0(%arg0: i32) -> (i32, i32) {
    %c0_i32 = arith.constant 0 : i32
    %c0_i32_0 = arith.constant 0 : i32
    return %arg0, %c0_i32 : i32, i32
  }
  func.func @transform_1(%arg0: i32) -> (i32, i32) {
    %c0_i32 = arith.constant 0 : i32
    %c0_i32_0 = arith.constant 0 : i32
    return %arg0, %c0_i32 : i32, i32
  }
  func.func @transform_2(%arg0: i32) -> (i32, i32) {
    %c0_i32 = arith.constant 0 : i32
    %c0_i32_0 = arith.constant 0 : i32
    %c0_i32_1 = arith.constant 0 : i32
    return %c0_i32, %c0_i32_0 : i32, i32
  }
  func.func @transform_3(%arg0: i32) -> (i32, i32) {
    %c0_i32 = arith.constant 0 : i32
    %c0_i32_0 = arith.constant 0 : i32
    %c0_i32_1 = arith.constant 0 : i32
    return %c0_i32, %c0_i32_0 : i32, i32
  }
  func.func @transform_4(%arg0: i32) -> (i32, i32) {
    %c0_i32 = arith.constant 0 : i32
    %c0_i32_0 = arith.constant 0 : i32
    return %arg0, %c0_i32 : i32, i32
  }
  func.func @transform_5(%arg0: i32) -> (i32, i32) {
    %c0_i32 = arith.constant 0 : i32
    %c0_i32_0 = arith.constant 0 : i32
    %c0_i32_1 = arith.constant 0 : i32
    return %c0_i32, %c0_i32_0 : i32, i32
  }
}

module attributes {stable_mosaic.version = 11 : i64} {
  func.func @_bn_relu_matmul_stats_kernel(%arg0: i32, %arg1: memref<32x256xf32, #tpu.memory_space<vmem>>, %arg2: memref<2x256xf32, #tpu.memory_space<vmem>>, %arg3: memref<1x256xf32, #tpu.memory_space<vmem>>, %arg4: memref<1x256xf32, #tpu.memory_space<vmem>>, %arg5: memref<256x256xbf16, #tpu.memory_space<vmem>>, %arg6: memref<32x256xf32, #tpu.memory_space<vmem>>, %arg7: memref<2x256xf32, #tpu.memory_space<vmem>>) attributes {dimension_semantics = [#tpu.dimension_semantics<arbitrary>], iteration_bounds = array<i64: 1>, scalar_prefetch = 0 : i64, scratch_operands = 0 : i64, tpu.core_type = #tpu.core_type<tc>, window_params = [{transform_indices = @transform_0, window_bounds = array<i64: 32, 256>}, {pipeline_mode = #tpu.pipeline_mode<synchronous>, transform_indices = @transform_1, window_bounds = array<i64: 2, 256>}, {pipeline_mode = #tpu.pipeline_mode<synchronous>, transform_indices = @transform_2, window_bounds = array<i64: 1, 256>}, {pipeline_mode = #tpu.pipeline_mode<synchronous>, transform_indices = @transform_3, window_bounds = array<i64: 1, 256>}, {pipeline_mode = #tpu.pipeline_mode<synchronous>, transform_indices = @transform_4, window_bounds = array<i64: 256, 256>}, {transform_indices = @transform_5, window_bounds = array<i64: 32, 256>}, {pipeline_mode = #tpu.pipeline_mode<synchronous>, transform_indices = @transform_6, window_bounds = array<i64: 2, 256>}]} {
    %c0 = arith.constant 0 : index
    %c0_0 = arith.constant 0 : index
    %0 = vector.load %arg2[%c0, %c0_0] : memref<2x256xf32, #tpu.memory_space<vmem>>, vector<1x256xf32>
    %cst = arith.constant 3.125000e-02 : f32
    %1 = vector.broadcast %cst : f32 to vector<1x256xf32>
    %2 = arith.mulf %0, %1 : vector<1x256xf32>
    %c1 = arith.constant 1 : index
    %c0_1 = arith.constant 0 : index
    %3 = vector.load %arg2[%c1, %c0_1] : memref<2x256xf32, #tpu.memory_space<vmem>>, vector<1x256xf32>
    %cst_2 = arith.constant 3.125000e-02 : f32
    %4 = vector.broadcast %cst_2 : f32 to vector<1x256xf32>
    %5 = arith.mulf %3, %4 : vector<1x256xf32>
    %6 = arith.mulf %2, %2 : vector<1x256xf32>
    %7 = arith.subf %5, %6 : vector<1x256xf32>
    %c0_3 = arith.constant 0 : index
    %c0_4 = arith.constant 0 : index
    %8 = vector.load %arg1[%c0_3, %c0_4] : memref<32x256xf32, #tpu.memory_space<vmem>>, vector<32x256xf32>
    %9 = vector.broadcast %2 : vector<1x256xf32> to vector<32x256xf32>
    %10 = arith.subf %8, %9 : vector<32x256xf32>
    %cst_5 = arith.constant 9.99999974E-6 : f32
    %11 = vector.broadcast %cst_5 : f32 to vector<1x256xf32>
    %12 = arith.addf %7, %11 : vector<1x256xf32>
    %13 = math.rsqrt %12 : vector<1x256xf32>
    %14 = vector.broadcast %13 : vector<1x256xf32> to vector<32x256xf32>
    %15 = arith.mulf %10, %14 : vector<32x256xf32>
    %c0_6 = arith.constant 0 : index
    %c0_7 = arith.constant 0 : index
    %16 = vector.load %arg3[%c0_6, %c0_7] : memref<1x256xf32, #tpu.memory_space<vmem>>, vector<1x256xf32>
    %17 = vector.broadcast %16 : vector<1x256xf32> to vector<32x256xf32>
    %18 = arith.mulf %15, %17 : vector<32x256xf32>
    %c0_8 = arith.constant 0 : index
    %c0_9 = arith.constant 0 : index
    %19 = vector.load %arg4[%c0_8, %c0_9] : memref<1x256xf32, #tpu.memory_space<vmem>>, vector<1x256xf32>
    %20 = vector.broadcast %19 : vector<1x256xf32> to vector<32x256xf32>
    %21 = arith.addf %18, %20 : vector<32x256xf32>
    %cst_10 = arith.constant 0.000000e+00 : f32
    %22 = vector.broadcast %cst_10 : f32 to vector<32x256xf32>
    %23 = arith.maximumf %21, %22 : vector<32x256xf32>
    %24 = arith.truncf %23 : vector<32x256xf32> to vector<32x256xbf16>
    %c0_11 = arith.constant 0 : index
    %c0_12 = arith.constant 0 : index
    %25 = vector.load %arg5[%c0_11, %c0_12] : memref<256x256xbf16, #tpu.memory_space<vmem>>, vector<256x256xbf16>
    %cst_13 = arith.constant dense<0.000000e+00> : vector<32x256xf32>
    %26 = tpu.matmul %24, %25, %cst_13 {dimension_numbers = #tpu.dot_dimension_numbers<[1], [0], [0], [1], [0, 0, 1, 1], [], []>} : vector<32x256xbf16>, vector<256x256xbf16>, vector<32x256xf32> -> vector<32x256xf32>
    %c0_14 = arith.constant 0 : index
    %c0_15 = arith.constant 0 : index
    %27 = vector.load %arg6[%c0_14, %c0_15] : memref<32x256xf32, #tpu.memory_space<vmem>>, vector<32x256xf32>
    tpu.vector_store %arg6[%c0_14, %c0_15], %26 {strides = array<i32>} : memref<32x256xf32, #tpu.memory_space<vmem>>, vector<32x256xf32>,
    %c0_i32 = arith.constant 0 : i32
    %28 = arith.cmpi eq, %arg0, %c0_i32 : i32
    %29 = arith.extui %28 : i1 to i32
    %c0_i32_16 = arith.constant 0 : i32
    %30 = arith.cmpi ne, %29, %c0_i32_16 : i32
    scf.if %30 {
      %cst_27 = arith.constant 0.000000e+00 : f32
      %42 = vector.broadcast %cst_27 : f32 to vector<2x256xf32>
      %c0_28 = arith.constant 0 : index
      %c0_29 = arith.constant 0 : index
      %43 = vector.load %arg7[%c0_28, %c0_29] : memref<2x256xf32, #tpu.memory_space<vmem>>, vector<2x256xf32>
      tpu.vector_store %arg7[%c0_28, %c0_29], %42 {strides = array<i32>} : memref<2x256xf32, #tpu.memory_space<vmem>>, vector<2x256xf32>,
    } else {
    }
    %c0_17 = arith.constant 0 : index
    %c0_18 = arith.constant 0 : index
    %31 = vector.load %arg7[%c0_17, %c0_18] : memref<2x256xf32, #tpu.memory_space<vmem>>, vector<1x256xf32>
    %cst_19 = arith.constant dense<0.000000e+00> : vector<256xf32>
    %32 = vector.multi_reduction <add>, %26, %cst_19 [0] : vector<32x256xf32> to vector<256xf32>
    %33 = vector.shape_cast %32 : vector<256xf32> to vector<1x256xf32>
    %34 = arith.addf %31, %33 : vector<1x256xf32>
    %c0_20 = arith.constant 0 : index
    %c0_21 = arith.constant 0 : index
    %35 = vector.load %arg7[%c0_20, %c0_21] : memref<2x256xf32, #tpu.memory_space<vmem>>, vector<1x256xf32>
    tpu.vector_store %arg7[%c0_20, %c0_21], %34 {strides = array<i32>} : memref<2x256xf32, #tpu.memory_space<vmem>>, vector<1x256xf32>,
    %c1_22 = arith.constant 1 : index
    %c0_23 = arith.constant 0 : index
    %36 = vector.load %arg7[%c1_22, %c0_23] : memref<2x256xf32, #tpu.memory_space<vmem>>, vector<1x256xf32>
    %37 = arith.mulf %26, %26 : vector<32x256xf32>
    %cst_24 = arith.constant dense<0.000000e+00> : vector<256xf32>
    %38 = vector.multi_reduction <add>, %37, %cst_24 [0] : vector<32x256xf32> to vector<256xf32>
    %39 = vector.shape_cast %38 : vector<256xf32> to vector<1x256xf32>
    %40 = arith.addf %36, %39 : vector<1x256xf32>
    %c1_25 = arith.constant 1 : index
    %c0_26 = arith.constant 0 : index
    %41 = vector.load %arg7[%c1_25, %c0_26] : memref<2x256xf32, #tpu.memory_space<vmem>>, vector<1x256xf32>
    tpu.vector_store %arg7[%c1_25, %c0_26], %40 {strides = array<i32>} : memref<2x256xf32, #tpu.memory_space<vmem>>, vector<1x256xf32>,
    return
  }
  func.func @transform_0(%arg0: i32) -> (i32, i32) {
    %c0_i32 = arith.constant 0 : i32
    %c0_i32_0 = arith.constant 0 : i32
    return %arg0, %c0_i32 : i32, i32
  }
  func.func @transform_1(%arg0: i32) -> (i32, i32) {
    %c0_i32 = arith.constant 0 : i32
    %c0_i32_0 = arith.constant 0 : i32
    %c0_i32_1 = arith.constant 0 : i32
    return %c0_i32, %c0_i32_0 : i32, i32
  }
  func.func @transform_2(%arg0: i32) -> (i32, i32) {
    %c0_i32 = arith.constant 0 : i32
    %c0_i32_0 = arith.constant 0 : i32
    %c0_i32_1 = arith.constant 0 : i32
    return %c0_i32, %c0_i32_0 : i32, i32
  }
  func.func @transform_3(%arg0: i32) -> (i32, i32) {
    %c0_i32 = arith.constant 0 : i32
    %c0_i32_0 = arith.constant 0 : i32
    %c0_i32_1 = arith.constant 0 : i32
    return %c0_i32, %c0_i32_0 : i32, i32
  }
  func.func @transform_4(%arg0: i32) -> (i32, i32) {
    %c0_i32 = arith.constant 0 : i32
    %c0_i32_0 = arith.constant 0 : i32
    %c0_i32_1 = arith.constant 0 : i32
    return %c0_i32, %c0_i32_0 : i32, i32
  }
  func.func @transform_5(%arg0: i32) -> (i32, i32) {
    %c0_i32 = arith.constant 0 : i32
    %c0_i32_0 = arith.constant 0 : i32
    return %arg0, %c0_i32 : i32, i32
  }
  func.func @transform_6(%arg0: i32) -> (i32, i32) {
    %c0_i32 = arith.constant 0 : i32
    %c0_i32_0 = arith.constant 0 : i32
    %c0_i32_1 = arith.constant 0 : i32
    return %c0_i32, %c0_i32_0 : i32, i32
  }
}

module attributes {stable_mosaic.version = 11 : i64} {
  func.func @_bn_relu_kernel(%arg0: i32, %arg1: memref<32x256xf32, #tpu.memory_space<vmem>>, %arg2: memref<2x256xf32, #tpu.memory_space<vmem>>, %arg3: memref<1x256xf32, #tpu.memory_space<vmem>>, %arg4: memref<1x256xf32, #tpu.memory_space<vmem>>, %arg5: memref<32x256xf32, #tpu.memory_space<vmem>>) attributes {dimension_semantics = [#tpu.dimension_semantics<parallel>], iteration_bounds = array<i64: 1>, scalar_prefetch = 0 : i64, scratch_operands = 0 : i64, tpu.core_type = #tpu.core_type<tc>, window_params = [{transform_indices = @transform_0, window_bounds = array<i64: 32, 256>}, {pipeline_mode = #tpu.pipeline_mode<synchronous>, transform_indices = @transform_1, window_bounds = array<i64: 2, 256>}, {pipeline_mode = #tpu.pipeline_mode<synchronous>, transform_indices = @transform_2, window_bounds = array<i64: 1, 256>}, {pipeline_mode = #tpu.pipeline_mode<synchronous>, transform_indices = @transform_3, window_bounds = array<i64: 1, 256>}, {transform_indices = @transform_4, window_bounds = array<i64: 32, 256>}]} {
    %c0 = arith.constant 0 : index
    %c0_0 = arith.constant 0 : index
    %0 = vector.load %arg2[%c0, %c0_0] : memref<2x256xf32, #tpu.memory_space<vmem>>, vector<1x256xf32>
    %cst = arith.constant 3.125000e-02 : f32
    %1 = vector.broadcast %cst : f32 to vector<1x256xf32>
    %2 = arith.mulf %0, %1 : vector<1x256xf32>
    %c1 = arith.constant 1 : index
    %c0_1 = arith.constant 0 : index
    %3 = vector.load %arg2[%c1, %c0_1] : memref<2x256xf32, #tpu.memory_space<vmem>>, vector<1x256xf32>
    %cst_2 = arith.constant 3.125000e-02 : f32
    %4 = vector.broadcast %cst_2 : f32 to vector<1x256xf32>
    %5 = arith.mulf %3, %4 : vector<1x256xf32>
    %6 = arith.mulf %2, %2 : vector<1x256xf32>
    %7 = arith.subf %5, %6 : vector<1x256xf32>
    %c0_3 = arith.constant 0 : index
    %c0_4 = arith.constant 0 : index
    %8 = vector.load %arg1[%c0_3, %c0_4] : memref<32x256xf32, #tpu.memory_space<vmem>>, vector<32x256xf32>
    %9 = vector.broadcast %2 : vector<1x256xf32> to vector<32x256xf32>
    %10 = arith.subf %8, %9 : vector<32x256xf32>
    %cst_5 = arith.constant 9.99999974E-6 : f32
    %11 = vector.broadcast %cst_5 : f32 to vector<1x256xf32>
    %12 = arith.addf %7, %11 : vector<1x256xf32>
    %13 = math.rsqrt %12 : vector<1x256xf32>
    %14 = vector.broadcast %13 : vector<1x256xf32> to vector<32x256xf32>
    %15 = arith.mulf %10, %14 : vector<32x256xf32>
    %c0_6 = arith.constant 0 : index
    %c0_7 = arith.constant 0 : index
    %16 = vector.load %arg3[%c0_6, %c0_7] : memref<1x256xf32, #tpu.memory_space<vmem>>, vector<1x256xf32>
    %17 = vector.broadcast %16 : vector<1x256xf32> to vector<32x256xf32>
    %18 = arith.mulf %15, %17 : vector<32x256xf32>
    %c0_8 = arith.constant 0 : index
    %c0_9 = arith.constant 0 : index
    %19 = vector.load %arg4[%c0_8, %c0_9] : memref<1x256xf32, #tpu.memory_space<vmem>>, vector<1x256xf32>
    %20 = vector.broadcast %19 : vector<1x256xf32> to vector<32x256xf32>
    %21 = arith.addf %18, %20 : vector<32x256xf32>
    %cst_10 = arith.constant 0.000000e+00 : f32
    %22 = vector.broadcast %cst_10 : f32 to vector<32x256xf32>
    %23 = arith.maximumf %21, %22 : vector<32x256xf32>
    %c0_11 = arith.constant 0 : index
    %c0_12 = arith.constant 0 : index
    %24 = vector.load %arg5[%c0_11, %c0_12] : memref<32x256xf32, #tpu.memory_space<vmem>>, vector<32x256xf32>
    tpu.vector_store %arg5[%c0_11, %c0_12], %23 {strides = array<i32>} : memref<32x256xf32, #tpu.memory_space<vmem>>, vector<32x256xf32>,
    return
  }
  func.func @transform_0(%arg0: i32) -> (i32, i32) {
    %c0_i32 = arith.constant 0 : i32
    %c0_i32_0 = arith.constant 0 : i32
    return %arg0, %c0_i32 : i32, i32
  }
  func.func @transform_1(%arg0: i32) -> (i32, i32) {
    %c0_i32 = arith.constant 0 : i32
    %c0_i32_0 = arith.constant 0 : i32
    %c0_i32_1 = arith.constant 0 : i32
    return %c0_i32, %c0_i32_0 : i32, i32
  }
  func.func @transform_2(%arg0: i32) -> (i32, i32) {
    %c0_i32 = arith.constant 0 : i32
    %c0_i32_0 = arith.constant 0 : i32
    %c0_i32_1 = arith.constant 0 : i32
    return %c0_i32, %c0_i32_0 : i32, i32
  }
  func.func @transform_3(%arg0: i32) -> (i32, i32) {
    %c0_i32 = arith.constant 0 : i32
    %c0_i32_0 = arith.constant 0 : i32
    %c0_i32_1 = arith.constant 0 : i32
    return %c0_i32, %c0_i32_0 : i32, i32
  }
  func.func @transform_4(%arg0: i32) -> (i32, i32) {
    %c0_i32 = arith.constant 0 : i32
    %c0_i32_0 = arith.constant 0 : i32
    return %arg0, %c0_i32 : i32, i32
  }
}

module attributes {stable_mosaic.version = 11 : i64} {
  func.func @_first_matmul_stats2_kernel(%arg0: i32, %arg1: memref<64x64xbf16, #tpu.memory_space<vmem>>, %arg2: memref<64x256xbf16, #tpu.memory_space<vmem>>, %arg3: memref<64x256xbf16, #tpu.memory_space<vmem>>, %arg4: memref<256x256xbf16, #tpu.memory_space<vmem>>, %arg5: memref<64x256xf32, #tpu.memory_space<vmem>>, %arg6: memref<2x256xf32, #tpu.memory_space<vmem>>) attributes {dimension_semantics = [#tpu.dimension_semantics<arbitrary>], iteration_bounds = array<i64: 1>, scalar_prefetch = 0 : i64, scratch_operands = 0 : i64, tpu.core_type = #tpu.core_type<tc>, window_params = [{transform_indices = @transform_0, window_bounds = array<i64: 64, 64>}, {transform_indices = @transform_1, window_bounds = array<i64: 64, 256>}, {pipeline_mode = #tpu.pipeline_mode<synchronous>, transform_indices = @transform_2, window_bounds = array<i64: 64, 256>}, {pipeline_mode = #tpu.pipeline_mode<synchronous>, transform_indices = @transform_3, window_bounds = array<i64: 256, 256>}, {transform_indices = @transform_4, window_bounds = array<i64: 64, 256>}, {pipeline_mode = #tpu.pipeline_mode<synchronous>, transform_indices = @transform_5, window_bounds = array<i64: 2, 256>}]} {
    %c0 = arith.constant 0 : index
    %c0_0 = arith.constant 0 : index
    %0 = vector.load %arg1[%c0, %c0_0] : memref<64x64xbf16, #tpu.memory_space<vmem>>, vector<64x64xbf16>
    %c0_1 = arith.constant 0 : index
    %c0_2 = arith.constant 0 : index
    %1 = vector.load %arg3[%c0_1, %c0_2] : memref<64x256xbf16, #tpu.memory_space<vmem>>, vector<64x256xbf16>
    %cst = arith.constant dense<0.000000e+00> : vector<64x256xf32>
    %2 = tpu.matmul %0, %1, %cst {dimension_numbers = #tpu.dot_dimension_numbers<[1], [0], [0], [1], [0, 0, 1, 1], [], []>} : vector<64x64xbf16>, vector<64x256xbf16>, vector<64x256xf32> -> vector<64x256xf32>
    %c0_3 = arith.constant 0 : index
    %c0_4 = arith.constant 0 : index
    %3 = vector.load %arg2[%c0_3, %c0_4] : memref<64x256xbf16, #tpu.memory_space<vmem>>, vector<64x256xbf16>
    %c0_5 = arith.constant 0 : index
    %c0_6 = arith.constant 0 : index
    %4 = vector.load %arg4[%c0_5, %c0_6] : memref<256x256xbf16, #tpu.memory_space<vmem>>, vector<256x256xbf16>
    %cst_7 = arith.constant dense<0.000000e+00> : vector<64x256xf32>
    %5 = tpu.matmul %3, %4, %cst_7 {dimension_numbers = #tpu.dot_dimension_numbers<[1], [0], [0], [1], [0, 0, 1, 1], [], []>} : vector<64x256xbf16>, vector<256x256xbf16>, vector<64x256xf32> -> vector<64x256xf32>
    %6 = arith.addf %2, %5 : vector<64x256xf32>
    %c0_8 = arith.constant 0 : index
    %c0_9 = arith.constant 0 : index
    %7 = vector.load %arg5[%c0_8, %c0_9] : memref<64x256xf32, #tpu.memory_space<vmem>>, vector<64x256xf32>
    tpu.vector_store %arg5[%c0_8, %c0_9], %6 {strides = array<i32>} : memref<64x256xf32, #tpu.memory_space<vmem>>, vector<64x256xf32>,
    %c0_i32 = arith.constant 0 : i32
    %8 = arith.cmpi eq, %arg0, %c0_i32 : i32
    %9 = arith.extui %8 : i1 to i32
    %c0_i32_10 = arith.constant 0 : i32
    %10 = arith.cmpi ne, %9, %c0_i32_10 : i32
    scf.if %10 {
      %cst_20 = arith.constant 0.000000e+00 : f32
      %22 = vector.broadcast %cst_20 : f32 to vector<2x256xf32>
      %c0_21 = arith.constant 0 : index
      %c0_22 = arith.constant 0 : index
      %23 = vector.load %arg6[%c0_21, %c0_22] : memref<2x256xf32, #tpu.memory_space<vmem>>, vector<2x256xf32>
      tpu.vector_store %arg6[%c0_21, %c0_22], %22 {strides = array<i32>} : memref<2x256xf32, #tpu.memory_space<vmem>>, vector<2x256xf32>,
    } else {
    }
    %c0_11 = arith.constant 0 : index
    %c0_12 = arith.constant 0 : index
    %11 = vector.load %arg6[%c0_11, %c0_12] : memref<2x256xf32, #tpu.memory_space<vmem>>, vector<1x256xf32>
    %cst_13 = arith.constant dense<0.000000e+00> : vector<256xf32>
    %12 = vector.multi_reduction <add>, %6, %cst_13 [0] : vector<64x256xf32> to vector<256xf32>
    %13 = vector.shape_cast %12 : vector<256xf32> to vector<1x256xf32>
    %14 = arith.addf %11, %13 : vector<1x256xf32>
    %c0_14 = arith.constant 0 : index
    %c0_15 = arith.constant 0 : index
    %15 = vector.load %arg6[%c0_14, %c0_15] : memref<2x256xf32, #tpu.memory_space<vmem>>, vector<1x256xf32>
    tpu.vector_store %arg6[%c0_14, %c0_15], %14 {strides = array<i32>} : memref<2x256xf32, #tpu.memory_space<vmem>>, vector<1x256xf32>,
    %c1 = arith.constant 1 : index
    %c0_16 = arith.constant 0 : index
    %16 = vector.load %arg6[%c1, %c0_16] : memref<2x256xf32, #tpu.memory_space<vmem>>, vector<1x256xf32>
    %17 = arith.mulf %6, %6 : vector<64x256xf32>
    %cst_17 = arith.constant dense<0.000000e+00> : vector<256xf32>
    %18 = vector.multi_reduction <add>, %17, %cst_17 [0] : vector<64x256xf32> to vector<256xf32>
    %19 = vector.shape_cast %18 : vector<256xf32> to vector<1x256xf32>
    %20 = arith.addf %16, %19 : vector<1x256xf32>
    %c1_18 = arith.constant 1 : index
    %c0_19 = arith.constant 0 : index
    %21 = vector.load %arg6[%c1_18, %c0_19] : memref<2x256xf32, #tpu.memory_space<vmem>>, vector<1x256xf32>
    tpu.vector_store %arg6[%c1_18, %c0_19], %20 {strides = array<i32>} : memref<2x256xf32, #tpu.memory_space<vmem>>, vector<1x256xf32>,
    return
  }
  func.func @transform_0(%arg0: i32) -> (i32, i32) {
    %c0_i32 = arith.constant 0 : i32
    %c0_i32_0 = arith.constant 0 : i32
    return %arg0, %c0_i32 : i32, i32
  }
  func.func @transform_1(%arg0: i32) -> (i32, i32) {
    %c0_i32 = arith.constant 0 : i32
    %c0_i32_0 = arith.constant 0 : i32
    return %arg0, %c0_i32 : i32, i32
  }
  func.func @transform_2(%arg0: i32) -> (i32, i32) {
    %c0_i32 = arith.constant 0 : i32
    %c0_i32_0 = arith.constant 0 : i32
    %c0_i32_1 = arith.constant 0 : i32
    return %c0_i32, %c0_i32_0 : i32, i32
  }
  func.func @transform_3(%arg0: i32) -> (i32, i32) {
    %c0_i32 = arith.constant 0 : i32
    %c0_i32_0 = arith.constant 0 : i32
    %c0_i32_1 = arith.constant 0 : i32
    return %c0_i32, %c0_i32_0 : i32, i32
  }
  func.func @transform_4(%arg0: i32) -> (i32, i32) {
    %c0_i32 = arith.constant 0 : i32
    %c0_i32_0 = arith.constant 0 : i32
    return %arg0, %c0_i32 : i32, i32
  }
  func.func @transform_5(%arg0: i32) -> (i32, i32) {
    %c0_i32 = arith.constant 0 : i32
    %c0_i32_0 = arith.constant 0 : i32
    %c0_i32_1 = arith.constant 0 : i32
    return %c0_i32, %c0_i32_0 : i32, i32
  }
}

module attributes {stable_mosaic.version = 11 : i64} {
  func.func @_three_nn_interp_kernel(%arg0: i32, %arg1: i32, %arg2: memref<1x32x8xf32, #tpu.memory_space<vmem>>, %arg3: memref<1x8x16xf32, #tpu.memory_space<vmem>>, %arg4: memref<1x16x256xbf16, #tpu.memory_space<vmem>>, %arg5: memref<1x32x256xbf16, #tpu.memory_space<vmem>>) attributes {dimension_semantics = [#tpu.dimension_semantics<parallel>, #tpu.dimension_semantics<parallel>], iteration_bounds = array<i64: 2, 1>, scalar_prefetch = 0 : i64, scratch_operands = 0 : i64, tpu.core_type = #tpu.core_type<tc>, window_params = [{transform_indices = @transform_0, window_bounds = array<i64: 1, 32, 8>}, {transform_indices = @transform_1, window_bounds = array<i64: 1, 8, 16>}, {transform_indices = @transform_2, window_bounds = array<i64: 1, 16, 256>}, {transform_indices = @transform_3, window_bounds = array<i64: 1, 32, 256>}]} {
    %c0 = arith.constant 0 : index
    %c0_0 = arith.constant 0 : index
    %c0_1 = arith.constant 0 : index
    %0 = vector.load %arg2[%c0, %c0_0, %c0_1] : memref<1x32x8xf32, #tpu.memory_space<vmem>>, vector<1x32x8xf32>
    %1 = vector.shape_cast %0 : vector<1x32x8xf32> to vector<32x8xf32>
    %c0_2 = arith.constant 0 : index
    %c0_3 = arith.constant 0 : index
    %c0_4 = arith.constant 0 : index
    %2 = vector.load %arg3[%c0_2, %c0_3, %c0_4] : memref<1x8x16xf32, #tpu.memory_space<vmem>>, vector<1x8x16xf32>
    %3 = vector.shape_cast %2 : vector<1x8x16xf32> to vector<8x16xf32>
    %c0_5 = arith.constant 0 : index
    %c0_6 = arith.constant 0 : index
    %c0_7 = arith.constant 0 : index
    %4 = vector.load %arg4[%c0_5, %c0_6, %c0_7] : memref<1x16x256xbf16, #tpu.memory_space<vmem>>, vector<1x16x256xbf16>
    %5 = vector.shape_cast %4 : vector<1x16x256xbf16> to vector<16x256xbf16>
    %6 = arith.mulf %1, %1 : vector<32x8xf32>
    %cst = arith.constant dense<0.000000e+00> : vector<32xf32>
    %7 = vector.multi_reduction <add>, %6, %cst [1] : vector<32x8xf32> to vector<32xf32>
    %8 = vector.shape_cast %7 : vector<32xf32> to vector<32x1xf32>
    %9 = arith.mulf %3, %3 : vector<8x16xf32>
    %cst_8 = arith.constant dense<0.000000e+00> : vector<16xf32>
    %10 = vector.multi_reduction <add>, %9, %cst_8 [0] : vector<8x16xf32> to vector<16xf32>
    %11 = vector.shape_cast %10 : vector<16xf32> to vector<1x16xf32>
    %cst_9 = arith.constant dense<0.000000e+00> : vector<32x16xf32>
    %12 = tpu.matmul %1, %3, %cst_9 {dimension_numbers = #tpu.dot_dimension_numbers<[1], [0], [0], [1], [0, 0, 1, 1], [], []>} : vector<32x8xf32>, vector<8x16xf32>, vector<32x16xf32> -> vector<32x16xf32>
    %13 = vector.broadcast %8 : vector<32x1xf32> to vector<32x16xf32>
    %14 = vector.broadcast %11 : vector<1x16xf32> to vector<32x16xf32>
    %15 = arith.addf %13, %14 : vector<32x16xf32>
    %cst_10 = arith.constant 2.000000e+00 : f32
    %16 = vector.broadcast %cst_10 : f32 to vector<32x16xf32>
    %17 = arith.mulf %16, %12 : vector<32x16xf32>
    %18 = arith.subf %15, %17 : vector<32x16xf32>
    %19 = tpu.iota {dimensions = array<i32: 1>} : vector<32x16xi32>
    %cst_11 = arith.constant 0.000000e+00 : f32
    %20 = vector.broadcast %cst_11 : f32 to vector<32x16xf32>
    %cst_12 = arith.constant 0.000000e+00 : f32
    %21 = vector.broadcast %cst_12 : f32 to vector<32x1xf32>
    %cst_13 = arith.constant dense<0x7F800000> : vector<32xf32>
    %22 = vector.multi_reduction <minimumf>, %18, %cst_13 [1] : vector<32x16xf32> to vector<32xf32>
    %23 = vector.shape_cast %22 : vector<32xf32> to vector<32x1xf32>
    %24 = vector.broadcast %23 : vector<32x1xf32> to vector<32x16xf32>
    %25 = arith.cmpf oeq, %18, %24 : vector<32x16xf32>
    %c16_i32 = arith.constant 16 : i32
    %26 = vector.broadcast %c16_i32 : i32 to vector<32x16xi32>
    %27 = arith.select %25, %19, %26 : vector<32x16xi1>, vector<32x16xi32>
    %cst_14 = arith.constant dense<2147483647> : vector<32xi32>
    %28 = vector.multi_reduction <minsi>, %27, %cst_14 [1] : vector<32x16xi32> to vector<32xi32>
    %29 = vector.shape_cast %28 : vector<32xi32> to vector<32x1xi32>
    %30 = vector.broadcast %29 : vector<32x1xi32> to vector<32x16xi32>
    %31 = arith.cmpi eq, %19, %30 : vector<32x16xi32>
    %cst_15 = arith.constant 9.99999993E-9 : f32
    %32 = vector.broadcast %cst_15 : f32 to vector<32x1xf32>
    %33 = arith.addf %23, %32 : vector<32x1xf32>
    %34 = tpu.reciprocal %33 {approx = true} : vector<32x1xf32> -> vector<32x1xf32>
    %cst_16 = arith.constant 0.000000e+00 : f32
    %35 = vector.shape_cast %34 : vector<32x1xf32> to vector<32x1xf32>
    %36 = vector.broadcast %35 : vector<32x1xf32> to vector<32x16xf32>
    %37 = vector.broadcast %cst_16 : f32 to vector<32x16xf32>
    %38 = arith.select %31, %36, %37 : vector<32x16xi1>, vector<32x16xf32>
    %39 = arith.addf %20, %38 : vector<32x16xf32>
    %40 = arith.addf %21, %34 : vector<32x1xf32>
    %cst_17 = arith.constant 0x7F800000 : f32
    %41 = vector.broadcast %cst_17 : f32 to vector<32x16xf32>
    %42 = arith.select %31, %41, %18 : vector<32x16xi1>, vector<32x16xf32>
    %cst_18 = arith.constant dense<0x7F800000> : vector<32xf32>
    %43 = vector.multi_reduction <minimumf>, %42, %cst_18 [1] : vector<32x16xf32> to vector<32xf32>
    %44 = vector.shape_cast %43 : vector<32xf32> to vector<32x1xf32>
    %45 = vector.broadcast %44 : vector<32x1xf32> to vector<32x16xf32>
    %46 = arith.cmpf oeq, %42, %45 : vector<32x16xf32>
    %c16_i32_19 = arith.constant 16 : i32
    %47 = vector.broadcast %c16_i32_19 : i32 to vector<32x16xi32>
    %48 = arith.select %46, %19, %47 : vector<32x16xi1>, vector<32x16xi32>
    %cst_20 = arith.constant dense<2147483647> : vector<32xi32>
    %49 = vector.multi_reduction <minsi>, %48, %cst_20 [1] : vector<32x16xi32> to vector<32xi32>
    %50 = vector.shape_cast %49 : vector<32xi32> to vector<32x1xi32>
    %51 = vector.broadcast %50 : vector<32x1xi32> to vector<32x16xi32>
    %52 = arith.cmpi eq, %19, %51 : vector<32x16xi32>
    %cst_21 = arith.constant 9.99999993E-9 : f32
    %53 = vector.broadcast %cst_21 : f32 to vector<32x1xf32>
    %54 = arith.addf %44, %53 : vector<32x1xf32>
    %55 = tpu.reciprocal %54 {approx = true} : vector<32x1xf32> -> vector<32x1xf32>
    %cst_22 = arith.constant 0.000000e+00 : f32
    %56 = vector.shape_cast %55 : vector<32x1xf32> to vector<32x1xf32>
    %57 = vector.broadcast %56 : vector<32x1xf32> to vector<32x16xf32>
    %58 = vector.broadcast %cst_22 : f32 to vector<32x16xf32>
    %59 = arith.select %52, %57, %58 : vector<32x16xi1>, vector<32x16xf32>
    %60 = arith.addf %39, %59 : vector<32x16xf32>
    %61 = arith.addf %40, %55 : vector<32x1xf32>
    %cst_23 = arith.constant 0x7F800000 : f32
    %62 = vector.broadcast %cst_23 : f32 to vector<32x16xf32>
    %63 = arith.select %52, %62, %42 : vector<32x16xi1>, vector<32x16xf32>
    %cst_24 = arith.constant dense<0x7F800000> : vector<32xf32>
    %64 = vector.multi_reduction <minimumf>, %63, %cst_24 [1] : vector<32x16xf32> to vector<32xf32>
    %65 = vector.shape_cast %64 : vector<32xf32> to vector<32x1xf32>
    %66 = vector.broadcast %65 : vector<32x1xf32> to vector<32x16xf32>
    %67 = arith.cmpf oeq, %63, %66 : vector<32x16xf32>
    %c16_i32_25 = arith.constant 16 : i32
    %68 = vector.broadcast %c16_i32_25 : i32 to vector<32x16xi32>
    %69 = arith.select %67, %19, %68 : vector<32x16xi1>, vector<32x16xi32>
    %cst_26 = arith.constant dense<2147483647> : vector<32xi32>
    %70 = vector.multi_reduction <minsi>, %69, %cst_26 [1] : vector<32x16xi32> to vector<32xi32>
    %71 = vector.shape_cast %70 : vector<32xi32> to vector<32x1xi32>
    %72 = vector.broadcast %71 : vector<32x1xi32> to vector<32x16xi32>
    %73 = arith.cmpi eq, %19, %72 : vector<32x16xi32>
    %cst_27 = arith.constant 9.99999993E-9 : f32
    %74 = vector.broadcast %cst_27 : f32 to vector<32x1xf32>
    %75 = arith.addf %65, %74 : vector<32x1xf32>
    %76 = tpu.reciprocal %75 {approx = true} : vector<32x1xf32> -> vector<32x1xf32>
    %cst_28 = arith.constant 0.000000e+00 : f32
    %77 = vector.shape_cast %76 : vector<32x1xf32> to vector<32x1xf32>
    %78 = vector.broadcast %77 : vector<32x1xf32> to vector<32x16xf32>
    %79 = vector.broadcast %cst_28 : f32 to vector<32x16xf32>
    %80 = arith.select %73, %78, %79 : vector<32x16xi1>, vector<32x16xf32>
    %81 = arith.addf %60, %80 : vector<32x16xf32>
    %82 = arith.addf %61, %76 : vector<32x1xf32>
    %83 = arith.truncf %81 : vector<32x16xf32> to vector<32x16xbf16>
    %cst_29 = arith.constant dense<0.000000e+00> : vector<32x256xf32>
    %84 = tpu.matmul %83, %5, %cst_29 {dimension_numbers = #tpu.dot_dimension_numbers<[1], [0], [0], [1], [0, 0, 1, 1], [], []>} : vector<32x16xbf16>, vector<16x256xbf16>, vector<32x256xf32> -> vector<32x256xf32>
    %85 = tpu.reciprocal %82 {approx = true} : vector<32x1xf32> -> vector<32x1xf32>
    %86 = vector.broadcast %85 : vector<32x1xf32> to vector<32x256xf32>
    %87 = arith.mulf %84, %86 : vector<32x256xf32>
    %88 = arith.truncf %87 : vector<32x256xf32> to vector<32x256xbf16>
    %c0_30 = arith.constant 0 : index
    %c0_31 = arith.constant 0 : index
    %c0_32 = arith.constant 0 : index
    %89 = vector.load %arg5[%c0_30, %c0_31, %c0_32] : memref<1x32x256xbf16, #tpu.memory_space<vmem>>, vector<1x32x256xbf16>
    %90 = vector.shape_cast %89 : vector<1x32x256xbf16> to vector<32x256xbf16>
    %91 = vector.shape_cast %88 : vector<32x256xbf16> to vector<1x32x256xbf16>
    tpu.vector_store %arg5[%c0_30, %c0_31, %c0_32], %91 {strides = array<i32>} : memref<1x32x256xbf16, #tpu.memory_space<vmem>>, vector<1x32x256xbf16>,
    return
  }
  func.func @transform_0(%arg0: i32, %arg1: i32) -> (i32, i32, i32) {
    %c0_i32 = arith.constant 0 : i32
    %c0_i32_0 = arith.constant 0 : i32
    return %arg0, %arg1, %c0_i32 : i32, i32, i32
  }
  func.func @transform_1(%arg0: i32, %arg1: i32) -> (i32, i32, i32) {
    %c0_i32 = arith.constant 0 : i32
    %c0_i32_0 = arith.constant 0 : i32
    %c0_i32_1 = arith.constant 0 : i32
    return %arg0, %c0_i32, %c0_i32_0 : i32, i32, i32
  }
  func.func @transform_2(%arg0: i32, %arg1: i32) -> (i32, i32, i32) {
    %c0_i32 = arith.constant 0 : i32
    %c0_i32_0 = arith.constant 0 : i32
    %c0_i32_1 = arith.constant 0 : i32
    return %arg0, %c0_i32, %c0_i32_0 : i32, i32, i32
  }
  func.func @transform_3(%arg0: i32, %arg1: i32) -> (i32, i32, i32) {
    %c0_i32 = arith.constant 0 : i32
    %c0_i32_0 = arith.constant 0 : i32
    return %arg0, %arg1, %c0_i32 : i32, i32, i32
  }
}

module attributes {stable_mosaic.version = 11 : i64} {
  func.func @_bn_relu_matmul_stats_kernel(%arg0: i32, %arg1: memref<64x256xf32, #tpu.memory_space<vmem>>, %arg2: memref<2x256xf32, #tpu.memory_space<vmem>>, %arg3: memref<1x256xf32, #tpu.memory_space<vmem>>, %arg4: memref<1x256xf32, #tpu.memory_space<vmem>>, %arg5: memref<256x128xbf16, #tpu.memory_space<vmem>>, %arg6: memref<64x128xf32, #tpu.memory_space<vmem>>, %arg7: memref<2x128xf32, #tpu.memory_space<vmem>>) attributes {dimension_semantics = [#tpu.dimension_semantics<arbitrary>], iteration_bounds = array<i64: 1>, scalar_prefetch = 0 : i64, scratch_operands = 0 : i64, tpu.core_type = #tpu.core_type<tc>, window_params = [{transform_indices = @transform_0, window_bounds = array<i64: 64, 256>}, {pipeline_mode = #tpu.pipeline_mode<synchronous>, transform_indices = @transform_1, window_bounds = array<i64: 2, 256>}, {pipeline_mode = #tpu.pipeline_mode<synchronous>, transform_indices = @transform_2, window_bounds = array<i64: 1, 256>}, {pipeline_mode = #tpu.pipeline_mode<synchronous>, transform_indices = @transform_3, window_bounds = array<i64: 1, 256>}, {pipeline_mode = #tpu.pipeline_mode<synchronous>, transform_indices = @transform_4, window_bounds = array<i64: 256, 128>}, {transform_indices = @transform_5, window_bounds = array<i64: 64, 128>}, {pipeline_mode = #tpu.pipeline_mode<synchronous>, transform_indices = @transform_6, window_bounds = array<i64: 2, 128>}]} {
    %c0 = arith.constant 0 : index
    %c0_0 = arith.constant 0 : index
    %0 = vector.load %arg2[%c0, %c0_0] : memref<2x256xf32, #tpu.memory_space<vmem>>, vector<1x256xf32>
    %cst = arith.constant 1.562500e-02 : f32
    %1 = vector.broadcast %cst : f32 to vector<1x256xf32>
    %2 = arith.mulf %0, %1 : vector<1x256xf32>
    %c1 = arith.constant 1 : index
    %c0_1 = arith.constant 0 : index
    %3 = vector.load %arg2[%c1, %c0_1] : memref<2x256xf32, #tpu.memory_space<vmem>>, vector<1x256xf32>
    %cst_2 = arith.constant 1.562500e-02 : f32
    %4 = vector.broadcast %cst_2 : f32 to vector<1x256xf32>
    %5 = arith.mulf %3, %4 : vector<1x256xf32>
    %6 = arith.mulf %2, %2 : vector<1x256xf32>
    %7 = arith.subf %5, %6 : vector<1x256xf32>
    %c0_3 = arith.constant 0 : index
    %c0_4 = arith.constant 0 : index
    %8 = vector.load %arg1[%c0_3, %c0_4] : memref<64x256xf32, #tpu.memory_space<vmem>>, vector<64x256xf32>
    %9 = vector.broadcast %2 : vector<1x256xf32> to vector<64x256xf32>
    %10 = arith.subf %8, %9 : vector<64x256xf32>
    %cst_5 = arith.constant 9.99999974E-6 : f32
    %11 = vector.broadcast %cst_5 : f32 to vector<1x256xf32>
    %12 = arith.addf %7, %11 : vector<1x256xf32>
    %13 = math.rsqrt %12 : vector<1x256xf32>
    %14 = vector.broadcast %13 : vector<1x256xf32> to vector<64x256xf32>
    %15 = arith.mulf %10, %14 : vector<64x256xf32>
    %c0_6 = arith.constant 0 : index
    %c0_7 = arith.constant 0 : index
    %16 = vector.load %arg3[%c0_6, %c0_7] : memref<1x256xf32, #tpu.memory_space<vmem>>, vector<1x256xf32>
    %17 = vector.broadcast %16 : vector<1x256xf32> to vector<64x256xf32>
    %18 = arith.mulf %15, %17 : vector<64x256xf32>
    %c0_8 = arith.constant 0 : index
    %c0_9 = arith.constant 0 : index
    %19 = vector.load %arg4[%c0_8, %c0_9] : memref<1x256xf32, #tpu.memory_space<vmem>>, vector<1x256xf32>
    %20 = vector.broadcast %19 : vector<1x256xf32> to vector<64x256xf32>
    %21 = arith.addf %18, %20 : vector<64x256xf32>
    %cst_10 = arith.constant 0.000000e+00 : f32
    %22 = vector.broadcast %cst_10 : f32 to vector<64x256xf32>
    %23 = arith.maximumf %21, %22 : vector<64x256xf32>
    %24 = arith.truncf %23 : vector<64x256xf32> to vector<64x256xbf16>
    %c0_11 = arith.constant 0 : index
    %c0_12 = arith.constant 0 : index
    %25 = vector.load %arg5[%c0_11, %c0_12] : memref<256x128xbf16, #tpu.memory_space<vmem>>, vector<256x128xbf16>
    %cst_13 = arith.constant dense<0.000000e+00> : vector<64x128xf32>
    %26 = tpu.matmul %24, %25, %cst_13 {dimension_numbers = #tpu.dot_dimension_numbers<[1], [0], [0], [1], [0, 0, 1, 1], [], []>} : vector<64x256xbf16>, vector<256x128xbf16>, vector<64x128xf32> -> vector<64x128xf32>
    %c0_14 = arith.constant 0 : index
    %c0_15 = arith.constant 0 : index
    %27 = vector.load %arg6[%c0_14, %c0_15] : memref<64x128xf32, #tpu.memory_space<vmem>>, vector<64x128xf32>
    tpu.vector_store %arg6[%c0_14, %c0_15], %26 {strides = array<i32>} : memref<64x128xf32, #tpu.memory_space<vmem>>, vector<64x128xf32>,
    %c0_i32 = arith.constant 0 : i32
    %28 = arith.cmpi eq, %arg0, %c0_i32 : i32
    %29 = arith.extui %28 : i1 to i32
    %c0_i32_16 = arith.constant 0 : i32
    %30 = arith.cmpi ne, %29, %c0_i32_16 : i32
    scf.if %30 {
      %cst_27 = arith.constant 0.000000e+00 : f32
      %42 = vector.broadcast %cst_27 : f32 to vector<2x128xf32>
      %c0_28 = arith.constant 0 : index
      %c0_29 = arith.constant 0 : index
      %43 = vector.load %arg7[%c0_28, %c0_29] : memref<2x128xf32, #tpu.memory_space<vmem>>, vector<2x128xf32>
      tpu.vector_store %arg7[%c0_28, %c0_29], %42 {strides = array<i32>} : memref<2x128xf32, #tpu.memory_space<vmem>>, vector<2x128xf32>,
    } else {
    }
    %c0_17 = arith.constant 0 : index
    %c0_18 = arith.constant 0 : index
    %31 = vector.load %arg7[%c0_17, %c0_18] : memref<2x128xf32, #tpu.memory_space<vmem>>, vector<1x128xf32>
    %cst_19 = arith.constant dense<0.000000e+00> : vector<128xf32>
    %32 = vector.multi_reduction <add>, %26, %cst_19 [0] : vector<64x128xf32> to vector<128xf32>
    %33 = vector.shape_cast %32 : vector<128xf32> to vector<1x128xf32>
    %34 = arith.addf %31, %33 : vector<1x128xf32>
    %c0_20 = arith.constant 0 : index
    %c0_21 = arith.constant 0 : index
    %35 = vector.load %arg7[%c0_20, %c0_21] : memref<2x128xf32, #tpu.memory_space<vmem>>, vector<1x128xf32>
    tpu.vector_store %arg7[%c0_20, %c0_21], %34 {strides = array<i32>} : memref<2x128xf32, #tpu.memory_space<vmem>>, vector<1x128xf32>,
    %c1_22 = arith.constant 1 : index
    %c0_23 = arith.constant 0 : index
    %36 = vector.load %arg7[%c1_22, %c0_23] : memref<2x128xf32, #tpu.memory_space<vmem>>, vector<1x128xf32>
    %37 = arith.mulf %26, %26 : vector<64x128xf32>
    %cst_24 = arith.constant dense<0.000000e+00> : vector<128xf32>
    %38 = vector.multi_reduction <add>, %37, %cst_24 [0] : vector<64x128xf32> to vector<128xf32>
    %39 = vector.shape_cast %38 : vector<128xf32> to vector<1x128xf32>
    %40 = arith.addf %36, %39 : vector<1x128xf32>
    %c1_25 = arith.constant 1 : index
    %c0_26 = arith.constant 0 : index
    %41 = vector.load %arg7[%c1_25, %c0_26] : memref<2x128xf32, #tpu.memory_space<vmem>>, vector<1x128xf32>
    tpu.vector_store %arg7[%c1_25, %c0_26], %40 {strides = array<i32>} : memref<2x128xf32, #tpu.memory_space<vmem>>, vector<1x128xf32>,
    return
  }
  func.func @transform_0(%arg0: i32) -> (i32, i32) {
    %c0_i32 = arith.constant 0 : i32
    %c0_i32_0 = arith.constant 0 : i32
    return %arg0, %c0_i32 : i32, i32
  }
  func.func @transform_1(%arg0: i32) -> (i32, i32) {
    %c0_i32 = arith.constant 0 : i32
    %c0_i32_0 = arith.constant 0 : i32
    %c0_i32_1 = arith.constant 0 : i32
    return %c0_i32, %c0_i32_0 : i32, i32
  }
  func.func @transform_2(%arg0: i32) -> (i32, i32) {
    %c0_i32 = arith.constant 0 : i32
    %c0_i32_0 = arith.constant 0 : i32
    %c0_i32_1 = arith.constant 0 : i32
    return %c0_i32, %c0_i32_0 : i32, i32
  }
  func.func @transform_3(%arg0: i32) -> (i32, i32) {
    %c0_i32 = arith.constant 0 : i32
    %c0_i32_0 = arith.constant 0 : i32
    %c0_i32_1 = arith.constant 0 : i32
    return %c0_i32, %c0_i32_0 : i32, i32
  }
  func.func @transform_4(%arg0: i32) -> (i32, i32) {
    %c0_i32 = arith.constant 0 : i32
    %c0_i32_0 = arith.constant 0 : i32
    %c0_i32_1 = arith.constant 0 : i32
    return %c0_i32, %c0_i32_0 : i32, i32
  }
  func.func @transform_5(%arg0: i32) -> (i32, i32) {
    %c0_i32 = arith.constant 0 : i32
    %c0_i32_0 = arith.constant 0 : i32
    return %arg0, %c0_i32 : i32, i32
  }
  func.func @transform_6(%arg0: i32) -> (i32, i32) {
    %c0_i32 = arith.constant 0 : i32
    %c0_i32_0 = arith.constant 0 : i32
    %c0_i32_1 = arith.constant 0 : i32
    return %c0_i32, %c0_i32_0 : i32, i32
  }
}

module attributes {stable_mosaic.version = 11 : i64} {
  func.func @_bn_relu_kernel(%arg0: i32, %arg1: memref<64x128xf32, #tpu.memory_space<vmem>>, %arg2: memref<2x128xf32, #tpu.memory_space<vmem>>, %arg3: memref<1x128xf32, #tpu.memory_space<vmem>>, %arg4: memref<1x128xf32, #tpu.memory_space<vmem>>, %arg5: memref<64x128xf32, #tpu.memory_space<vmem>>) attributes {dimension_semantics = [#tpu.dimension_semantics<parallel>], iteration_bounds = array<i64: 1>, scalar_prefetch = 0 : i64, scratch_operands = 0 : i64, tpu.core_type = #tpu.core_type<tc>, window_params = [{transform_indices = @transform_0, window_bounds = array<i64: 64, 128>}, {pipeline_mode = #tpu.pipeline_mode<synchronous>, transform_indices = @transform_1, window_bounds = array<i64: 2, 128>}, {pipeline_mode = #tpu.pipeline_mode<synchronous>, transform_indices = @transform_2, window_bounds = array<i64: 1, 128>}, {pipeline_mode = #tpu.pipeline_mode<synchronous>, transform_indices = @transform_3, window_bounds = array<i64: 1, 128>}, {transform_indices = @transform_4, window_bounds = array<i64: 64, 128>}]} {
    %c0 = arith.constant 0 : index
    %c0_0 = arith.constant 0 : index
    %0 = vector.load %arg2[%c0, %c0_0] : memref<2x128xf32, #tpu.memory_space<vmem>>, vector<1x128xf32>
    %cst = arith.constant 1.562500e-02 : f32
    %1 = vector.broadcast %cst : f32 to vector<1x128xf32>
    %2 = arith.mulf %0, %1 : vector<1x128xf32>
    %c1 = arith.constant 1 : index
    %c0_1 = arith.constant 0 : index
    %3 = vector.load %arg2[%c1, %c0_1] : memref<2x128xf32, #tpu.memory_space<vmem>>, vector<1x128xf32>
    %cst_2 = arith.constant 1.562500e-02 : f32
    %4 = vector.broadcast %cst_2 : f32 to vector<1x128xf32>
    %5 = arith.mulf %3, %4 : vector<1x128xf32>
    %6 = arith.mulf %2, %2 : vector<1x128xf32>
    %7 = arith.subf %5, %6 : vector<1x128xf32>
    %c0_3 = arith.constant 0 : index
    %c0_4 = arith.constant 0 : index
    %8 = vector.load %arg1[%c0_3, %c0_4] : memref<64x128xf32, #tpu.memory_space<vmem>>, vector<64x128xf32>
    %9 = vector.broadcast %2 : vector<1x128xf32> to vector<64x128xf32>
    %10 = arith.subf %8, %9 : vector<64x128xf32>
    %cst_5 = arith.constant 9.99999974E-6 : f32
    %11 = vector.broadcast %cst_5 : f32 to vector<1x128xf32>
    %12 = arith.addf %7, %11 : vector<1x128xf32>
    %13 = math.rsqrt %12 : vector<1x128xf32>
    %14 = vector.broadcast %13 : vector<1x128xf32> to vector<64x128xf32>
    %15 = arith.mulf %10, %14 : vector<64x128xf32>
    %c0_6 = arith.constant 0 : index
    %c0_7 = arith.constant 0 : index
    %16 = vector.load %arg3[%c0_6, %c0_7] : memref<1x128xf32, #tpu.memory_space<vmem>>, vector<1x128xf32>
    %17 = vector.broadcast %16 : vector<1x128xf32> to vector<64x128xf32>
    %18 = arith.mulf %15, %17 : vector<64x128xf32>
    %c0_8 = arith.constant 0 : index
    %c0_9 = arith.constant 0 : index
    %19 = vector.load %arg4[%c0_8, %c0_9] : memref<1x128xf32, #tpu.memory_space<vmem>>, vector<1x128xf32>
    %20 = vector.broadcast %19 : vector<1x128xf32> to vector<64x128xf32>
    %21 = arith.addf %18, %20 : vector<64x128xf32>
    %cst_10 = arith.constant 0.000000e+00 : f32
    %22 = vector.broadcast %cst_10 : f32 to vector<64x128xf32>
    %23 = arith.maximumf %21, %22 : vector<64x128xf32>
    %c0_11 = arith.constant 0 : index
    %c0_12 = arith.constant 0 : index
    %24 = vector.load %arg5[%c0_11, %c0_12] : memref<64x128xf32, #tpu.memory_space<vmem>>, vector<64x128xf32>
    tpu.vector_store %arg5[%c0_11, %c0_12], %23 {strides = array<i32>} : memref<64x128xf32, #tpu.memory_space<vmem>>, vector<64x128xf32>,
    return
  }
  func.func @transform_0(%arg0: i32) -> (i32, i32) {
    %c0_i32 = arith.constant 0 : i32
    %c0_i32_0 = arith.constant 0 : i32
    return %arg0, %c0_i32 : i32, i32
  }
  func.func @transform_1(%arg0: i32) -> (i32, i32) {
    %c0_i32 = arith.constant 0 : i32
    %c0_i32_0 = arith.constant 0 : i32
    %c0_i32_1 = arith.constant 0 : i32
    return %c0_i32, %c0_i32_0 : i32, i32
  }
  func.func @transform_2(%arg0: i32) -> (i32, i32) {
    %c0_i32 = arith.constant 0 : i32
    %c0_i32_0 = arith.constant 0 : i32
    %c0_i32_1 = arith.constant 0 : i32
    return %c0_i32, %c0_i32_0 : i32, i32
  }
  func.func @transform_3(%arg0: i32) -> (i32, i32) {
    %c0_i32 = arith.constant 0 : i32
    %c0_i32_0 = arith.constant 0 : i32
    %c0_i32_1 = arith.constant 0 : i32
    return %c0_i32, %c0_i32_0 : i32, i32
  }
  func.func @transform_4(%arg0: i32) -> (i32, i32) {
    %c0_i32 = arith.constant 0 : i32
    %c0_i32_0 = arith.constant 0 : i32
    return %arg0, %c0_i32 : i32, i32
  }
}

module attributes {stable_mosaic.version = 11 : i64} {
  func.func @_first_matmul_stats1_kernel(%arg0: i32, %arg1: memref<128x128xbf16, #tpu.memory_space<vmem>>, %arg2: memref<128x128xbf16, #tpu.memory_space<vmem>>, %arg3: memref<128x128xf32, #tpu.memory_space<vmem>>, %arg4: memref<2x128xf32, #tpu.memory_space<vmem>>) attributes {dimension_semantics = [#tpu.dimension_semantics<arbitrary>], iteration_bounds = array<i64: 1>, scalar_prefetch = 0 : i64, scratch_operands = 0 : i64, tpu.core_type = #tpu.core_type<tc>, window_params = [{transform_indices = @transform_0, window_bounds = array<i64: 128, 128>}, {pipeline_mode = #tpu.pipeline_mode<synchronous>, transform_indices = @transform_1, window_bounds = array<i64: 128, 128>}, {transform_indices = @transform_2, window_bounds = array<i64: 128, 128>}, {pipeline_mode = #tpu.pipeline_mode<synchronous>, transform_indices = @transform_3, window_bounds = array<i64: 2, 128>}]} {
    %c0 = arith.constant 0 : index
    %c0_0 = arith.constant 0 : index
    %0 = vector.load %arg1[%c0, %c0_0] : memref<128x128xbf16, #tpu.memory_space<vmem>>, vector<128x128xbf16>
    %c0_1 = arith.constant 0 : index
    %c0_2 = arith.constant 0 : index
    %1 = vector.load %arg2[%c0_1, %c0_2] : memref<128x128xbf16, #tpu.memory_space<vmem>>, vector<128x128xbf16>
    %cst = arith.constant dense<0.000000e+00> : vector<128x128xf32>
    %2 = tpu.matmul %0, %1, %cst {dimension_numbers = #tpu.dot_dimension_numbers<[1], [0], [0], [1], [0, 0, 1, 1], [], []>} : vector<128x128xbf16>, vector<128x128xbf16>, vector<128x128xf32> -> vector<128x128xf32>
    %c0_3 = arith.constant 0 : index
    %c0_4 = arith.constant 0 : index
    %3 = vector.load %arg3[%c0_3, %c0_4] : memref<128x128xf32, #tpu.memory_space<vmem>>, vector<128x128xf32>
    tpu.vector_store %arg3[%c0_3, %c0_4], %2 {strides = array<i32>} : memref<128x128xf32, #tpu.memory_space<vmem>>, vector<128x128xf32>,
    %c0_i32 = arith.constant 0 : i32
    %4 = arith.cmpi eq, %arg0, %c0_i32 : i32
    %5 = arith.extui %4 : i1 to i32
    %c0_i32_5 = arith.constant 0 : i32
    %6 = arith.cmpi ne, %5, %c0_i32_5 : i32
    scf.if %6 {
      %cst_15 = arith.constant 0.000000e+00 : f32
      %18 = vector.broadcast %cst_15 : f32 to vector<2x128xf32>
      %c0_16 = arith.constant 0 : index
      %c0_17 = arith.constant 0 : index
      %19 = vector.load %arg4[%c0_16, %c0_17] : memref<2x128xf32, #tpu.memory_space<vmem>>, vector<2x128xf32>
      tpu.vector_store %arg4[%c0_16, %c0_17], %18 {strides = array<i32>} : memref<2x128xf32, #tpu.memory_space<vmem>>, vector<2x128xf32>,
    } else {
    }
    %c0_6 = arith.constant 0 : index
    %c0_7 = arith.constant 0 : index
    %7 = vector.load %arg4[%c0_6, %c0_7] : memref<2x128xf32, #tpu.memory_space<vmem>>, vector<1x128xf32>
    %cst_8 = arith.constant dense<0.000000e+00> : vector<128xf32>
    %8 = vector.multi_reduction <add>, %2, %cst_8 [0] : vector<128x128xf32> to vector<128xf32>
    %9 = vector.shape_cast %8 : vector<128xf32> to vector<1x128xf32>
    %10 = arith.addf %7, %9 : vector<1x128xf32>
    %c0_9 = arith.constant 0 : index
    %c0_10 = arith.constant 0 : index
    %11 = vector.load %arg4[%c0_9, %c0_10] : memref<2x128xf32, #tpu.memory_space<vmem>>, vector<1x128xf32>
    tpu.vector_store %arg4[%c0_9, %c0_10], %10 {strides = array<i32>} : memref<2x128xf32, #tpu.memory_space<vmem>>, vector<1x128xf32>,
    %c1 = arith.constant 1 : index
    %c0_11 = arith.constant 0 : index
    %12 = vector.load %arg4[%c1, %c0_11] : memref<2x128xf32, #tpu.memory_space<vmem>>, vector<1x128xf32>
    %13 = arith.mulf %2, %2 : vector<128x128xf32>
    %cst_12 = arith.constant dense<0.000000e+00> : vector<128xf32>
    %14 = vector.multi_reduction <add>, %13, %cst_12 [0] : vector<128x128xf32> to vector<128xf32>
    %15 = vector.shape_cast %14 : vector<128xf32> to vector<1x128xf32>
    %16 = arith.addf %12, %15 : vector<1x128xf32>
    %c1_13 = arith.constant 1 : index
    %c0_14 = arith.constant 0 : index
    %17 = vector.load %arg4[%c1_13, %c0_14] : memref<2x128xf32, #tpu.memory_space<vmem>>, vector<1x128xf32>
    tpu.vector_store %arg4[%c1_13, %c0_14], %16 {strides = array<i32>} : memref<2x128xf32, #tpu.memory_space<vmem>>, vector<1x128xf32>,
    return
  }
  func.func @transform_0(%arg0: i32) -> (i32, i32) {
    %c0_i32 = arith.constant 0 : i32
    %c0_i32_0 = arith.constant 0 : i32
    return %arg0, %c0_i32 : i32, i32
  }
  func.func @transform_1(%arg0: i32) -> (i32, i32) {
    %c0_i32 = arith.constant 0 : i32
    %c0_i32_0 = arith.constant 0 : i32
    %c0_i32_1 = arith.constant 0 : i32
    return %c0_i32, %c0_i32_0 : i32, i32
  }
  func.func @transform_2(%arg0: i32) -> (i32, i32) {
    %c0_i32 = arith.constant 0 : i32
    %c0_i32_0 = arith.constant 0 : i32
    return %arg0, %c0_i32 : i32, i32
  }
  func.func @transform_3(%arg0: i32) -> (i32, i32) {
    %c0_i32 = arith.constant 0 : i32
    %c0_i32_0 = arith.constant 0 : i32
    %c0_i32_1 = arith.constant 0 : i32
    return %c0_i32, %c0_i32_0 : i32, i32
  }
}

module attributes {stable_mosaic.version = 11 : i64} {
  func.func @_bn_relu_matmul_stats_kernel(%arg0: i32, %arg1: memref<128x128xf32, #tpu.memory_space<vmem>>, %arg2: memref<2x128xf32, #tpu.memory_space<vmem>>, %arg3: memref<1x128xf32, #tpu.memory_space<vmem>>, %arg4: memref<1x128xf32, #tpu.memory_space<vmem>>, %arg5: memref<128x128xbf16, #tpu.memory_space<vmem>>, %arg6: memref<128x128xf32, #tpu.memory_space<vmem>>, %arg7: memref<2x128xf32, #tpu.memory_space<vmem>>) attributes {dimension_semantics = [#tpu.dimension_semantics<arbitrary>], iteration_bounds = array<i64: 1>, scalar_prefetch = 0 : i64, scratch_operands = 0 : i64, tpu.core_type = #tpu.core_type<tc>, window_params = [{transform_indices = @transform_0, window_bounds = array<i64: 128, 128>}, {pipeline_mode = #tpu.pipeline_mode<synchronous>, transform_indices = @transform_1, window_bounds = array<i64: 2, 128>}, {pipeline_mode = #tpu.pipeline_mode<synchronous>, transform_indices = @transform_2, window_bounds = array<i64: 1, 128>}, {pipeline_mode = #tpu.pipeline_mode<synchronous>, transform_indices = @transform_3, window_bounds = array<i64: 1, 128>}, {pipeline_mode = #tpu.pipeline_mode<synchronous>, transform_indices = @transform_4, window_bounds = array<i64: 128, 128>}, {transform_indices = @transform_5, window_bounds = array<i64: 128, 128>}, {pipeline_mode = #tpu.pipeline_mode<synchronous>, transform_indices = @transform_6, window_bounds = array<i64: 2, 128>}]} {
    %c0 = arith.constant 0 : index
    %c0_0 = arith.constant 0 : index
    %0 = vector.load %arg2[%c0, %c0_0] : memref<2x128xf32, #tpu.memory_space<vmem>>, vector<1x128xf32>
    %cst = arith.constant 7.812500e-03 : f32
    %1 = vector.broadcast %cst : f32 to vector<1x128xf32>
    %2 = arith.mulf %0, %1 : vector<1x128xf32>
    %c1 = arith.constant 1 : index
    %c0_1 = arith.constant 0 : index
    %3 = vector.load %arg2[%c1, %c0_1] : memref<2x128xf32, #tpu.memory_space<vmem>>, vector<1x128xf32>
    %cst_2 = arith.constant 7.812500e-03 : f32
    %4 = vector.broadcast %cst_2 : f32 to vector<1x128xf32>
    %5 = arith.mulf %3, %4 : vector<1x128xf32>
    %6 = arith.mulf %2, %2 : vector<1x128xf32>
    %7 = arith.subf %5, %6 : vector<1x128xf32>
    %c0_3 = arith.constant 0 : index
    %c0_4 = arith.constant 0 : index
    %8 = vector.load %arg1[%c0_3, %c0_4] : memref<128x128xf32, #tpu.memory_space<vmem>>, vector<128x128xf32>
    %9 = vector.broadcast %2 : vector<1x128xf32> to vector<128x128xf32>
    %10 = arith.subf %8, %9 : vector<128x128xf32>
    %cst_5 = arith.constant 9.99999974E-6 : f32
    %11 = vector.broadcast %cst_5 : f32 to vector<1x128xf32>
    %12 = arith.addf %7, %11 : vector<1x128xf32>
    %13 = math.rsqrt %12 : vector<1x128xf32>
    %14 = vector.broadcast %13 : vector<1x128xf32> to vector<128x128xf32>
    %15 = arith.mulf %10, %14 : vector<128x128xf32>
    %c0_6 = arith.constant 0 : index
    %c0_7 = arith.constant 0 : index
    %16 = vector.load %arg3[%c0_6, %c0_7] : memref<1x128xf32, #tpu.memory_space<vmem>>, vector<1x128xf32>
    %17 = vector.broadcast %16 : vector<1x128xf32> to vector<128x128xf32>
    %18 = arith.mulf %15, %17 : vector<128x128xf32>
    %c0_8 = arith.constant 0 : index
    %c0_9 = arith.constant 0 : index
    %19 = vector.load %arg4[%c0_8, %c0_9] : memref<1x128xf32, #tpu.memory_space<vmem>>, vector<1x128xf32>
    %20 = vector.broadcast %19 : vector<1x128xf32> to vector<128x128xf32>
    %21 = arith.addf %18, %20 : vector<128x128xf32>
    %cst_10 = arith.constant 0.000000e+00 : f32
    %22 = vector.broadcast %cst_10 : f32 to vector<128x128xf32>
    %23 = arith.maximumf %21, %22 : vector<128x128xf32>
    %24 = arith.truncf %23 : vector<128x128xf32> to vector<128x128xbf16>
    %c0_11 = arith.constant 0 : index
    %c0_12 = arith.constant 0 : index
    %25 = vector.load %arg5[%c0_11, %c0_12] : memref<128x128xbf16, #tpu.memory_space<vmem>>, vector<128x128xbf16>
    %cst_13 = arith.constant dense<0.000000e+00> : vector<128x128xf32>
    %26 = tpu.matmul %24, %25, %cst_13 {dimension_numbers = #tpu.dot_dimension_numbers<[1], [0], [0], [1], [0, 0, 1, 1], [], []>} : vector<128x128xbf16>, vector<128x128xbf16>, vector<128x128xf32> -> vector<128x128xf32>
    %c0_14 = arith.constant 0 : index
    %c0_15 = arith.constant 0 : index
    %27 = vector.load %arg6[%c0_14, %c0_15] : memref<128x128xf32, #tpu.memory_space<vmem>>, vector<128x128xf32>
    tpu.vector_store %arg6[%c0_14, %c0_15], %26 {strides = array<i32>} : memref<128x128xf32, #tpu.memory_space<vmem>>, vector<128x128xf32>,
    %c0_i32 = arith.constant 0 : i32
    %28 = arith.cmpi eq, %arg0, %c0_i32 : i32
    %29 = arith.extui %28 : i1 to i32
    %c0_i32_16 = arith.constant 0 : i32
    %30 = arith.cmpi ne, %29, %c0_i32_16 : i32
    scf.if %30 {
      %cst_27 = arith.constant 0.000000e+00 : f32
      %42 = vector.broadcast %cst_27 : f32 to vector<2x128xf32>
      %c0_28 = arith.constant 0 : index
      %c0_29 = arith.constant 0 : index
      %43 = vector.load %arg7[%c0_28, %c0_29] : memref<2x128xf32, #tpu.memory_space<vmem>>, vector<2x128xf32>
      tpu.vector_store %arg7[%c0_28, %c0_29], %42 {strides = array<i32>} : memref<2x128xf32, #tpu.memory_space<vmem>>, vector<2x128xf32>,
    } else {
    }
    %c0_17 = arith.constant 0 : index
    %c0_18 = arith.constant 0 : index
    %31 = vector.load %arg7[%c0_17, %c0_18] : memref<2x128xf32, #tpu.memory_space<vmem>>, vector<1x128xf32>
    %cst_19 = arith.constant dense<0.000000e+00> : vector<128xf32>
    %32 = vector.multi_reduction <add>, %26, %cst_19 [0] : vector<128x128xf32> to vector<128xf32>
    %33 = vector.shape_cast %32 : vector<128xf32> to vector<1x128xf32>
    %34 = arith.addf %31, %33 : vector<1x128xf32>
    %c0_20 = arith.constant 0 : index
    %c0_21 = arith.constant 0 : index
    %35 = vector.load %arg7[%c0_20, %c0_21] : memref<2x128xf32, #tpu.memory_space<vmem>>, vector<1x128xf32>
    tpu.vector_store %arg7[%c0_20, %c0_21], %34 {strides = array<i32>} : memref<2x128xf32, #tpu.memory_space<vmem>>, vector<1x128xf32>,
    %c1_22 = arith.constant 1 : index
    %c0_23 = arith.constant 0 : index
    %36 = vector.load %arg7[%c1_22, %c0_23] : memref<2x128xf32, #tpu.memory_space<vmem>>, vector<1x128xf32>
    %37 = arith.mulf %26, %26 : vector<128x128xf32>
    %cst_24 = arith.constant dense<0.000000e+00> : vector<128xf32>
    %38 = vector.multi_reduction <add>, %37, %cst_24 [0] : vector<128x128xf32> to vector<128xf32>
    %39 = vector.shape_cast %38 : vector<128xf32> to vector<1x128xf32>
    %40 = arith.addf %36, %39 : vector<1x128xf32>
    %c1_25 = arith.constant 1 : index
    %c0_26 = arith.constant 0 : index
    %41 = vector.load %arg7[%c1_25, %c0_26] : memref<2x128xf32, #tpu.memory_space<vmem>>, vector<1x128xf32>
    tpu.vector_store %arg7[%c1_25, %c0_26], %40 {strides = array<i32>} : memref<2x128xf32, #tpu.memory_space<vmem>>, vector<1x128xf32>,
    return
  }
  func.func @transform_0(%arg0: i32) -> (i32, i32) {
    %c0_i32 = arith.constant 0 : i32
    %c0_i32_0 = arith.constant 0 : i32
    return %arg0, %c0_i32 : i32, i32
  }
  func.func @transform_1(%arg0: i32) -> (i32, i32) {
    %c0_i32 = arith.constant 0 : i32
    %c0_i32_0 = arith.constant 0 : i32
    %c0_i32_1 = arith.constant 0 : i32
    return %c0_i32, %c0_i32_0 : i32, i32
  }
  func.func @transform_2(%arg0: i32) -> (i32, i32) {
    %c0_i32 = arith.constant 0 : i32
    %c0_i32_0 = arith.constant 0 : i32
    %c0_i32_1 = arith.constant 0 : i32
    return %c0_i32, %c0_i32_0 : i32, i32
  }
  func.func @transform_3(%arg0: i32) -> (i32, i32) {
    %c0_i32 = arith.constant 0 : i32
    %c0_i32_0 = arith.constant 0 : i32
    %c0_i32_1 = arith.constant 0 : i32
    return %c0_i32, %c0_i32_0 : i32, i32
  }
  func.func @transform_4(%arg0: i32) -> (i32, i32) {
    %c0_i32 = arith.constant 0 : i32
    %c0_i32_0 = arith.constant 0 : i32
    %c0_i32_1 = arith.constant 0 : i32
    return %c0_i32, %c0_i32_0 : i32, i32
  }
  func.func @transform_5(%arg0: i32) -> (i32, i32) {
    %c0_i32 = arith.constant 0 : i32
    %c0_i32_0 = arith.constant 0 : i32
    return %arg0, %c0_i32 : i32, i32
  }
  func.func @transform_6(%arg0: i32) -> (i32, i32) {
    %c0_i32 = arith.constant 0 : i32
    %c0_i32_0 = arith.constant 0 : i32
    %c0_i32_1 = arith.constant 0 : i32
    return %c0_i32, %c0_i32_0 : i32, i32
  }
}

module attributes {stable_mosaic.version = 11 : i64} {
  func.func @_bn_relu_kernel(%arg0: i32, %arg1: memref<128x128xf32, #tpu.memory_space<vmem>>, %arg2: memref<2x128xf32, #tpu.memory_space<vmem>>, %arg3: memref<1x128xf32, #tpu.memory_space<vmem>>, %arg4: memref<1x128xf32, #tpu.memory_space<vmem>>, %arg5: memref<128x128xf32, #tpu.memory_space<vmem>>) attributes {dimension_semantics = [#tpu.dimension_semantics<parallel>], iteration_bounds = array<i64: 1>, scalar_prefetch = 0 : i64, scratch_operands = 0 : i64, tpu.core_type = #tpu.core_type<tc>, window_params = [{transform_indices = @transform_0, window_bounds = array<i64: 128, 128>}, {pipeline_mode = #tpu.pipeline_mode<synchronous>, transform_indices = @transform_1, window_bounds = array<i64: 2, 128>}, {pipeline_mode = #tpu.pipeline_mode<synchronous>, transform_indices = @transform_2, window_bounds = array<i64: 1, 128>}, {pipeline_mode = #tpu.pipeline_mode<synchronous>, transform_indices = @transform_3, window_bounds = array<i64: 1, 128>}, {transform_indices = @transform_4, window_bounds = array<i64: 128, 128>}]} {
    %c0 = arith.constant 0 : index
    %c0_0 = arith.constant 0 : index
    %0 = vector.load %arg2[%c0, %c0_0] : memref<2x128xf32, #tpu.memory_space<vmem>>, vector<1x128xf32>
    %cst = arith.constant 7.812500e-03 : f32
    %1 = vector.broadcast %cst : f32 to vector<1x128xf32>
    %2 = arith.mulf %0, %1 : vector<1x128xf32>
    %c1 = arith.constant 1 : index
    %c0_1 = arith.constant 0 : index
    %3 = vector.load %arg2[%c1, %c0_1] : memref<2x128xf32, #tpu.memory_space<vmem>>, vector<1x128xf32>
    %cst_2 = arith.constant 7.812500e-03 : f32
    %4 = vector.broadcast %cst_2 : f32 to vector<1x128xf32>
    %5 = arith.mulf %3, %4 : vector<1x128xf32>
    %6 = arith.mulf %2, %2 : vector<1x128xf32>
    %7 = arith.subf %5, %6 : vector<1x128xf32>
    %c0_3 = arith.constant 0 : index
    %c0_4 = arith.constant 0 : index
    %8 = vector.load %arg1[%c0_3, %c0_4] : memref<128x128xf32, #tpu.memory_space<vmem>>, vector<128x128xf32>
    %9 = vector.broadcast %2 : vector<1x128xf32> to vector<128x128xf32>
    %10 = arith.subf %8, %9 : vector<128x128xf32>
    %cst_5 = arith.constant 9.99999974E-6 : f32
    %11 = vector.broadcast %cst_5 : f32 to vector<1x128xf32>
    %12 = arith.addf %7, %11 : vector<1x128xf32>
    %13 = math.rsqrt %12 : vector<1x128xf32>
    %14 = vector.broadcast %13 : vector<1x128xf32> to vector<128x128xf32>
    %15 = arith.mulf %10, %14 : vector<128x128xf32>
    %c0_6 = arith.constant 0 : index
    %c0_7 = arith.constant 0 : index
    %16 = vector.load %arg3[%c0_6, %c0_7] : memref<1x128xf32, #tpu.memory_space<vmem>>, vector<1x128xf32>
    %17 = vector.broadcast %16 : vector<1x128xf32> to vector<128x128xf32>
    %18 = arith.mulf %15, %17 : vector<128x128xf32>
    %c0_8 = arith.constant 0 : index
    %c0_9 = arith.constant 0 : index
    %19 = vector.load %arg4[%c0_8, %c0_9] : memref<1x128xf32, #tpu.memory_space<vmem>>, vector<1x128xf32>
    %20 = vector.broadcast %19 : vector<1x128xf32> to vector<128x128xf32>
    %21 = arith.addf %18, %20 : vector<128x128xf32>
    %cst_10 = arith.constant 0.000000e+00 : f32
    %22 = vector.broadcast %cst_10 : f32 to vector<128x128xf32>
    %23 = arith.maximumf %21, %22 : vector<128x128xf32>
    %c0_11 = arith.constant 0 : index
    %c0_12 = arith.constant 0 : index
    %24 = vector.load %arg5[%c0_11, %c0_12] : memref<128x128xf32, #tpu.memory_space<vmem>>, vector<128x128xf32>
    tpu.vector_store %arg5[%c0_11, %c0_12], %23 {strides = array<i32>} : memref<128x128xf32, #tpu.memory_space<vmem>>, vector<128x128xf32>,
    return
  }
  func.func @transform_0(%arg0: i32) -> (i32, i32) {
    %c0_i32 = arith.constant 0 : i32
    %c0_i32_0 = arith.constant 0 : i32
    return %arg0, %c0_i32 : i32, i32
  }
  func.func @transform_1(%arg0: i32) -> (i32, i32) {
    %c0_i32 = arith.constant 0 : i32
    %c0_i32_0 = arith.constant 0 : i32
    %c0_i32_1 = arith.constant 0 : i32
    return %c0_i32, %c0_i32_0 : i32, i32
  }
  func.func @transform_2(%arg0: i32) -> (i32, i32) {
    %c0_i32 = arith.constant 0 : i32
    %c0_i32_0 = arith.constant 0 : i32
    %c0_i32_1 = arith.constant 0 : i32
    return %c0_i32, %c0_i32_0 : i32, i32
  }
  func.func @transform_3(%arg0: i32) -> (i32, i32) {
    %c0_i32 = arith.constant 0 : i32
    %c0_i32_0 = arith.constant 0 : i32
    %c0_i32_1 = arith.constant 0 : i32
    return %c0_i32, %c0_i32_0 : i32, i32
  }
  func.func @transform_4(%arg0: i32) -> (i32, i32) {
    %c0_i32 = arith.constant 0 : i32
    %c0_i32_0 = arith.constant 0 : i32
    return %arg0, %c0_i32 : i32, i32
  }
}

module attributes {stable_mosaic.version = 11 : i64} {
  func.func @_three_nn_interp_kernel(%arg0: i32, %arg1: i32, %arg2: memref<1x64x8xf32, #tpu.memory_space<vmem>>, %arg3: memref<1x8x32xf32, #tpu.memory_space<vmem>>, %arg4: memref<1x32x128xbf16, #tpu.memory_space<vmem>>, %arg5: memref<1x64x128xbf16, #tpu.memory_space<vmem>>) attributes {dimension_semantics = [#tpu.dimension_semantics<parallel>, #tpu.dimension_semantics<parallel>], iteration_bounds = array<i64: 2, 1>, scalar_prefetch = 0 : i64, scratch_operands = 0 : i64, tpu.core_type = #tpu.core_type<tc>, window_params = [{transform_indices = @transform_0, window_bounds = array<i64: 1, 64, 8>}, {transform_indices = @transform_1, window_bounds = array<i64: 1, 8, 32>}, {transform_indices = @transform_2, window_bounds = array<i64: 1, 32, 128>}, {transform_indices = @transform_3, window_bounds = array<i64: 1, 64, 128>}]} {
    %c0 = arith.constant 0 : index
    %c0_0 = arith.constant 0 : index
    %c0_1 = arith.constant 0 : index
    %0 = vector.load %arg2[%c0, %c0_0, %c0_1] : memref<1x64x8xf32, #tpu.memory_space<vmem>>, vector<1x64x8xf32>
    %1 = vector.shape_cast %0 : vector<1x64x8xf32> to vector<64x8xf32>
    %c0_2 = arith.constant 0 : index
    %c0_3 = arith.constant 0 : index
    %c0_4 = arith.constant 0 : index
    %2 = vector.load %arg3[%c0_2, %c0_3, %c0_4] : memref<1x8x32xf32, #tpu.memory_space<vmem>>, vector<1x8x32xf32>
    %3 = vector.shape_cast %2 : vector<1x8x32xf32> to vector<8x32xf32>
    %c0_5 = arith.constant 0 : index
    %c0_6 = arith.constant 0 : index
    %c0_7 = arith.constant 0 : index
    %4 = vector.load %arg4[%c0_5, %c0_6, %c0_7] : memref<1x32x128xbf16, #tpu.memory_space<vmem>>, vector<1x32x128xbf16>
    %5 = vector.shape_cast %4 : vector<1x32x128xbf16> to vector<32x128xbf16>
    %6 = arith.mulf %1, %1 : vector<64x8xf32>
    %cst = arith.constant dense<0.000000e+00> : vector<64xf32>
    %7 = vector.multi_reduction <add>, %6, %cst [1] : vector<64x8xf32> to vector<64xf32>
    %8 = vector.shape_cast %7 : vector<64xf32> to vector<64x1xf32>
    %9 = arith.mulf %3, %3 : vector<8x32xf32>
    %cst_8 = arith.constant dense<0.000000e+00> : vector<32xf32>
    %10 = vector.multi_reduction <add>, %9, %cst_8 [0] : vector<8x32xf32> to vector<32xf32>
    %11 = vector.shape_cast %10 : vector<32xf32> to vector<1x32xf32>
    %cst_9 = arith.constant dense<0.000000e+00> : vector<64x32xf32>
    %12 = tpu.matmul %1, %3, %cst_9 {dimension_numbers = #tpu.dot_dimension_numbers<[1], [0], [0], [1], [0, 0, 1, 1], [], []>} : vector<64x8xf32>, vector<8x32xf32>, vector<64x32xf32> -> vector<64x32xf32>
    %13 = vector.broadcast %8 : vector<64x1xf32> to vector<64x32xf32>
    %14 = vector.broadcast %11 : vector<1x32xf32> to vector<64x32xf32>
    %15 = arith.addf %13, %14 : vector<64x32xf32>
    %cst_10 = arith.constant 2.000000e+00 : f32
    %16 = vector.broadcast %cst_10 : f32 to vector<64x32xf32>
    %17 = arith.mulf %16, %12 : vector<64x32xf32>
    %18 = arith.subf %15, %17 : vector<64x32xf32>
    %19 = tpu.iota {dimensions = array<i32: 1>} : vector<64x32xi32>
    %cst_11 = arith.constant 0.000000e+00 : f32
    %20 = vector.broadcast %cst_11 : f32 to vector<64x32xf32>
    %cst_12 = arith.constant 0.000000e+00 : f32
    %21 = vector.broadcast %cst_12 : f32 to vector<64x1xf32>
    %cst_13 = arith.constant dense<0x7F800000> : vector<64xf32>
    %22 = vector.multi_reduction <minimumf>, %18, %cst_13 [1] : vector<64x32xf32> to vector<64xf32>
    %23 = vector.shape_cast %22 : vector<64xf32> to vector<64x1xf32>
    %24 = vector.broadcast %23 : vector<64x1xf32> to vector<64x32xf32>
    %25 = arith.cmpf oeq, %18, %24 : vector<64x32xf32>
    %c32_i32 = arith.constant 32 : i32
    %26 = vector.broadcast %c32_i32 : i32 to vector<64x32xi32>
    %27 = arith.select %25, %19, %26 : vector<64x32xi1>, vector<64x32xi32>
    %cst_14 = arith.constant dense<2147483647> : vector<64xi32>
    %28 = vector.multi_reduction <minsi>, %27, %cst_14 [1] : vector<64x32xi32> to vector<64xi32>
    %29 = vector.shape_cast %28 : vector<64xi32> to vector<64x1xi32>
    %30 = vector.broadcast %29 : vector<64x1xi32> to vector<64x32xi32>
    %31 = arith.cmpi eq, %19, %30 : vector<64x32xi32>
    %cst_15 = arith.constant 9.99999993E-9 : f32
    %32 = vector.broadcast %cst_15 : f32 to vector<64x1xf32>
    %33 = arith.addf %23, %32 : vector<64x1xf32>
    %34 = tpu.reciprocal %33 {approx = true} : vector<64x1xf32> -> vector<64x1xf32>
    %cst_16 = arith.constant 0.000000e+00 : f32
    %35 = vector.shape_cast %34 : vector<64x1xf32> to vector<64x1xf32>
    %36 = vector.broadcast %35 : vector<64x1xf32> to vector<64x32xf32>
    %37 = vector.broadcast %cst_16 : f32 to vector<64x32xf32>
    %38 = arith.select %31, %36, %37 : vector<64x32xi1>, vector<64x32xf32>
    %39 = arith.addf %20, %38 : vector<64x32xf32>
    %40 = arith.addf %21, %34 : vector<64x1xf32>
    %cst_17 = arith.constant 0x7F800000 : f32
    %41 = vector.broadcast %cst_17 : f32 to vector<64x32xf32>
    %42 = arith.select %31, %41, %18 : vector<64x32xi1>, vector<64x32xf32>
    %cst_18 = arith.constant dense<0x7F800000> : vector<64xf32>
    %43 = vector.multi_reduction <minimumf>, %42, %cst_18 [1] : vector<64x32xf32> to vector<64xf32>
    %44 = vector.shape_cast %43 : vector<64xf32> to vector<64x1xf32>
    %45 = vector.broadcast %44 : vector<64x1xf32> to vector<64x32xf32>
    %46 = arith.cmpf oeq, %42, %45 : vector<64x32xf32>
    %c32_i32_19 = arith.constant 32 : i32
    %47 = vector.broadcast %c32_i32_19 : i32 to vector<64x32xi32>
    %48 = arith.select %46, %19, %47 : vector<64x32xi1>, vector<64x32xi32>
    %cst_20 = arith.constant dense<2147483647> : vector<64xi32>
    %49 = vector.multi_reduction <minsi>, %48, %cst_20 [1] : vector<64x32xi32> to vector<64xi32>
    %50 = vector.shape_cast %49 : vector<64xi32> to vector<64x1xi32>
    %51 = vector.broadcast %50 : vector<64x1xi32> to vector<64x32xi32>
    %52 = arith.cmpi eq, %19, %51 : vector<64x32xi32>
    %cst_21 = arith.constant 9.99999993E-9 : f32
    %53 = vector.broadcast %cst_21 : f32 to vector<64x1xf32>
    %54 = arith.addf %44, %53 : vector<64x1xf32>
    %55 = tpu.reciprocal %54 {approx = true} : vector<64x1xf32> -> vector<64x1xf32>
    %cst_22 = arith.constant 0.000000e+00 : f32
    %56 = vector.shape_cast %55 : vector<64x1xf32> to vector<64x1xf32>
    %57 = vector.broadcast %56 : vector<64x1xf32> to vector<64x32xf32>
    %58 = vector.broadcast %cst_22 : f32 to vector<64x32xf32>
    %59 = arith.select %52, %57, %58 : vector<64x32xi1>, vector<64x32xf32>
    %60 = arith.addf %39, %59 : vector<64x32xf32>
    %61 = arith.addf %40, %55 : vector<64x1xf32>
    %cst_23 = arith.constant 0x7F800000 : f32
    %62 = vector.broadcast %cst_23 : f32 to vector<64x32xf32>
    %63 = arith.select %52, %62, %42 : vector<64x32xi1>, vector<64x32xf32>
    %cst_24 = arith.constant dense<0x7F800000> : vector<64xf32>
    %64 = vector.multi_reduction <minimumf>, %63, %cst_24 [1] : vector<64x32xf32> to vector<64xf32>
    %65 = vector.shape_cast %64 : vector<64xf32> to vector<64x1xf32>
    %66 = vector.broadcast %65 : vector<64x1xf32> to vector<64x32xf32>
    %67 = arith.cmpf oeq, %63, %66 : vector<64x32xf32>
    %c32_i32_25 = arith.constant 32 : i32
    %68 = vector.broadcast %c32_i32_25 : i32 to vector<64x32xi32>
    %69 = arith.select %67, %19, %68 : vector<64x32xi1>, vector<64x32xi32>
    %cst_26 = arith.constant dense<2147483647> : vector<64xi32>
    %70 = vector.multi_reduction <minsi>, %69, %cst_26 [1] : vector<64x32xi32> to vector<64xi32>
    %71 = vector.shape_cast %70 : vector<64xi32> to vector<64x1xi32>
    %72 = vector.broadcast %71 : vector<64x1xi32> to vector<64x32xi32>
    %73 = arith.cmpi eq, %19, %72 : vector<64x32xi32>
    %cst_27 = arith.constant 9.99999993E-9 : f32
    %74 = vector.broadcast %cst_27 : f32 to vector<64x1xf32>
    %75 = arith.addf %65, %74 : vector<64x1xf32>
    %76 = tpu.reciprocal %75 {approx = true} : vector<64x1xf32> -> vector<64x1xf32>
    %cst_28 = arith.constant 0.000000e+00 : f32
    %77 = vector.shape_cast %76 : vector<64x1xf32> to vector<64x1xf32>
    %78 = vector.broadcast %77 : vector<64x1xf32> to vector<64x32xf32>
    %79 = vector.broadcast %cst_28 : f32 to vector<64x32xf32>
    %80 = arith.select %73, %78, %79 : vector<64x32xi1>, vector<64x32xf32>
    %81 = arith.addf %60, %80 : vector<64x32xf32>
    %82 = arith.addf %61, %76 : vector<64x1xf32>
    %83 = arith.truncf %81 : vector<64x32xf32> to vector<64x32xbf16>
    %cst_29 = arith.constant dense<0.000000e+00> : vector<64x128xf32>
    %84 = tpu.matmul %83, %5, %cst_29 {dimension_numbers = #tpu.dot_dimension_numbers<[1], [0], [0], [1], [0, 0, 1, 1], [], []>} : vector<64x32xbf16>, vector<32x128xbf16>, vector<64x128xf32> -> vector<64x128xf32>
    %85 = tpu.reciprocal %82 {approx = true} : vector<64x1xf32> -> vector<64x1xf32>
    %86 = vector.broadcast %85 : vector<64x1xf32> to vector<64x128xf32>
    %87 = arith.mulf %84, %86 : vector<64x128xf32>
    %88 = arith.truncf %87 : vector<64x128xf32> to vector<64x128xbf16>
    %c0_30 = arith.constant 0 : index
    %c0_31 = arith.constant 0 : index
    %c0_32 = arith.constant 0 : index
    %89 = vector.load %arg5[%c0_30, %c0_31, %c0_32] : memref<1x64x128xbf16, #tpu.memory_space<vmem>>, vector<1x64x128xbf16>
    %90 = vector.shape_cast %89 : vector<1x64x128xbf16> to vector<64x128xbf16>
    %91 = vector.shape_cast %88 : vector<64x128xbf16> to vector<1x64x128xbf16>
    tpu.vector_store %arg5[%c0_30, %c0_31, %c0_32], %91 {strides = array<i32>} : memref<1x64x128xbf16, #tpu.memory_space<vmem>>, vector<1x64x128xbf16>,
    return
  }
  func.func @transform_0(%arg0: i32, %arg1: i32) -> (i32, i32, i32) {
    %c0_i32 = arith.constant 0 : i32
    %c0_i32_0 = arith.constant 0 : i32
    return %arg0, %arg1, %c0_i32 : i32, i32, i32
  }
  func.func @transform_1(%arg0: i32, %arg1: i32) -> (i32, i32, i32) {
    %c0_i32 = arith.constant 0 : i32
    %c0_i32_0 = arith.constant 0 : i32
    %c0_i32_1 = arith.constant 0 : i32
    return %arg0, %c0_i32, %c0_i32_0 : i32, i32, i32
  }
  func.func @transform_2(%arg0: i32, %arg1: i32) -> (i32, i32, i32) {
    %c0_i32 = arith.constant 0 : i32
    %c0_i32_0 = arith.constant 0 : i32
    %c0_i32_1 = arith.constant 0 : i32
    return %arg0, %c0_i32, %c0_i32_0 : i32, i32, i32
  }
  func.func @transform_3(%arg0: i32, %arg1: i32) -> (i32, i32, i32) {
    %c0_i32 = arith.constant 0 : i32
    %c0_i32_0 = arith.constant 0 : i32
    return %arg0, %arg1, %c0_i32 : i32, i32, i32
  }
}

</mosaic_0001>

<llo_original>
// kernel: pointnet2_decoder_without_cls_head.20
$region0: #{pointnet2_decoder_without_cls_head.20}
  #allocation0 [shape = 'u32[]', space=smem, size = 0x4, offset = 0x4, fixed_abs, tag = 'smem constant byte address 0x4 - core index']
  #allocation1 [shape = 'u32[144,128]{1,0:T(1,128)}', space=vmem, size = 0x12000, scoped, tag = 'internal scratch']
  %s0 = inlined_call_operand.vmem [shape: f32[16,256], index: 0, kind: input, shape index: {}]
  %s1 = inlined_call_operand.vmem [shape: f32[2,256], index: 1, kind: input, shape index: {}]
  %s2 = inlined_call_operand.vmem [shape: f32[1,256], index: 2, kind: input, shape index: {}]
  %s3 = inlined_call_operand.vmem [shape: f32[1,256], index: 3, kind: input, shape index: {}]
  %s4 = inlined_call_operand.vmem [shape: f32[16,256], index: 4, kind: output, shape index: {}]
  %s5 = sld [smem:[#allocation0]]
  $region26: #{pointnet2_decoder_without_cls_head.20} parent=0
    _
  %s7 = ssub.s32 1, %s5
  %s8 = scalar_select 0, %s7, %s5
  // Predicated region
  $region2: #{pointnet2_decoder_without_cls_head.20} parent=0 // pred_check
    _
  $region3: #{pointnet2_decoder_without_cls_head.20} parent=0 // pred_check_branch
    %10 = sbr.rel (0) target = $region5
  $region4: #{pointnet2_decoder_without_cls_head.20} parent=0 // pred_region
    _
  $region5: #{pointnet2_decoder_without_cls_head.20} parent=0 // pred_fallthru
    _
  // Predicated region
  $region6: #{pointnet2_decoder_without_cls_head.20} parent=0 // pred_check
    _
  $region7: #{pointnet2_decoder_without_cls_head.20} parent=0 // pred_check_branch
    %12 = sbr.rel (0) target = $region9
  $region8: #{pointnet2_decoder_without_cls_head.20} parent=0 // pred_region
    _
  $region9: #{pointnet2_decoder_without_cls_head.20} parent=0 // pred_fallthru
    _
  // Predicated region
  $region10: #{pointnet2_decoder_without_cls_head.20} parent=0 // pred_check
    _
  $region11: #{pointnet2_decoder_without_cls_head.20} parent=0 // pred_check_branch
    %14 = sbr.rel (0) target = $region13
  $region12: #{pointnet2_decoder_without_cls_head.20} parent=0 // pred_region
    _
  $region13: #{pointnet2_decoder_without_cls_head.20} parent=0 // pred_fallthru
    _
  // Predicated region
  $region14: #{pointnet2_decoder_without_cls_head.20} parent=0 // pred_check
    _
  $region15: #{pointnet2_decoder_without_cls_head.20} parent=0 // pred_check_branch
    %16 = sbr.rel (0) target = $region17
  $region16: #{pointnet2_decoder_without_cls_head.20} parent=0 // pred_region
    _
  $region17: #{pointnet2_decoder_without_cls_head.20} parent=0 // pred_fallthru
    _
  %v17 = vld [vmem:[%s1] ss:$2 sm:$0x3]
  %v18 = vmul.f32 %v17, 0.0625
  %s19 = scalar_lea.vmem %s1, 1
  %v20 = vld [vmem:[%s19] ss:$2 sm:$0x3]
  %v21 = vmul.f32 %v20, 0.0625
  %v22 = vmul.f32 %v18, %v18
  %v23 = vsub.f32 %v21, %v22
  %v24 = vld [vmem:[%s0] sm:$0xff]
  %v25 = vld [vmem:[%s0 + $0x8] sm:$0xff]
  %v26 = vld [vmem:[%s0 + $0x10] sm:$0xff]
  %v27 = vld [vmem:[%s0 + $0x18] sm:$0xff]
  %v29 = vlaneseq
  %v30 = vshrl.u32 %v29, 7
  %v31 = vsub.s32 0, %v30
  %v32 = vrot.slane %v18, %v31
  %v33 = vlaneseq
  %v34 = vshrl.u32 %v33, 7
  %v35 = vsub.s32 1, %v34
  %v36 = vrot.slane %v18, %v35
  %v39 = vsub.f32 %v24, %v32
  %v40 = vsub.f32 %v25, %v36
  %v41 = vsub.f32 %v26, %v32
  %v42 = vsub.f32 %v27, %v36
  %v43 = vadd.f32 %v23, 1e-05
  %v44 = vrsqrt.pop %v43
  %v46 = vlaneseq
  %v47 = vshrl.u32 %v46, 7
  %v48 = vsub.s32 0, %v47
  %v49 = vrot.slane %v44, %v48
  %v50 = vlaneseq
  %v51 = vshrl.u32 %v50, 7
  %v52 = vsub.s32 1, %v51
  %v53 = vrot.slane %v44, %v52
  %v56 = vmul.f32 %v39, %v49
  %v57 = vmul.f32 %v40, %v53
  %v58 = vmul.f32 %v41, %v49
  %v59 = vmul.f32 %v42, %v53
  %v60 = vld [vmem:[%s2] sm:$0x3]
  %v62 = vlaneseq
  %v63 = vshrl.u32 %v62, 7
  %v64 = vsub.s32 0, %v63
  %v65 = vrot.slane %v60, %v64
  %v66 = vlaneseq
  %v67 = vshrl.u32 %v66, 7
  %v68 = vsub.s32 1, %v67
  %v69 = vrot.slane %v60, %v68
  %v72 = vmul.f32 %v56, %v65
  %v73 = vmul.f32 %v57, %v69
  %v74 = vmul.f32 %v58, %v65
  %v75 = vmul.f32 %v59, %v69
  %v76 = vld [vmem:[%s3] sm:$0x3]
  %v78 = vlaneseq
  %v79 = vshrl.u32 %v78, 7
  %v80 = vsub.s32 0, %v79
  %v81 = vrot.slane %v76, %v80
  %v82 = vlaneseq
  %v83 = vshrl.u32 %v82, 7
  %v84 = vsub.s32 1, %v83
  %v85 = vrot.slane %v76, %v84
  %v88 = vadd.f32 %v72, %v81
  %v89 = vadd.f32 %v73, %v85
  %v90 = vadd.f32 %v74, %v81
  %v91 = vadd.f32 %v75, %v85
  %v92 = vmax.f32 %v88, 0.0
  %v93 = vmax.f32 %v89, 0.0
  %v94 = vmax.f32 %v90, 0.0
  %v95 = vmax.f32 %v91, 0.0
  %96 = vst [vmem:[%s4] sm:$0xff] %v92
  %97 = vst [vmem:[%s4 + $0x8] sm:$0xff] %v93
  %98 = vst [vmem:[%s4 + $0x10] sm:$0xff] %v94
  %99 = vst [vmem:[%s4 + $0x18] sm:$0xff] %v95
  // Predicated region
  $region18: #{pointnet2_decoder_without_cls_head.20} parent=0 // pred_check
    _
  $region19: #{pointnet2_decoder_without_cls_head.20} parent=0 // pred_check_branch
    %101 = sbr.rel (0) target = $region21
  $region20: #{pointnet2_decoder_without_cls_head.20} parent=0 // pred_region
    _
  $region21: #{pointnet2_decoder_without_cls_head.20} parent=0 // pred_fallthru
    _
  // Predicated region
  $region22: #{pointnet2_decoder_without_cls_head.20} parent=0 // pred_check
    _
  $region23: #{pointnet2_decoder_without_cls_head.20} parent=0 // pred_check_branch
    %103 = sbr.rel (0) target = $region25
  $region24: #{pointnet2_decoder_without_cls_head.20} parent=0 // pred_region
    _
  $region25: #{pointnet2_decoder_without_cls_head.20} parent=0 // pred_fallthru
    _

// kernel: pointnet2_decoder_without_cls_head.17
$region0: #{pointnet2_decoder_without_cls_head.17}
  #allocation0 [shape = 'u32[]', space=smem, size = 0x4, offset = 0x4, fixed_abs, tag = 'smem constant byte address 0x4 - core index']
  #allocation1 [shape = 'u32[144,128]{1,0:T(1,128)}', space=vmem, size = 0x12000, scoped, tag = 'internal scratch']
  %s0 = inlined_call_operand.vmem [shape: f32[2,8,8], index: 0, kind: input, shape index: {}]
  %s1 = inlined_call_operand.vmem [shape: f32[2,8,4], index: 1, kind: input, shape index: {}]
  %s2 = inlined_call_operand.vmem [shape: bf16[2,4,512], index: 2, kind: input, shape index: {}]
  %s3 = inlined_call_operand.vmem [shape: bf16[2,8,512], index: 3, kind: output, shape index: {}]
  %s4 = sld [smem:[#allocation0]]
  $region45: #{pointnet2_decoder_without_cls_head.17} parent=0
    _
  %s6 = ssub.s32 1, %s4
  %s7 = scalar_select 0, %s6, %s4
  loop: start=0, step=1, limit=4
  $region2: #{pointnet2_decoder_without_cls_head.17} parent=0 // loop_pre_header
    _
  $region3: #{pointnet2_decoder_without_cls_head.17} parent=0 // loop_header
    %s9 = sphi 0, %s13
    %p10 = scmp.ge.s32.totalorder %s9, 4
    %s16 = sphi 0, %s28
    %s17 = sphi 0, %s24
    %s18 = sphi 0, %s16
    %s19 = sphi 0, %s17
    %s20 = sphi 0, %s18
    %s21 = sphi 0, %s19
    %s33 = sphi 0, %s35
    %s36 = sphi 0, %s33
    %s37 = sphi 0, %s36
    %s53 = sphi 0, %s37
    %s59 = sphi 0, %s61
    %s62 = sphi 0, %s59
    %s63 = sphi 0, %s62
    %s79 = sphi 0, %s63
    %s85 = sphi 0, %s87
    %s88 = sphi 0, %s85
    %s89 = sphi 0, %s88
    %s105 = sphi 0, %s89
    %s113 = sphi 0, %s115
    %s116 = sphi 0, %s113
    %s117 = sphi 0, %s116
    %s133 = sphi 0, %s117
  $region4: #{pointnet2_decoder_without_cls_head.17} parent=0 // loop_header_branch
    %12 = sbr.rel (%p10) target = $region8
  $region5: #{pointnet2_decoder_without_cls_head.17} parent=0 // loop_body
    %s14 = ssub.s32 %s9, 1
    %s15 = ssub.s32 %s9, 2
    %s22 = sadd.s32 1, %s17
    %p23 = scmp.ge.s32.totalorder %s22, 1
    %s24 = scalar_select %p23, 0, %s22
    %s25 = sadd.s32 1, %s16
    %s26 = scalar_select %p23, %s25, %s16
    %p27 = scmp.ge.s32.totalorder %s26, 2
    %s28 = scalar_select %p27, 0, %s26
    %s29 = ssub.s32 %s16, %s28
    %s30 = ssub.s32 %s17, %s24
    %s31 = sor.u32 %s29, %s30
    %p32 = scmp.eq.s32.totalorder %s31, 0
    %s34 = sadd.s32 %s33, 1
    %s35 = scalar_select %p32, %s33, %s34
    %p38 = pneg %p32
    %p39 = scmp.eq.s32.totalorder %s9, 1
    %p40 = por %p38, %p39
    %p41 = scmp.ne.s32.totalorder %s33, %s36
    %p42 = scmp.eq.s32.totalorder %s9, 0
    %p43 = por %p41, %p42
    %p44 = scmp.ne.s32.totalorder %s33, %s36
    %p45 = scmp.eq.s32.totalorder %s14, 1
    %p46 = por %p44, %p45
    %p47 = scmp.ne.s32.totalorder %s36, %s37
    %p48 = scmp.eq.s32.totalorder %s14, 0
    %p49 = por %p47, %p48
    %p50 = scmp.ne.s32.totalorder %s36, %s37
    %p51 = scmp.eq.s32.totalorder %s15, 1
    %p52 = por %p50, %p51
    %p54 = scmp.ne.s32.totalorder %s37, %s53
    %p55 = scmp.eq.s32.totalorder %s15, 0
    %p56 = por %p54, %p55
    %s57 = ssub.s32 %s16, %s28
    %p58 = scmp.eq.s32.totalorder %s57, 0
    %s60 = sadd.s32 %s59, 1
    %s61 = scalar_select %p58, %s59, %s60
    %p64 = pneg %p58
    %p65 = scmp.eq.s32.totalorder %s9, 1
    %p66 = por %p64, %p65
    %p67 = scmp.ne.s32.totalorder %s59, %s62
    %p68 = scmp.eq.s32.totalorder %s9, 0
    %p69 = por %p67, %p68
    %p70 = scmp.ne.s32.totalorder %s59, %s62
    %p71 = scmp.eq.s32.totalorder %s14, 1
    %p72 = por %p70, %p71
    %p73 = scmp.ne.s32.totalorder %s62, %s63
    %p74 = scmp.eq.s32.totalorder %s14, 0
    %p75 = por %p73, %p74
    %p76 = scmp.ne.s32.totalorder %s62, %s63
    %p77 = scmp.eq.s32.totalorder %s15, 1
    %p78 = por %p76, %p77
    %p80 = scmp.ne.s32.totalorder %s63, %s79
    %p81 = scmp.eq.s32.totalorder %s15, 0
    %p82 = por %p80, %p81
    %s83 = ssub.s32 %s16, %s28
    %p84 = scmp.eq.s32.totalorder %s83, 0
    %s86 = sadd.s32 %s85, 1
    %s87 = scalar_select %p84, %s85, %s86
    %p90 = pneg %p84
    %p91 = scmp.eq.s32.totalorder %s9, 1
    %p92 = por %p90, %p91
    %p93 = scmp.ne.s32.totalorder %s85, %s88
    %p94 = scmp.eq.s32.totalorder %s9, 0
    %p95 = por %p93, %p94
    %p96 = scmp.ne.s32.totalorder %s85, %s88
    %p97 = scmp.eq.s32.totalorder %s14, 1
    %p98 = por %p96, %p97
    %p99 = scmp.ne.s32.totalorder %s88, %s89
    %p100 = scmp.eq.s32.totalorder %s14, 0
    %p101 = por %p99, %p100
    %p102 = scmp.ne.s32.totalorder %s88, %s89
    %p103 = scmp.eq.s32.totalorder %s15, 1
    %p104 = por %p102, %p103
    %p106 = scmp.ne.s32.totalorder %s89, %s105
    %p107 = scmp.eq.s32.totalorder %s15, 0
    %p108 = por %p106, %p107
    %s109 = ssub.s32 %s16, %s28
    %s110 = ssub.s32 %s17, %s24
    %s111 = sor.u32 %s109, %s110
    %p112 = scmp.eq.s32.totalorder %s111, 0
    %s114 = sadd.s32 %s113, 1
    %s115 = scalar_select %p112, %s113, %s114
    %p118 = pneg %p112
    %p119 = scmp.eq.s32.totalorder %s9, 1
    %p120 = por %p118, %p119
    %p121 = scmp.ne.s32.totalorder %s113, %s116
    %p122 = scmp.eq.s32.totalorder %s9, 0
    %p123 = por %p121, %p122
    %p124 = scmp.ne.s32.totalorder %s113, %s116
    %p125 = scmp.eq.s32.totalorder %s14, 1
    %p126 = por %p124, %p125
    %p127 = scmp.ne.s32.totalorder %s116, %s117
    %p128 = scmp.eq.s32.totalorder %s14, 0
    %p129 = por %p127, %p128
    %p130 = scmp.ne.s32.totalorder %s116, %s117
    %p131 = scmp.eq.s32.totalorder %s15, 1
    %p132 = por %p130, %p131
    %p134 = scmp.ne.s32.totalorder %s117, %s133
    %p135 = scmp.eq.s32.totalorder %s15, 0
    %p136 = por %p134, %p135
    %p137 = scmp.le.s32.totalorder 1, %s9
    %p138 = scmp.lt.s32.totalorder %s9, 3
    %p139 = pnand %p137, %p138
    %p140 = pneg %p139
    // Predicated region
    $region9: #{pointnet2_decoder_without_cls_head.17} parent=5 // pred_check
      _
    $region10: #{pointnet2_decoder_without_cls_head.17} parent=5 // pred_check_branch
      %142 = sbr.rel (%p139) target = $region12
    $region11: #{pointnet2_decoder_without_cls_head.17} parent=5 // pred_region
      %s143 = ssub.s32 %s9, 1
    $region12: #{pointnet2_decoder_without_cls_head.17} parent=5 // pred_fallthru
      _
    %p144 = scmp.lt.s32.totalorder %s9, 2
    // Predicated region
    $region13: #{pointnet2_decoder_without_cls_head.17} parent=5 // pred_check
      %p145 = pneg %p144
    $region14: #{pointnet2_decoder_without_cls_head.17} parent=5 // pred_check_branch
      %147 = sbr.rel (%p145) target = $region16
    $region15: #{pointnet2_decoder_without_cls_head.17} parent=5 // pred_region
      // Predicated region
      $region17: #{pointnet2_decoder_without_cls_head.17} parent=15 // pred_check
        %p148 = pneg %p43
      $region18: #{pointnet2_decoder_without_cls_head.17} parent=15 // pred_check_branch
        %150 = sbr.rel (%p148) target = $region20
      $region19: #{pointnet2_decoder_without_cls_head.17} parent=15 // pred_region
        %p151 = scmp.lt.s32.totalorder %s16, 1
        %s152 = scalar_select %p151, %s16, 1
        %p153 = scmp.lt.s32.totalorder %s17, 0
        %s154 = scalar_select %p153, %s17, 0
        %s155 = sadd.s32 %s154, %s152
        %s156 = smul.addr %s155, 8
        %s157 = scalar_lea.vmem %s0, %s156
      $region20: #{pointnet2_decoder_without_cls_head.17} parent=15 // pred_fallthru
        _
      // Predicated region
      $region21: #{pointnet2_decoder_without_cls_head.17} parent=15 // pred_check
        %p158 = pneg %p69
      $region22: #{pointnet2_decoder_without_cls_head.17} parent=15 // pred_check_branch
        %160 = sbr.rel (%p158) target = $region24
      $region23: #{pointnet2_decoder_without_cls_head.17} parent=15 // pred_region
        %p161 = scmp.lt.s32.totalorder %s16, 1
        %s162 = scalar_select %p161, %s16, 1
        %s163 = smul.addr %s162, 8
        %s164 = scalar_lea.vmem %s1, %s163
      $region24: #{pointnet2_decoder_without_cls_head.17} parent=15 // pred_fallthru
        _
      // Predicated region
      $region25: #{pointnet2_decoder_without_cls_head.17} parent=15 // pred_check
        %p165 = pneg %p95
      $region26: #{pointnet2_decoder_without_cls_head.17} parent=15 // pred_check_branch
        %167 = sbr.rel (%p165) target = $region28
      $region27: #{pointnet2_decoder_without_cls_head.17} parent=15 // pred_region
        %p168 = scmp.lt.s32.totalorder %s16, 1
        %s169 = scalar_select %p168, %s16, 1
        %s170 = smul.addr %s169, 4
        %s171 = smul.addr %s170, 2
        %s172 = scalar_lea.vmem %s2, %s171
      $region28: #{pointnet2_decoder_without_cls_head.17} parent=15 // pred_fallthru
        _
    $region16: #{pointnet2_decoder_without_cls_head.17} parent=5 // pred_fallthru
      _
    %p173 = scmp.le.s32.totalorder 1, %s9
    %p174 = scmp.lt.s32.totalorder %s9, 3
    %p175 = pnand %p173, %p174
    %p176 = pneg %p175
    // Predicated region
    $region29: #{pointnet2_decoder_without_cls_head.17} parent=5 // pred_check
      _
    $region30: #{pointnet2_decoder_without_cls_head.17} parent=5 // pred_check_branch
      %178 = sbr.rel (%p175) target = $region32
    $region31: #{pointnet2_decoder_without_cls_head.17} parent=5 // pred_region
      %s179 = ssub.s32 %s9, 1
      %p180 = scmp.lt.s32.totalorder %s18, 1
      %s181 = scalar_select %p180, %s18, 1
      %p182 = scmp.lt.s32.totalorder %s19, 0
      %s183 = scalar_select %p182, %s19, 0
      %s184 = sadd.s32 %s183, %s181
      %s185 = smul.addr %s184, 8
      %s186 = scalar_lea.vmem %s0, %s185
      %p187 = pneg %p49
      %p188 = pneg %p46
      %p189 = scmp.lt.s32.totalorder %s18, 1
      %s190 = scalar_select %p189, %s18, 1
      %s191 = smul.addr %s190, 8
      %s192 = scalar_lea.vmem %s1, %s191
      %p193 = pneg %p75
      %p194 = pneg %p72
      %p195 = scmp.lt.s32.totalorder %s18, 1
      %s196 = scalar_select %p195, %s18, 1
      %s197 = smul.addr %s196, 4
      %s198 = smul.addr %s197, 2
      %s199 = scalar_lea.vmem %s2, %s198
      %p200 = pneg %p101
      %p201 = pneg %p98
      %p202 = pneg %p129
      %p203 = pneg %p126
      %p204 = scmp.lt.s32.totalorder %s18, 1
      %s205 = scalar_select %p204, %s18, 1
      %p206 = scmp.lt.s32.totalorder %s19, 0
      %s207 = scalar_select %p206, %s19, 0
      %s208 = smul.addr %s207, 4
      %s209 = smul.addr %s205, 4
      %s210 = sadd.s32 %s208, %s209
      %s211 = smul.addr %s210, 4
      %s212 = scalar_lea.vmem %s3, %s211
      %p213 = scmp.lt.s32.totalorder %s18, 1
      %s214 = scalar_select %p213, %s18, 1
      %p215 = scmp.lt.s32.totalorder %s19, 0
      %s216 = scalar_select %p215, %s19, 0
      %s217 = sadd.s32 %s216, %s214
      %s218 = smul.addr %s217, 8
      %s219 = scalar_lea.vmem %s0, %s218
      %p220 = scmp.lt.s32.totalorder %s18, 1
      %s221 = scalar_select %p220, %s18, 1
      %s222 = smul.addr %s221, 8
      %s223 = scalar_lea.vmem %s1, %s222
      %p224 = scmp.lt.s32.totalorder %s18, 1
      %s225 = scalar_select %p224, %s18, 1
      %s226 = smul.addr %s225, 4
      %s227 = smul.addr %s226, 2
      %s228 = scalar_lea.vmem %s2, %s227
      %p229 = scmp.lt.s32.totalorder %s18, 1
      %s230 = scalar_select %p229, %s18, 1
      %p231 = scmp.lt.s32.totalorder %s19, 0
      %s232 = scalar_select %p231, %s19, 0
      %s233 = smul.addr %s232, 4
      %s234 = smul.addr %s230, 4
      %s235 = sadd.s32 %s233, %s234
      %s236 = smul.addr %s235, 4
      %s237 = scalar_lea.vmem %s3, %s236
      %v239 = vld [vmem:[%s219] sm:$0xff]
      %v240 = vld [vmem:[%s223] sm:$0xff]
      %v241 = vld [vmem:[%s228] sm:$0xff]
      %v242 = vmul.f32 %v239, %v239
      %vm243 = vcmask 64512
      %v244 = vsel %vm243, %v242, 0.0
      %245 = vadd.xlane.f32.xlu0 %v244
      %v246 = vpop.xlane.xlu0 %245
      %v247 = vmul.f32 %v240, %v240
      %vm248 = vcmask 31744
      %v249 = vsel %vm248, %v247, 0.0
      %v250 = vrot.slane %v249, 4
      %v251 = vadd.f32 %v249, %v250
      %v252 = vrot.slane %v251, 2
      %v253 = vadd.f32 %v251, %v252
      %v254 = vrot.slane %v253, 1
      %v255 = vadd.f32 %v253, %v254
      %v257 = vsel %vm243, %v239, 0
      %259 = vmatprep.subr.mxu0 0.0
      %260 = vmatpush1.msra.mxu0 %v240
      %261 = vmatprep.subr.mxu0 0.0
      %262 = vmatpush1.msra.mxu0 0.0
      %263 = vmatprep.subr.mxu0 0.0
      %264 = vmatpush1.msra.mxu0 0.0
      %265 = vmatprep.subr.mxu0 0.0
      %266 = vmatpush1.msra.mxu0 0.0
      %267 = vmatprep.subr.mxu0 0.0
      %268 = vmatpush1.msra.mxu0 0.0
      %269 = vmatprep.subr.mxu0 0.0
      %270 = vmatpush1.msra.mxu0 0.0
      %271 = vmatprep.subr.mxu0 0.0
      %272 = vmatpush1.msra.mxu0 0.0
      %273 = vmatprep.subr.mxu0 0.0
      %274 = vmatpush1.msra.mxu0 0.0
      %275 = vmatprep.subr.mxu0 0.0
      %276 = vmatpush1.msra.mxu0 0.0
      %277 = vmatprep.subr.mxu0 0.0
      %278 = vmatpush1.msra.mxu0 0.0
      %279 = vmatprep.subr.mxu0 0.0
      %280 = vmatpush1.msra.mxu0 0.0
      %281 = vmatprep.subr.mxu0 0.0
      %282 = vmatpush1.msra.mxu0 0.0
      %283 = vmatprep.subr.mxu0 0.0
      %284 = vmatpush1.msra.mxu0 0.0
      %285 = vmatprep.subr.mxu0 0.0
      %286 = vmatpush1.msra.mxu0 0.0
      %287 = vmatprep.subr.mxu0 0.0
      %288 = vmatpush1.msra.mxu0 0.0
      %289 = vmatprep.subr.mxu0 0.0
      %290 = vmatpush1.msra.mxu0 0.0
      %291 = vmatprep.subr.mxu0 0.0
      %292 = vmatpush1.msra.mxu0 0.0
      %293 = vmatprep.subr.mxu0 0.0
      %294 = vmatpush1.msra.mxu0 0.0
      %295 = vmatprep.subr.mxu0 0.0
      %296 = vmatpush1.msra.mxu0 0.0
      %297 = vmatprep.subr.mxu0 0.0
      %298 = vmatpush1.msra.mxu0 0.0
      %299 = vmatprep.subr.mxu0 0.0
      %300 = vmatpush1.msra.mxu0 0.0
      %301 = vmatprep.subr.mxu0 0.0
      %302 = vmatpush1.msra.mxu0 0.0
      %303 = vmatprep.subr.mxu0 0.0
      %304 = vmatpush1.msra.mxu0 0.0
      %305 = vmatprep.subr.mxu0 0.0
      %306 = vmatpush1.msra.mxu0 0.0
      %307 = vmatprep.subr.mxu0 0.0
      %308 = vmatpush1.msra.mxu0 0.0
      %309 = vmatprep.subr.mxu0 0.0
      %310 = vmatpush1.msra.mxu0 0.0
      %311 = vmatprep.subr.mxu0 0.0
      %312 = vmatpush1.msra.mxu0 0.0
      %313 = vmatprep.subr.mxu0 0.0
      %314 = vmatpush1.msra.mxu0 0.0
      %315 = vmatprep.subr.mxu0 0.0
      %316 = vmatpush1.msra.mxu0 0.0
      %317 = vmatprep.subr.mxu0 0.0
      %318 = vmatpush1.msra.mxu0 0.0
      %319 = vmatprep.subr.mxu0 0.0
      %320 = vmatpush1.msra.mxu0 0.0
      %321 = vmatprep.subr.mxu0 0.0
      %322 = vmatpush1.msra.mxu0 0.0
      %323 = vmatprep.mubr.f32.mxu0 0.0
      %324 = vmatmul.mubr.f32.gmra.mrb[0].mxu0 %v257
      %v325 = vpop.f32.mrb[0].mxu0
      %v326 = vadd.f32 0.0, %v325
      %v327 = vpop.f32.mrb[0].mxu0
      %328 = vdwg.mxu0
      %v329 = vadd.f32 %v246, %v255
      %v330 = vmul.f32 %v326, 2.0
      %v331 = vsub.f32 %v329, %v330
      %v332 = vlaneseq
      %v333 = vand.u32 %v332, 127
      %v334 = vsel %vm248, %v331, inf
      %335 = vmin.xlane.f32.xlu0 %v334
      %v336 = vpop.xlane.xlu0 %335
      %vm337 = vcmp.eq.f32.partialorder %v331, %v336
      %v338 = vsel %vm337, %v333, 4
      %v339 = vsel %vm248, %v338, 2147483647
      %v340 = vand.u32 %v339, 65535
      %v341 = vshra.s32 %v339, 16
      %v342 = vcvt.s32.f32 %v340
      %v343 = vcvt.s32.f32 %v341
      %344 = vmin.xlane.f32.xlu0 %v343
      %v345 = vpop.xlane.xlu0 %344
      %vm346 = vcmp.eq.f32.partialorder %v343, %v345
      %v347 = vsel %vm346, %v342, inf
      %348 = vmin.xlane.f32.xlu0 %v347
      %v349 = vpop.xlane.xlu0 %348
      %v350 = vcvt.f32.s32 %v349
      %v351 = vcvt.f32.s32 %v345
      %v352 = vshll.u32 %v351, 16
      %v353 = vadd.s32 %v352, %v350
      %vm354 = vcmp.eq.s32.totalorder %v333, %v353
      %v355 = vadd.f32 %v336, 1e-08
      %v356 = vrcp.pop %v355
      %v357 = vsel %vm354, %v356, 0.0
      %v358 = vadd.f32 %v357, 0.0
      %v359 = vadd.f32 %v356, 0.0
      %v360 = vsel %vm354, inf, %v331
      %v361 = vsel %vm248, %v360, inf
      %362 = vmin.xlane.f32.xlu0 %v361
      %v363 = vpop.xlane.xlu0 %362
      %vm364 = vcmp.eq.f32.partialorder %v360, %v363
      %v365 = vsel %vm364, %v333, 4
      %v366 = vsel %vm248, %v365, 2147483647
      %v367 = vand.u32 %v366, 65535
      %v368 = vshra.s32 %v366, 16
      %v369 = vcvt.s32.f32 %v367
      %v370 = vcvt.s32.f32 %v368
      %371 = vmin.xlane.f32.xlu0 %v370
      %v372 = vpop.xlane.xlu0 %371
      %vm373 = vcmp.eq.f32.partialorder %v370, %v372
      %v374 = vsel %vm373, %v369, inf
      %375 = vmin.xlane.f32.xlu0 %v374
      %v376 = vpop.xlane.xlu0 %375
      %v377 = vcvt.f32.s32 %v376
      %v378 = vcvt.f32.s32 %v372
      %v379 = vshll.u32 %v378, 16
      %v380 = vadd.s32 %v379, %v377
      %vm381 = vcmp.eq.s32.totalorder %v333, %v380
      %v382 = vadd.f32 %v363, 1e-08
      %v383 = vrcp.pop %v382
      %v384 = vsel %vm381, %v383, 0.0
      %v385 = vadd.f32 %v358, %v384
      %v386 = vadd.f32 %v359, %v383
      %v387 = vsel %vm381, inf, %v360
      %v388 = vsel %vm248, %v387, inf
      %389 = vmin.xlane.f32.xlu0 %v388
      %v390 = vpop.xlane.xlu0 %389
      %vm391 = vcmp.eq.f32.partialorder %v387, %v390
      %v392 = vsel %vm391, %v333, 4
      %v393 = vsel %vm248, %v392, 2147483647
      %v394 = vand.u32 %v393, 65535
      %v395 = vshra.s32 %v393, 16
      %v396 = vcvt.s32.f32 %v394
      %v397 = vcvt.s32.f32 %v395
      %398 = vmin.xlane.f32.xlu0 %v397
      %v399 = vpop.xlane.xlu0 %398
      %vm400 = vcmp.eq.f32.partialorder %v397, %v399
      %v401 = vsel %vm400, %v396, inf
      %402 = vmin.xlane.f32.xlu0 %v401
      %v403 = vpop.xlane.xlu0 %402
      %v404 = vcvt.f32.s32 %v403
      %v405 = vcvt.f32.s32 %v399
      %v406 = vshll.u32 %v405, 16
      %v407 = vadd.s32 %v406, %v404
      %vm408 = vcmp.eq.s32.totalorder %v333, %v407
      %v409 = vadd.f32 %v390, 1e-08
      %v410 = vrcp.pop %v409
      %v411 = vsel %vm408, %v410, 0.0
      %v412 = vadd.f32 %v385, %v411
      %v413 = vadd.f32 %v386, %v410
      %v414 = vpack.c.bf16 %v412, %v412
      %v416 = vcombine.high %v241, %v241
      %v418 = vunpack.c.l.s4 1983009808
      %v419 = vunpack.c.0.s8 %v418
      %v420 = vlaneseq
      %v421 = vshrl.u32 %v420, 7
      %v422 = vsub.s32 %v419, %v421
      %v423 = vrot.slane %v241, %v422
      %v425 = vunpack.c.l.s4 1983009808
      %v426 = vunpack.c.0.s8 %v425
      %v427 = vlaneseq
      %v428 = vshrl.u32 %v427, 7
      %v429 = vsub.s32 %v426, %v428
      %v430 = vrot.slane %v416, %v429
      %v431 = vcombine.high %v423, %v423
      %v432 = vcombine.high %v430, %v430
      %v434 = vsel %vm248, %v414, 0
      %vm436 = vcmask 1041408
      %v438 = vsel %vm436, %v423, 0
      %v441 = vsel %vm436, %v431, 0
      %v444 = vsel %vm436, %v430, 0
      %v447 = vsel %vm436, %v432, 0
      %449 = vmatprep.subr.bf16.mxu0 %v441
      %450 = vmatpush1.bf16.msra.mxu0 %v438
      %451 = vmatprep.subr.bf16.mxu0 0
      %452 = vmatpush1.bf16.msra.mxu0 0
      %453 = vmatprep.subr.bf16.mxu0 0
      %454 = vmatpush1.bf16.msra.mxu0 0
      %455 = vmatprep.subr.bf16.mxu0 0
      %456 = vmatpush1.bf16.msra.mxu0 0
      %457 = vmatprep.subr.bf16.mxu0 0
      %458 = vmatpush1.bf16.msra.mxu0 0
      %459 = vmatprep.subr.bf16.mxu0 0
      %460 = vmatpush1.bf16.msra.mxu0 0
      %461 = vmatprep.subr.bf16.mxu0 0
      %462 = vmatpush1.bf16.msra.mxu0 0
      %463 = vmatprep.subr.bf16.mxu0 0
      %464 = vmatpush1.bf16.msra.mxu0 0
      %465 = vmatprep.subr.bf16.mxu0 0
      %466 = vmatpush1.bf16.msra.mxu0 0
      %467 = vmatprep.subr.bf16.mxu0 0
      %468 = vmatpush1.bf16.msra.mxu0 0
      %469 = vmatprep.subr.bf16.mxu0 0
      %470 = vmatpush1.bf16.msra.mxu0 0
      %471 = vmatprep.subr.bf16.mxu0 0
      %472 = vmatpush1.bf16.msra.mxu0 0
      %473 = vmatprep.subr.bf16.mxu0 0
      %474 = vmatpush1.bf16.msra.mxu0 0
      %475 = vmatprep.subr.bf16.mxu0 0
      %476 = vmatpush1.bf16.msra.mxu0 0
      %477 = vmatprep.subr.bf16.mxu0 0
      %478 = vmatpush1.bf16.msra.mxu0 0
      %479 = vmatprep.subr.bf16.mxu0 0
      %480 = vmatpush1.bf16.msra.mxu0 0
      %481 = vmatprep.mubr.bf16.mxu0 0
      %482 = vmatmul.mubr.bf16.gmra.mrb[0].mxu0 %v434
      %v483 = vpop.f32.mrb[0].mxu0
      %v484 = vadd.f32 0.0, %v483
      %v485 = vpop.f32.mrb[0].mxu0
      %v486 = vadd.f32 0.0, %v485
      %v487 = vpop.f32.mrb[0].mxu0
      %v488 = vpop.f32.mrb[0].mxu0
      %489 = vdwg.mxu0
      %490 = vmatprep.subr.bf16.mxu0 %v447
      %491 = vmatpush1.bf16.msra.mxu0 %v444
      %492 = vmatprep.subr.bf16.mxu0 0
      %493 = vmatpush1.bf16.msra.mxu0 0
      %494 = vmatprep.subr.bf16.mxu0 0
      %495 = vmatpush1.bf16.msra.mxu0 0
      %496 = vmatprep.subr.bf16.mxu0 0
      %497 = vmatpush1.bf16.msra.mxu0 0
      %498 = vmatprep.subr.bf16.mxu0 0
      %499 = vmatpush1.bf16.msra.mxu0 0
      %500 = vmatprep.subr.bf16.mxu0 0
      %501 = vmatpush1.bf16.msra.mxu0 0
      %502 = vmatprep.subr.bf16.mxu0 0
      %503 = vmatpush1.bf16.msra.mxu0 0
      %504 = vmatprep.subr.bf16.mxu0 0
      %505 = vmatpush1.bf16.msra.mxu0 0
      %506 = vmatprep.subr.bf16.mxu0 0
      %507 = vmatpush1.bf16.msra.mxu0 0
      %508 = vmatprep.subr.bf16.mxu0 0
      %509 = vmatpush1.bf16.msra.mxu0 0
      %510 = vmatprep.subr.bf16.mxu0 0
      %511 = vmatpush1.bf16.msra.mxu0 0
      %512 = vmatprep.subr.bf16.mxu0 0
      %513 = vmatpush1.bf16.msra.mxu0 0
      %514 = vmatprep.subr.bf16.mxu0 0
      %515 = vmatpush1.bf16.msra.mxu0 0
      %516 = vmatprep.subr.bf16.mxu0 0
      %517 = vmatpush1.bf16.msra.mxu0 0
      %518 = vmatprep.subr.bf16.mxu0 0
      %519 = vmatpush1.bf16.msra.mxu0 0
      %520 = vmatprep.subr.bf16.mxu0 0
      %521 = vmatpush1.bf16.msra.mxu0 0
      %522 = vmatprep.mubr.bf16.mxu0 0
      %523 = vmatmul.mubr.bf16.gmra.mrb[0].mxu0 %v434
      %v524 = vpop.f32.mrb[0].mxu0
      %v525 = vadd.f32 0.0, %v524
      %v526 = vpop.f32.mrb[0].mxu0
      %v527 = vadd.f32 0.0, %v526
      %v528 = vpop.f32.mrb[0].mxu0
      %v529 = vpop.f32.mrb[0].mxu0
      %530 = vdwg.mxu0
      %v531 = vrcp.pop %v413
      %v532 = vmul.f32 %v484, %v531
      %v533 = vmul.f32 %v486, %v531
      %v534 = vmul.f32 %v525, %v531
      %v535 = vmul.f32 %v527, %v531
      %v536 = vpack.c.bf16 %v532, %v532
      %v537 = vpack.c.bf16 %v533, %v533
      %v538 = vpack.c.bf16 %v534, %v534
      %v539 = vpack.c.bf16 %v535, %v535
      %v544 = vunpack.c.l.b16 %v536
      %v545 = vunpack.c.l.b16 %v537
      %v546 = vunpack.c.l.b16 %v538
      %v547 = vunpack.c.l.b16 %v539
      %v548 = vpack.c.b16 %v545, %v544
      %v549 = vpack.c.b16 %v547, %v546
      %552 = vst [vmem:[%s237] sm:$0xff] %v548
      %553 = vst [vmem:[%s237 + $0x8] sm:$0xff] %v549
      %p554 = scmp.lt.s32.totalorder %s18, 1
      %s555 = scalar_select %p554, %s18, 1
      %p556 = scmp.lt.s32.totalorder %s19, 0
      %s557 = scalar_select %p556, %s19, 0
      %s558 = smul.addr %s557, 4
      %s559 = smul.addr %s555, 4
      %s560 = sadd.s32 %s558, %s559
      %s561 = smul.addr %s560, 4
      %s562 = scalar_lea.vmem %s3, %s561
      // Predicated region
      $region33: #{pointnet2_decoder_without_cls_head.17} parent=31 // pred_check
        %p563 = pneg %p126
      $region34: #{pointnet2_decoder_without_cls_head.17} parent=31 // pred_check_branch
        %565 = sbr.rel (%p563) target = $region36
      $region35: #{pointnet2_decoder_without_cls_head.17} parent=31 // pred_region
        _
      $region36: #{pointnet2_decoder_without_cls_head.17} parent=31 // pred_fallthru
        _
    $region32: #{pointnet2_decoder_without_cls_head.17} parent=5 // pred_fallthru
      _
    %p566 = scmp.le.s32.totalorder 2, %s9
    // Predicated region
    $region37: #{pointnet2_decoder_without_cls_head.17} parent=5 // pred_check
      %p567 = pneg %p566
    $region38: #{pointnet2_decoder_without_cls_head.17} parent=5 // pred_check_branch
      %569 = sbr.rel (%p567) target = $region40
    $region39: #{pointnet2_decoder_without_cls_head.17} parent=5 // pred_region
      %s570 = ssub.s32 %s9, 2
      // Predicated region
      $region41: #{pointnet2_decoder_without_cls_head.17} parent=39 // pred_check
        %p571 = pneg %p132
      $region42: #{pointnet2_decoder_without_cls_head.17} parent=39 // pred_check_branch
        %573 = sbr.rel (%p571) target = $region44
      $region43: #{pointnet2_decoder_without_cls_head.17} parent=39 // pred_region
        %p574 = scmp.lt.s32.totalorder %s20, 1
        %s575 = scalar_select %p574, %s20, 1
        %p576 = scmp.lt.s32.totalorder %s21, 0
        %s577 = scalar_select %p576, %s21, 0
        %s578 = smul.addr %s577, 4
        %s579 = smul.addr %s575, 4
        %s580 = sadd.s32 %s578, %s579
        %s581 = smul.addr %s580, 4
        %s582 = scalar_lea.vmem %s3, %s581
      $region44: #{pointnet2_decoder_without_cls_head.17} parent=39 // pred_fallthru
        _
    $region40: #{pointnet2_decoder_without_cls_head.17} parent=5 // pred_fallthru
      _
  $region6: #{pointnet2_decoder_without_cls_head.17} parent=0 // loop_footer
    %s13 = sadd.s32 1, %s9
  $region7: #{pointnet2_decoder_without_cls_head.17} parent=0 // loop_footer_branch
    %8 = sbr.rel target = $region3
  $region8: #{pointnet2_decoder_without_cls_head.17} parent=0 // loop_exit
    _

// kernel: pointnet2_decoder_without_cls_head.19
$region0: #{pointnet2_decoder_without_cls_head.19}
  #allocation0 [shape = 'u32[]', space=smem, size = 0x4, offset = 0x4, fixed_abs, tag = 'smem constant byte address 0x4 - core index']
  #allocation1 [shape = 'u32[144,128]{1,0:T(1,128)}', space=vmem, size = 0x12000, scoped, tag = 'internal scratch']
  %s0 = inlined_call_operand.vmem [shape: f32[16,256], index: 0, kind: input, shape index: {}]
  %s1 = inlined_call_operand.vmem [shape: f32[2,256], index: 1, kind: input, shape index: {}]
  %s2 = inlined_call_operand.vmem [shape: f32[1,256], index: 2, kind: input, shape index: {}]
  %s3 = inlined_call_operand.vmem [shape: f32[1,256], index: 3, kind: input, shape index: {}]
  %s4 = inlined_call_operand.vmem [shape: bf16[256,256], index: 4, kind: input, shape index: {}]
  %s5 = inlined_call_operand.vmem [shape: f32[16,256], index: 5, kind: output, shape index: {0}]
  %s6 = inlined_call_operand.vmem [shape: f32[2,256], index: 6, kind: output, shape index: {1}]
  %7 = xla_tuple %s5, %s6
  %s8 = sld [smem:[#allocation0]]
  $region42: #{pointnet2_decoder_without_cls_head.19} parent=0
    _
  %s10 = ssub.s32 1, %s8
  %s11 = scalar_select 0, %s10, %s8
  // Predicated region
  $region2: #{pointnet2_decoder_without_cls_head.19} parent=0 // pred_check
    _
  $region3: #{pointnet2_decoder_without_cls_head.19} parent=0 // pred_check_branch
    %13 = sbr.rel (0) target = $region5
  $region4: #{pointnet2_decoder_without_cls_head.19} parent=0 // pred_region
    _
  $region5: #{pointnet2_decoder_without_cls_head.19} parent=0 // pred_fallthru
    _
  // Predicated region
  $region6: #{pointnet2_decoder_without_cls_head.19} parent=0 // pred_check
    _
  $region7: #{pointnet2_decoder_without_cls_head.19} parent=0 // pred_check_branch
    %15 = sbr.rel (0) target = $region9
  $region8: #{pointnet2_decoder_without_cls_head.19} parent=0 // pred_region
    _
  $region9: #{pointnet2_decoder_without_cls_head.19} parent=0 // pred_fallthru
    _
  // Predicated region
  $region10: #{pointnet2_decoder_without_cls_head.19} parent=0 // pred_check
    _
  $region11: #{pointnet2_decoder_without_cls_head.19} parent=0 // pred_check_branch
    %17 = sbr.rel (0) target = $region13
  $region12: #{pointnet2_decoder_without_cls_head.19} parent=0 // pred_region
    _
  $region13: #{pointnet2_decoder_without_cls_head.19} parent=0 // pred_fallthru
    _
  // Predicated region
  $region14: #{pointnet2_decoder_without_cls_head.19} parent=0 // pred_check
    _
  $region15: #{pointnet2_decoder_without_cls_head.19} parent=0 // pred_check_branch
    %19 = sbr.rel (0) target = $region17
  $region16: #{pointnet2_decoder_without_cls_head.19} parent=0 // pred_region
    _
  $region17: #{pointnet2_decoder_without_cls_head.19} parent=0 // pred_fallthru
    _
  // Predicated region
  $region18: #{pointnet2_decoder_without_cls_head.19} parent=0 // pred_check
    _
  $region19: #{pointnet2_decoder_without_cls_head.19} parent=0 // pred_check_branch
    %21 = sbr.rel (0) target = $region21
  $region20: #{pointnet2_decoder_without_cls_head.19} parent=0 // pred_region
    _
  $region21: #{pointnet2_decoder_without_cls_head.19} parent=0 // pred_fallthru
    _
  %v22 = vld [vmem:[%s1] ss:$2 sm:$0x3]
  %v23 = vmul.f32 %v22, 0.0625
  %s24 = scalar_lea.vmem %s1, 1
  %v25 = vld [vmem:[%s24] ss:$2 sm:$0x3]
  %v26 = vmul.f32 %v25, 0.0625
  %v27 = vmul.f32 %v23, %v23
  %v28 = vsub.f32 %v26, %v27
  %v29 = vld [vmem:[%s0] sm:$0xff]
  %v30 = vld [vmem:[%s0 + $0x8] sm:$0xff]
  %v31 = vld [vmem:[%s0 + $0x10] sm:$0xff]
  %v32 = vld [vmem:[%s0 + $0x18] sm:$0xff]
  %v34 = vlaneseq
  %v35 = vshrl.u32 %v34, 7
  %v36 = vsub.s32 0, %v35
  %v37 = vrot.slane %v23, %v36
  %v38 = vlaneseq
  %v39 = vshrl.u32 %v38, 7
  %v40 = vsub.s32 1, %v39
  %v41 = vrot.slane %v23, %v40
  %v44 = vsub.f32 %v29, %v37
  %v45 = vsub.f32 %v30, %v41
  %v46 = vsub.f32 %v31, %v37
  %v47 = vsub.f32 %v32, %v41
  %v48 = vadd.f32 %v28, 1e-05
  %v49 = vrsqrt.pop %v48
  %v51 = vlaneseq
  %v52 = vshrl.u32 %v51, 7
  %v53 = vsub.s32 0, %v52
  %v54 = vrot.slane %v49, %v53
  %v55 = vlaneseq
  %v56 = vshrl.u32 %v55, 7
  %v57 = vsub.s32 1, %v56
  %v58 = vrot.slane %v49, %v57
  %v61 = vmul.f32 %v44, %v54
  %v62 = vmul.f32 %v45, %v58
  %v63 = vmul.f32 %v46, %v54
  %v64 = vmul.f32 %v47, %v58
  %v65 = vld [vmem:[%s2] sm:$0x3]
  %v67 = vlaneseq
  %v68 = vshrl.u32 %v67, 7
  %v69 = vsub.s32 0, %v68
  %v70 = vrot.slane %v65, %v69
  %v71 = vlaneseq
  %v72 = vshrl.u32 %v71, 7
  %v73 = vsub.s32 1, %v72
  %v74 = vrot.slane %v65, %v73
  %v77 = vmul.f32 %v61, %v70
  %v78 = vmul.f32 %v62, %v74
  %v79 = vmul.f32 %v63, %v70
  %v80 = vmul.f32 %v64, %v74
  %v81 = vld [vmem:[%s3] sm:$0x3]
  %v83 = vlaneseq
  %v84 = vshrl.u32 %v83, 7
  %v85 = vsub.s32 0, %v84
  %v86 = vrot.slane %v81, %v85
  %v87 = vlaneseq
  %v88 = vshrl.u32 %v87, 7
  %v89 = vsub.s32 1, %v88
  %v90 = vrot.slane %v81, %v89
  %v93 = vadd.f32 %v77, %v86
  %v94 = vadd.f32 %v78, %v90
  %v95 = vadd.f32 %v79, %v86
  %v96 = vadd.f32 %v80, %v90
  %v97 = vmax.f32 %v93, 0.0
  %v98 = vmax.f32 %v94, 0.0
  %v99 = vmax.f32 %v95, 0.0
  %v100 = vmax.f32 %v96, 0.0
  %v101 = vpack.c.bf16 %v99, %v97
  %v102 = vpack.c.bf16 %v100, %v98
  %v103 = vld [vmem:[%s4] sm:$0xff]
  %v104 = vld [vmem:[%s4 + $0x8] sm:$0xff]
  %v105 = vld [vmem:[%s4 + $0x10] sm:$0xff]
  %v106 = vld [vmem:[%s4 + $0x18] sm:$0xff]
  %v107 = vld [vmem:[%s4 + $0x20] sm:$0xff]
  %v108 = vld [vmem:[%s4 + $0x28] sm:$0xff]
  %v109 = vld [vmem:[%s4 + $0x30] sm:$0xff]
  %v110 = vld [vmem:[%s4 + $0x38] sm:$0xff]
  %v111 = vld [vmem:[%s4 + $0x40] sm:$0xff]
  %v112 = vld [vmem:[%s4 + $0x48] sm:$0xff]
  %v113 = vld [vmem:[%s4 + $0x50] sm:$0xff]
  %v114 = vld [vmem:[%s4 + $0x58] sm:$0xff]
  %v115 = vld [vmem:[%s4 + $0x60] sm:$0xff]
  %v116 = vld [vmem:[%s4 + $0x68] sm:$0xff]
  %v117 = vld [vmem:[%s4 + $0x70] sm:$0xff]
  %v118 = vld [vmem:[%s4 + $0x78] sm:$0xff]
  %v119 = vld [vmem:[%s4 + $0x80] sm:$0xff]
  %v120 = vld [vmem:[%s4 + $0x88] sm:$0xff]
  %v121 = vld [vmem:[%s4 + $0x90] sm:$0xff]
  %v122 = vld [vmem:[%s4 + $0x98] sm:$0xff]
  %v123 = vld [vmem:[%s4 + $0xa0] sm:$0xff]
  %v124 = vld [vmem:[%s4 + $0xa8] sm:$0xff]
  %v125 = vld [vmem:[%s4 + $0xb0] sm:$0xff]
  %v126 = vld [vmem:[%s4 + $0xb8] sm:$0xff]
  %v127 = vld [vmem:[%s4 + $0xc0] sm:$0xff]
  %v128 = vld [vmem:[%s4 + $0xc8] sm:$0xff]
  %v129 = vld [vmem:[%s4 + $0xd0] sm:$0xff]
  %v130 = vld [vmem:[%s4 + $0xd8] sm:$0xff]
  %v131 = vld [vmem:[%s4 + $0xe0] sm:$0xff]
  %v132 = vld [vmem:[%s4 + $0xe8] sm:$0xff]
  %v133 = vld [vmem:[%s4 + $0xf0] sm:$0xff]
  %v134 = vld [vmem:[%s4 + $0xf8] sm:$0xff]
  %v167 = vunpack.c.l.b16 %v103
  %v168 = vunpack.c.h.b16 %v103
  %v169 = vunpack.c.l.b16 %v104
  %v170 = vunpack.c.h.b16 %v104
  %v171 = vunpack.c.l.b16 %v105
  %v172 = vunpack.c.h.b16 %v105
  %v173 = vunpack.c.l.b16 %v106
  %v174 = vunpack.c.h.b16 %v106
  %v175 = vunpack.c.l.b16 %v107
  %v176 = vunpack.c.h.b16 %v107
  %v177 = vunpack.c.l.b16 %v108
  %v178 = vunpack.c.h.b16 %v108
  %v179 = vunpack.c.l.b16 %v109
  %v180 = vunpack.c.h.b16 %v109
  %v181 = vunpack.c.l.b16 %v110
  %v182 = vunpack.c.h.b16 %v110
  %v183 = vunpack.c.l.b16 %v111
  %v184 = vunpack.c.h.b16 %v111
  %v185 = vunpack.c.l.b16 %v112
  %v186 = vunpack.c.h.b16 %v112
  %v187 = vunpack.c.l.b16 %v113
  %v188 = vunpack.c.h.b16 %v113
  %v189 = vunpack.c.l.b16 %v114
  %v190 = vunpack.c.h.b16 %v114
  %v191 = vunpack.c.l.b16 %v115
  %v192 = vunpack.c.h.b16 %v115
  %v193 = vunpack.c.l.b16 %v116
  %v194 = vunpack.c.h.b16 %v116
  %v195 = vunpack.c.l.b16 %v117
  %v196 = vunpack.c.h.b16 %v117
  %v197 = vunpack.c.l.b16 %v118
  %v198 = vunpack.c.h.b16 %v118
  %v199 = vunpack.c.l.b16 %v119
  %v200 = vunpack.c.h.b16 %v119
  %v201 = vunpack.c.l.b16 %v120
  %v202 = vunpack.c.h.b16 %v120
  %v203 = vunpack.c.l.b16 %v121
  %v204 = vunpack.c.h.b16 %v121
  %v205 = vunpack.c.l.b16 %v122
  %v206 = vunpack.c.h.b16 %v122
  %v207 = vunpack.c.l.b16 %v123
  %v208 = vunpack.c.h.b16 %v123
  %v209 = vunpack.c.l.b16 %v124
  %v210 = vunpack.c.h.b16 %v124
  %v211 = vunpack.c.l.b16 %v125
  %v212 = vunpack.c.h.b16 %v125
  %v213 = vunpack.c.l.b16 %v126
  %v214 = vunpack.c.h.b16 %v126
  %v215 = vunpack.c.l.b16 %v127
  %v216 = vunpack.c.h.b16 %v127
  %v217 = vunpack.c.l.b16 %v128
  %v218 = vunpack.c.h.b16 %v128
  %v219 = vunpack.c.l.b16 %v129
  %v220 = vunpack.c.h.b16 %v129
  %v221 = vunpack.c.l.b16 %v130
  %v222 = vunpack.c.h.b16 %v130
  %v223 = vunpack.c.l.b16 %v131
  %v224 = vunpack.c.h.b16 %v131
  %v225 = vunpack.c.l.b16 %v132
  %v226 = vunpack.c.h.b16 %v132
  %v227 = vunpack.c.l.b16 %v133
  %v228 = vunpack.c.h.b16 %v133
  %v229 = vunpack.c.l.b16 %v134
  %v230 = vunpack.c.h.b16 %v134
  %v231 = vpack.c.b16 %v169, %v167
  %v232 = vpack.c.b16 %v170, %v168
  %v233 = vpack.c.b16 %v173, %v171
  %v234 = vpack.c.b16 %v174, %v172
  %v235 = vpack.c.b16 %v177, %v175
  %v236 = vpack.c.b16 %v178, %v176
  %v237 = vpack.c.b16 %v181, %v179
  %v238 = vpack.c.b16 %v182, %v180
  %v239 = vpack.c.b16 %v185, %v183
  %v240 = vpack.c.b16 %v186, %v184
  %v241 = vpack.c.b16 %v189, %v187
  %v242 = vpack.c.b16 %v190, %v188
  %v243 = vpack.c.b16 %v193, %v191
  %v244 = vpack.c.b16 %v194, %v192
  %v245 = vpack.c.b16 %v197, %v195
  %v246 = vpack.c.b16 %v198, %v196
  %v247 = vpack.c.b16 %v201, %v199
  %v248 = vpack.c.b16 %v202, %v200
  %v249 = vpack.c.b16 %v205, %v203
  %v250 = vpack.c.b16 %v206, %v204
  %v251 = vpack.c.b16 %v209, %v207
  %v252 = vpack.c.b16 %v210, %v208
  %v253 = vpack.c.b16 %v213, %v211
  %v254 = vpack.c.b16 %v214, %v212
  %v255 = vpack.c.b16 %v217, %v215
  %v256 = vpack.c.b16 %v218, %v216
  %v257 = vpack.c.b16 %v221, %v219
  %v258 = vpack.c.b16 %v222, %v220
  %v259 = vpack.c.b16 %v225, %v223
  %v260 = vpack.c.b16 %v226, %v224
  %v261 = vpack.c.b16 %v229, %v227
  %v262 = vpack.c.b16 %v230, %v228
  %295 = vmatprep.subr.bf16.mxu0 %v232
  %296 = vmatpush1.bf16.msra.mxu0 %v231
  %297 = vmatprep.subr.bf16.mxu0 %v234
  %298 = vmatpush1.bf16.msra.mxu0 %v233
  %299 = vmatprep.subr.bf16.mxu0 %v236
  %300 = vmatpush1.bf16.msra.mxu0 %v235
  %301 = vmatprep.subr.bf16.mxu0 %v238
  %302 = vmatpush1.bf16.msra.mxu0 %v237
  %303 = vmatprep.subr.bf16.mxu0 %v240
  %304 = vmatpush1.bf16.msra.mxu0 %v239
  %305 = vmatprep.subr.bf16.mxu0 %v242
  %306 = vmatpush1.bf16.msra.mxu0 %v241
  %307 = vmatprep.subr.bf16.mxu0 %v244
  %308 = vmatpush1.bf16.msra.mxu0 %v243
  %309 = vmatprep.subr.bf16.mxu0 %v246
  %310 = vmatpush1.bf16.msra.mxu0 %v245
  %311 = vmatprep.subr.bf16.mxu0 %v248
  %312 = vmatpush1.bf16.msra.mxu0 %v247
  %313 = vmatprep.subr.bf16.mxu0 %v250
  %314 = vmatpush1.bf16.msra.mxu0 %v249
  %315 = vmatprep.subr.bf16.mxu0 %v252
  %316 = vmatpush1.bf16.msra.mxu0 %v251
  %317 = vmatprep.subr.bf16.mxu0 %v254
  %318 = vmatpush1.bf16.msra.mxu0 %v253
  %319 = vmatprep.subr.bf16.mxu0 %v256
  %320 = vmatpush1.bf16.msra.mxu0 %v255
  %321 = vmatprep.subr.bf16.mxu0 %v258
  %322 = vmatpush1.bf16.msra.mxu0 %v257
  %323 = vmatprep.subr.bf16.mxu0 %v260
  %324 = vmatpush1.bf16.msra.mxu0 %v259
  %325 = vmatprep.subr.bf16.mxu0 %v262
  %326 = vmatpush1.bf16.msra.mxu0 %v261
  %327 = vmatprep.mubr.bf16.mxu0 %v102
  %328 = vmatmul.mubr.bf16.gmra.mrb[0].mxu0 %v101
  %v329 = vpop.f32.mrb[0].mxu0
  %v330 = vadd.f32 0.0, %v329
  %v331 = vpop.f32.mrb[0].mxu0
  %v332 = vadd.f32 0.0, %v331
  %v333 = vpop.f32.mrb[0].mxu0
  %v334 = vadd.f32 0.0, %v333
  %v335 = vpop.f32.mrb[0].mxu0
  %v336 = vadd.f32 0.0, %v335
  %337 = vdwg.mxu0
  %338 = vst [vmem:[%s5] sm:$0xff] %v330
  %339 = vst [vmem:[%s5 + $0x8] sm:$0xff] %v332
  %340 = vst [vmem:[%s5 + $0x10] sm:$0xff] %v334
  %341 = vst [vmem:[%s5 + $0x18] sm:$0xff] %v336
  %p342 = scmp.eq.s32.totalorder 0, 0
  // Predicated region
  $region22: #{pointnet2_decoder_without_cls_head.19} parent=0 // pred_check
    %p343 = pneg %p342
  $region23: #{pointnet2_decoder_without_cls_head.19} parent=0 // pred_check_branch
    %345 = sbr.rel (%p343) target = $region25
  $region24: #{pointnet2_decoder_without_cls_head.19} parent=0 // pred_region
    %346 = vst [vmem:[%s6] sm:$0xf] 0.0
  $region25: #{pointnet2_decoder_without_cls_head.19} parent=0 // pred_fallthru
    _
  %v347 = vld [vmem:[%s6] ss:$2 sm:$0x3]
  %v348 = vadd.f32 %v330, %v334
  %v349 = vrot.slane %v348, 4
  %v350 = vadd.f32 %v348, %v349
  %v351 = vrot.slane %v350, 2
  %v352 = vadd.f32 %v350, %v351
  %v353 = vrot.slane %v352, 1
  %v354 = vadd.f32 %v352, %v353
  %v355 = vadd.f32 %v332, %v336
  %v356 = vrot.slane %v355, 4
  %v357 = vadd.f32 %v355, %v356
  %v358 = vrot.slane %v357, 2
  %v359 = vadd.f32 %v357, %v358
  %v360 = vrot.slane %v359, 1
  %v361 = vadd.f32 %v359, %v360
  %v364 = vcombine.low %v354, %v361
  %v366 = vunpack.c.l.s4 1966171168
  %v367 = vunpack.c.0.s8 %v366
  %v368 = vlaneseq
  %v369 = vshrl.u32 %v368, 7
  %v370 = vsub.s32 %v367, %v369
  %v371 = vrot.slane %v364, %v370
  %v373 = vunpack.c.l.s4 1966171168
  %v374 = vunpack.c.0.s8 %v373
  %v375 = vlaneseq
  %v376 = vshrl.u32 %v375, 7
  %v377 = vsub.s32 %v374, %v376
  %v378 = vrot.slane %v371, %v377
  %v380 = vadd.f32 %v347, %v378
  %v381 = vlaneseq
  %vm382 = vcmp.ge.s32.totalorder %v381, 0
  %vm383 = vcmp.lt.s32.totalorder %v381, 256
  %vm384 = vmand %vm382, %vm383
  %385 = vst.msk [vmem:[%s6] ss:$2 sm:$0x3] %vm384, %v380
  %s386 = scalar_lea.vmem %s6, 1
  %v387 = vld [vmem:[%s386] ss:$2 sm:$0x3]
  %v388 = vmul.f32 %v330, %v330
  %v389 = vmul.f32 %v332, %v332
  %v390 = vmul.f32 %v334, %v334
  %v391 = vmul.f32 %v336, %v336
  %v392 = vadd.f32 %v388, %v390
  %v393 = vrot.slane %v392, 4
  %v394 = vadd.f32 %v392, %v393
  %v395 = vrot.slane %v394, 2
  %v396 = vadd.f32 %v394, %v395
  %v397 = vrot.slane %v396, 1
  %v398 = vadd.f32 %v396, %v397
  %v399 = vadd.f32 %v389, %v391
  %v400 = vrot.slane %v399, 4
  %v401 = vadd.f32 %v399, %v400
  %v402 = vrot.slane %v401, 2
  %v403 = vadd.f32 %v401, %v402
  %v404 = vrot.slane %v403, 1
  %v405 = vadd.f32 %v403, %v404
  %v408 = vcombine.low %v398, %v405
  %v410 = vunpack.c.l.s4 1966171168
  %v411 = vunpack.c.0.s8 %v410
  %v412 = vlaneseq
  %v413 = vshrl.u32 %v412, 7
  %v414 = vsub.s32 %v411, %v413
  %v415 = vrot.slane %v408, %v414
  %v417 = vunpack.c.l.s4 1966171168
  %v418 = vunpack.c.0.s8 %v417
  %v419 = vlaneseq
  %v420 = vshrl.u32 %v419, 7
  %v421 = vsub.s32 %v418, %v420
  %v422 = vrot.slane %v415, %v421
  %v424 = vadd.f32 %v387, %v422
  %425 = vst.msk [vmem:[%s386] ss:$2 sm:$0x3] %vm384, %v424
  // Predicated region
  $region26: #{pointnet2_decoder_without_cls_head.19} parent=0 // pred_check
    _
  $region27: #{pointnet2_decoder_without_cls_head.19} parent=0 // pred_check_branch
    %427 = sbr.rel (0) target = $region29
  $region28: #{pointnet2_decoder_without_cls_head.19} parent=0 // pred_region
    _
  $region29: #{pointnet2_decoder_without_cls_head.19} parent=0 // pred_fallthru
    _
  // Predicated region
  $region30: #{pointnet2_decoder_without_cls_head.19} parent=0 // pred_check
    _
  $region31: #{pointnet2_decoder_without_cls_head.19} parent=0 // pred_check_branch
    %429 = sbr.rel (0) target = $region33
  $region32: #{pointnet2_decoder_without_cls_head.19} parent=0 // pred_region
    _
  $region33: #{pointnet2_decoder_without_cls_head.19} parent=0 // pred_fallthru
    _
  // Predicated region
  $region34: #{pointnet2_decoder_without_cls_head.19} parent=0 // pred_check
    _
  $region35: #{pointnet2_decoder_without_cls_head.19} parent=0 // pred_check_branch
    %431 = sbr.rel (0) target = $region37
  $region36: #{pointnet2_decoder_without_cls_head.19} parent=0 // pred_region
    _
  $region37: #{pointnet2_decoder_without_cls_head.19} parent=0 // pred_fallthru
    _
  // Predicated region
  $region38: #{pointnet2_decoder_without_cls_head.19} parent=0 // pred_check
    _
  $region39: #{pointnet2_decoder_without_cls_head.19} parent=0 // pred_check_branch
    %433 = sbr.rel (0) target = $region41
  $region40: #{pointnet2_decoder_without_cls_head.19} parent=0 // pred_region
    _
  $region41: #{pointnet2_decoder_without_cls_head.19} parent=0 // pred_fallthru
    _

// kernel: pointnet2_decoder_without_cls_head.18
$region0: #{pointnet2_decoder_without_cls_head.18}
  #allocation0 [shape = 'u32[]', space=smem, size = 0x4, offset = 0x4, fixed_abs, tag = 'smem constant byte address 0x4 - core index']
  #allocation1 [shape = 'u32[144,128]{1,0:T(1,128)}', space=vmem, size = 0x12000, scoped, tag = 'internal scratch']
  %s0 = inlined_call_operand.vmem [shape: bf16[16,256], index: 0, kind: input, shape index: {}]
  %s1 = inlined_call_operand.vmem [shape: bf16[16,512], index: 1, kind: input, shape index: {}]
  %s2 = inlined_call_operand.vmem [shape: bf16[256,256], index: 2, kind: input, shape index: {}]
  %s3 = inlined_call_operand.vmem [shape: bf16[512,256], index: 3, kind: input, shape index: {}]
  %s4 = inlined_call_operand.vmem [shape: f32[16,256], index: 4, kind: output, shape index: {0}]
  %s5 = inlined_call_operand.vmem [shape: f32[2,256], index: 5, kind: output, shape index: {1}]
  %6 = xla_tuple %s4, %s5
  %s7 = sld [smem:[#allocation0]]
  $region38: #{pointnet2_decoder_without_cls_head.18} parent=0
    _
  %s9 = ssub.s32 1, %s7
  %s10 = scalar_select 0, %s9, %s7
  // Predicated region
  $region2: #{pointnet2_decoder_without_cls_head.18} parent=0 // pred_check
    _
  $region3: #{pointnet2_decoder_without_cls_head.18} parent=0 // pred_check_branch
    %12 = sbr.rel (0) target = $region5
  $region4: #{pointnet2_decoder_without_cls_head.18} parent=0 // pred_region
    _
  $region5: #{pointnet2_decoder_without_cls_head.18} parent=0 // pred_fallthru
    _
  // Predicated region
  $region6: #{pointnet2_decoder_without_cls_head.18} parent=0 // pred_check
    _
  $region7: #{pointnet2_decoder_without_cls_head.18} parent=0 // pred_check_branch
    %14 = sbr.rel (0) target = $region9
  $region8: #{pointnet2_decoder_without_cls_head.18} parent=0 // pred_region
    _
  $region9: #{pointnet2_decoder_without_cls_head.18} parent=0 // pred_fallthru
    _
  // Predicated region
  $region10: #{pointnet2_decoder_without_cls_head.18} parent=0 // pred_check
    _
  $region11: #{pointnet2_decoder_without_cls_head.18} parent=0 // pred_check_branch
    %16 = sbr.rel (0) target = $region13
  $region12: #{pointnet2_decoder_without_cls_head.18} parent=0 // pred_region
    _
  $region13: #{pointnet2_decoder_without_cls_head.18} parent=0 // pred_fallthru
    _
  // Predicated region
  $region14: #{pointnet2_decoder_without_cls_head.18} parent=0 // pred_check
    _
  $region15: #{pointnet2_decoder_without_cls_head.18} parent=0 // pred_check_branch
    %18 = sbr.rel (0) target = $region17
  $region16: #{pointnet2_decoder_without_cls_head.18} parent=0 // pred_region
    _
  $region17: #{pointnet2_decoder_without_cls_head.18} parent=0 // pred_fallthru
    _
  %v19 = vld [vmem:[%s0] sm:$0xff]
  %v20 = vld [vmem:[%s0 + $0x8] sm:$0xff]
  %v21 = vld [vmem:[%s2] sm:$0xff]
  %v22 = vld [vmem:[%s2 + $0x8] sm:$0xff]
  %v23 = vld [vmem:[%s2 + $0x10] sm:$0xff]
  %v24 = vld [vmem:[%s2 + $0x18] sm:$0xff]
  %v25 = vld [vmem:[%s2 + $0x20] sm:$0xff]
  %v26 = vld [vmem:[%s2 + $0x28] sm:$0xff]
  %v27 = vld [vmem:[%s2 + $0x30] sm:$0xff]
  %v28 = vld [vmem:[%s2 + $0x38] sm:$0xff]
  %v29 = vld [vmem:[%s2 + $0x40] sm:$0xff]
  %v30 = vld [vmem:[%s2 + $0x48] sm:$0xff]
  %v31 = vld [vmem:[%s2 + $0x50] sm:$0xff]
  %v32 = vld [vmem:[%s2 + $0x58] sm:$0xff]
  %v33 = vld [vmem:[%s2 + $0x60] sm:$0xff]
  %v34 = vld [vmem:[%s2 + $0x68] sm:$0xff]
  %v35 = vld [vmem:[%s2 + $0x70] sm:$0xff]
  %v36 = vld [vmem:[%s2 + $0x78] sm:$0xff]
  %v37 = vld [vmem:[%s2 + $0x80] sm:$0xff]
  %v38 = vld [vmem:[%s2 + $0x88] sm:$0xff]
  %v39 = vld [vmem:[%s2 + $0x90] sm:$0xff]
  %v40 = vld [vmem:[%s2 + $0x98] sm:$0xff]
  %v41 = vld [vmem:[%s2 + $0xa0] sm:$0xff]
  %v42 = vld [vmem:[%s2 + $0xa8] sm:$0xff]
  %v43 = vld [vmem:[%s2 + $0xb0] sm:$0xff]
  %v44 = vld [vmem:[%s2 + $0xb8] sm:$0xff]
  %v45 = vld [vmem:[%s2 + $0xc0] sm:$0xff]
  %v46 = vld [vmem:[%s2 + $0xc8] sm:$0xff]
  %v47 = vld [vmem:[%s2 + $0xd0] sm:$0xff]
  %v48 = vld [vmem:[%s2 + $0xd8] sm:$0xff]
  %v49 = vld [vmem:[%s2 + $0xe0] sm:$0xff]
  %v50 = vld [vmem:[%s2 + $0xe8] sm:$0xff]
  %v51 = vld [vmem:[%s2 + $0xf0] sm:$0xff]
  %v52 = vld [vmem:[%s2 + $0xf8] sm:$0xff]
  %v53 = vld [vmem:[%s1] sm:$0xff]
  %v54 = vld [vmem:[%s1 + $0x8] sm:$0xff]
  %v55 = vld [vmem:[%s1 + $0x10] sm:$0xff]
  %v56 = vld [vmem:[%s1 + $0x18] sm:$0xff]
  %v57 = vld [vmem:[%s3] sm:$0xff]
  %v58 = vld [vmem:[%s3 + $0x8] sm:$0xff]
  %v59 = vld [vmem:[%s3 + $0x10] sm:$0xff]
  %v60 = vld [vmem:[%s3 + $0x18] sm:$0xff]
  %v61 = vld [vmem:[%s3 + $0x20] sm:$0xff]
  %v62 = vld [vmem:[%s3 + $0x28] sm:$0xff]
  %v63 = vld [vmem:[%s3 + $0x30] sm:$0xff]
  %v64 = vld [vmem:[%s3 + $0x38] sm:$0xff]
  %v65 = vld [vmem:[%s3 + $0x40] sm:$0xff]
  %v66 = vld [vmem:[%s3 + $0x48] sm:$0xff]
  %v67 = vld [vmem:[%s3 + $0x50] sm:$0xff]
  %v68 = vld [vmem:[%s3 + $0x58] sm:$0xff]
  %v69 = vld [vmem:[%s3 + $0x60] sm:$0xff]
  %v70 = vld [vmem:[%s3 + $0x68] sm:$0xff]
  %v71 = vld [vmem:[%s3 + $0x70] sm:$0xff]
  %v72 = vld [vmem:[%s3 + $0x78] sm:$0xff]
  %v73 = vld [vmem:[%s3 + $0x80] sm:$0xff]
  %v74 = vld [vmem:[%s3 + $0x88] sm:$0xff]
  %v75 = vld [vmem:[%s3 + $0x90] sm:$0xff]
  %v76 = vld [vmem:[%s3 + $0x98] sm:$0xff]
  %v77 = vld [vmem:[%s3 + $0xa0] sm:$0xff]
  %v78 = vld [vmem:[%s3 + $0xa8] sm:$0xff]
  %v79 = vld [vmem:[%s3 + $0xb0] sm:$0xff]
  %v80 = vld [vmem:[%s3 + $0xb8] sm:$0xff]
  %v81 = vld [vmem:[%s3 + $0xc0] sm:$0xff]
  %v82 = vld [vmem:[%s3 + $0xc8] sm:$0xff]
  %v83 = vld [vmem:[%s3 + $0xd0] sm:$0xff]
  %v84 = vld [vmem:[%s3 + $0xd8] sm:$0xff]
  %v85 = vld [vmem:[%s3 + $0xe0] sm:$0xff]
  %v86 = vld [vmem:[%s3 + $0xe8] sm:$0xff]
  %v87 = vld [vmem:[%s3 + $0xf0] sm:$0xff]
  %v88 = vld [vmem:[%s3 + $0xf8] sm:$0xff]
  %v89 = vld [vmem:[%s3 + $0x100] sm:$0xff]
  %v90 = vld [vmem:[%s3 + $0x108] sm:$0xff]
  %v91 = vld [vmem:[%s3 + $0x110] sm:$0xff]
  %v92 = vld [vmem:[%s3 + $0x118] sm:$0xff]
  %v93 = vld [vmem:[%s3 + $0x120] sm:$0xff]
  %v94 = vld [vmem:[%s3 + $0x128] sm:$0xff]
  %v95 = vld [vmem:[%s3 + $0x130] sm:$0xff]
  %v96 = vld [vmem:[%s3 + $0x138] sm:$0xff]
  %v97 = vld [vmem:[%s3 + $0x140] sm:$0xff]
  %v98 = vld [vmem:[%s3 + $0x148] sm:$0xff]
  %v99 = vld [vmem:[%s3 + $0x150] sm:$0xff]
  %v100 = vld [vmem:[%s3 + $0x158] sm:$0xff]
  %v101 = vld [vmem:[%s3 + $0x160] sm:$0xff]
  %v102 = vld [vmem:[%s3 + $0x168] sm:$0xff]
  %v103 = vld [vmem:[%s3 + $0x170] sm:$0xff]
  %v104 = vld [vmem:[%s3 + $0x178] sm:$0xff]
  %v105 = vld [vmem:[%s3 + $0x180] sm:$0xff]
  %v106 = vld [vmem:[%s3 + $0x188] sm:$0xff]
  %v107 = vld [vmem:[%s3 + $0x190] sm:$0xff]
  %v108 = vld [vmem:[%s3 + $0x198] sm:$0xff]
  %v109 = vld [vmem:[%s3 + $0x1a0] sm:$0xff]
  %v110 = vld [vmem:[%s3 + $0x1a8] sm:$0xff]
  %v111 = vld [vmem:[%s3 + $0x1b0] sm:$0xff]
  %v112 = vld [vmem:[%s3 + $0x1b8] sm:$0xff]
  %v113 = vld [vmem:[%s3 + $0x1c0] sm:$0xff]
  %v114 = vld [vmem:[%s3 + $0x1c8] sm:$0xff]
  %v115 = vld [vmem:[%s3 + $0x1d0] sm:$0xff]
  %v116 = vld [vmem:[%s3 + $0x1d8] sm:$0xff]
  %v117 = vld [vmem:[%s3 + $0x1e0] sm:$0xff]
  %v118 = vld [vmem:[%s3 + $0x1e8] sm:$0xff]
  %v119 = vld [vmem:[%s3 + $0x1f0] sm:$0xff]
  %v120 = vld [vmem:[%s3 + $0x1f8] sm:$0xff]
  %v125 = vunpack.c.l.b16 %v53
  %v126 = vunpack.c.h.b16 %v53
  %v127 = vunpack.c.l.b16 %v54
  %v128 = vunpack.c.h.b16 %v54
  %v129 = vunpack.c.l.b16 %v55
  %v130 = vunpack.c.h.b16 %v55
  %v131 = vunpack.c.l.b16 %v56
  %v132 = vunpack.c.h.b16 %v56
  %v133 = vpack.c.b16 %v129, %v125
  %v134 = vpack.c.b16 %v130, %v126
  %v135 = vpack.c.b16 %v131, %v127
  %v136 = vpack.c.b16 %v132, %v128
  %v205 = vunpack.c.l.b16 %v57
  %v206 = vunpack.c.h.b16 %v57
  %v207 = vunpack.c.l.b16 %v58
  %v208 = vunpack.c.h.b16 %v58
  %v209 = vunpack.c.l.b16 %v59
  %v210 = vunpack.c.h.b16 %v59
  %v211 = vunpack.c.l.b16 %v60
  %v212 = vunpack.c.h.b16 %v60
  %v213 = vunpack.c.l.b16 %v61
  %v214 = vunpack.c.h.b16 %v61
  %v215 = vunpack.c.l.b16 %v62
  %v216 = vunpack.c.h.b16 %v62
  %v217 = vunpack.c.l.b16 %v63
  %v218 = vunpack.c.h.b16 %v63
  %v219 = vunpack.c.l.b16 %v64
  %v220 = vunpack.c.h.b16 %v64
  %v221 = vunpack.c.l.b16 %v65
  %v222 = vunpack.c.h.b16 %v65
  %v223 = vunpack.c.l.b16 %v66
  %v224 = vunpack.c.h.b16 %v66
  %v225 = vunpack.c.l.b16 %v67
  %v226 = vunpack.c.h.b16 %v67
  %v227 = vunpack.c.l.b16 %v68
  %v228 = vunpack.c.h.b16 %v68
  %v229 = vunpack.c.l.b16 %v69
  %v230 = vunpack.c.h.b16 %v69
  %v231 = vunpack.c.l.b16 %v70
  %v232 = vunpack.c.h.b16 %v70
  %v233 = vunpack.c.l.b16 %v71
  %v234 = vunpack.c.h.b16 %v71
  %v235 = vunpack.c.l.b16 %v72
  %v236 = vunpack.c.h.b16 %v72
  %v237 = vunpack.c.l.b16 %v73
  %v238 = vunpack.c.h.b16 %v73
  %v239 = vunpack.c.l.b16 %v74
  %v240 = vunpack.c.h.b16 %v74
  %v241 = vunpack.c.l.b16 %v75
  %v242 = vunpack.c.h.b16 %v75
  %v243 = vunpack.c.l.b16 %v76
  %v244 = vunpack.c.h.b16 %v76
  %v245 = vunpack.c.l.b16 %v77
  %v246 = vunpack.c.h.b16 %v77
  %v247 = vunpack.c.l.b16 %v78
  %v248 = vunpack.c.h.b16 %v78
  %v249 = vunpack.c.l.b16 %v79
  %v250 = vunpack.c.h.b16 %v79
  %v251 = vunpack.c.l.b16 %v80
  %v252 = vunpack.c.h.b16 %v80
  %v253 = vunpack.c.l.b16 %v81
  %v254 = vunpack.c.h.b16 %v81
  %v255 = vunpack.c.l.b16 %v82
  %v256 = vunpack.c.h.b16 %v82
  %v257 = vunpack.c.l.b16 %v83
  %v258 = vunpack.c.h.b16 %v83
  %v259 = vunpack.c.l.b16 %v84
  %v260 = vunpack.c.h.b16 %v84
  %v261 = vunpack.c.l.b16 %v85
  %v262 = vunpack.c.h.b16 %v85
  %v263 = vunpack.c.l.b16 %v86
  %v264 = vunpack.c.h.b16 %v86
  %v265 = vunpack.c.l.b16 %v87
  %v266 = vunpack.c.h.b16 %v87
  %v267 = vunpack.c.l.b16 %v88
  %v268 = vunpack.c.h.b16 %v88
  %v269 = vunpack.c.l.b16 %v89
  %v270 = vunpack.c.h.b16 %v89
  %v271 = vunpack.c.l.b16 %v90
  %v272 = vunpack.c.h.b16 %v90
  %v273 = vunpack.c.l.b16 %v91
  %v274 = vunpack.c.h.b16 %v91
  %v275 = vunpack.c.l.b16 %v92
  %v276 = vunpack.c.h.b16 %v92
  %v277 = vunpack.c.l.b16 %v93
  %v278 = vunpack.c.h.b16 %v93
  %v279 = vunpack.c.l.b16 %v94
  %v280 = vunpack.c.h.b16 %v94
  %v281 = vunpack.c.l.b16 %v95
  %v282 = vunpack.c.h.b16 %v95
  %v283 = vunpack.c.l.b16 %v96
  %v284 = vunpack.c.h.b16 %v96
  %v285 = vunpack.c.l.b16 %v97
  %v286 = vunpack.c.h.b16 %v97
  %v287 = vunpack.c.l.b16 %v98
  %v288 = vunpack.c.h.b16 %v98
  %v289 = vunpack.c.l.b16 %v99
  %v290 = vunpack.c.h.b16 %v99
  %v291 = vunpack.c.l.b16 %v100
  %v292 = vunpack.c.h.b16 %v100
  %v293 = vunpack.c.l.b16 %v101
  %v294 = vunpack.c.h.b16 %v101
  %v295 = vunpack.c.l.b16 %v102
  %v296 = vunpack.c.h.b16 %v102
  %v297 = vunpack.c.l.b16 %v103
  %v298 = vunpack.c.h.b16 %v103
  %v299 = vunpack.c.l.b16 %v104
  %v300 = vunpack.c.h.b16 %v104
  %v301 = vunpack.c.l.b16 %v105
  %v302 = vunpack.c.h.b16 %v105
  %v303 = vunpack.c.l.b16 %v106
  %v304 = vunpack.c.h.b16 %v106
  %v305 = vunpack.c.l.b16 %v107
  %v306 = vunpack.c.h.b16 %v107
  %v307 = vunpack.c.l.b16 %v108
  %v308 = vunpack.c.h.b16 %v108
  %v309 = vunpack.c.l.b16 %v109
  %v310 = vunpack.c.h.b16 %v109
  %v311 = vunpack.c.l.b16 %v110
  %v312 = vunpack.c.h.b16 %v110
  %v313 = vunpack.c.l.b16 %v111
  %v314 = vunpack.c.h.b16 %v111
  %v315 = vunpack.c.l.b16 %v112
  %v316 = vunpack.c.h.b16 %v112
  %v317 = vunpack.c.l.b16 %v113
  %v318 = vunpack.c.h.b16 %v113
  %v319 = vunpack.c.l.b16 %v114
  %v320 = vunpack.c.h.b16 %v114
  %v321 = vunpack.c.l.b16 %v115
  %v322 = vunpack.c.h.b16 %v115
  %v323 = vunpack.c.l.b16 %v116
  %v324 = vunpack.c.h.b16 %v116
  %v325 = vunpack.c.l.b16 %v117
  %v326 = vunpack.c.h.b16 %v117
  %v327 = vunpack.c.l.b16 %v118
  %v328 = vunpack.c.h.b16 %v118
  %v329 = vunpack.c.l.b16 %v119
  %v330 = vunpack.c.h.b16 %v119
  %v331 = vunpack.c.l.b16 %v120
  %v332 = vunpack.c.h.b16 %v120
  %v333 = vpack.c.b16 %v207, %v205
  %v334 = vpack.c.b16 %v208, %v206
  %v335 = vpack.c.b16 %v211, %v209
  %v336 = vpack.c.b16 %v212, %v210
  %v337 = vpack.c.b16 %v215, %v213
  %v338 = vpack.c.b16 %v216, %v214
  %v339 = vpack.c.b16 %v219, %v217
  %v340 = vpack.c.b16 %v220, %v218
  %v341 = vpack.c.b16 %v223, %v221
  %v342 = vpack.c.b16 %v224, %v222
  %v343 = vpack.c.b16 %v227, %v225
  %v344 = vpack.c.b16 %v228, %v226
  %v345 = vpack.c.b16 %v231, %v229
  %v346 = vpack.c.b16 %v232, %v230
  %v347 = vpack.c.b16 %v235, %v233
  %v348 = vpack.c.b16 %v236, %v234
  %v349 = vpack.c.b16 %v239, %v237
  %v350 = vpack.c.b16 %v240, %v238
  %v351 = vpack.c.b16 %v243, %v241
  %v352 = vpack.c.b16 %v244, %v242
  %v353 = vpack.c.b16 %v247, %v245
  %v354 = vpack.c.b16 %v248, %v246
  %v355 = vpack.c.b16 %v251, %v249
  %v356 = vpack.c.b16 %v252, %v250
  %v357 = vpack.c.b16 %v255, %v253
  %v358 = vpack.c.b16 %v256, %v254
  %v359 = vpack.c.b16 %v259, %v257
  %v360 = vpack.c.b16 %v260, %v258
  %v361 = vpack.c.b16 %v263, %v261
  %v362 = vpack.c.b16 %v264, %v262
  %v363 = vpack.c.b16 %v267, %v265
  %v364 = vpack.c.b16 %v268, %v266
  %v365 = vpack.c.b16 %v271, %v269
  %v366 = vpack.c.b16 %v272, %v270
  %v367 = vpack.c.b16 %v275, %v273
  %v368 = vpack.c.b16 %v276, %v274
  %v369 = vpack.c.b16 %v279, %v277
  %v370 = vpack.c.b16 %v280, %v278
  %v371 = vpack.c.b16 %v283, %v281
  %v372 = vpack.c.b16 %v284, %v282
  %v373 = vpack.c.b16 %v287, %v285
  %v374 = vpack.c.b16 %v288, %v286
  %v375 = vpack.c.b16 %v291, %v289
  %v376 = vpack.c.b16 %v292, %v290
  %v377 = vpack.c.b16 %v295, %v293
  %v378 = vpack.c.b16 %v296, %v294
  %v379 = vpack.c.b16 %v299, %v297
  %v380 = vpack.c.b16 %v300, %v298
  %v381 = vpack.c.b16 %v303, %v301
  %v382 = vpack.c.b16 %v304, %v302
  %v383 = vpack.c.b16 %v307, %v305
  %v384 = vpack.c.b16 %v308, %v306
  %v385 = vpack.c.b16 %v311, %v309
  %v386 = vpack.c.b16 %v312, %v310
  %v387 = vpack.c.b16 %v315, %v313
  %v388 = vpack.c.b16 %v316, %v314
  %v389 = vpack.c.b16 %v319, %v317
  %v390 = vpack.c.b16 %v320, %v318
  %v391 = vpack.c.b16 %v323, %v321
  %v392 = vpack.c.b16 %v324, %v322
  %v393 = vpack.c.b16 %v327, %v325
  %v394 = vpack.c.b16 %v328, %v326
  %v395 = vpack.c.b16 %v331, %v329
  %v396 = vpack.c.b16 %v332, %v330
  %461 = vmatprep.subr.bf16.mxu0 %v334
  %462 = vmatpush1.bf16.msra.mxu0 %v333
  %463 = vmatprep.subr.bf16.mxu0 %v336
  %464 = vmatpush1.bf16.msra.mxu0 %v335
  %465 = vmatprep.subr.bf16.mxu0 %v338
  %466 = vmatpush1.bf16.msra.mxu0 %v337
  %467 = vmatprep.subr.bf16.mxu0 %v340
  %468 = vmatpush1.bf16.msra.mxu0 %v339
  %469 = vmatprep.subr.bf16.mxu0 %v342
  %470 = vmatpush1.bf16.msra.mxu0 %v341
  %471 = vmatprep.subr.bf16.mxu0 %v344
  %472 = vmatpush1.bf16.msra.mxu0 %v343
  %473 = vmatprep.subr.bf16.mxu0 %v346
  %474 = vmatpush1.bf16.msra.mxu0 %v345
  %475 = vmatprep.subr.bf16.mxu0 %v348
  %476 = vmatpush1.bf16.msra.mxu0 %v347
  %477 = vmatprep.subr.bf16.mxu0 %v350
  %478 = vmatpush1.bf16.msra.mxu0 %v349
  %479 = vmatprep.subr.bf16.mxu0 %v352
  %480 = vmatpush1.bf16.msra.mxu0 %v351
  %481 = vmatprep.subr.bf16.mxu0 %v354
  %482 = vmatpush1.bf16.msra.mxu0 %v353
  %483 = vmatprep.subr.bf16.mxu0 %v356
  %484 = vmatpush1.bf16.msra.mxu0 %v355
  %485 = vmatprep.subr.bf16.mxu0 %v358
  %486 = vmatpush1.bf16.msra.mxu0 %v357
  %487 = vmatprep.subr.bf16.mxu0 %v360
  %488 = vmatpush1.bf16.msra.mxu0 %v359
  %489 = vmatprep.subr.bf16.mxu0 %v362
  %490 = vmatpush1.bf16.msra.mxu0 %v361
  %491 = vmatprep.subr.bf16.mxu0 %v364
  %492 = vmatpush1.bf16.msra.mxu0 %v363
  %493 = vmatprep.mubr.bf16.mxu0 %v134
  %494 = vmatmul.mubr.bf16.gmra.mrb[0].mxu0 %v133
  %v495 = vpop.f32.mrb[0].mxu0
  %v496 = vadd.f32 0.0, %v495
  %v497 = vpop.f32.mrb[0].mxu0
  %v498 = vadd.f32 0.0, %v497
  %v499 = vpop.f32.mrb[0].mxu0
  %v500 = vadd.f32 0.0, %v499
  %v501 = vpop.f32.mrb[0].mxu0
  %v502 = vadd.f32 0.0, %v501
  %503 = vdwg.mxu0
  %504 = vmatprep.subr.bf16.mxu0 %v366
  %505 = vmatpush1.bf16.msra.mxu0 %v365
  %506 = vmatprep.subr.bf16.mxu0 %v368
  %507 = vmatpush1.bf16.msra.mxu0 %v367
  %508 = vmatprep.subr.bf16.mxu0 %v370
  %509 = vmatpush1.bf16.msra.mxu0 %v369
  %510 = vmatprep.subr.bf16.mxu0 %v372
  %511 = vmatpush1.bf16.msra.mxu0 %v371
  %512 = vmatprep.subr.bf16.mxu0 %v374
  %513 = vmatpush1.bf16.msra.mxu0 %v373
  %514 = vmatprep.subr.bf16.mxu0 %v376
  %515 = vmatpush1.bf16.msra.mxu0 %v375
  %516 = vmatprep.subr.bf16.mxu0 %v378
  %517 = vmatpush1.bf16.msra.mxu0 %v377
  %518 = vmatprep.subr.bf16.mxu0 %v380
  %519 = vmatpush1.bf16.msra.mxu0 %v379
  %520 = vmatprep.subr.bf16.mxu0 %v382
  %521 = vmatpush1.bf16.msra.mxu0 %v381
  %522 = vmatprep.subr.bf16.mxu0 %v384
  %523 = vmatpush1.bf16.msra.mxu0 %v383
  %524 = vmatprep.subr.bf16.mxu0 %v386
  %525 = vmatpush1.bf16.msra.mxu0 %v385
  %526 = vmatprep.subr.bf16.mxu0 %v388
  %527 = vmatpush1.bf16.msra.mxu0 %v387
  %528 = vmatprep.subr.bf16.mxu0 %v390
  %529 = vmatpush1.bf16.msra.mxu0 %v389
  %530 = vmatprep.subr.bf16.mxu0 %v392
  %531 = vmatpush1.bf16.msra.mxu0 %v391
  %532 = vmatprep.subr.bf16.mxu0 %v394
  %533 = vmatpush1.bf16.msra.mxu0 %v393
  %534 = vmatprep.subr.bf16.mxu0 %v396
  %535 = vmatpush1.bf16.msra.mxu0 %v395
  %536 = vmatprep.mubr.bf16.mxu0 %v136
  %537 = vmatmul.mubr.bf16.gmra.mrb[0].mxu0 %v135
  %v538 = vpop.f32.mrb[0].mxu0
  %v539 = vadd.f32 %v496, %v538
  %v540 = vpop.f32.mrb[0].mxu0
  %v541 = vadd.f32 %v498, %v540
  %v542 = vpop.f32.mrb[0].mxu0
  %v543 = vadd.f32 %v500, %v542
  %v544 = vpop.f32.mrb[0].mxu0
  %v545 = vadd.f32 %v502, %v544
  %546 = vdwg.mxu0
  %v549 = vunpack.c.l.b16 %v19
  %v550 = vunpack.c.h.b16 %v19
  %v551 = vunpack.c.l.b16 %v20
  %v552 = vunpack.c.h.b16 %v20
  %v553 = vpack.c.b16 %v551, %v549
  %v554 = vpack.c.b16 %v552, %v550
  %v589 = vunpack.c.l.b16 %v21
  %v590 = vunpack.c.h.b16 %v21
  %v591 = vunpack.c.l.b16 %v22
  %v592 = vunpack.c.h.b16 %v22
  %v593 = vunpack.c.l.b16 %v23
  %v594 = vunpack.c.h.b16 %v23
  %v595 = vunpack.c.l.b16 %v24
  %v596 = vunpack.c.h.b16 %v24
  %v597 = vunpack.c.l.b16 %v25
  %v598 = vunpack.c.h.b16 %v25
  %v599 = vunpack.c.l.b16 %v26
  %v600 = vunpack.c.h.b16 %v26
  %v601 = vunpack.c.l.b16 %v27
  %v602 = vunpack.c.h.b16 %v27
  %v603 = vunpack.c.l.b16 %v28
  %v604 = vunpack.c.h.b16 %v28
  %v605 = vunpack.c.l.b16 %v29
  %v606 = vunpack.c.h.b16 %v29
  %v607 = vunpack.c.l.b16 %v30
  %v608 = vunpack.c.h.b16 %v30
  %v609 = vunpack.c.l.b16 %v31
  %v610 = vunpack.c.h.b16 %v31
  %v611 = vunpack.c.l.b16 %v32
  %v612 = vunpack.c.h.b16 %v32
  %v613 = vunpack.c.l.b16 %v33
  %v614 = vunpack.c.h.b16 %v33
  %v615 = vunpack.c.l.b16 %v34
  %v616 = vunpack.c.h.b16 %v34
  %v617 = vunpack.c.l.b16 %v35
  %v618 = vunpack.c.h.b16 %v35
  %v619 = vunpack.c.l.b16 %v36
  %v620 = vunpack.c.h.b16 %v36
  %v621 = vunpack.c.l.b16 %v37
  %v622 = vunpack.c.h.b16 %v37
  %v623 = vunpack.c.l.b16 %v38
  %v624 = vunpack.c.h.b16 %v38
  %v625 = vunpack.c.l.b16 %v39
  %v626 = vunpack.c.h.b16 %v39
  %v627 = vunpack.c.l.b16 %v40
  %v628 = vunpack.c.h.b16 %v40
  %v629 = vunpack.c.l.b16 %v41
  %v630 = vunpack.c.h.b16 %v41
  %v631 = vunpack.c.l.b16 %v42
  %v632 = vunpack.c.h.b16 %v42
  %v633 = vunpack.c.l.b16 %v43
  %v634 = vunpack.c.h.b16 %v43
  %v635 = vunpack.c.l.b16 %v44
  %v636 = vunpack.c.h.b16 %v44
  %v637 = vunpack.c.l.b16 %v45
  %v638 = vunpack.c.h.b16 %v45
  %v639 = vunpack.c.l.b16 %v46
  %v640 = vunpack.c.h.b16 %v46
  %v641 = vunpack.c.l.b16 %v47
  %v642 = vunpack.c.h.b16 %v47
  %v643 = vunpack.c.l.b16 %v48
  %v644 = vunpack.c.h.b16 %v48
  %v645 = vunpack.c.l.b16 %v49
  %v646 = vunpack.c.h.b16 %v49
  %v647 = vunpack.c.l.b16 %v50
  %v648 = vunpack.c.h.b16 %v50
  %v649 = vunpack.c.l.b16 %v51
  %v650 = vunpack.c.h.b16 %v51
  %v651 = vunpack.c.l.b16 %v52
  %v652 = vunpack.c.h.b16 %v52
  %v653 = vpack.c.b16 %v591, %v589
  %v654 = vpack.c.b16 %v592, %v590
  %v655 = vpack.c.b16 %v595, %v593
  %v656 = vpack.c.b16 %v596, %v594
  %v657 = vpack.c.b16 %v599, %v597
  %v658 = vpack.c.b16 %v600, %v598
  %v659 = vpack.c.b16 %v603, %v601
  %v660 = vpack.c.b16 %v604, %v602
  %v661 = vpack.c.b16 %v607, %v605
  %v662 = vpack.c.b16 %v608, %v606
  %v663 = vpack.c.b16 %v611, %v609
  %v664 = vpack.c.b16 %v612, %v610
  %v665 = vpack.c.b16 %v615, %v613
  %v666 = vpack.c.b16 %v616, %v614
  %v667 = vpack.c.b16 %v619, %v617
  %v668 = vpack.c.b16 %v620, %v618
  %v669 = vpack.c.b16 %v623, %v621
  %v670 = vpack.c.b16 %v624, %v622
  %v671 = vpack.c.b16 %v627, %v625
  %v672 = vpack.c.b16 %v628, %v626
  %v673 = vpack.c.b16 %v631, %v629
  %v674 = vpack.c.b16 %v632, %v630
  %v675 = vpack.c.b16 %v635, %v633
  %v676 = vpack.c.b16 %v636, %v634
  %v677 = vpack.c.b16 %v639, %v637
  %v678 = vpack.c.b16 %v640, %v638
  %v679 = vpack.c.b16 %v643, %v641
  %v680 = vpack.c.b16 %v644, %v642
  %v681 = vpack.c.b16 %v647, %v645
  %v682 = vpack.c.b16 %v648, %v646
  %v683 = vpack.c.b16 %v651, %v649
  %v684 = vpack.c.b16 %v652, %v650
  %717 = vmatprep.subr.bf16.mxu0 %v654
  %718 = vmatpush1.bf16.msra.mxu0 %v653
  %719 = vmatprep.subr.bf16.mxu0 %v656
  %720 = vmatpush1.bf16.msra.mxu0 %v655
  %721 = vmatprep.subr.bf16.mxu0 %v658
  %722 = vmatpush1.bf16.msra.mxu0 %v657
  %723 = vmatprep.subr.bf16.mxu0 %v660
  %724 = vmatpush1.bf16.msra.mxu0 %v659
  %725 = vmatprep.subr.bf16.mxu0 %v662
  %726 = vmatpush1.bf16.msra.mxu0 %v661
  %727 = vmatprep.subr.bf16.mxu0 %v664
  %728 = vmatpush1.bf16.msra.mxu0 %v663
  %729 = vmatprep.subr.bf16.mxu0 %v666
  %730 = vmatpush1.bf16.msra.mxu0 %v665
  %731 = vmatprep.subr.bf16.mxu0 %v668
  %732 = vmatpush1.bf16.msra.mxu0 %v667
  %733 = vmatprep.subr.bf16.mxu0 %v670
  %734 = vmatpush1.bf16.msra.mxu0 %v669
  %735 = vmatprep.subr.bf16.mxu0 %v672
  %736 = vmatpush1.bf16.msra.mxu0 %v671
  %737 = vmatprep.subr.bf16.mxu0 %v674
  %738 = vmatpush1.bf16.msra.mxu0 %v673
  %739 = vmatprep.subr.bf16.mxu0 %v676
  %740 = vmatpush1.bf16.msra.mxu0 %v675
  %741 = vmatprep.subr.bf16.mxu0 %v678
  %742 = vmatpush1.bf16.msra.mxu0 %v677
  %743 = vmatprep.subr.bf16.mxu0 %v680
  %744 = vmatpush1.bf16.msra.mxu0 %v679
  %745 = vmatprep.subr.bf16.mxu0 %v682
  %746 = vmatpush1.bf16.msra.mxu0 %v681
  %747 = vmatprep.subr.bf16.mxu0 %v684
  %748 = vmatpush1.bf16.msra.mxu0 %v683
  %749 = vmatprep.mubr.bf16.mxu0 %v554
  %750 = vmatmul.mubr.bf16.gmra.mrb[0].mxu0 %v553
  %v751 = vpop.f32.mrb[0].mxu0
  %v752 = vadd.f32 %v539, %v751
  %v753 = vpop.f32.mrb[0].mxu0
  %v754 = vadd.f32 %v541, %v753
  %v755 = vpop.f32.mrb[0].mxu0
  %v756 = vadd.f32 %v543, %v755
  %v757 = vpop.f32.mrb[0].mxu0
  %v758 = vadd.f32 %v545, %v757
  %759 = vdwg.mxu0
  %760 = vst [vmem:[%s4] sm:$0xff] %v752
  %761 = vst [vmem:[%s4 + $0x8] sm:$0xff] %v754
  %762 = vst [vmem:[%s4 + $0x10] sm:$0xff] %v756
  %763 = vst [vmem:[%s4 + $0x18] sm:$0xff] %v758
  %p764 = scmp.eq.s32.totalorder 0, 0
  // Predicated region
  $region18: #{pointnet2_decoder_without_cls_head.18} parent=0 // pred_check
    %p765 = pneg %p764
  $region19: #{pointnet2_decoder_without_cls_head.18} parent=0 // pred_check_branch
    %767 = sbr.rel (%p765) target = $region21
  $region20: #{pointnet2_decoder_without_cls_head.18} parent=0 // pred_region
    %768 = vst [vmem:[%s5] sm:$0xf] 0.0
  $region21: #{pointnet2_decoder_without_cls_head.18} parent=0 // pred_fallthru
    _
  %v769 = vld [vmem:[%s5] ss:$2 sm:$0x3]
  %v770 = vadd.f32 %v752, %v756
  %v771 = vrot.slane %v770, 4
  %v772 = vadd.f32 %v770, %v771
  %v773 = vrot.slane %v772, 2
  %v774 = vadd.f32 %v772, %v773
  %v775 = vrot.slane %v774, 1
  %v776 = vadd.f32 %v774, %v775
  %v777 = vadd.f32 %v754, %v758
  %v778 = vrot.slane %v777, 4
  %v779 = vadd.f32 %v777, %v778
  %v780 = vrot.slane %v779, 2
  %v781 = vadd.f32 %v779, %v780
  %v782 = vrot.slane %v781, 1
  %v783 = vadd.f32 %v781, %v782
  %v786 = vcombine.low %v776, %v783
  %v788 = vunpack.c.l.s4 1966171168
  %v789 = vunpack.c.0.s8 %v788
  %v790 = vlaneseq
  %v791 = vshrl.u32 %v790, 7
  %v792 = vsub.s32 %v789, %v791
  %v793 = vrot.slane %v786, %v792
  %v795 = vunpack.c.l.s4 1966171168
  %v796 = vunpack.c.0.s8 %v795
  %v797 = vlaneseq
  %v798 = vshrl.u32 %v797, 7
  %v799 = vsub.s32 %v796, %v798
  %v800 = vrot.slane %v793, %v799
  %v802 = vadd.f32 %v769, %v800
  %v803 = vlaneseq
  %vm804 = vcmp.ge.s32.totalorder %v803, 0
  %vm805 = vcmp.lt.s32.totalorder %v803, 256
  %vm806 = vmand %vm804, %vm805
  %807 = vst.msk [vmem:[%s5] ss:$2 sm:$0x3] %vm806, %v802
  %s808 = scalar_lea.vmem %s5, 1
  %v809 = vld [vmem:[%s808] ss:$2 sm:$0x3]
  %v810 = vmul.f32 %v752, %v752
  %v811 = vmul.f32 %v754, %v754
  %v812 = vmul.f32 %v756, %v756
  %v813 = vmul.f32 %v758, %v758
  %v814 = vadd.f32 %v810, %v812
  %v815 = vrot.slane %v814, 4
  %v816 = vadd.f32 %v814, %v815
  %v817 = vrot.slane %v816, 2
  %v818 = vadd.f32 %v816, %v817
  %v819 = vrot.slane %v818, 1
  %v820 = vadd.f32 %v818, %v819
  %v821 = vadd.f32 %v811, %v813
  %v822 = vrot.slane %v821, 4
  %v823 = vadd.f32 %v821, %v822
  %v824 = vrot.slane %v823, 2
  %v825 = vadd.f32 %v823, %v824
  %v826 = vrot.slane %v825, 1
  %v827 = vadd.f32 %v825, %v826
  %v830 = vcombine.low %v820, %v827
  %v832 = vunpack.c.l.s4 1966171168
  %v833 = vunpack.c.0.s8 %v832
  %v834 = vlaneseq
  %v835 = vshrl.u32 %v834, 7
  %v836 = vsub.s32 %v833, %v835
  %v837 = vrot.slane %v830, %v836
  %v839 = vunpack.c.l.s4 1966171168
  %v840 = vunpack.c.0.s8 %v839
  %v841 = vlaneseq
  %v842 = vshrl.u32 %v841, 7
  %v843 = vsub.s32 %v840, %v842
  %v844 = vrot.slane %v837, %v843
  %v846 = vadd.f32 %v809, %v844
  %847 = vst.msk [vmem:[%s808] ss:$2 sm:$0x3] %vm806, %v846
  // Predicated region
  $region22: #{pointnet2_decoder_without_cls_head.18} parent=0 // pred_check
    _
  $region23: #{pointnet2_decoder_without_cls_head.18} parent=0 // pred_check_branch
    %849 = sbr.rel (0) target = $region25
  $region24: #{pointnet2_decoder_without_cls_head.18} parent=0 // pred_region
    _
  $region25: #{pointnet2_decoder_without_cls_head.18} parent=0 // pred_fallthru
    _
  // Predicated region
  $region26: #{pointnet2_decoder_without_cls_head.18} parent=0 // pred_check
    _
  $region27: #{pointnet2_decoder_without_cls_head.18} parent=0 // pred_check_branch
    %851 = sbr.rel (0) target = $region29
  $region28: #{pointnet2_decoder_without_cls_head.18} parent=0 // pred_region
    _
  $region29: #{pointnet2_decoder_without_cls_head.18} parent=0 // pred_fallthru
    _
  // Predicated region
  $region30: #{pointnet2_decoder_without_cls_head.18} parent=0 // pred_check
    _
  $region31: #{pointnet2_decoder_without_cls_head.18} parent=0 // pred_check_branch
    %853 = sbr.rel (0) target = $region33
  $region32: #{pointnet2_decoder_without_cls_head.18} parent=0 // pred_region
    _
  $region33: #{pointnet2_decoder_without_cls_head.18} parent=0 // pred_fallthru
    _
  // Predicated region
  $region34: #{pointnet2_decoder_without_cls_head.18} parent=0 // pred_check
    _
  $region35: #{pointnet2_decoder_without_cls_head.18} parent=0 // pred_check_branch
    %855 = sbr.rel (0) target = $region37
  $region36: #{pointnet2_decoder_without_cls_head.18} parent=0 // pred_region
    _
  $region37: #{pointnet2_decoder_without_cls_head.18} parent=0 // pred_fallthru
    _

// kernel: pointnet2_decoder_without_cls_head.21
$region0: #{pointnet2_decoder_without_cls_head.21}
  #allocation0 [shape = 'u32[]', space=smem, size = 0x4, offset = 0x4, fixed_abs, tag = 'smem constant byte address 0x4 - core index']
  #allocation1 [shape = 'u32[144,128]{1,0:T(1,128)}', space=vmem, size = 0x12000, scoped, tag = 'internal scratch']
  %s0 = inlined_call_operand.vmem [shape: f32[2,16,8], index: 0, kind: input, shape index: {}]
  %s1 = inlined_call_operand.vmem [shape: f32[2,8,8], index: 1, kind: input, shape index: {}]
  %s2 = inlined_call_operand.vmem [shape: bf16[2,8,256], index: 2, kind: input, shape index: {}]
  %s3 = inlined_call_operand.vmem [shape: bf16[2,16,256], index: 3, kind: output, shape index: {}]
  %s4 = sld [smem:[#allocation0]]
  $region45: #{pointnet2_decoder_without_cls_head.21} parent=0
    _
  %s6 = ssub.s32 1, %s4
  %s7 = scalar_select 0, %s6, %s4
  loop: start=0, step=1, limit=4
  $region2: #{pointnet2_decoder_without_cls_head.21} parent=0 // loop_pre_header
    _
  $region3: #{pointnet2_decoder_without_cls_head.21} parent=0 // loop_header
    %s9 = sphi 0, %s13
    %p10 = scmp.ge.s32.totalorder %s9, 4
    %s16 = sphi 0, %s28
    %s17 = sphi 0, %s24
    %s18 = sphi 0, %s16
    %s19 = sphi 0, %s17
    %s20 = sphi 0, %s18
    %s21 = sphi 0, %s19
    %s33 = sphi 0, %s35
    %s36 = sphi 0, %s33
    %s37 = sphi 0, %s36
    %s53 = sphi 0, %s37
    %s59 = sphi 0, %s61
    %s62 = sphi 0, %s59
    %s63 = sphi 0, %s62
    %s79 = sphi 0, %s63
    %s85 = sphi 0, %s87
    %s88 = sphi 0, %s85
    %s89 = sphi 0, %s88
    %s105 = sphi 0, %s89
    %s113 = sphi 0, %s115
    %s116 = sphi 0, %s113
    %s117 = sphi 0, %s116
    %s133 = sphi 0, %s117
  $region4: #{pointnet2_decoder_without_cls_head.21} parent=0 // loop_header_branch
    %12 = sbr.rel (%p10) target = $region8
  $region5: #{pointnet2_decoder_without_cls_head.21} parent=0 // loop_body
    %s14 = ssub.s32 %s9, 1
    %s15 = ssub.s32 %s9, 2
    %s22 = sadd.s32 1, %s17
    %p23 = scmp.ge.s32.totalorder %s22, 1
    %s24 = scalar_select %p23, 0, %s22
    %s25 = sadd.s32 1, %s16
    %s26 = scalar_select %p23, %s25, %s16
    %p27 = scmp.ge.s32.totalorder %s26, 2
    %s28 = scalar_select %p27, 0, %s26
    %s29 = ssub.s32 %s16, %s28
    %s30 = ssub.s32 %s17, %s24
    %s31 = sor.u32 %s29, %s30
    %p32 = scmp.eq.s32.totalorder %s31, 0
    %s34 = sadd.s32 %s33, 1
    %s35 = scalar_select %p32, %s33, %s34
    %p38 = pneg %p32
    %p39 = scmp.eq.s32.totalorder %s9, 1
    %p40 = por %p38, %p39
    %p41 = scmp.ne.s32.totalorder %s33, %s36
    %p42 = scmp.eq.s32.totalorder %s9, 0
    %p43 = por %p41, %p42
    %p44 = scmp.ne.s32.totalorder %s33, %s36
    %p45 = scmp.eq.s32.totalorder %s14, 1
    %p46 = por %p44, %p45
    %p47 = scmp.ne.s32.totalorder %s36, %s37
    %p48 = scmp.eq.s32.totalorder %s14, 0
    %p49 = por %p47, %p48
    %p50 = scmp.ne.s32.totalorder %s36, %s37
    %p51 = scmp.eq.s32.totalorder %s15, 1
    %p52 = por %p50, %p51
    %p54 = scmp.ne.s32.totalorder %s37, %s53
    %p55 = scmp.eq.s32.totalorder %s15, 0
    %p56 = por %p54, %p55
    %s57 = ssub.s32 %s16, %s28
    %p58 = scmp.eq.s32.totalorder %s57, 0
    %s60 = sadd.s32 %s59, 1
    %s61 = scalar_select %p58, %s59, %s60
    %p64 = pneg %p58
    %p65 = scmp.eq.s32.totalorder %s9, 1
    %p66 = por %p64, %p65
    %p67 = scmp.ne.s32.totalorder %s59, %s62
    %p68 = scmp.eq.s32.totalorder %s9, 0
    %p69 = por %p67, %p68
    %p70 = scmp.ne.s32.totalorder %s59, %s62
    %p71 = scmp.eq.s32.totalorder %s14, 1
    %p72 = por %p70, %p71
    %p73 = scmp.ne.s32.totalorder %s62, %s63
    %p74 = scmp.eq.s32.totalorder %s14, 0
    %p75 = por %p73, %p74
    %p76 = scmp.ne.s32.totalorder %s62, %s63
    %p77 = scmp.eq.s32.totalorder %s15, 1
    %p78 = por %p76, %p77
    %p80 = scmp.ne.s32.totalorder %s63, %s79
    %p81 = scmp.eq.s32.totalorder %s15, 0
    %p82 = por %p80, %p81
    %s83 = ssub.s32 %s16, %s28
    %p84 = scmp.eq.s32.totalorder %s83, 0
    %s86 = sadd.s32 %s85, 1
    %s87 = scalar_select %p84, %s85, %s86
    %p90 = pneg %p84
    %p91 = scmp.eq.s32.totalorder %s9, 1
    %p92 = por %p90, %p91
    %p93 = scmp.ne.s32.totalorder %s85, %s88
    %p94 = scmp.eq.s32.totalorder %s9, 0
    %p95 = por %p93, %p94
    %p96 = scmp.ne.s32.totalorder %s85, %s88
    %p97 = scmp.eq.s32.totalorder %s14, 1
    %p98 = por %p96, %p97
    %p99 = scmp.ne.s32.totalorder %s88, %s89
    %p100 = scmp.eq.s32.totalorder %s14, 0
    %p101 = por %p99, %p100
    %p102 = scmp.ne.s32.totalorder %s88, %s89
    %p103 = scmp.eq.s32.totalorder %s15, 1
    %p104 = por %p102, %p103
    %p106 = scmp.ne.s32.totalorder %s89, %s105
    %p107 = scmp.eq.s32.totalorder %s15, 0
    %p108 = por %p106, %p107
    %s109 = ssub.s32 %s16, %s28
    %s110 = ssub.s32 %s17, %s24
    %s111 = sor.u32 %s109, %s110
    %p112 = scmp.eq.s32.totalorder %s111, 0
    %s114 = sadd.s32 %s113, 1
    %s115 = scalar_select %p112, %s113, %s114
    %p118 = pneg %p112
    %p119 = scmp.eq.s32.totalorder %s9, 1
    %p120 = por %p118, %p119
    %p121 = scmp.ne.s32.totalorder %s113, %s116
    %p122 = scmp.eq.s32.totalorder %s9, 0
    %p123 = por %p121, %p122
    %p124 = scmp.ne.s32.totalorder %s113, %s116
    %p125 = scmp.eq.s32.totalorder %s14, 1
    %p126 = por %p124, %p125
    %p127 = scmp.ne.s32.totalorder %s116, %s117
    %p128 = scmp.eq.s32.totalorder %s14, 0
    %p129 = por %p127, %p128
    %p130 = scmp.ne.s32.totalorder %s116, %s117
    %p131 = scmp.eq.s32.totalorder %s15, 1
    %p132 = por %p130, %p131
    %p134 = scmp.ne.s32.totalorder %s117, %s133
    %p135 = scmp.eq.s32.totalorder %s15, 0
    %p136 = por %p134, %p135
    %p137 = scmp.le.s32.totalorder 1, %s9
    %p138 = scmp.lt.s32.totalorder %s9, 3
    %p139 = pnand %p137, %p138
    %p140 = pneg %p139
    // Predicated region
    $region9: #{pointnet2_decoder_without_cls_head.21} parent=5 // pred_check
      _
    $region10: #{pointnet2_decoder_without_cls_head.21} parent=5 // pred_check_branch
      %142 = sbr.rel (%p139) target = $region12
    $region11: #{pointnet2_decoder_without_cls_head.21} parent=5 // pred_region
      %s143 = ssub.s32 %s9, 1
    $region12: #{pointnet2_decoder_without_cls_head.21} parent=5 // pred_fallthru
      _
    %p144 = scmp.lt.s32.totalorder %s9, 2
    // Predicated region
    $region13: #{pointnet2_decoder_without_cls_head.21} parent=5 // pred_check
      %p145 = pneg %p144
    $region14: #{pointnet2_decoder_without_cls_head.21} parent=5 // pred_check_branch
      %147 = sbr.rel (%p145) target = $region16
    $region15: #{pointnet2_decoder_without_cls_head.21} parent=5 // pred_region
      // Predicated region
      $region17: #{pointnet2_decoder_without_cls_head.21} parent=15 // pred_check
        %p148 = pneg %p43
      $region18: #{pointnet2_decoder_without_cls_head.21} parent=15 // pred_check_branch
        %150 = sbr.rel (%p148) target = $region20
      $region19: #{pointnet2_decoder_without_cls_head.21} parent=15 // pred_region
        %s151 = smul.u32 2, %s17
        %p152 = scmp.lt.s32.totalorder %s16, 1
        %s153 = scalar_select %p152, %s16, 1
        %p154 = scmp.lt.s32.totalorder %s151, 1
        %s155 = scalar_select %p154, %s151, 1
        %s156 = smul.addr %s153, 2
        %s157 = sadd.s32 %s155, %s156
        %s158 = smul.addr %s157, 8
        %s159 = scalar_lea.vmem %s0, %s158
        %s160 = smul.u32 2, %s17
      $region20: #{pointnet2_decoder_without_cls_head.21} parent=15 // pred_fallthru
        _
      // Predicated region
      $region21: #{pointnet2_decoder_without_cls_head.21} parent=15 // pred_check
        %p161 = pneg %p69
      $region22: #{pointnet2_decoder_without_cls_head.21} parent=15 // pred_check_branch
        %163 = sbr.rel (%p161) target = $region24
      $region23: #{pointnet2_decoder_without_cls_head.21} parent=15 // pred_region
        %p164 = scmp.lt.s32.totalorder %s16, 1
        %s165 = scalar_select %p164, %s16, 1
        %s166 = smul.addr %s165, 8
        %s167 = scalar_lea.vmem %s1, %s166
      $region24: #{pointnet2_decoder_without_cls_head.21} parent=15 // pred_fallthru
        _
      // Predicated region
      $region25: #{pointnet2_decoder_without_cls_head.21} parent=15 // pred_check
        %p168 = pneg %p95
      $region26: #{pointnet2_decoder_without_cls_head.21} parent=15 // pred_check_branch
        %170 = sbr.rel (%p168) target = $region28
      $region27: #{pointnet2_decoder_without_cls_head.21} parent=15 // pred_region
        %p171 = scmp.lt.s32.totalorder %s16, 1
        %s172 = scalar_select %p171, %s16, 1
        %s173 = smul.addr %s172, 2
        %s174 = smul.addr %s173, 4
        %s175 = scalar_lea.vmem %s2, %s174
      $region28: #{pointnet2_decoder_without_cls_head.21} parent=15 // pred_fallthru
        _
    $region16: #{pointnet2_decoder_without_cls_head.21} parent=5 // pred_fallthru
      _
    %p176 = scmp.le.s32.totalorder 1, %s9
    %p177 = scmp.lt.s32.totalorder %s9, 3
    %p178 = pnand %p176, %p177
    %p179 = pneg %p178
    // Predicated region
    $region29: #{pointnet2_decoder_without_cls_head.21} parent=5 // pred_check
      _
    $region30: #{pointnet2_decoder_without_cls_head.21} parent=5 // pred_check_branch
      %181 = sbr.rel (%p178) target = $region32
    $region31: #{pointnet2_decoder_without_cls_head.21} parent=5 // pred_region
      %s182 = ssub.s32 %s9, 1
      %s183 = smul.u32 2, %s19
      %p184 = scmp.lt.s32.totalorder %s18, 1
      %s185 = scalar_select %p184, %s18, 1
      %p186 = scmp.lt.s32.totalorder %s183, 1
      %s187 = scalar_select %p186, %s183, 1
      %s188 = smul.addr %s185, 2
      %s189 = sadd.s32 %s187, %s188
      %s190 = smul.addr %s189, 8
      %s191 = scalar_lea.vmem %s0, %s190
      %p192 = pneg %p49
      %p193 = pneg %p46
      %p194 = scmp.lt.s32.totalorder %s18, 1
      %s195 = scalar_select %p194, %s18, 1
      %s196 = smul.addr %s195, 8
      %s197 = scalar_lea.vmem %s1, %s196
      %p198 = pneg %p75
      %p199 = pneg %p72
      %p200 = scmp.lt.s32.totalorder %s18, 1
      %s201 = scalar_select %p200, %s18, 1
      %s202 = smul.addr %s201, 2
      %s203 = smul.addr %s202, 4
      %s204 = scalar_lea.vmem %s2, %s203
      %p205 = pneg %p101
      %p206 = pneg %p98
      %p207 = pneg %p129
      %p208 = pneg %p126
      %s209 = smul.u32 2, %s19
      %p210 = scmp.lt.s32.totalorder %s18, 1
      %s211 = scalar_select %p210, %s18, 1
      %p212 = scmp.lt.s32.totalorder %s209, 1
      %s213 = scalar_select %p212, %s209, 1
      %s214 = smul.addr %s213, 2
      %s215 = smul.addr %s211, 4
      %s216 = sadd.s32 %s214, %s215
      %s217 = smul.addr %s216, 4
      %s218 = scalar_lea.vmem %s3, %s217
      %s219 = smul.u32 2, %s19
      %p220 = scmp.lt.s32.totalorder %s18, 1
      %s221 = scalar_select %p220, %s18, 1
      %p222 = scmp.lt.s32.totalorder %s219, 1
      %s223 = scalar_select %p222, %s219, 1
      %s224 = smul.addr %s221, 2
      %s225 = sadd.s32 %s223, %s224
      %s226 = smul.addr %s225, 8
      %s227 = scalar_lea.vmem %s0, %s226
      %s228 = smul.u32 2, %s19
      %p229 = scmp.lt.s32.totalorder %s18, 1
      %s230 = scalar_select %p229, %s18, 1
      %s231 = smul.addr %s230, 8
      %s232 = scalar_lea.vmem %s1, %s231
      %p233 = scmp.lt.s32.totalorder %s18, 1
      %s234 = scalar_select %p233, %s18, 1
      %s235 = smul.addr %s234, 2
      %s236 = smul.addr %s235, 4
      %s237 = scalar_lea.vmem %s2, %s236
      %s238 = smul.u32 2, %s19
      %p239 = scmp.lt.s32.totalorder %s18, 1
      %s240 = scalar_select %p239, %s18, 1
      %p241 = scmp.lt.s32.totalorder %s238, 1
      %s242 = scalar_select %p241, %s238, 1
      %s243 = smul.addr %s242, 2
      %s244 = smul.addr %s240, 4
      %s245 = sadd.s32 %s243, %s244
      %s246 = smul.addr %s245, 4
      %s247 = scalar_lea.vmem %s3, %s246
      %s248 = smul.u32 2, %s19
      %v250 = vld [vmem:[%s227] sm:$0xff]
      %v251 = vld [vmem:[%s227 + $0x8] sm:$0xff]
      %v252 = vld [vmem:[%s232] sm:$0xff]
      %v253 = vld [vmem:[%s237] sm:$0xff]
      %v254 = vmul.f32 %v250, %v250
      %v255 = vmul.f32 %v251, %v251
      %vm256 = vcmask 64512
      %v257 = vsel %vm256, %v254, 0.0
      %258 = vadd.xlane.f32.xlu0 %v257
      %v259 = vpop.xlane.xlu0 %258
      %v260 = vsel %vm256, %v255, 0.0
      %261 = vadd.xlane.f32.xlu0 %v260
      %v262 = vpop.xlane.xlu0 %261
      %v263 = vmul.f32 %v252, %v252
      %v264 = vsel %vm256, %v263, 0.0
      %v265 = vrot.slane %v264, 4
      %v266 = vadd.f32 %v264, %v265
      %v267 = vrot.slane %v266, 2
      %v268 = vadd.f32 %v266, %v267
      %v269 = vrot.slane %v268, 1
      %v270 = vadd.f32 %v268, %v269
      %v272 = vsel %vm256, %v250, 0
      %v275 = vsel %vm256, %v251, 0
      %277 = vmatprep.subr.mxu0 0.0
      %278 = vmatpush1.msra.mxu0 %v252
      %279 = vmatprep.subr.mxu0 0.0
      %280 = vmatpush1.msra.mxu0 0.0
      %281 = vmatprep.subr.mxu0 0.0
      %282 = vmatpush1.msra.mxu0 0.0
      %283 = vmatprep.subr.mxu0 0.0
      %284 = vmatpush1.msra.mxu0 0.0
      %285 = vmatprep.subr.mxu0 0.0
      %286 = vmatpush1.msra.mxu0 0.0
      %287 = vmatprep.subr.mxu0 0.0
      %288 = vmatpush1.msra.mxu0 0.0
      %289 = vmatprep.subr.mxu0 0.0
      %290 = vmatpush1.msra.mxu0 0.0
      %291 = vmatprep.subr.mxu0 0.0
      %292 = vmatpush1.msra.mxu0 0.0
      %293 = vmatprep.subr.mxu0 0.0
      %294 = vmatpush1.msra.mxu0 0.0
      %295 = vmatprep.subr.mxu0 0.0
      %296 = vmatpush1.msra.mxu0 0.0
      %297 = vmatprep.subr.mxu0 0.0
      %298 = vmatpush1.msra.mxu0 0.0
      %299 = vmatprep.subr.mxu0 0.0
      %300 = vmatpush1.msra.mxu0 0.0
      %301 = vmatprep.subr.mxu0 0.0
      %302 = vmatpush1.msra.mxu0 0.0
      %303 = vmatprep.subr.mxu0 0.0
      %304 = vmatpush1.msra.mxu0 0.0
      %305 = vmatprep.subr.mxu0 0.0
      %306 = vmatpush1.msra.mxu0 0.0
      %307 = vmatprep.subr.mxu0 0.0
      %308 = vmatpush1.msra.mxu0 0.0
      %309 = vmatprep.subr.mxu0 0.0
      %310 = vmatpush1.msra.mxu0 0.0
      %311 = vmatprep.subr.mxu0 0.0
      %312 = vmatpush1.msra.mxu0 0.0
      %313 = vmatprep.subr.mxu0 0.0
      %314 = vmatpush1.msra.mxu0 0.0
      %315 = vmatprep.subr.mxu0 0.0
      %316 = vmatpush1.msra.mxu0 0.0
      %317 = vmatprep.subr.mxu0 0.0
      %318 = vmatpush1.msra.mxu0 0.0
      %319 = vmatprep.subr.mxu0 0.0
      %320 = vmatpush1.msra.mxu0 0.0
      %321 = vmatprep.subr.mxu0 0.0
      %322 = vmatpush1.msra.mxu0 0.0
      %323 = vmatprep.subr.mxu0 0.0
      %324 = vmatpush1.msra.mxu0 0.0
      %325 = vmatprep.subr.mxu0 0.0
      %326 = vmatpush1.msra.mxu0 0.0
      %327 = vmatprep.subr.mxu0 0.0
      %328 = vmatpush1.msra.mxu0 0.0
      %329 = vmatprep.subr.mxu0 0.0
      %330 = vmatpush1.msra.mxu0 0.0
      %331 = vmatprep.subr.mxu0 0.0
      %332 = vmatpush1.msra.mxu0 0.0
      %333 = vmatprep.subr.mxu0 0.0
      %334 = vmatpush1.msra.mxu0 0.0
      %335 = vmatprep.subr.mxu0 0.0
      %336 = vmatpush1.msra.mxu0 0.0
      %337 = vmatprep.subr.mxu0 0.0
      %338 = vmatpush1.msra.mxu0 0.0
      %339 = vmatprep.subr.mxu0 0.0
      %340 = vmatpush1.msra.mxu0 0.0
      %341 = vmatprep.mubr.f32.mxu0 0.0
      %342 = vmatmul.mubr.f32.gmra.mrb[0].mxu0 %v272
      %v343 = vpop.f32.mrb[0].mxu0
      %v344 = vadd.f32 0.0, %v343
      %v345 = vpop.f32.mrb[0].mxu0
      %346 = vmatprep.mubr.f32.mxu0 0.0
      %347 = vmatmul.mubr.f32.gmra.mrb[0].mxu0 %v275
      %v348 = vpop.f32.mrb[0].mxu0
      %v349 = vadd.f32 0.0, %v348
      %v350 = vpop.f32.mrb[0].mxu0
      %351 = vdwg.mxu0
      %v352 = vadd.f32 %v259, %v270
      %v353 = vadd.f32 %v262, %v270
      %v354 = vmul.f32 %v344, 2.0
      %v355 = vmul.f32 %v349, 2.0
      %v356 = vsub.f32 %v352, %v354
      %v357 = vsub.f32 %v353, %v355
      %v358 = vlaneseq
      %v359 = vand.u32 %v358, 127
      %v360 = vsel %vm256, %v356, inf
      %361 = vmin.xlane.f32.xlu0 %v360
      %v362 = vpop.xlane.xlu0 %361
      %v363 = vsel %vm256, %v357, inf
      %364 = vmin.xlane.f32.xlu0 %v363
      %v365 = vpop.xlane.xlu0 %364
      %vm366 = vcmp.eq.f32.partialorder %v356, %v362
      %vm367 = vcmp.eq.f32.partialorder %v357, %v365
      %v368 = vsel %vm366, %v359, 8
      %v369 = vsel %vm367, %v359, 8
      %v370 = vsel %vm256, %v368, 2147483647
      %v371 = vand.u32 %v370, 65535
      %v372 = vshra.s32 %v370, 16
      %v373 = vcvt.s32.f32 %v371
      %v374 = vcvt.s32.f32 %v372
      %375 = vmin.xlane.f32.xlu0 %v374
      %v376 = vpop.xlane.xlu0 %375
      %vm377 = vcmp.eq.f32.partialorder %v374, %v376
      %v378 = vsel %vm377, %v373, inf
      %379 = vmin.xlane.f32.xlu0 %v378
      %v380 = vpop.xlane.xlu0 %379
      %v381 = vcvt.f32.s32 %v380
      %v382 = vcvt.f32.s32 %v376
      %v383 = vshll.u32 %v382, 16
      %v384 = vadd.s32 %v383, %v381
      %v385 = vsel %vm256, %v369, 2147483647
      %v386 = vand.u32 %v385, 65535
      %v387 = vshra.s32 %v385, 16
      %v388 = vcvt.s32.f32 %v386
      %v389 = vcvt.s32.f32 %v387
      %390 = vmin.xlane.f32.xlu0 %v389
      %v391 = vpop.xlane.xlu0 %390
      %vm392 = vcmp.eq.f32.partialorder %v389, %v391
      %v393 = vsel %vm392, %v388, inf
      %394 = vmin.xlane.f32.xlu0 %v393
      %v395 = vpop.xlane.xlu0 %394
      %v396 = vcvt.f32.s32 %v395
      %v397 = vcvt.f32.s32 %v391
      %v398 = vshll.u32 %v397, 16
      %v399 = vadd.s32 %v398, %v396
      %vm400 = vcmp.eq.s32.totalorder %v359, %v384
      %vm401 = vcmp.eq.s32.totalorder %v359, %v399
      %v402 = vadd.f32 %v362, 1e-08
      %v403 = vadd.f32 %v365, 1e-08
      %v404 = vrcp.pop %v402
      %v405 = vrcp.pop %v403
      %v406 = vsel %vm400, %v404, 0.0
      %v407 = vsel %vm401, %v405, 0.0
      %v408 = vadd.f32 %v406, 0.0
      %v409 = vadd.f32 %v407, 0.0
      %v410 = vadd.f32 %v404, 0.0
      %v411 = vadd.f32 %v405, 0.0
      %v412 = vsel %vm400, inf, %v356
      %v413 = vsel %vm401, inf, %v357
      %v414 = vsel %vm256, %v412, inf
      %415 = vmin.xlane.f32.xlu0 %v414
      %v416 = vpop.xlane.xlu0 %415
      %v417 = vsel %vm256, %v413, inf
      %418 = vmin.xlane.f32.xlu0 %v417
      %v419 = vpop.xlane.xlu0 %418
      %vm420 = vcmp.eq.f32.partialorder %v412, %v416
      %vm421 = vcmp.eq.f32.partialorder %v413, %v419
      %v422 = vsel %vm420, %v359, 8
      %v423 = vsel %vm421, %v359, 8
      %v424 = vsel %vm256, %v422, 2147483647
      %v425 = vand.u32 %v424, 65535
      %v426 = vshra.s32 %v424, 16
      %v427 = vcvt.s32.f32 %v425
      %v428 = vcvt.s32.f32 %v426
      %429 = vmin.xlane.f32.xlu0 %v428
      %v430 = vpop.xlane.xlu0 %429
      %vm431 = vcmp.eq.f32.partialorder %v428, %v430
      %v432 = vsel %vm431, %v427, inf
      %433 = vmin.xlane.f32.xlu0 %v432
      %v434 = vpop.xlane.xlu0 %433
      %v435 = vcvt.f32.s32 %v434
      %v436 = vcvt.f32.s32 %v430
      %v437 = vshll.u32 %v436, 16
      %v438 = vadd.s32 %v437, %v435
      %v439 = vsel %vm256, %v423, 2147483647
      %v440 = vand.u32 %v439, 65535
      %v441 = vshra.s32 %v439, 16
      %v442 = vcvt.s32.f32 %v440
      %v443 = vcvt.s32.f32 %v441
      %444 = vmin.xlane.f32.xlu0 %v443
      %v445 = vpop.xlane.xlu0 %444
      %vm446 = vcmp.eq.f32.partialorder %v443, %v445
      %v447 = vsel %vm446, %v442, inf
      %448 = vmin.xlane.f32.xlu0 %v447
      %v449 = vpop.xlane.xlu0 %448
      %v450 = vcvt.f32.s32 %v449
      %v451 = vcvt.f32.s32 %v445
      %v452 = vshll.u32 %v451, 16
      %v453 = vadd.s32 %v452, %v450
      %vm454 = vcmp.eq.s32.totalorder %v359, %v438
      %vm455 = vcmp.eq.s32.totalorder %v359, %v453
      %v456 = vadd.f32 %v416, 1e-08
      %v457 = vadd.f32 %v419, 1e-08
      %v458 = vrcp.pop %v456
      %v459 = vrcp.pop %v457
      %v460 = vsel %vm454, %v458, 0.0
      %v461 = vsel %vm455, %v459, 0.0
      %v462 = vadd.f32 %v408, %v460
      %v463 = vadd.f32 %v409, %v461
      %v464 = vadd.f32 %v410, %v458
      %v465 = vadd.f32 %v411, %v459
      %v466 = vsel %vm454, inf, %v412
      %v467 = vsel %vm455, inf, %v413
      %v468 = vsel %vm256, %v466, inf
      %469 = vmin.xlane.f32.xlu0 %v468
      %v470 = vpop.xlane.xlu0 %469
      %v471 = vsel %vm256, %v467, inf
      %472 = vmin.xlane.f32.xlu0 %v471
      %v473 = vpop.xlane.xlu0 %472
      %vm474 = vcmp.eq.f32.partialorder %v466, %v470
      %vm475 = vcmp.eq.f32.partialorder %v467, %v473
      %v476 = vsel %vm474, %v359, 8
      %v477 = vsel %vm475, %v359, 8
      %v478 = vsel %vm256, %v476, 2147483647
      %v479 = vand.u32 %v478, 65535
      %v480 = vshra.s32 %v478, 16
      %v481 = vcvt.s32.f32 %v479
      %v482 = vcvt.s32.f32 %v480
      %483 = vmin.xlane.f32.xlu0 %v482
      %v484 = vpop.xlane.xlu0 %483
      %vm485 = vcmp.eq.f32.partialorder %v482, %v484
      %v486 = vsel %vm485, %v481, inf
      %487 = vmin.xlane.f32.xlu0 %v486
      %v488 = vpop.xlane.xlu0 %487
      %v489 = vcvt.f32.s32 %v488
      %v490 = vcvt.f32.s32 %v484
      %v491 = vshll.u32 %v490, 16
      %v492 = vadd.s32 %v491, %v489
      %v493 = vsel %vm256, %v477, 2147483647
      %v494 = vand.u32 %v493, 65535
      %v495 = vshra.s32 %v493, 16
      %v496 = vcvt.s32.f32 %v494
      %v497 = vcvt.s32.f32 %v495
      %498 = vmin.xlane.f32.xlu0 %v497
      %v499 = vpop.xlane.xlu0 %498
      %vm500 = vcmp.eq.f32.partialorder %v497, %v499
      %v501 = vsel %vm500, %v496, inf
      %502 = vmin.xlane.f32.xlu0 %v501
      %v503 = vpop.xlane.xlu0 %502
      %v504 = vcvt.f32.s32 %v503
      %v505 = vcvt.f32.s32 %v499
      %v506 = vshll.u32 %v505, 16
      %v507 = vadd.s32 %v506, %v504
      %vm508 = vcmp.eq.s32.totalorder %v359, %v492
      %vm509 = vcmp.eq.s32.totalorder %v359, %v507
      %v510 = vadd.f32 %v470, 1e-08
      %v511 = vadd.f32 %v473, 1e-08
      %v512 = vrcp.pop %v510
      %v513 = vrcp.pop %v511
      %v514 = vsel %vm508, %v512, 0.0
      %v515 = vsel %vm509, %v513, 0.0
      %v516 = vadd.f32 %v462, %v514
      %v517 = vadd.f32 %v463, %v515
      %v518 = vadd.f32 %v464, %v512
      %v519 = vadd.f32 %v465, %v513
      %v520 = vpack.c.bf16 %v517, %v516
      %v522 = vunpack.c.l.b16 %v253
      %v523 = vunpack.c.h.b16 %v253
      %v524 = vpack.c.b16 %v522, %v522
      %v525 = vpack.c.b16 %v523, %v523
      %v527 = vsel %vm256, %v520, 0
      %vm529 = vcmask 1043456
      %v531 = vsel %vm529, %v524, 0
      %v534 = vsel %vm529, %v525, 0
      %536 = vmatprep.subr.bf16.mxu0 %v534
      %537 = vmatpush1.bf16.msra.mxu0 %v531
      %538 = vmatprep.subr.bf16.mxu0 0
      %539 = vmatpush1.bf16.msra.mxu0 0
      %540 = vmatprep.subr.bf16.mxu0 0
      %541 = vmatpush1.bf16.msra.mxu0 0
      %542 = vmatprep.subr.bf16.mxu0 0
      %543 = vmatpush1.bf16.msra.mxu0 0
      %544 = vmatprep.subr.bf16.mxu0 0
      %545 = vmatpush1.bf16.msra.mxu0 0
      %546 = vmatprep.subr.bf16.mxu0 0
      %547 = vmatpush1.bf16.msra.mxu0 0
      %548 = vmatprep.subr.bf16.mxu0 0
      %549 = vmatpush1.bf16.msra.mxu0 0
      %550 = vmatprep.subr.bf16.mxu0 0
      %551 = vmatpush1.bf16.msra.mxu0 0
      %552 = vmatprep.subr.bf16.mxu0 0
      %553 = vmatpush1.bf16.msra.mxu0 0
      %554 = vmatprep.subr.bf16.mxu0 0
      %555 = vmatpush1.bf16.msra.mxu0 0
      %556 = vmatprep.subr.bf16.mxu0 0
      %557 = vmatpush1.bf16.msra.mxu0 0
      %558 = vmatprep.subr.bf16.mxu0 0
      %559 = vmatpush1.bf16.msra.mxu0 0
      %560 = vmatprep.subr.bf16.mxu0 0
      %561 = vmatpush1.bf16.msra.mxu0 0
      %562 = vmatprep.subr.bf16.mxu0 0
      %563 = vmatpush1.bf16.msra.mxu0 0
      %564 = vmatprep.subr.bf16.mxu0 0
      %565 = vmatpush1.bf16.msra.mxu0 0
      %566 = vmatprep.subr.bf16.mxu0 0
      %567 = vmatpush1.bf16.msra.mxu0 0
      %568 = vmatprep.mubr.bf16.mxu0 0
      %569 = vmatmul.mubr.bf16.gmra.mrb[0].mxu0 %v527
      %v570 = vpop.f32.mrb[0].mxu0
      %v571 = vadd.f32 0.0, %v570
      %v572 = vpop.f32.mrb[0].mxu0
      %v573 = vadd.f32 0.0, %v572
      %v574 = vpop.f32.mrb[0].mxu0
      %v575 = vadd.f32 0.0, %v574
      %v576 = vpop.f32.mrb[0].mxu0
      %v577 = vadd.f32 0.0, %v576
      %578 = vdwg.mxu0
      %v579 = vrcp.pop %v518
      %v580 = vrcp.pop %v519
      %v581 = vmul.f32 %v571, %v579
      %v582 = vmul.f32 %v573, %v579
      %v583 = vmul.f32 %v575, %v580
      %v584 = vmul.f32 %v577, %v580
      %v585 = vpack.c.bf16 %v583, %v581
      %v586 = vpack.c.bf16 %v584, %v582
      %v589 = vunpack.c.l.b16 %v585
      %v590 = vunpack.c.l.b16 %v586
      %v591 = vunpack.c.h.b16 %v585
      %v592 = vunpack.c.h.b16 %v586
      %v593 = vpack.c.b16 %v590, %v589
      %v594 = vpack.c.b16 %v592, %v591
      %597 = vst [vmem:[%s247] sm:$0xff] %v593
      %598 = vst [vmem:[%s247 + $0x8] sm:$0xff] %v594
      %s599 = smul.u32 2, %s19
      %p600 = scmp.lt.s32.totalorder %s18, 1
      %s601 = scalar_select %p600, %s18, 1
      %p602 = scmp.lt.s32.totalorder %s599, 1
      %s603 = scalar_select %p602, %s599, 1
      %s604 = smul.addr %s603, 2
      %s605 = smul.addr %s601, 4
      %s606 = sadd.s32 %s604, %s605
      %s607 = smul.addr %s606, 4
      %s608 = scalar_lea.vmem %s3, %s607
      // Predicated region
      $region33: #{pointnet2_decoder_without_cls_head.21} parent=31 // pred_check
        %p609 = pneg %p126
      $region34: #{pointnet2_decoder_without_cls_head.21} parent=31 // pred_check_branch
        %611 = sbr.rel (%p609) target = $region36
      $region35: #{pointnet2_decoder_without_cls_head.21} parent=31 // pred_region
        %s612 = smul.u32 2, %s19
      $region36: #{pointnet2_decoder_without_cls_head.21} parent=31 // pred_fallthru
        _
    $region32: #{pointnet2_decoder_without_cls_head.21} parent=5 // pred_fallthru
      _
    %p613 = scmp.le.s32.totalorder 2, %s9
    // Predicated region
    $region37: #{pointnet2_decoder_without_cls_head.21} parent=5 // pred_check
      %p614 = pneg %p613
    $region38: #{pointnet2_decoder_without_cls_head.21} parent=5 // pred_check_branch
      %616 = sbr.rel (%p614) target = $region40
    $region39: #{pointnet2_decoder_without_cls_head.21} parent=5 // pred_region
      %s617 = ssub.s32 %s9, 2
      // Predicated region
      $region41: #{pointnet2_decoder_without_cls_head.21} parent=39 // pred_check
        %p618 = pneg %p132
      $region42: #{pointnet2_decoder_without_cls_head.21} parent=39 // pred_check_branch
        %620 = sbr.rel (%p618) target = $region44
      $region43: #{pointnet2_decoder_without_cls_head.21} parent=39 // pred_region
        %s621 = smul.u32 2, %s21
        %p622 = scmp.lt.s32.totalorder %s20, 1
        %s623 = scalar_select %p622, %s20, 1
        %p624 = scmp.lt.s32.totalorder %s621, 1
        %s625 = scalar_select %p624, %s621, 1
        %s626 = smul.addr %s625, 2
        %s627 = smul.addr %s623, 4
        %s628 = sadd.s32 %s626, %s627
        %s629 = smul.addr %s628, 4
        %s630 = scalar_lea.vmem %s3, %s629
      $region44: #{pointnet2_decoder_without_cls_head.21} parent=39 // pred_fallthru
        _
    $region40: #{pointnet2_decoder_without_cls_head.21} parent=5 // pred_fallthru
      _
  $region6: #{pointnet2_decoder_without_cls_head.21} parent=0 // loop_footer
    %s13 = sadd.s32 1, %s9
  $region7: #{pointnet2_decoder_without_cls_head.21} parent=0 // loop_footer_branch
    %8 = sbr.rel target = $region3
  $region8: #{pointnet2_decoder_without_cls_head.21} parent=0 // loop_exit
    _

// kernel: pointnet2_decoder_without_cls_head.23
$region0: #{pointnet2_decoder_without_cls_head.23}
  #allocation0 [shape = 'u32[]', space=smem, size = 0x4, offset = 0x4, fixed_abs, tag = 'smem constant byte address 0x4 - core index']
  #allocation1 [shape = 'u32[144,128]{1,0:T(1,128)}', space=vmem, size = 0x12000, scoped, tag = 'internal scratch']
  %s0 = inlined_call_operand.vmem [shape: f32[32,256], index: 0, kind: input, shape index: {}]
  %s1 = inlined_call_operand.vmem [shape: f32[2,256], index: 1, kind: input, shape index: {}]
  %s2 = inlined_call_operand.vmem [shape: f32[1,256], index: 2, kind: input, shape index: {}]
  %s3 = inlined_call_operand.vmem [shape: f32[1,256], index: 3, kind: input, shape index: {}]
  %s4 = inlined_call_operand.vmem [shape: bf16[256,256], index: 4, kind: input, shape index: {}]
  %s5 = inlined_call_operand.vmem [shape: f32[32,256], index: 5, kind: output, shape index: {0}]
  %s6 = inlined_call_operand.vmem [shape: f32[2,256], index: 6, kind: output, shape index: {1}]
  %7 = xla_tuple %s5, %s6
  %s8 = sld [smem:[#allocation0]]
  $region42: #{pointnet2_decoder_without_cls_head.23} parent=0
    _
  %s10 = ssub.s32 1, %s8
  %s11 = scalar_select 0, %s10, %s8
  // Predicated region
  $region2: #{pointnet2_decoder_without_cls_head.23} parent=0 // pred_check
    _
  $region3: #{pointnet2_decoder_without_cls_head.23} parent=0 // pred_check_branch
    %13 = sbr.rel (0) target = $region5
  $region4: #{pointnet2_decoder_without_cls_head.23} parent=0 // pred_region
    _
  $region5: #{pointnet2_decoder_without_cls_head.23} parent=0 // pred_fallthru
    _
  // Predicated region
  $region6: #{pointnet2_decoder_without_cls_head.23} parent=0 // pred_check
    _
  $region7: #{pointnet2_decoder_without_cls_head.23} parent=0 // pred_check_branch
    %15 = sbr.rel (0) target = $region9
  $region8: #{pointnet2_decoder_without_cls_head.23} parent=0 // pred_region
    _
  $region9: #{pointnet2_decoder_without_cls_head.23} parent=0 // pred_fallthru
    _
  // Predicated region
  $region10: #{pointnet2_decoder_without_cls_head.23} parent=0 // pred_check
    _
  $region11: #{pointnet2_decoder_without_cls_head.23} parent=0 // pred_check_branch
    %17 = sbr.rel (0) target = $region13
  $region12: #{pointnet2_decoder_without_cls_head.23} parent=0 // pred_region
    _
  $region13: #{pointnet2_decoder_without_cls_head.23} parent=0 // pred_fallthru
    _
  // Predicated region
  $region14: #{pointnet2_decoder_without_cls_head.23} parent=0 // pred_check
    _
  $region15: #{pointnet2_decoder_without_cls_head.23} parent=0 // pred_check_branch
    %19 = sbr.rel (0) target = $region17
  $region16: #{pointnet2_decoder_without_cls_head.23} parent=0 // pred_region
    _
  $region17: #{pointnet2_decoder_without_cls_head.23} parent=0 // pred_fallthru
    _
  // Predicated region
  $region18: #{pointnet2_decoder_without_cls_head.23} parent=0 // pred_check
    _
  $region19: #{pointnet2_decoder_without_cls_head.23} parent=0 // pred_check_branch
    %21 = sbr.rel (0) target = $region21
  $region20: #{pointnet2_decoder_without_cls_head.23} parent=0 // pred_region
    _
  $region21: #{pointnet2_decoder_without_cls_head.23} parent=0 // pred_fallthru
    _
  %v22 = vld [vmem:[%s1] ss:$2 sm:$0x3]
  %v23 = vmul.f32 %v22, 0.03125
  %s24 = scalar_lea.vmem %s1, 1
  %v25 = vld [vmem:[%s24] ss:$2 sm:$0x3]
  %v26 = vmul.f32 %v25, 0.03125
  %v27 = vmul.f32 %v23, %v23
  %v28 = vsub.f32 %v26, %v27
  %v29 = vld [vmem:[%s0] sm:$0xff]
  %v30 = vld [vmem:[%s0 + $0x8] sm:$0xff]
  %v31 = vld [vmem:[%s0 + $0x10] sm:$0xff]
  %v32 = vld [vmem:[%s0 + $0x18] sm:$0xff]
  %v33 = vld [vmem:[%s0 + $0x20] sm:$0xff]
  %v34 = vld [vmem:[%s0 + $0x28] sm:$0xff]
  %v35 = vld [vmem:[%s0 + $0x30] sm:$0xff]
  %v36 = vld [vmem:[%s0 + $0x38] sm:$0xff]
  %v38 = vlaneseq
  %v39 = vshrl.u32 %v38, 7
  %v40 = vsub.s32 0, %v39
  %v41 = vrot.slane %v23, %v40
  %v42 = vlaneseq
  %v43 = vshrl.u32 %v42, 7
  %v44 = vsub.s32 1, %v43
  %v45 = vrot.slane %v23, %v44
  %v48 = vsub.f32 %v29, %v41
  %v49 = vsub.f32 %v30, %v45
  %v50 = vsub.f32 %v31, %v41
  %v51 = vsub.f32 %v32, %v45
  %v52 = vsub.f32 %v33, %v41
  %v53 = vsub.f32 %v34, %v45
  %v54 = vsub.f32 %v35, %v41
  %v55 = vsub.f32 %v36, %v45
  %v56 = vadd.f32 %v28, 1e-05
  %v57 = vrsqrt.pop %v56
  %v59 = vlaneseq
  %v60 = vshrl.u32 %v59, 7
  %v61 = vsub.s32 0, %v60
  %v62 = vrot.slane %v57, %v61
  %v63 = vlaneseq
  %v64 = vshrl.u32 %v63, 7
  %v65 = vsub.s32 1, %v64
  %v66 = vrot.slane %v57, %v65
  %v69 = vmul.f32 %v48, %v62
  %v70 = vmul.f32 %v49, %v66
  %v71 = vmul.f32 %v50, %v62
  %v72 = vmul.f32 %v51, %v66
  %v73 = vmul.f32 %v52, %v62
  %v74 = vmul.f32 %v53, %v66
  %v75 = vmul.f32 %v54, %v62
  %v76 = vmul.f32 %v55, %v66
  %v77 = vld [vmem:[%s2] sm:$0x3]
  %v79 = vlaneseq
  %v80 = vshrl.u32 %v79, 7
  %v81 = vsub.s32 0, %v80
  %v82 = vrot.slane %v77, %v81
  %v83 = vlaneseq
  %v84 = vshrl.u32 %v83, 7
  %v85 = vsub.s32 1, %v84
  %v86 = vrot.slane %v77, %v85
  %v89 = vmul.f32 %v69, %v82
  %v90 = vmul.f32 %v70, %v86
  %v91 = vmul.f32 %v71, %v82
  %v92 = vmul.f32 %v72, %v86
  %v93 = vmul.f32 %v73, %v82
  %v94 = vmul.f32 %v74, %v86
  %v95 = vmul.f32 %v75, %v82
  %v96 = vmul.f32 %v76, %v86
  %v97 = vld [vmem:[%s3] sm:$0x3]
  %v99 = vlaneseq
  %v100 = vshrl.u32 %v99, 7
  %v101 = vsub.s32 0, %v100
  %v102 = vrot.slane %v97, %v101
  %v103 = vlaneseq
  %v104 = vshrl.u32 %v103, 7
  %v105 = vsub.s32 1, %v104
  %v106 = vrot.slane %v97, %v105
  %v109 = vadd.f32 %v89, %v102
  %v110 = vadd.f32 %v90, %v106
  %v111 = vadd.f32 %v91, %v102
  %v112 = vadd.f32 %v92, %v106
  %v113 = vadd.f32 %v93, %v102
  %v114 = vadd.f32 %v94, %v106
  %v115 = vadd.f32 %v95, %v102
  %v116 = vadd.f32 %v96, %v106
  %v117 = vmax.f32 %v109, 0.0
  %v118 = vmax.f32 %v110, 0.0
  %v119 = vmax.f32 %v111, 0.0
  %v120 = vmax.f32 %v112, 0.0
  %v121 = vmax.f32 %v113, 0.0
  %v122 = vmax.f32 %v114, 0.0
  %v123 = vmax.f32 %v115, 0.0
  %v124 = vmax.f32 %v116, 0.0
  %v125 = vpack.c.bf16 %v119, %v117
  %v126 = vpack.c.bf16 %v120, %v118
  %v127 = vpack.c.bf16 %v123, %v121
  %v128 = vpack.c.bf16 %v124, %v122
  %v129 = vld [vmem:[%s4] sm:$0xff]
  %v130 = vld [vmem:[%s4 + $0x8] sm:$0xff]
  %v131 = vld [vmem:[%s4 + $0x10] sm:$0xff]
  %v132 = vld [vmem:[%s4 + $0x18] sm:$0xff]
  %v133 = vld [vmem:[%s4 + $0x20] sm:$0xff]
  %v134 = vld [vmem:[%s4 + $0x28] sm:$0xff]
  %v135 = vld [vmem:[%s4 + $0x30] sm:$0xff]
  %v136 = vld [vmem:[%s4 + $0x38] sm:$0xff]
  %v137 = vld [vmem:[%s4 + $0x40] sm:$0xff]
  %v138 = vld [vmem:[%s4 + $0x48] sm:$0xff]
  %v139 = vld [vmem:[%s4 + $0x50] sm:$0xff]
  %v140 = vld [vmem:[%s4 + $0x58] sm:$0xff]
  %v141 = vld [vmem:[%s4 + $0x60] sm:$0xff]
  %v142 = vld [vmem:[%s4 + $0x68] sm:$0xff]
  %v143 = vld [vmem:[%s4 + $0x70] sm:$0xff]
  %v144 = vld [vmem:[%s4 + $0x78] sm:$0xff]
  %v145 = vld [vmem:[%s4 + $0x80] sm:$0xff]
  %v146 = vld [vmem:[%s4 + $0x88] sm:$0xff]
  %v147 = vld [vmem:[%s4 + $0x90] sm:$0xff]
  %v148 = vld [vmem:[%s4 + $0x98] sm:$0xff]
  %v149 = vld [vmem:[%s4 + $0xa0] sm:$0xff]
  %v150 = vld [vmem:[%s4 + $0xa8] sm:$0xff]
  %v151 = vld [vmem:[%s4 + $0xb0] sm:$0xff]
  %v152 = vld [vmem:[%s4 + $0xb8] sm:$0xff]
  %v153 = vld [vmem:[%s4 + $0xc0] sm:$0xff]
  %v154 = vld [vmem:[%s4 + $0xc8] sm:$0xff]
  %v155 = vld [vmem:[%s4 + $0xd0] sm:$0xff]
  %v156 = vld [vmem:[%s4 + $0xd8] sm:$0xff]
  %v157 = vld [vmem:[%s4 + $0xe0] sm:$0xff]
  %v158 = vld [vmem:[%s4 + $0xe8] sm:$0xff]
  %v159 = vld [vmem:[%s4 + $0xf0] sm:$0xff]
  %v160 = vld [vmem:[%s4 + $0xf8] sm:$0xff]
  %v193 = vunpack.c.l.b16 %v129
  %v194 = vunpack.c.h.b16 %v129
  %v195 = vunpack.c.l.b16 %v130
  %v196 = vunpack.c.h.b16 %v130
  %v197 = vunpack.c.l.b16 %v131
  %v198 = vunpack.c.h.b16 %v131
  %v199 = vunpack.c.l.b16 %v132
  %v200 = vunpack.c.h.b16 %v132
  %v201 = vunpack.c.l.b16 %v133
  %v202 = vunpack.c.h.b16 %v133
  %v203 = vunpack.c.l.b16 %v134
  %v204 = vunpack.c.h.b16 %v134
  %v205 = vunpack.c.l.b16 %v135
  %v206 = vunpack.c.h.b16 %v135
  %v207 = vunpack.c.l.b16 %v136
  %v208 = vunpack.c.h.b16 %v136
  %v209 = vunpack.c.l.b16 %v137
  %v210 = vunpack.c.h.b16 %v137
  %v211 = vunpack.c.l.b16 %v138
  %v212 = vunpack.c.h.b16 %v138
  %v213 = vunpack.c.l.b16 %v139
  %v214 = vunpack.c.h.b16 %v139
  %v215 = vunpack.c.l.b16 %v140
  %v216 = vunpack.c.h.b16 %v140
  %v217 = vunpack.c.l.b16 %v141
  %v218 = vunpack.c.h.b16 %v141
  %v219 = vunpack.c.l.b16 %v142
  %v220 = vunpack.c.h.b16 %v142
  %v221 = vunpack.c.l.b16 %v143
  %v222 = vunpack.c.h.b16 %v143
  %v223 = vunpack.c.l.b16 %v144
  %v224 = vunpack.c.h.b16 %v144
  %v225 = vunpack.c.l.b16 %v145
  %v226 = vunpack.c.h.b16 %v145
  %v227 = vunpack.c.l.b16 %v146
  %v228 = vunpack.c.h.b16 %v146
  %v229 = vunpack.c.l.b16 %v147
  %v230 = vunpack.c.h.b16 %v147
  %v231 = vunpack.c.l.b16 %v148
  %v232 = vunpack.c.h.b16 %v148
  %v233 = vunpack.c.l.b16 %v149
  %v234 = vunpack.c.h.b16 %v149
  %v235 = vunpack.c.l.b16 %v150
  %v236 = vunpack.c.h.b16 %v150
  %v237 = vunpack.c.l.b16 %v151
  %v238 = vunpack.c.h.b16 %v151
  %v239 = vunpack.c.l.b16 %v152
  %v240 = vunpack.c.h.b16 %v152
  %v241 = vunpack.c.l.b16 %v153
  %v242 = vunpack.c.h.b16 %v153
  %v243 = vunpack.c.l.b16 %v154
  %v244 = vunpack.c.h.b16 %v154
  %v245 = vunpack.c.l.b16 %v155
  %v246 = vunpack.c.h.b16 %v155
  %v247 = vunpack.c.l.b16 %v156
  %v248 = vunpack.c.h.b16 %v156
  %v249 = vunpack.c.l.b16 %v157
  %v250 = vunpack.c.h.b16 %v157
  %v251 = vunpack.c.l.b16 %v158
  %v252 = vunpack.c.h.b16 %v158
  %v253 = vunpack.c.l.b16 %v159
  %v254 = vunpack.c.h.b16 %v159
  %v255 = vunpack.c.l.b16 %v160
  %v256 = vunpack.c.h.b16 %v160
  %v257 = vpack.c.b16 %v195, %v193
  %v258 = vpack.c.b16 %v196, %v194
  %v259 = vpack.c.b16 %v199, %v197
  %v260 = vpack.c.b16 %v200, %v198
  %v261 = vpack.c.b16 %v203, %v201
  %v262 = vpack.c.b16 %v204, %v202
  %v263 = vpack.c.b16 %v207, %v205
  %v264 = vpack.c.b16 %v208, %v206
  %v265 = vpack.c.b16 %v211, %v209
  %v266 = vpack.c.b16 %v212, %v210
  %v267 = vpack.c.b16 %v215, %v213
  %v268 = vpack.c.b16 %v216, %v214
  %v269 = vpack.c.b16 %v219, %v217
  %v270 = vpack.c.b16 %v220, %v218
  %v271 = vpack.c.b16 %v223, %v221
  %v272 = vpack.c.b16 %v224, %v222
  %v273 = vpack.c.b16 %v227, %v225
  %v274 = vpack.c.b16 %v228, %v226
  %v275 = vpack.c.b16 %v231, %v229
  %v276 = vpack.c.b16 %v232, %v230
  %v277 = vpack.c.b16 %v235, %v233
  %v278 = vpack.c.b16 %v236, %v234
  %v279 = vpack.c.b16 %v239, %v237
  %v280 = vpack.c.b16 %v240, %v238
  %v281 = vpack.c.b16 %v243, %v241
  %v282 = vpack.c.b16 %v244, %v242
  %v283 = vpack.c.b16 %v247, %v245
  %v284 = vpack.c.b16 %v248, %v246
  %v285 = vpack.c.b16 %v251, %v249
  %v286 = vpack.c.b16 %v252, %v250
  %v287 = vpack.c.b16 %v255, %v253
  %v288 = vpack.c.b16 %v256, %v254
  %321 = vmatprep.subr.bf16.mxu0 %v258
  %322 = vmatpush1.bf16.msra.mxu0 %v257
  %323 = vmatprep.subr.bf16.mxu0 %v260
  %324 = vmatpush1.bf16.msra.mxu0 %v259
  %325 = vmatprep.subr.bf16.mxu0 %v262
  %326 = vmatpush1.bf16.msra.mxu0 %v261
  %327 = vmatprep.subr.bf16.mxu0 %v264
  %328 = vmatpush1.bf16.msra.mxu0 %v263
  %329 = vmatprep.subr.bf16.mxu0 %v266
  %330 = vmatpush1.bf16.msra.mxu0 %v265
  %331 = vmatprep.subr.bf16.mxu0 %v268
  %332 = vmatpush1.bf16.msra.mxu0 %v267
  %333 = vmatprep.subr.bf16.mxu0 %v270
  %334 = vmatpush1.bf16.msra.mxu0 %v269
  %335 = vmatprep.subr.bf16.mxu0 %v272
  %336 = vmatpush1.bf16.msra.mxu0 %v271
  %337 = vmatprep.subr.bf16.mxu0 %v274
  %338 = vmatpush1.bf16.msra.mxu0 %v273
  %339 = vmatprep.subr.bf16.mxu0 %v276
  %340 = vmatpush1.bf16.msra.mxu0 %v275
  %341 = vmatprep.subr.bf16.mxu0 %v278
  %342 = vmatpush1.bf16.msra.mxu0 %v277
  %343 = vmatprep.subr.bf16.mxu0 %v280
  %344 = vmatpush1.bf16.msra.mxu0 %v279
  %345 = vmatprep.subr.bf16.mxu0 %v282
  %346 = vmatpush1.bf16.msra.mxu0 %v281
  %347 = vmatprep.subr.bf16.mxu0 %v284
  %348 = vmatpush1.bf16.msra.mxu0 %v283
  %349 = vmatprep.subr.bf16.mxu0 %v286
  %350 = vmatpush1.bf16.msra.mxu0 %v285
  %351 = vmatprep.subr.bf16.mxu0 %v288
  %352 = vmatpush1.bf16.msra.mxu0 %v287
  %353 = vmatprep.mubr.bf16.mxu0 %v126
  %354 = vmatmul.mubr.bf16.gmra.mrb[0].mxu0 %v125
  %v355 = vpop.f32.mrb[0].mxu0
  %v356 = vadd.f32 0.0, %v355
  %v357 = vpop.f32.mrb[0].mxu0
  %v358 = vadd.f32 0.0, %v357
  %v359 = vpop.f32.mrb[0].mxu0
  %v360 = vadd.f32 0.0, %v359
  %v361 = vpop.f32.mrb[0].mxu0
  %v362 = vadd.f32 0.0, %v361
  %363 = vmatprep.mubr.bf16.mxu0 %v128
  %364 = vmatmul.mubr.bf16.gmra.mrb[0].mxu0 %v127
  %v365 = vpop.f32.mrb[0].mxu0
  %v366 = vadd.f32 0.0, %v365
  %v367 = vpop.f32.mrb[0].mxu0
  %v368 = vadd.f32 0.0, %v367
  %v369 = vpop.f32.mrb[0].mxu0
  %v370 = vadd.f32 0.0, %v369
  %v371 = vpop.f32.mrb[0].mxu0
  %v372 = vadd.f32 0.0, %v371
  %373 = vdwg.mxu0
  %374 = vst [vmem:[%s5] sm:$0xff] %v356
  %375 = vst [vmem:[%s5 + $0x8] sm:$0xff] %v358
  %376 = vst [vmem:[%s5 + $0x10] sm:$0xff] %v360
  %377 = vst [vmem:[%s5 + $0x18] sm:$0xff] %v362
  %378 = vst [vmem:[%s5 + $0x20] sm:$0xff] %v366
  %379 = vst [vmem:[%s5 + $0x28] sm:$0xff] %v368
  %380 = vst [vmem:[%s5 + $0x30] sm:$0xff] %v370
  %381 = vst [vmem:[%s5 + $0x38] sm:$0xff] %v372
  %p382 = scmp.eq.s32.totalorder 0, 0
  // Predicated region
  $region22: #{pointnet2_decoder_without_cls_head.23} parent=0 // pred_check
    %p383 = pneg %p382
  $region23: #{pointnet2_decoder_without_cls_head.23} parent=0 // pred_check_branch
    %385 = sbr.rel (%p383) target = $region25
  $region24: #{pointnet2_decoder_without_cls_head.23} parent=0 // pred_region
    %386 = vst [vmem:[%s6] sm:$0xf] 0.0
  $region25: #{pointnet2_decoder_without_cls_head.23} parent=0 // pred_fallthru
    _
  %v387 = vld [vmem:[%s6] ss:$2 sm:$0x3]
  %v388 = vadd.f32 %v356, %v360
  %v389 = vadd.f32 %v388, %v366
  %v390 = vadd.f32 %v389, %v370
  %v391 = vrot.slane %v390, 4
  %v392 = vadd.f32 %v390, %v391
  %v393 = vrot.slane %v392, 2
  %v394 = vadd.f32 %v392, %v393
  %v395 = vrot.slane %v394, 1
  %v396 = vadd.f32 %v394, %v395
  %v397 = vadd.f32 %v358, %v362
  %v398 = vadd.f32 %v397, %v368
  %v399 = vadd.f32 %v398, %v372
  %v400 = vrot.slane %v399, 4
  %v401 = vadd.f32 %v399, %v400
  %v402 = vrot.slane %v401, 2
  %v403 = vadd.f32 %v401, %v402
  %v404 = vrot.slane %v403, 1
  %v405 = vadd.f32 %v403, %v404
  %v408 = vcombine.low %v396, %v405
  %v410 = vunpack.c.l.s4 1966171168
  %v411 = vunpack.c.0.s8 %v410
  %v412 = vlaneseq
  %v413 = vshrl.u32 %v412, 7
  %v414 = vsub.s32 %v411, %v413
  %v415 = vrot.slane %v408, %v414
  %v417 = vunpack.c.l.s4 1966171168
  %v418 = vunpack.c.0.s8 %v417
  %v419 = vlaneseq
  %v420 = vshrl.u32 %v419, 7
  %v421 = vsub.s32 %v418, %v420
  %v422 = vrot.slane %v415, %v421
  %v424 = vadd.f32 %v387, %v422
  %v425 = vlaneseq
  %vm426 = vcmp.ge.s32.totalorder %v425, 0
  %vm427 = vcmp.lt.s32.totalorder %v425, 256
  %vm428 = vmand %vm426, %vm427
  %429 = vst.msk [vmem:[%s6] ss:$2 sm:$0x3] %vm428, %v424
  %s430 = scalar_lea.vmem %s6, 1
  %v431 = vld [vmem:[%s430] ss:$2 sm:$0x3]
  %v432 = vmul.f32 %v356, %v356
  %v433 = vmul.f32 %v358, %v358
  %v434 = vmul.f32 %v360, %v360
  %v435 = vmul.f32 %v362, %v362
  %v436 = vmul.f32 %v366, %v366
  %v437 = vmul.f32 %v368, %v368
  %v438 = vmul.f32 %v370, %v370
  %v439 = vmul.f32 %v372, %v372
  %v440 = vadd.f32 %v432, %v434
  %v441 = vadd.f32 %v440, %v436
  %v442 = vadd.f32 %v441, %v438
  %v443 = vrot.slane %v442, 4
  %v444 = vadd.f32 %v442, %v443
  %v445 = vrot.slane %v444, 2
  %v446 = vadd.f32 %v444, %v445
  %v447 = vrot.slane %v446, 1
  %v448 = vadd.f32 %v446, %v447
  %v449 = vadd.f32 %v433, %v435
  %v450 = vadd.f32 %v449, %v437
  %v451 = vadd.f32 %v450, %v439
  %v452 = vrot.slane %v451, 4
  %v453 = vadd.f32 %v451, %v452
  %v454 = vrot.slane %v453, 2
  %v455 = vadd.f32 %v453, %v454
  %v456 = vrot.slane %v455, 1
  %v457 = vadd.f32 %v455, %v456
  %v460 = vcombine.low %v448, %v457
  %v462 = vunpack.c.l.s4 1966171168
  %v463 = vunpack.c.0.s8 %v462
  %v464 = vlaneseq
  %v465 = vshrl.u32 %v464, 7
  %v466 = vsub.s32 %v463, %v465
  %v467 = vrot.slane %v460, %v466
  %v469 = vunpack.c.l.s4 1966171168
  %v470 = vunpack.c.0.s8 %v469
  %v471 = vlaneseq
  %v472 = vshrl.u32 %v471, 7
  %v473 = vsub.s32 %v470, %v472
  %v474 = vrot.slane %v467, %v473
  %v476 = vadd.f32 %v431, %v474
  %477 = vst.msk [vmem:[%s430] ss:$2 sm:$0x3] %vm428, %v476
  // Predicated region
  $region26: #{pointnet2_decoder_without_cls_head.23} parent=0 // pred_check
    _
  $region27: #{pointnet2_decoder_without_cls_head.23} parent=0 // pred_check_branch
    %479 = sbr.rel (0) target = $region29
  $region28: #{pointnet2_decoder_without_cls_head.23} parent=0 // pred_region
    _
  $region29: #{pointnet2_decoder_without_cls_head.23} parent=0 // pred_fallthru
    _
  // Predicated region
  $region30: #{pointnet2_decoder_without_cls_head.23} parent=0 // pred_check
    _
  $region31: #{pointnet2_decoder_without_cls_head.23} parent=0 // pred_check_branch
    %481 = sbr.rel (0) target = $region33
  $region32: #{pointnet2_decoder_without_cls_head.23} parent=0 // pred_region
    _
  $region33: #{pointnet2_decoder_without_cls_head.23} parent=0 // pred_fallthru
    _
  // Predicated region
  $region34: #{pointnet2_decoder_without_cls_head.23} parent=0 // pred_check
    _
  $region35: #{pointnet2_decoder_without_cls_head.23} parent=0 // pred_check_branch
    %483 = sbr.rel (0) target = $region37
  $region36: #{pointnet2_decoder_without_cls_head.23} parent=0 // pred_region
    _
  $region37: #{pointnet2_decoder_without_cls_head.23} parent=0 // pred_fallthru
    _
  // Predicated region
  $region38: #{pointnet2_decoder_without_cls_head.23} parent=0 // pred_check
    _
  $region39: #{pointnet2_decoder_without_cls_head.23} parent=0 // pred_check_branch
    %485 = sbr.rel (0) target = $region41
  $region40: #{pointnet2_decoder_without_cls_head.23} parent=0 // pred_region
    _
  $region41: #{pointnet2_decoder_without_cls_head.23} parent=0 // pred_fallthru
    _

// kernel: pointnet2_decoder_without_cls_head.22
$region0: #{pointnet2_decoder_without_cls_head.22}
  #allocation0 [shape = 'u32[]', space=smem, size = 0x4, offset = 0x4, fixed_abs, tag = 'smem constant byte address 0x4 - core index']
  #allocation1 [shape = 'u32[144,128]{1,0:T(1,128)}', space=vmem, size = 0x12000, scoped, tag = 'internal scratch']
  %s0 = inlined_call_operand.vmem [shape: bf16[32,128], index: 0, kind: input, shape index: {}]
  %s1 = inlined_call_operand.vmem [shape: bf16[32,256], index: 1, kind: input, shape index: {}]
  %s2 = inlined_call_operand.vmem [shape: bf16[128,256], index: 2, kind: input, shape index: {}]
  %s3 = inlined_call_operand.vmem [shape: bf16[256,256], index: 3, kind: input, shape index: {}]
  %s4 = inlined_call_operand.vmem [shape: f32[32,256], index: 4, kind: output, shape index: {0}]
  %s5 = inlined_call_operand.vmem [shape: f32[2,256], index: 5, kind: output, shape index: {1}]
  %6 = xla_tuple %s4, %s5
  %s7 = sld [smem:[#allocation0]]
  $region38: #{pointnet2_decoder_without_cls_head.22} parent=0
    _
  %s9 = ssub.s32 1, %s7
  %s10 = scalar_select 0, %s9, %s7
  // Predicated region
  $region2: #{pointnet2_decoder_without_cls_head.22} parent=0 // pred_check
    _
  $region3: #{pointnet2_decoder_without_cls_head.22} parent=0 // pred_check_branch
    %12 = sbr.rel (0) target = $region5
  $region4: #{pointnet2_decoder_without_cls_head.22} parent=0 // pred_region
    _
  $region5: #{pointnet2_decoder_without_cls_head.22} parent=0 // pred_fallthru
    _
  // Predicated region
  $region6: #{pointnet2_decoder_without_cls_head.22} parent=0 // pred_check
    _
  $region7: #{pointnet2_decoder_without_cls_head.22} parent=0 // pred_check_branch
    %14 = sbr.rel (0) target = $region9
  $region8: #{pointnet2_decoder_without_cls_head.22} parent=0 // pred_region
    _
  $region9: #{pointnet2_decoder_without_cls_head.22} parent=0 // pred_fallthru
    _
  // Predicated region
  $region10: #{pointnet2_decoder_without_cls_head.22} parent=0 // pred_check
    _
  $region11: #{pointnet2_decoder_without_cls_head.22} parent=0 // pred_check_branch
    %16 = sbr.rel (0) target = $region13
  $region12: #{pointnet2_decoder_without_cls_head.22} parent=0 // pred_region
    _
  $region13: #{pointnet2_decoder_without_cls_head.22} parent=0 // pred_fallthru
    _
  // Predicated region
  $region14: #{pointnet2_decoder_without_cls_head.22} parent=0 // pred_check
    _
  $region15: #{pointnet2_decoder_without_cls_head.22} parent=0 // pred_check_branch
    %18 = sbr.rel (0) target = $region17
  $region16: #{pointnet2_decoder_without_cls_head.22} parent=0 // pred_region
    _
  $region17: #{pointnet2_decoder_without_cls_head.22} parent=0 // pred_fallthru
    _
  %v20 = vld [vmem:[%s0] sm:$0xf]
  %v21 = vld [vmem:[%s0 + $0x4] sm:$0xf]
  %v22 = vld [vmem:[%s0 + $0x8] sm:$0xf]
  %v23 = vld [vmem:[%s0 + $0xc] sm:$0xf]
  %v24 = vld [vmem:[%s2] sm:$0xff]
  %v25 = vld [vmem:[%s2 + $0x8] sm:$0xff]
  %v26 = vld [vmem:[%s2 + $0x10] sm:$0xff]
  %v27 = vld [vmem:[%s2 + $0x18] sm:$0xff]
  %v28 = vld [vmem:[%s2 + $0x20] sm:$0xff]
  %v29 = vld [vmem:[%s2 + $0x28] sm:$0xff]
  %v30 = vld [vmem:[%s2 + $0x30] sm:$0xff]
  %v31 = vld [vmem:[%s2 + $0x38] sm:$0xff]
  %v32 = vld [vmem:[%s2 + $0x40] sm:$0xff]
  %v33 = vld [vmem:[%s2 + $0x48] sm:$0xff]
  %v34 = vld [vmem:[%s2 + $0x50] sm:$0xff]
  %v35 = vld [vmem:[%s2 + $0x58] sm:$0xff]
  %v36 = vld [vmem:[%s2 + $0x60] sm:$0xff]
  %v37 = vld [vmem:[%s2 + $0x68] sm:$0xff]
  %v38 = vld [vmem:[%s2 + $0x70] sm:$0xff]
  %v39 = vld [vmem:[%s2 + $0x78] sm:$0xff]
  %v40 = vld [vmem:[%s1] sm:$0xff]
  %v41 = vld [vmem:[%s1 + $0x8] sm:$0xff]
  %v42 = vld [vmem:[%s1 + $0x10] sm:$0xff]
  %v43 = vld [vmem:[%s1 + $0x18] sm:$0xff]
  %v44 = vld [vmem:[%s3] sm:$0xff]
  %v45 = vld [vmem:[%s3 + $0x8] sm:$0xff]
  %v46 = vld [vmem:[%s3 + $0x10] sm:$0xff]
  %v47 = vld [vmem:[%s3 + $0x18] sm:$0xff]
  %v48 = vld [vmem:[%s3 + $0x20] sm:$0xff]
  %v49 = vld [vmem:[%s3 + $0x28] sm:$0xff]
  %v50 = vld [vmem:[%s3 + $0x30] sm:$0xff]
  %v51 = vld [vmem:[%s3 + $0x38] sm:$0xff]
  %v52 = vld [vmem:[%s3 + $0x40] sm:$0xff]
  %v53 = vld [vmem:[%s3 + $0x48] sm:$0xff]
  %v54 = vld [vmem:[%s3 + $0x50] sm:$0xff]
  %v55 = vld [vmem:[%s3 + $0x58] sm:$0xff]
  %v56 = vld [vmem:[%s3 + $0x60] sm:$0xff]
  %v57 = vld [vmem:[%s3 + $0x68] sm:$0xff]
  %v58 = vld [vmem:[%s3 + $0x70] sm:$0xff]
  %v59 = vld [vmem:[%s3 + $0x78] sm:$0xff]
  %v60 = vld [vmem:[%s3 + $0x80] sm:$0xff]
  %v61 = vld [vmem:[%s3 + $0x88] sm:$0xff]
  %v62 = vld [vmem:[%s3 + $0x90] sm:$0xff]
  %v63 = vld [vmem:[%s3 + $0x98] sm:$0xff]
  %v64 = vld [vmem:[%s3 + $0xa0] sm:$0xff]
  %v65 = vld [vmem:[%s3 + $0xa8] sm:$0xff]
  %v66 = vld [vmem:[%s3 + $0xb0] sm:$0xff]
  %v67 = vld [vmem:[%s3 + $0xb8] sm:$0xff]
  %v68 = vld [vmem:[%s3 + $0xc0] sm:$0xff]
  %v69 = vld [vmem:[%s3 + $0xc8] sm:$0xff]
  %v70 = vld [vmem:[%s3 + $0xd0] sm:$0xff]
  %v71 = vld [vmem:[%s3 + $0xd8] sm:$0xff]
  %v72 = vld [vmem:[%s3 + $0xe0] sm:$0xff]
  %v73 = vld [vmem:[%s3 + $0xe8] sm:$0xff]
  %v74 = vld [vmem:[%s3 + $0xf0] sm:$0xff]
  %v75 = vld [vmem:[%s3 + $0xf8] sm:$0xff]
  %v80 = vunpack.c.l.b16 %v40
  %v81 = vunpack.c.h.b16 %v40
  %v82 = vunpack.c.l.b16 %v41
  %v83 = vunpack.c.h.b16 %v41
  %v84 = vunpack.c.l.b16 %v42
  %v85 = vunpack.c.h.b16 %v42
  %v86 = vunpack.c.l.b16 %v43
  %v87 = vunpack.c.h.b16 %v43
  %v88 = vpack.c.b16 %v82, %v80
  %v89 = vpack.c.b16 %v83, %v81
  %v90 = vpack.c.b16 %v86, %v84
  %v91 = vpack.c.b16 %v87, %v85
  %v128 = vunpack.c.l.b16 %v44
  %v129 = vunpack.c.h.b16 %v44
  %v130 = vunpack.c.l.b16 %v45
  %v131 = vunpack.c.h.b16 %v45
  %v132 = vunpack.c.l.b16 %v46
  %v133 = vunpack.c.h.b16 %v46
  %v134 = vunpack.c.l.b16 %v47
  %v135 = vunpack.c.h.b16 %v47
  %v136 = vunpack.c.l.b16 %v48
  %v137 = vunpack.c.h.b16 %v48
  %v138 = vunpack.c.l.b16 %v49
  %v139 = vunpack.c.h.b16 %v49
  %v140 = vunpack.c.l.b16 %v50
  %v141 = vunpack.c.h.b16 %v50
  %v142 = vunpack.c.l.b16 %v51
  %v143 = vunpack.c.h.b16 %v51
  %v144 = vunpack.c.l.b16 %v52
  %v145 = vunpack.c.h.b16 %v52
  %v146 = vunpack.c.l.b16 %v53
  %v147 = vunpack.c.h.b16 %v53
  %v148 = vunpack.c.l.b16 %v54
  %v149 = vunpack.c.h.b16 %v54
  %v150 = vunpack.c.l.b16 %v55
  %v151 = vunpack.c.h.b16 %v55
  %v152 = vunpack.c.l.b16 %v56
  %v153 = vunpack.c.h.b16 %v56
  %v154 = vunpack.c.l.b16 %v57
  %v155 = vunpack.c.h.b16 %v57
  %v156 = vunpack.c.l.b16 %v58
  %v157 = vunpack.c.h.b16 %v58
  %v158 = vunpack.c.l.b16 %v59
  %v159 = vunpack.c.h.b16 %v59
  %v160 = vunpack.c.l.b16 %v60
  %v161 = vunpack.c.h.b16 %v60
  %v162 = vunpack.c.l.b16 %v61
  %v163 = vunpack.c.h.b16 %v61
  %v164 = vunpack.c.l.b16 %v62
  %v165 = vunpack.c.h.b16 %v62
  %v166 = vunpack.c.l.b16 %v63
  %v167 = vunpack.c.h.b16 %v63
  %v168 = vunpack.c.l.b16 %v64
  %v169 = vunpack.c.h.b16 %v64
  %v170 = vunpack.c.l.b16 %v65
  %v171 = vunpack.c.h.b16 %v65
  %v172 = vunpack.c.l.b16 %v66
  %v173 = vunpack.c.h.b16 %v66
  %v174 = vunpack.c.l.b16 %v67
  %v175 = vunpack.c.h.b16 %v67
  %v176 = vunpack.c.l.b16 %v68
  %v177 = vunpack.c.h.b16 %v68
  %v178 = vunpack.c.l.b16 %v69
  %v179 = vunpack.c.h.b16 %v69
  %v180 = vunpack.c.l.b16 %v70
  %v181 = vunpack.c.h.b16 %v70
  %v182 = vunpack.c.l.b16 %v71
  %v183 = vunpack.c.h.b16 %v71
  %v184 = vunpack.c.l.b16 %v72
  %v185 = vunpack.c.h.b16 %v72
  %v186 = vunpack.c.l.b16 %v73
  %v187 = vunpack.c.h.b16 %v73
  %v188 = vunpack.c.l.b16 %v74
  %v189 = vunpack.c.h.b16 %v74
  %v190 = vunpack.c.l.b16 %v75
  %v191 = vunpack.c.h.b16 %v75
  %v192 = vpack.c.b16 %v130, %v128
  %v193 = vpack.c.b16 %v131, %v129
  %v194 = vpack.c.b16 %v134, %v132
  %v195 = vpack.c.b16 %v135, %v133
  %v196 = vpack.c.b16 %v138, %v136
  %v197 = vpack.c.b16 %v139, %v137
  %v198 = vpack.c.b16 %v142, %v140
  %v199 = vpack.c.b16 %v143, %v141
  %v200 = vpack.c.b16 %v146, %v144
  %v201 = vpack.c.b16 %v147, %v145
  %v202 = vpack.c.b16 %v150, %v148
  %v203 = vpack.c.b16 %v151, %v149
  %v204 = vpack.c.b16 %v154, %v152
  %v205 = vpack.c.b16 %v155, %v153
  %v206 = vpack.c.b16 %v158, %v156
  %v207 = vpack.c.b16 %v159, %v157
  %v208 = vpack.c.b16 %v162, %v160
  %v209 = vpack.c.b16 %v163, %v161
  %v210 = vpack.c.b16 %v166, %v164
  %v211 = vpack.c.b16 %v167, %v165
  %v212 = vpack.c.b16 %v170, %v168
  %v213 = vpack.c.b16 %v171, %v169
  %v214 = vpack.c.b16 %v174, %v172
  %v215 = vpack.c.b16 %v175, %v173
  %v216 = vpack.c.b16 %v178, %v176
  %v217 = vpack.c.b16 %v179, %v177
  %v218 = vpack.c.b16 %v182, %v180
  %v219 = vpack.c.b16 %v183, %v181
  %v220 = vpack.c.b16 %v186, %v184
  %v221 = vpack.c.b16 %v187, %v185
  %v222 = vpack.c.b16 %v190, %v188
  %v223 = vpack.c.b16 %v191, %v189
  %256 = vmatprep.subr.bf16.mxu0 %v193
  %257 = vmatpush1.bf16.msra.mxu0 %v192
  %258 = vmatprep.subr.bf16.mxu0 %v195
  %259 = vmatpush1.bf16.msra.mxu0 %v194
  %260 = vmatprep.subr.bf16.mxu0 %v197
  %261 = vmatpush1.bf16.msra.mxu0 %v196
  %262 = vmatprep.subr.bf16.mxu0 %v199
  %263 = vmatpush1.bf16.msra.mxu0 %v198
  %264 = vmatprep.subr.bf16.mxu0 %v201
  %265 = vmatpush1.bf16.msra.mxu0 %v200
  %266 = vmatprep.subr.bf16.mxu0 %v203
  %267 = vmatpush1.bf16.msra.mxu0 %v202
  %268 = vmatprep.subr.bf16.mxu0 %v205
  %269 = vmatpush1.bf16.msra.mxu0 %v204
  %270 = vmatprep.subr.bf16.mxu0 %v207
  %271 = vmatpush1.bf16.msra.mxu0 %v206
  %272 = vmatprep.subr.bf16.mxu0 %v209
  %273 = vmatpush1.bf16.msra.mxu0 %v208
  %274 = vmatprep.subr.bf16.mxu0 %v211
  %275 = vmatpush1.bf16.msra.mxu0 %v210
  %276 = vmatprep.subr.bf16.mxu0 %v213
  %277 = vmatpush1.bf16.msra.mxu0 %v212
  %278 = vmatprep.subr.bf16.mxu0 %v215
  %279 = vmatpush1.bf16.msra.mxu0 %v214
  %280 = vmatprep.subr.bf16.mxu0 %v217
  %281 = vmatpush1.bf16.msra.mxu0 %v216
  %282 = vmatprep.subr.bf16.mxu0 %v219
  %283 = vmatpush1.bf16.msra.mxu0 %v218
  %284 = vmatprep.subr.bf16.mxu0 %v221
  %285 = vmatpush1.bf16.msra.mxu0 %v220
  %286 = vmatprep.subr.bf16.mxu0 %v223
  %287 = vmatpush1.bf16.msra.mxu0 %v222
  %288 = vmatprep.mubr.bf16.mxu0 %v89
  %289 = vmatmul.mubr.bf16.gmra.mrb[0].mxu0 %v88
  %v290 = vpop.f32.mrb[0].mxu0
  %v291 = vadd.f32 0.0, %v290
  %v292 = vpop.f32.mrb[0].mxu0
  %v293 = vadd.f32 0.0, %v292
  %v294 = vpop.f32.mrb[0].mxu0
  %v295 = vadd.f32 0.0, %v294
  %v296 = vpop.f32.mrb[0].mxu0
  %v297 = vadd.f32 0.0, %v296
  %298 = vmatprep.mubr.bf16.mxu0 %v91
  %299 = vmatmul.mubr.bf16.gmra.mrb[0].mxu0 %v90
  %v300 = vpop.f32.mrb[0].mxu0
  %v301 = vadd.f32 0.0, %v300
  %v302 = vpop.f32.mrb[0].mxu0
  %v303 = vadd.f32 0.0, %v302
  %v304 = vpop.f32.mrb[0].mxu0
  %v305 = vadd.f32 0.0, %v304
  %v306 = vpop.f32.mrb[0].mxu0
  %v307 = vadd.f32 0.0, %v306
  %308 = vdwg.mxu0
  %v313 = vunpack.c.l.b16 %v20
  %v314 = vunpack.c.l.b16 %v21
  %v315 = vunpack.c.l.b16 %v22
  %v316 = vunpack.c.l.b16 %v23
  %v317 = vpack.c.b16 %v314, %v313
  %v318 = vpack.c.b16 %v316, %v315
  %v337 = vunpack.c.l.b16 %v24
  %v338 = vunpack.c.h.b16 %v24
  %v339 = vunpack.c.l.b16 %v25
  %v340 = vunpack.c.h.b16 %v25
  %v341 = vunpack.c.l.b16 %v26
  %v342 = vunpack.c.h.b16 %v26
  %v343 = vunpack.c.l.b16 %v27
  %v344 = vunpack.c.h.b16 %v27
  %v345 = vunpack.c.l.b16 %v28
  %v346 = vunpack.c.h.b16 %v28
  %v347 = vunpack.c.l.b16 %v29
  %v348 = vunpack.c.h.b16 %v29
  %v349 = vunpack.c.l.b16 %v30
  %v350 = vunpack.c.h.b16 %v30
  %v351 = vunpack.c.l.b16 %v31
  %v352 = vunpack.c.h.b16 %v31
  %v353 = vunpack.c.l.b16 %v32
  %v354 = vunpack.c.h.b16 %v32
  %v355 = vunpack.c.l.b16 %v33
  %v356 = vunpack.c.h.b16 %v33
  %v357 = vunpack.c.l.b16 %v34
  %v358 = vunpack.c.h.b16 %v34
  %v359 = vunpack.c.l.b16 %v35
  %v360 = vunpack.c.h.b16 %v35
  %v361 = vunpack.c.l.b16 %v36
  %v362 = vunpack.c.h.b16 %v36
  %v363 = vunpack.c.l.b16 %v37
  %v364 = vunpack.c.h.b16 %v37
  %v365 = vunpack.c.l.b16 %v38
  %v366 = vunpack.c.h.b16 %v38
  %v367 = vunpack.c.l.b16 %v39
  %v368 = vunpack.c.h.b16 %v39
  %v369 = vpack.c.b16 %v339, %v337
  %v370 = vpack.c.b16 %v340, %v338
  %v371 = vpack.c.b16 %v343, %v341
  %v372 = vpack.c.b16 %v344, %v342
  %v373 = vpack.c.b16 %v347, %v345
  %v374 = vpack.c.b16 %v348, %v346
  %v375 = vpack.c.b16 %v351, %v349
  %v376 = vpack.c.b16 %v352, %v350
  %v377 = vpack.c.b16 %v355, %v353
  %v378 = vpack.c.b16 %v356, %v354
  %v379 = vpack.c.b16 %v359, %v357
  %v380 = vpack.c.b16 %v360, %v358
  %v381 = vpack.c.b16 %v363, %v361
  %v382 = vpack.c.b16 %v364, %v362
  %v383 = vpack.c.b16 %v367, %v365
  %v384 = vpack.c.b16 %v368, %v366
  %401 = vmatprep.subr.bf16.mxu0 %v370
  %402 = vmatpush1.bf16.msra.mxu0 %v369
  %403 = vmatprep.subr.bf16.mxu0 %v372
  %404 = vmatpush1.bf16.msra.mxu0 %v371
  %405 = vmatprep.subr.bf16.mxu0 %v374
  %406 = vmatpush1.bf16.msra.mxu0 %v373
  %407 = vmatprep.subr.bf16.mxu0 %v376
  %408 = vmatpush1.bf16.msra.mxu0 %v375
  %409 = vmatprep.subr.bf16.mxu0 %v378
  %410 = vmatpush1.bf16.msra.mxu0 %v377
  %411 = vmatprep.subr.bf16.mxu0 %v380
  %412 = vmatpush1.bf16.msra.mxu0 %v379
  %413 = vmatprep.subr.bf16.mxu0 %v382
  %414 = vmatpush1.bf16.msra.mxu0 %v381
  %415 = vmatprep.subr.bf16.mxu0 %v384
  %416 = vmatpush1.bf16.msra.mxu0 %v383
  %417 = vmatprep.subr.bf16.mxu0 0
  %418 = vmatpush1.bf16.msra.mxu0 0
  %419 = vmatprep.subr.bf16.mxu0 0
  %420 = vmatpush1.bf16.msra.mxu0 0
  %421 = vmatprep.subr.bf16.mxu0 0
  %422 = vmatpush1.bf16.msra.mxu0 0
  %423 = vmatprep.subr.bf16.mxu0 0
  %424 = vmatpush1.bf16.msra.mxu0 0
  %425 = vmatprep.subr.bf16.mxu0 0
  %426 = vmatpush1.bf16.msra.mxu0 0
  %427 = vmatprep.subr.bf16.mxu0 0
  %428 = vmatpush1.bf16.msra.mxu0 0
  %429 = vmatprep.subr.bf16.mxu0 0
  %430 = vmatpush1.bf16.msra.mxu0 0
  %431 = vmatprep.subr.bf16.mxu0 0
  %432 = vmatpush1.bf16.msra.mxu0 0
  %433 = vmatprep.mubr.bf16.mxu0 0
  %434 = vmatmul.mubr.bf16.gmra.mrb[0].mxu0 %v317
  %v435 = vpop.f32.mrb[0].mxu0
  %v436 = vadd.f32 %v291, %v435
  %v437 = vpop.f32.mrb[0].mxu0
  %v438 = vadd.f32 %v293, %v437
  %v439 = vpop.f32.mrb[0].mxu0
  %v440 = vadd.f32 %v295, %v439
  %v441 = vpop.f32.mrb[0].mxu0
  %v442 = vadd.f32 %v297, %v441
  %443 = vmatprep.mubr.bf16.mxu0 0
  %444 = vmatmul.mubr.bf16.gmra.mrb[0].mxu0 %v318
  %v445 = vpop.f32.mrb[0].mxu0
  %v446 = vadd.f32 %v301, %v445
  %v447 = vpop.f32.mrb[0].mxu0
  %v448 = vadd.f32 %v303, %v447
  %v449 = vpop.f32.mrb[0].mxu0
  %v450 = vadd.f32 %v305, %v449
  %v451 = vpop.f32.mrb[0].mxu0
  %v452 = vadd.f32 %v307, %v451
  %453 = vdwg.mxu0
  %454 = vst [vmem:[%s4] sm:$0xff] %v436
  %455 = vst [vmem:[%s4 + $0x8] sm:$0xff] %v438
  %456 = vst [vmem:[%s4 + $0x10] sm:$0xff] %v440
  %457 = vst [vmem:[%s4 + $0x18] sm:$0xff] %v442
  %458 = vst [vmem:[%s4 + $0x20] sm:$0xff] %v446
  %459 = vst [vmem:[%s4 + $0x28] sm:$0xff] %v448
  %460 = vst [vmem:[%s4 + $0x30] sm:$0xff] %v450
  %461 = vst [vmem:[%s4 + $0x38] sm:$0xff] %v452
  %p462 = scmp.eq.s32.totalorder 0, 0
  // Predicated region
  $region18: #{pointnet2_decoder_without_cls_head.22} parent=0 // pred_check
    %p463 = pneg %p462
  $region19: #{pointnet2_decoder_without_cls_head.22} parent=0 // pred_check_branch
    %465 = sbr.rel (%p463) target = $region21
  $region20: #{pointnet2_decoder_without_cls_head.22} parent=0 // pred_region
    %466 = vst [vmem:[%s5] sm:$0xf] 0.0
  $region21: #{pointnet2_decoder_without_cls_head.22} parent=0 // pred_fallthru
    _
  %v467 = vld [vmem:[%s5] ss:$2 sm:$0x3]
  %v468 = vadd.f32 %v436, %v440
  %v469 = vadd.f32 %v468, %v446
  %v470 = vadd.f32 %v469, %v450
  %v471 = vrot.slane %v470, 4
  %v472 = vadd.f32 %v470, %v471
  %v473 = vrot.slane %v472, 2
  %v474 = vadd.f32 %v472, %v473
  %v475 = vrot.slane %v474, 1
  %v476 = vadd.f32 %v474, %v475
  %v477 = vadd.f32 %v438, %v442
  %v478 = vadd.f32 %v477, %v448
  %v479 = vadd.f32 %v478, %v452
  %v480 = vrot.slane %v479, 4
  %v481 = vadd.f32 %v479, %v480
  %v482 = vrot.slane %v481, 2
  %v483 = vadd.f32 %v481, %v482
  %v484 = vrot.slane %v483, 1
  %v485 = vadd.f32 %v483, %v484
  %v488 = vcombine.low %v476, %v485
  %v490 = vunpack.c.l.s4 1966171168
  %v491 = vunpack.c.0.s8 %v490
  %v492 = vlaneseq
  %v493 = vshrl.u32 %v492, 7
  %v494 = vsub.s32 %v491, %v493
  %v495 = vrot.slane %v488, %v494
  %v497 = vunpack.c.l.s4 1966171168
  %v498 = vunpack.c.0.s8 %v497
  %v499 = vlaneseq
  %v500 = vshrl.u32 %v499, 7
  %v501 = vsub.s32 %v498, %v500
  %v502 = vrot.slane %v495, %v501
  %v504 = vadd.f32 %v467, %v502
  %v505 = vlaneseq
  %vm506 = vcmp.ge.s32.totalorder %v505, 0
  %vm507 = vcmp.lt.s32.totalorder %v505, 256
  %vm508 = vmand %vm506, %vm507
  %509 = vst.msk [vmem:[%s5] ss:$2 sm:$0x3] %vm508, %v504
  %s510 = scalar_lea.vmem %s5, 1
  %v511 = vld [vmem:[%s510] ss:$2 sm:$0x3]
  %v512 = vmul.f32 %v436, %v436
  %v513 = vmul.f32 %v438, %v438
  %v514 = vmul.f32 %v440, %v440
  %v515 = vmul.f32 %v442, %v442
  %v516 = vmul.f32 %v446, %v446
  %v517 = vmul.f32 %v448, %v448
  %v518 = vmul.f32 %v450, %v450
  %v519 = vmul.f32 %v452, %v452
  %v520 = vadd.f32 %v512, %v514
  %v521 = vadd.f32 %v520, %v516
  %v522 = vadd.f32 %v521, %v518
  %v523 = vrot.slane %v522, 4
  %v524 = vadd.f32 %v522, %v523
  %v525 = vrot.slane %v524, 2
  %v526 = vadd.f32 %v524, %v525
  %v527 = vrot.slane %v526, 1
  %v528 = vadd.f32 %v526, %v527
  %v529 = vadd.f32 %v513, %v515
  %v530 = vadd.f32 %v529, %v517
  %v531 = vadd.f32 %v530, %v519
  %v532 = vrot.slane %v531, 4
  %v533 = vadd.f32 %v531, %v532
  %v534 = vrot.slane %v533, 2
  %v535 = vadd.f32 %v533, %v534
  %v536 = vrot.slane %v535, 1
  %v537 = vadd.f32 %v535, %v536
  %v540 = vcombine.low %v528, %v537
  %v542 = vunpack.c.l.s4 1966171168
  %v543 = vunpack.c.0.s8 %v542
  %v544 = vlaneseq
  %v545 = vshrl.u32 %v544, 7
  %v546 = vsub.s32 %v543, %v545
  %v547 = vrot.slane %v540, %v546
  %v549 = vunpack.c.l.s4 1966171168
  %v550 = vunpack.c.0.s8 %v549
  %v551 = vlaneseq
  %v552 = vshrl.u32 %v551, 7
  %v553 = vsub.s32 %v550, %v552
  %v554 = vrot.slane %v547, %v553
  %v556 = vadd.f32 %v511, %v554
  %557 = vst.msk [vmem:[%s510] ss:$2 sm:$0x3] %vm508, %v556
  // Predicated region
  $region22: #{pointnet2_decoder_without_cls_head.22} parent=0 // pred_check
    _
  $region23: #{pointnet2_decoder_without_cls_head.22} parent=0 // pred_check_branch
    %559 = sbr.rel (0) target = $region25
  $region24: #{pointnet2_decoder_without_cls_head.22} parent=0 // pred_region
    _
  $region25: #{pointnet2_decoder_without_cls_head.22} parent=0 // pred_fallthru
    _
  // Predicated region
  $region26: #{pointnet2_decoder_without_cls_head.22} parent=0 // pred_check
    _
  $region27: #{pointnet2_decoder_without_cls_head.22} parent=0 // pred_check_branch
    %561 = sbr.rel (0) target = $region29
  $region28: #{pointnet2_decoder_without_cls_head.22} parent=0 // pred_region
    _
  $region29: #{pointnet2_decoder_without_cls_head.22} parent=0 // pred_fallthru
    _
  // Predicated region
  $region30: #{pointnet2_decoder_without_cls_head.22} parent=0 // pred_check
    _
  $region31: #{pointnet2_decoder_without_cls_head.22} parent=0 // pred_check_branch
    %563 = sbr.rel (0) target = $region33
  $region32: #{pointnet2_decoder_without_cls_head.22} parent=0 // pred_region
    _
  $region33: #{pointnet2_decoder_without_cls_head.22} parent=0 // pred_fallthru
    _
  // Predicated region
  $region34: #{pointnet2_decoder_without_cls_head.22} parent=0 // pred_check
    _
  $region35: #{pointnet2_decoder_without_cls_head.22} parent=0 // pred_check_branch
    %565 = sbr.rel (0) target = $region37
  $region36: #{pointnet2_decoder_without_cls_head.22} parent=0 // pred_region
    _
  $region37: #{pointnet2_decoder_without_cls_head.22} parent=0 // pred_fallthru
    _

// kernel: pointnet2_decoder_without_cls_head.24
$region0: #{pointnet2_decoder_without_cls_head.24}
  #allocation0 [shape = 'u32[]', space=smem, size = 0x4, offset = 0x4, fixed_abs, tag = 'smem constant byte address 0x4 - core index']
  #allocation1 [shape = 'u32[144,128]{1,0:T(1,128)}', space=vmem, size = 0x12000, scoped, tag = 'internal scratch']
  %s0 = inlined_call_operand.vmem [shape: f32[32,256], index: 0, kind: input, shape index: {}]
  %s1 = inlined_call_operand.vmem [shape: f32[2,256], index: 1, kind: input, shape index: {}]
  %s2 = inlined_call_operand.vmem [shape: f32[1,256], index: 2, kind: input, shape index: {}]
  %s3 = inlined_call_operand.vmem [shape: f32[1,256], index: 3, kind: input, shape index: {}]
  %s4 = inlined_call_operand.vmem [shape: f32[32,256], index: 4, kind: output, shape index: {}]
  %s5 = sld [smem:[#allocation0]]
  $region26: #{pointnet2_decoder_without_cls_head.24} parent=0
    _
  %s7 = ssub.s32 1, %s5
  %s8 = scalar_select 0, %s7, %s5
  // Predicated region
  $region2: #{pointnet2_decoder_without_cls_head.24} parent=0 // pred_check
    _
  $region3: #{pointnet2_decoder_without_cls_head.24} parent=0 // pred_check_branch
    %10 = sbr.rel (0) target = $region5
  $region4: #{pointnet2_decoder_without_cls_head.24} parent=0 // pred_region
    _
  $region5: #{pointnet2_decoder_without_cls_head.24} parent=0 // pred_fallthru
    _
  // Predicated region
  $region6: #{pointnet2_decoder_without_cls_head.24} parent=0 // pred_check
    _
  $region7: #{pointnet2_decoder_without_cls_head.24} parent=0 // pred_check_branch
    %12 = sbr.rel (0) target = $region9
  $region8: #{pointnet2_decoder_without_cls_head.24} parent=0 // pred_region
    _
  $region9: #{pointnet2_decoder_without_cls_head.24} parent=0 // pred_fallthru
    _
  // Predicated region
  $region10: #{pointnet2_decoder_without_cls_head.24} parent=0 // pred_check
    _
  $region11: #{pointnet2_decoder_without_cls_head.24} parent=0 // pred_check_branch
    %14 = sbr.rel (0) target = $region13
  $region12: #{pointnet2_decoder_without_cls_head.24} parent=0 // pred_region
    _
  $region13: #{pointnet2_decoder_without_cls_head.24} parent=0 // pred_fallthru
    _
  // Predicated region
  $region14: #{pointnet2_decoder_without_cls_head.24} parent=0 // pred_check
    _
  $region15: #{pointnet2_decoder_without_cls_head.24} parent=0 // pred_check_branch
    %16 = sbr.rel (0) target = $region17
  $region16: #{pointnet2_decoder_without_cls_head.24} parent=0 // pred_region
    _
  $region17: #{pointnet2_decoder_without_cls_head.24} parent=0 // pred_fallthru
    _
  %v17 = vld [vmem:[%s1] ss:$2 sm:$0x3]
  %v18 = vmul.f32 %v17, 0.03125
  %s19 = scalar_lea.vmem %s1, 1
  %v20 = vld [vmem:[%s19] ss:$2 sm:$0x3]
  %v21 = vmul.f32 %v20, 0.03125
  %v22 = vmul.f32 %v18, %v18
  %v23 = vsub.f32 %v21, %v22
  %v24 = vld [vmem:[%s0] sm:$0xff]
  %v25 = vld [vmem:[%s0 + $0x8] sm:$0xff]
  %v26 = vld [vmem:[%s0 + $0x10] sm:$0xff]
  %v27 = vld [vmem:[%s0 + $0x18] sm:$0xff]
  %v28 = vld [vmem:[%s0 + $0x20] sm:$0xff]
  %v29 = vld [vmem:[%s0 + $0x28] sm:$0xff]
  %v30 = vld [vmem:[%s0 + $0x30] sm:$0xff]
  %v31 = vld [vmem:[%s0 + $0x38] sm:$0xff]
  %v33 = vlaneseq
  %v34 = vshrl.u32 %v33, 7
  %v35 = vsub.s32 0, %v34
  %v36 = vrot.slane %v18, %v35
  %v37 = vlaneseq
  %v38 = vshrl.u32 %v37, 7
  %v39 = vsub.s32 1, %v38
  %v40 = vrot.slane %v18, %v39
  %v43 = vsub.f32 %v24, %v36
  %v44 = vsub.f32 %v25, %v40
  %v45 = vsub.f32 %v26, %v36
  %v46 = vsub.f32 %v27, %v40
  %v47 = vsub.f32 %v28, %v36
  %v48 = vsub.f32 %v29, %v40
  %v49 = vsub.f32 %v30, %v36
  %v50 = vsub.f32 %v31, %v40
  %v51 = vadd.f32 %v23, 1e-05
  %v52 = vrsqrt.pop %v51
  %v54 = vlaneseq
  %v55 = vshrl.u32 %v54, 7
  %v56 = vsub.s32 0, %v55
  %v57 = vrot.slane %v52, %v56
  %v58 = vlaneseq
  %v59 = vshrl.u32 %v58, 7
  %v60 = vsub.s32 1, %v59
  %v61 = vrot.slane %v52, %v60
  %v64 = vmul.f32 %v43, %v57
  %v65 = vmul.f32 %v44, %v61
  %v66 = vmul.f32 %v45, %v57
  %v67 = vmul.f32 %v46, %v61
  %v68 = vmul.f32 %v47, %v57
  %v69 = vmul.f32 %v48, %v61
  %v70 = vmul.f32 %v49, %v57
  %v71 = vmul.f32 %v50, %v61
  %v72 = vld [vmem:[%s2] sm:$0x3]
  %v74 = vlaneseq
  %v75 = vshrl.u32 %v74, 7
  %v76 = vsub.s32 0, %v75
  %v77 = vrot.slane %v72, %v76
  %v78 = vlaneseq
  %v79 = vshrl.u32 %v78, 7
  %v80 = vsub.s32 1, %v79
  %v81 = vrot.slane %v72, %v80
  %v84 = vmul.f32 %v64, %v77
  %v85 = vmul.f32 %v65, %v81
  %v86 = vmul.f32 %v66, %v77
  %v87 = vmul.f32 %v67, %v81
  %v88 = vmul.f32 %v68, %v77
  %v89 = vmul.f32 %v69, %v81
  %v90 = vmul.f32 %v70, %v77
  %v91 = vmul.f32 %v71, %v81
  %v92 = vld [vmem:[%s3] sm:$0x3]
  %v94 = vlaneseq
  %v95 = vshrl.u32 %v94, 7
  %v96 = vsub.s32 0, %v95
  %v97 = vrot.slane %v92, %v96
  %v98 = vlaneseq
  %v99 = vshrl.u32 %v98, 7
  %v100 = vsub.s32 1, %v99
  %v101 = vrot.slane %v92, %v100
  %v104 = vadd.f32 %v84, %v97
  %v105 = vadd.f32 %v85, %v101
  %v106 = vadd.f32 %v86, %v97
  %v107 = vadd.f32 %v87, %v101
  %v108 = vadd.f32 %v88, %v97
  %v109 = vadd.f32 %v89, %v101
  %v110 = vadd.f32 %v90, %v97
  %v111 = vadd.f32 %v91, %v101
  %v112 = vmax.f32 %v104, 0.0
  %v113 = vmax.f32 %v105, 0.0
  %v114 = vmax.f32 %v106, 0.0
  %v115 = vmax.f32 %v107, 0.0
  %v116 = vmax.f32 %v108, 0.0
  %v117 = vmax.f32 %v109, 0.0
  %v118 = vmax.f32 %v110, 0.0
  %v119 = vmax.f32 %v111, 0.0
  %120 = vst [vmem:[%s4] sm:$0xff] %v112
  %121 = vst [vmem:[%s4 + $0x8] sm:$0xff] %v113
  %122 = vst [vmem:[%s4 + $0x10] sm:$0xff] %v114
  %123 = vst [vmem:[%s4 + $0x18] sm:$0xff] %v115
  %124 = vst [vmem:[%s4 + $0x20] sm:$0xff] %v116
  %125 = vst [vmem:[%s4 + $0x28] sm:$0xff] %v117
  %126 = vst [vmem:[%s4 + $0x30] sm:$0xff] %v118
  %127 = vst [vmem:[%s4 + $0x38] sm:$0xff] %v119
  // Predicated region
  $region18: #{pointnet2_decoder_without_cls_head.24} parent=0 // pred_check
    _
  $region19: #{pointnet2_decoder_without_cls_head.24} parent=0 // pred_check_branch
    %129 = sbr.rel (0) target = $region21
  $region20: #{pointnet2_decoder_without_cls_head.24} parent=0 // pred_region
    _
  $region21: #{pointnet2_decoder_without_cls_head.24} parent=0 // pred_fallthru
    _
  // Predicated region
  $region22: #{pointnet2_decoder_without_cls_head.24} parent=0 // pred_check
    _
  $region23: #{pointnet2_decoder_without_cls_head.24} parent=0 // pred_check_branch
    %131 = sbr.rel (0) target = $region25
  $region24: #{pointnet2_decoder_without_cls_head.24} parent=0 // pred_region
    _
  $region25: #{pointnet2_decoder_without_cls_head.24} parent=0 // pred_fallthru
    _

// kernel: pointnet2_decoder_without_cls_head.28
$region0: #{pointnet2_decoder_without_cls_head.28}
  #allocation0 [shape = 'u32[]', space=smem, size = 0x4, offset = 0x4, fixed_abs, tag = 'smem constant byte address 0x4 - core index']
  #allocation1 [shape = 'u32[144,128]{1,0:T(1,128)}', space=vmem, size = 0x12000, scoped, tag = 'internal scratch']
  %s0 = inlined_call_operand.vmem [shape: f32[64,128], index: 0, kind: input, shape index: {}]
  %s1 = inlined_call_operand.vmem [shape: f32[2,128], index: 1, kind: input, shape index: {}]
  %s2 = inlined_call_operand.vmem [shape: f32[1,128], index: 2, kind: input, shape index: {}]
  %s3 = inlined_call_operand.vmem [shape: f32[1,128], index: 3, kind: input, shape index: {}]
  %s4 = inlined_call_operand.vmem [shape: f32[64,128], index: 4, kind: output, shape index: {}]
  %s5 = sld [smem:[#allocation0]]
  $region26: #{pointnet2_decoder_without_cls_head.28} parent=0
    _
  %s7 = ssub.s32 1, %s5
  %s8 = scalar_select 0, %s7, %s5
  // Predicated region
  $region2: #{pointnet2_decoder_without_cls_head.28} parent=0 // pred_check
    _
  $region3: #{pointnet2_decoder_without_cls_head.28} parent=0 // pred_check_branch
    %10 = sbr.rel (0) target = $region5
  $region4: #{pointnet2_decoder_without_cls_head.28} parent=0 // pred_region
    _
  $region5: #{pointnet2_decoder_without_cls_head.28} parent=0 // pred_fallthru
    _
  // Predicated region
  $region6: #{pointnet2_decoder_without_cls_head.28} parent=0 // pred_check
    _
  $region7: #{pointnet2_decoder_without_cls_head.28} parent=0 // pred_check_branch
    %12 = sbr.rel (0) target = $region9
  $region8: #{pointnet2_decoder_without_cls_head.28} parent=0 // pred_region
    _
  $region9: #{pointnet2_decoder_without_cls_head.28} parent=0 // pred_fallthru
    _
  // Predicated region
  $region10: #{pointnet2_decoder_without_cls_head.28} parent=0 // pred_check
    _
  $region11: #{pointnet2_decoder_without_cls_head.28} parent=0 // pred_check_branch
    %14 = sbr.rel (0) target = $region13
  $region12: #{pointnet2_decoder_without_cls_head.28} parent=0 // pred_region
    _
  $region13: #{pointnet2_decoder_without_cls_head.28} parent=0 // pred_fallthru
    _
  // Predicated region
  $region14: #{pointnet2_decoder_without_cls_head.28} parent=0 // pred_check
    _
  $region15: #{pointnet2_decoder_without_cls_head.28} parent=0 // pred_check_branch
    %16 = sbr.rel (0) target = $region17
  $region16: #{pointnet2_decoder_without_cls_head.28} parent=0 // pred_region
    _
  $region17: #{pointnet2_decoder_without_cls_head.28} parent=0 // pred_fallthru
    _
  %v17 = vld [vmem:[%s1] sm:$0x1]
  %v18 = vmul.f32 %v17, 0.015625
  %v19 = vld [vmem:[%s1 + $0x1] sm:$0x1]
  %v20 = vmul.f32 %v19, 0.015625
  %v21 = vmul.f32 %v18, %v18
  %v22 = vsub.f32 %v20, %v21
  %v23 = vld [vmem:[%s0] sm:$0xff]
  %v24 = vld [vmem:[%s0 + $0x8] sm:$0xff]
  %v25 = vld [vmem:[%s0 + $0x10] sm:$0xff]
  %v26 = vld [vmem:[%s0 + $0x18] sm:$0xff]
  %v27 = vld [vmem:[%s0 + $0x20] sm:$0xff]
  %v28 = vld [vmem:[%s0 + $0x28] sm:$0xff]
  %v29 = vld [vmem:[%s0 + $0x30] sm:$0xff]
  %v30 = vld [vmem:[%s0 + $0x38] sm:$0xff]
  %v31 = vlaneseq
  %v32 = vshrl.u32 %v31, 7
  %v33 = vsub.s32 0, %v32
  %v34 = vrot.slane %v18, %v33
  %v35 = vsub.f32 %v23, %v34
  %v36 = vsub.f32 %v24, %v34
  %v37 = vsub.f32 %v25, %v34
  %v38 = vsub.f32 %v26, %v34
  %v39 = vsub.f32 %v27, %v34
  %v40 = vsub.f32 %v28, %v34
  %v41 = vsub.f32 %v29, %v34
  %v42 = vsub.f32 %v30, %v34
  %v43 = vadd.f32 %v22, 1e-05
  %v44 = vrsqrt.pop %v43
  %v45 = vlaneseq
  %v46 = vshrl.u32 %v45, 7
  %v47 = vsub.s32 0, %v46
  %v48 = vrot.slane %v44, %v47
  %v49 = vmul.f32 %v35, %v48
  %v50 = vmul.f32 %v36, %v48
  %v51 = vmul.f32 %v37, %v48
  %v52 = vmul.f32 %v38, %v48
  %v53 = vmul.f32 %v39, %v48
  %v54 = vmul.f32 %v40, %v48
  %v55 = vmul.f32 %v41, %v48
  %v56 = vmul.f32 %v42, %v48
  %v57 = vld [vmem:[%s2] sm:$0x1]
  %v59 = vlaneseq
  %v60 = vshrl.u32 %v59, 7
  %v61 = vsub.s32 0, %v60
  %v62 = vrot.slane %v57, %v61
  %v64 = vmul.f32 %v49, %v62
  %v65 = vmul.f32 %v50, %v62
  %v66 = vmul.f32 %v51, %v62
  %v67 = vmul.f32 %v52, %v62
  %v68 = vmul.f32 %v53, %v62
  %v69 = vmul.f32 %v54, %v62
  %v70 = vmul.f32 %v55, %v62
  %v71 = vmul.f32 %v56, %v62
  %v72 = vld [vmem:[%s3] sm:$0x1]
  %v74 = vlaneseq
  %v75 = vshrl.u32 %v74, 7
  %v76 = vsub.s32 0, %v75
  %v77 = vrot.slane %v72, %v76
  %v79 = vadd.f32 %v64, %v77
  %v80 = vadd.f32 %v65, %v77
  %v81 = vadd.f32 %v66, %v77
  %v82 = vadd.f32 %v67, %v77
  %v83 = vadd.f32 %v68, %v77
  %v84 = vadd.f32 %v69, %v77
  %v85 = vadd.f32 %v70, %v77
  %v86 = vadd.f32 %v71, %v77
  %v87 = vmax.f32 %v79, 0.0
  %v88 = vmax.f32 %v80, 0.0
  %v89 = vmax.f32 %v81, 0.0
  %v90 = vmax.f32 %v82, 0.0
  %v91 = vmax.f32 %v83, 0.0
  %v92 = vmax.f32 %v84, 0.0
  %v93 = vmax.f32 %v85, 0.0
  %v94 = vmax.f32 %v86, 0.0
  %95 = vst [vmem:[%s4] sm:$0xff] %v87
  %96 = vst [vmem:[%s4 + $0x8] sm:$0xff] %v88
  %97 = vst [vmem:[%s4 + $0x10] sm:$0xff] %v89
  %98 = vst [vmem:[%s4 + $0x18] sm:$0xff] %v90
  %99 = vst [vmem:[%s4 + $0x20] sm:$0xff] %v91
  %100 = vst [vmem:[%s4 + $0x28] sm:$0xff] %v92
  %101 = vst [vmem:[%s4 + $0x30] sm:$0xff] %v93
  %102 = vst [vmem:[%s4 + $0x38] sm:$0xff] %v94
  // Predicated region
  $region18: #{pointnet2_decoder_without_cls_head.28} parent=0 // pred_check
    _
  $region19: #{pointnet2_decoder_without_cls_head.28} parent=0 // pred_check_branch
    %104 = sbr.rel (0) target = $region21
  $region20: #{pointnet2_decoder_without_cls_head.28} parent=0 // pred_region
    _
  $region21: #{pointnet2_decoder_without_cls_head.28} parent=0 // pred_fallthru
    _
  // Predicated region
  $region22: #{pointnet2_decoder_without_cls_head.28} parent=0 // pred_check
    _
  $region23: #{pointnet2_decoder_without_cls_head.28} parent=0 // pred_check_branch
    %106 = sbr.rel (0) target = $region25
  $region24: #{pointnet2_decoder_without_cls_head.28} parent=0 // pred_region
    _
  $region25: #{pointnet2_decoder_without_cls_head.28} parent=0 // pred_fallthru
    _

// kernel: pointnet2_decoder_without_cls_head.25
$region0: #{pointnet2_decoder_without_cls_head.25}
  #allocation0 [shape = 'u32[]', space=smem, size = 0x4, offset = 0x4, fixed_abs, tag = 'smem constant byte address 0x4 - core index']
  #allocation1 [shape = 'u32[144,128]{1,0:T(1,128)}', space=vmem, size = 0x12000, scoped, tag = 'internal scratch']
  %s0 = inlined_call_operand.vmem [shape: f32[2,32,8], index: 0, kind: input, shape index: {}]
  %s1 = inlined_call_operand.vmem [shape: f32[2,8,16], index: 1, kind: input, shape index: {}]
  %s2 = inlined_call_operand.vmem [shape: bf16[2,16,256], index: 2, kind: input, shape index: {}]
  %s3 = inlined_call_operand.vmem [shape: bf16[2,32,256], index: 3, kind: output, shape index: {}]
  %s4 = sld [smem:[#allocation0]]
  $region45: #{pointnet2_decoder_without_cls_head.25} parent=0
    _
  %s6 = ssub.s32 1, %s4
  %s7 = scalar_select 0, %s6, %s4
  loop: start=0, step=1, limit=4
  $region2: #{pointnet2_decoder_without_cls_head.25} parent=0 // loop_pre_header
    _
  $region3: #{pointnet2_decoder_without_cls_head.25} parent=0 // loop_header
    %s9 = sphi 0, %s13
    %p10 = scmp.ge.s32.totalorder %s9, 4
    %s16 = sphi 0, %s28
    %s17 = sphi 0, %s24
    %s18 = sphi 0, %s16
    %s19 = sphi 0, %s17
    %s20 = sphi 0, %s18
    %s21 = sphi 0, %s19
    %s33 = sphi 0, %s35
    %s36 = sphi 0, %s33
    %s37 = sphi 0, %s36
    %s53 = sphi 0, %s37
    %s59 = sphi 0, %s61
    %s62 = sphi 0, %s59
    %s63 = sphi 0, %s62
    %s79 = sphi 0, %s63
    %s85 = sphi 0, %s87
    %s88 = sphi 0, %s85
    %s89 = sphi 0, %s88
    %s105 = sphi 0, %s89
    %s113 = sphi 0, %s115
    %s116 = sphi 0, %s113
    %s117 = sphi 0, %s116
    %s133 = sphi 0, %s117
  $region4: #{pointnet2_decoder_without_cls_head.25} parent=0 // loop_header_branch
    %12 = sbr.rel (%p10) target = $region8
  $region5: #{pointnet2_decoder_without_cls_head.25} parent=0 // loop_body
    %s14 = ssub.s32 %s9, 1
    %s15 = ssub.s32 %s9, 2
    %s22 = sadd.s32 1, %s17
    %p23 = scmp.ge.s32.totalorder %s22, 1
    %s24 = scalar_select %p23, 0, %s22
    %s25 = sadd.s32 1, %s16
    %s26 = scalar_select %p23, %s25, %s16
    %p27 = scmp.ge.s32.totalorder %s26, 2
    %s28 = scalar_select %p27, 0, %s26
    %s29 = ssub.s32 %s16, %s28
    %s30 = ssub.s32 %s17, %s24
    %s31 = sor.u32 %s29, %s30
    %p32 = scmp.eq.s32.totalorder %s31, 0
    %s34 = sadd.s32 %s33, 1
    %s35 = scalar_select %p32, %s33, %s34
    %p38 = pneg %p32
    %p39 = scmp.eq.s32.totalorder %s9, 1
    %p40 = por %p38, %p39
    %p41 = scmp.ne.s32.totalorder %s33, %s36
    %p42 = scmp.eq.s32.totalorder %s9, 0
    %p43 = por %p41, %p42
    %p44 = scmp.ne.s32.totalorder %s33, %s36
    %p45 = scmp.eq.s32.totalorder %s14, 1
    %p46 = por %p44, %p45
    %p47 = scmp.ne.s32.totalorder %s36, %s37
    %p48 = scmp.eq.s32.totalorder %s14, 0
    %p49 = por %p47, %p48
    %p50 = scmp.ne.s32.totalorder %s36, %s37
    %p51 = scmp.eq.s32.totalorder %s15, 1
    %p52 = por %p50, %p51
    %p54 = scmp.ne.s32.totalorder %s37, %s53
    %p55 = scmp.eq.s32.totalorder %s15, 0
    %p56 = por %p54, %p55
    %s57 = ssub.s32 %s16, %s28
    %p58 = scmp.eq.s32.totalorder %s57, 0
    %s60 = sadd.s32 %s59, 1
    %s61 = scalar_select %p58, %s59, %s60
    %p64 = pneg %p58
    %p65 = scmp.eq.s32.totalorder %s9, 1
    %p66 = por %p64, %p65
    %p67 = scmp.ne.s32.totalorder %s59, %s62
    %p68 = scmp.eq.s32.totalorder %s9, 0
    %p69 = por %p67, %p68
    %p70 = scmp.ne.s32.totalorder %s59, %s62
    %p71 = scmp.eq.s32.totalorder %s14, 1
    %p72 = por %p70, %p71
    %p73 = scmp.ne.s32.totalorder %s62, %s63
    %p74 = scmp.eq.s32.totalorder %s14, 0
    %p75 = por %p73, %p74
    %p76 = scmp.ne.s32.totalorder %s62, %s63
    %p77 = scmp.eq.s32.totalorder %s15, 1
    %p78 = por %p76, %p77
    %p80 = scmp.ne.s32.totalorder %s63, %s79
    %p81 = scmp.eq.s32.totalorder %s15, 0
    %p82 = por %p80, %p81
    %s83 = ssub.s32 %s16, %s28
    %p84 = scmp.eq.s32.totalorder %s83, 0
    %s86 = sadd.s32 %s85, 1
    %s87 = scalar_select %p84, %s85, %s86
    %p90 = pneg %p84
    %p91 = scmp.eq.s32.totalorder %s9, 1
    %p92 = por %p90, %p91
    %p93 = scmp.ne.s32.totalorder %s85, %s88
    %p94 = scmp.eq.s32.totalorder %s9, 0
    %p95 = por %p93, %p94
    %p96 = scmp.ne.s32.totalorder %s85, %s88
    %p97 = scmp.eq.s32.totalorder %s14, 1
    %p98 = por %p96, %p97
    %p99 = scmp.ne.s32.totalorder %s88, %s89
    %p100 = scmp.eq.s32.totalorder %s14, 0
    %p101 = por %p99, %p100
    %p102 = scmp.ne.s32.totalorder %s88, %s89
    %p103 = scmp.eq.s32.totalorder %s15, 1
    %p104 = por %p102, %p103
    %p106 = scmp.ne.s32.totalorder %s89, %s105
    %p107 = scmp.eq.s32.totalorder %s15, 0
    %p108 = por %p106, %p107
    %s109 = ssub.s32 %s16, %s28
    %s110 = ssub.s32 %s17, %s24
    %s111 = sor.u32 %s109, %s110
    %p112 = scmp.eq.s32.totalorder %s111, 0
    %s114 = sadd.s32 %s113, 1
    %s115 = scalar_select %p112, %s113, %s114
    %p118 = pneg %p112
    %p119 = scmp.eq.s32.totalorder %s9, 1
    %p120 = por %p118, %p119
    %p121 = scmp.ne.s32.totalorder %s113, %s116
    %p122 = scmp.eq.s32.totalorder %s9, 0
    %p123 = por %p121, %p122
    %p124 = scmp.ne.s32.totalorder %s113, %s116
    %p125 = scmp.eq.s32.totalorder %s14, 1
    %p126 = por %p124, %p125
    %p127 = scmp.ne.s32.totalorder %s116, %s117
    %p128 = scmp.eq.s32.totalorder %s14, 0
    %p129 = por %p127, %p128
    %p130 = scmp.ne.s32.totalorder %s116, %s117
    %p131 = scmp.eq.s32.totalorder %s15, 1
    %p132 = por %p130, %p131
    %p134 = scmp.ne.s32.totalorder %s117, %s133
    %p135 = scmp.eq.s32.totalorder %s15, 0
    %p136 = por %p134, %p135
    %p137 = scmp.le.s32.totalorder 1, %s9
    %p138 = scmp.lt.s32.totalorder %s9, 3
    %p139 = pnand %p137, %p138
    %p140 = pneg %p139
    // Predicated region
    $region9: #{pointnet2_decoder_without_cls_head.25} parent=5 // pred_check
      _
    $region10: #{pointnet2_decoder_without_cls_head.25} parent=5 // pred_check_branch
      %142 = sbr.rel (%p139) target = $region12
    $region11: #{pointnet2_decoder_without_cls_head.25} parent=5 // pred_region
      %s143 = ssub.s32 %s9, 1
    $region12: #{pointnet2_decoder_without_cls_head.25} parent=5 // pred_fallthru
      _
    %p144 = scmp.lt.s32.totalorder %s9, 2
    // Predicated region
    $region13: #{pointnet2_decoder_without_cls_head.25} parent=5 // pred_check
      %p145 = pneg %p144
    $region14: #{pointnet2_decoder_without_cls_head.25} parent=5 // pred_check_branch
      %147 = sbr.rel (%p145) target = $region16
    $region15: #{pointnet2_decoder_without_cls_head.25} parent=5 // pred_region
      // Predicated region
      $region17: #{pointnet2_decoder_without_cls_head.25} parent=15 // pred_check
        %p148 = pneg %p43
      $region18: #{pointnet2_decoder_without_cls_head.25} parent=15 // pred_check_branch
        %150 = sbr.rel (%p148) target = $region20
      $region19: #{pointnet2_decoder_without_cls_head.25} parent=15 // pred_region
        %s151 = smul.u32 4, %s17
        %p152 = scmp.lt.s32.totalorder %s16, 1
        %s153 = scalar_select %p152, %s16, 1
        %p154 = scmp.lt.s32.totalorder %s151, 3
        %s155 = scalar_select %p154, %s151, 3
        %s156 = smul.addr %s153, 4
        %s157 = sadd.s32 %s155, %s156
        %s158 = smul.addr %s157, 8
        %s159 = scalar_lea.vmem %s0, %s158
        %s160 = smul.u32 4, %s17
      $region20: #{pointnet2_decoder_without_cls_head.25} parent=15 // pred_fallthru
        _
      // Predicated region
      $region21: #{pointnet2_decoder_without_cls_head.25} parent=15 // pred_check
        %p161 = pneg %p69
      $region22: #{pointnet2_decoder_without_cls_head.25} parent=15 // pred_check_branch
        %163 = sbr.rel (%p161) target = $region24
      $region23: #{pointnet2_decoder_without_cls_head.25} parent=15 // pred_region
        %p164 = scmp.lt.s32.totalorder %s16, 1
        %s165 = scalar_select %p164, %s16, 1
        %s166 = smul.addr %s165, 8
        %s167 = scalar_lea.vmem %s1, %s166
      $region24: #{pointnet2_decoder_without_cls_head.25} parent=15 // pred_fallthru
        _
      // Predicated region
      $region25: #{pointnet2_decoder_without_cls_head.25} parent=15 // pred_check
        %p168 = pneg %p95
      $region26: #{pointnet2_decoder_without_cls_head.25} parent=15 // pred_check_branch
        %170 = sbr.rel (%p168) target = $region28
      $region27: #{pointnet2_decoder_without_cls_head.25} parent=15 // pred_region
        %p171 = scmp.lt.s32.totalorder %s16, 1
        %s172 = scalar_select %p171, %s16, 1
        %s173 = smul.addr %s172, 4
        %s174 = smul.addr %s173, 4
        %s175 = scalar_lea.vmem %s2, %s174
      $region28: #{pointnet2_decoder_without_cls_head.25} parent=15 // pred_fallthru
        _
    $region16: #{pointnet2_decoder_without_cls_head.25} parent=5 // pred_fallthru
      _
    %p176 = scmp.le.s32.totalorder 1, %s9
    %p177 = scmp.lt.s32.totalorder %s9, 3
    %p178 = pnand %p176, %p177
    %p179 = pneg %p178
    // Predicated region
    $region29: #{pointnet2_decoder_without_cls_head.25} parent=5 // pred_check
      _
    $region30: #{pointnet2_decoder_without_cls_head.25} parent=5 // pred_check_branch
      %181 = sbr.rel (%p178) target = $region32
    $region31: #{pointnet2_decoder_without_cls_head.25} parent=5 // pred_region
      %s182 = ssub.s32 %s9, 1
      %s183 = smul.u32 4, %s19
      %p184 = scmp.lt.s32.totalorder %s18, 1
      %s185 = scalar_select %p184, %s18, 1
      %p186 = scmp.lt.s32.totalorder %s183, 3
      %s187 = scalar_select %p186, %s183, 3
      %s188 = smul.addr %s185, 4
      %s189 = sadd.s32 %s187, %s188
      %s190 = smul.addr %s189, 8
      %s191 = scalar_lea.vmem %s0, %s190
      %p192 = pneg %p49
      %p193 = pneg %p46
      %p194 = scmp.lt.s32.totalorder %s18, 1
      %s195 = scalar_select %p194, %s18, 1
      %s196 = smul.addr %s195, 8
      %s197 = scalar_lea.vmem %s1, %s196
      %p198 = pneg %p75
      %p199 = pneg %p72
      %p200 = scmp.lt.s32.totalorder %s18, 1
      %s201 = scalar_select %p200, %s18, 1
      %s202 = smul.addr %s201, 4
      %s203 = smul.addr %s202, 4
      %s204 = scalar_lea.vmem %s2, %s203
      %p205 = pneg %p101
      %p206 = pneg %p98
      %p207 = pneg %p129
      %p208 = pneg %p126
      %s209 = smul.u32 4, %s19
      %p210 = scmp.lt.s32.totalorder %s18, 1
      %s211 = scalar_select %p210, %s18, 1
      %p212 = scmp.lt.s32.totalorder %s209, 3
      %s213 = scalar_select %p212, %s209, 3
      %s214 = smul.addr %s213, 2
      %s215 = smul.addr %s211, 8
      %s216 = sadd.s32 %s214, %s215
      %s217 = smul.addr %s216, 4
      %s218 = scalar_lea.vmem %s3, %s217
      %s219 = smul.u32 4, %s19
      %p220 = scmp.lt.s32.totalorder %s18, 1
      %s221 = scalar_select %p220, %s18, 1
      %p222 = scmp.lt.s32.totalorder %s219, 3
      %s223 = scalar_select %p222, %s219, 3
      %s224 = smul.addr %s221, 4
      %s225 = sadd.s32 %s223, %s224
      %s226 = smul.addr %s225, 8
      %s227 = scalar_lea.vmem %s0, %s226
      %s228 = smul.u32 4, %s19
      %p229 = scmp.lt.s32.totalorder %s18, 1
      %s230 = scalar_select %p229, %s18, 1
      %s231 = smul.addr %s230, 8
      %s232 = scalar_lea.vmem %s1, %s231
      %p233 = scmp.lt.s32.totalorder %s18, 1
      %s234 = scalar_select %p233, %s18, 1
      %s235 = smul.addr %s234, 4
      %s236 = smul.addr %s235, 4
      %s237 = scalar_lea.vmem %s2, %s236
      %s238 = smul.u32 4, %s19
      %p239 = scmp.lt.s32.totalorder %s18, 1
      %s240 = scalar_select %p239, %s18, 1
      %p241 = scmp.lt.s32.totalorder %s238, 3
      %s242 = scalar_select %p241, %s238, 3
      %s243 = smul.addr %s242, 2
      %s244 = smul.addr %s240, 8
      %s245 = sadd.s32 %s243, %s244
      %s246 = smul.addr %s245, 4
      %s247 = scalar_lea.vmem %s3, %s246
      %s248 = smul.u32 4, %s19
      %v250 = vld [vmem:[%s227] sm:$0xff]
      %v251 = vld [vmem:[%s227 + $0x8] sm:$0xff]
      %v252 = vld [vmem:[%s227 + $0x10] sm:$0xff]
      %v253 = vld [vmem:[%s227 + $0x18] sm:$0xff]
      %v254 = vld [vmem:[%s232] sm:$0xff]
      %v255 = vld [vmem:[%s237] sm:$0xff]
      %v256 = vld [vmem:[%s237 + $0x8] sm:$0xff]
      %v257 = vmul.f32 %v250, %v250
      %v258 = vmul.f32 %v251, %v251
      %v259 = vmul.f32 %v252, %v252
      %v260 = vmul.f32 %v253, %v253
      %vm261 = vcmask 64512
      %v262 = vsel %vm261, %v257, 0.0
      %263 = vadd.xlane.f32.xlu0 %v262
      %v264 = vpop.xlane.xlu0 %263
      %v265 = vsel %vm261, %v258, 0.0
      %266 = vadd.xlane.f32.xlu0 %v265
      %v267 = vpop.xlane.xlu0 %266
      %v268 = vsel %vm261, %v259, 0.0
      %269 = vadd.xlane.f32.xlu0 %v268
      %v270 = vpop.xlane.xlu0 %269
      %v271 = vsel %vm261, %v260, 0.0
      %272 = vadd.xlane.f32.xlu0 %v271
      %v273 = vpop.xlane.xlu0 %272
      %v274 = vmul.f32 %v254, %v254
      %vm275 = vcmask 130048
      %v276 = vsel %vm275, %v274, 0.0
      %v277 = vrot.slane %v276, 4
      %v278 = vadd.f32 %v276, %v277
      %v279 = vrot.slane %v278, 2
      %v280 = vadd.f32 %v278, %v279
      %v281 = vrot.slane %v280, 1
      %v282 = vadd.f32 %v280, %v281
      %v284 = vsel %vm261, %v250, 0
      %v287 = vsel %vm261, %v251, 0
      %v290 = vsel %vm261, %v252, 0
      %v293 = vsel %vm261, %v253, 0
      %295 = vmatprep.subr.mxu0 0.0
      %296 = vmatpush1.msra.mxu0 %v254
      %297 = vmatprep.subr.mxu0 0.0
      %298 = vmatpush1.msra.mxu0 0.0
      %299 = vmatprep.subr.mxu0 0.0
      %300 = vmatpush1.msra.mxu0 0.0
      %301 = vmatprep.subr.mxu0 0.0
      %302 = vmatpush1.msra.mxu0 0.0
      %303 = vmatprep.subr.mxu0 0.0
      %304 = vmatpush1.msra.mxu0 0.0
      %305 = vmatprep.subr.mxu0 0.0
      %306 = vmatpush1.msra.mxu0 0.0
      %307 = vmatprep.subr.mxu0 0.0
      %308 = vmatpush1.msra.mxu0 0.0
      %309 = vmatprep.subr.mxu0 0.0
      %310 = vmatpush1.msra.mxu0 0.0
      %311 = vmatprep.subr.mxu0 0.0
      %312 = vmatpush1.msra.mxu0 0.0
      %313 = vmatprep.subr.mxu0 0.0
      %314 = vmatpush1.msra.mxu0 0.0
      %315 = vmatprep.subr.mxu0 0.0
      %316 = vmatpush1.msra.mxu0 0.0
      %317 = vmatprep.subr.mxu0 0.0
      %318 = vmatpush1.msra.mxu0 0.0
      %319 = vmatprep.subr.mxu0 0.0
      %320 = vmatpush1.msra.mxu0 0.0
      %321 = vmatprep.subr.mxu0 0.0
      %322 = vmatpush1.msra.mxu0 0.0
      %323 = vmatprep.subr.mxu0 0.0
      %324 = vmatpush1.msra.mxu0 0.0
      %325 = vmatprep.subr.mxu0 0.0
      %326 = vmatpush1.msra.mxu0 0.0
      %327 = vmatprep.subr.mxu0 0.0
      %328 = vmatpush1.msra.mxu0 0.0
      %329 = vmatprep.subr.mxu0 0.0
      %330 = vmatpush1.msra.mxu0 0.0
      %331 = vmatprep.subr.mxu0 0.0
      %332 = vmatpush1.msra.mxu0 0.0
      %333 = vmatprep.subr.mxu0 0.0
      %334 = vmatpush1.msra.mxu0 0.0
      %335 = vmatprep.subr.mxu0 0.0
      %336 = vmatpush1.msra.mxu0 0.0
      %337 = vmatprep.subr.mxu0 0.0
      %338 = vmatpush1.msra.mxu0 0.0
      %339 = vmatprep.subr.mxu0 0.0
      %340 = vmatpush1.msra.mxu0 0.0
      %341 = vmatprep.subr.mxu0 0.0
      %342 = vmatpush1.msra.mxu0 0.0
      %343 = vmatprep.subr.mxu0 0.0
      %344 = vmatpush1.msra.mxu0 0.0
      %345 = vmatprep.subr.mxu0 0.0
      %346 = vmatpush1.msra.mxu0 0.0
      %347 = vmatprep.subr.mxu0 0.0
      %348 = vmatpush1.msra.mxu0 0.0
      %349 = vmatprep.subr.mxu0 0.0
      %350 = vmatpush1.msra.mxu0 0.0
      %351 = vmatprep.subr.mxu0 0.0
      %352 = vmatpush1.msra.mxu0 0.0
      %353 = vmatprep.subr.mxu0 0.0
      %354 = vmatpush1.msra.mxu0 0.0
      %355 = vmatprep.subr.mxu0 0.0
      %356 = vmatpush1.msra.mxu0 0.0
      %357 = vmatprep.subr.mxu0 0.0
      %358 = vmatpush1.msra.mxu0 0.0
      %359 = vmatprep.mubr.f32.mxu0 0.0
      %360 = vmatmul.mubr.f32.gmra.mrb[0].mxu0 %v284
      %v361 = vpop.f32.mrb[0].mxu0
      %v362 = vadd.f32 0.0, %v361
      %v363 = vpop.f32.mrb[0].mxu0
      %364 = vmatprep.mubr.f32.mxu0 0.0
      %365 = vmatmul.mubr.f32.gmra.mrb[0].mxu0 %v287
      %v366 = vpop.f32.mrb[0].mxu0
      %v367 = vadd.f32 0.0, %v366
      %v368 = vpop.f32.mrb[0].mxu0
      %369 = vmatprep.mubr.f32.mxu0 0.0
      %370 = vmatmul.mubr.f32.gmra.mrb[0].mxu0 %v290
      %v371 = vpop.f32.mrb[0].mxu0
      %v372 = vadd.f32 0.0, %v371
      %v373 = vpop.f32.mrb[0].mxu0
      %374 = vmatprep.mubr.f32.mxu0 0.0
      %375 = vmatmul.mubr.f32.gmra.mrb[0].mxu0 %v293
      %v376 = vpop.f32.mrb[0].mxu0
      %v377 = vadd.f32 0.0, %v376
      %v378 = vpop.f32.mrb[0].mxu0
      %379 = vdwg.mxu0
      %v380 = vadd.f32 %v264, %v282
      %v381 = vadd.f32 %v267, %v282
      %v382 = vadd.f32 %v270, %v282
      %v383 = vadd.f32 %v273, %v282
      %v384 = vmul.f32 %v362, 2.0
      %v385 = vmul.f32 %v367, 2.0
      %v386 = vmul.f32 %v372, 2.0
      %v387 = vmul.f32 %v377, 2.0
      %v388 = vsub.f32 %v380, %v384
      %v389 = vsub.f32 %v381, %v385
      %v390 = vsub.f32 %v382, %v386
      %v391 = vsub.f32 %v383, %v387
      %v392 = vlaneseq
      %v393 = vand.u32 %v392, 127
      %v394 = vsel %vm275, %v388, inf
      %395 = vmin.xlane.f32.xlu0 %v394
      %v396 = vpop.xlane.xlu0 %395
      %v397 = vsel %vm275, %v389, inf
      %398 = vmin.xlane.f32.xlu0 %v397
      %v399 = vpop.xlane.xlu0 %398
      %v400 = vsel %vm275, %v390, inf
      %401 = vmin.xlane.f32.xlu0 %v400
      %v402 = vpop.xlane.xlu0 %401
      %v403 = vsel %vm275, %v391, inf
      %404 = vmin.xlane.f32.xlu0 %v403
      %v405 = vpop.xlane.xlu0 %404
      %vm406 = vcmp.eq.f32.partialorder %v388, %v396
      %vm407 = vcmp.eq.f32.partialorder %v389, %v399
      %vm408 = vcmp.eq.f32.partialorder %v390, %v402
      %vm409 = vcmp.eq.f32.partialorder %v391, %v405
      %v410 = vsel %vm406, %v393, 16
      %v411 = vsel %vm407, %v393, 16
      %v412 = vsel %vm408, %v393, 16
      %v413 = vsel %vm409, %v393, 16
      %v414 = vsel %vm275, %v410, 2147483647
      %v415 = vand.u32 %v414, 65535
      %v416 = vshra.s32 %v414, 16
      %v417 = vcvt.s32.f32 %v415
      %v418 = vcvt.s32.f32 %v416
      %419 = vmin.xlane.f32.xlu0 %v418
      %v420 = vpop.xlane.xlu0 %419
      %vm421 = vcmp.eq.f32.partialorder %v418, %v420
      %v422 = vsel %vm421, %v417, inf
      %423 = vmin.xlane.f32.xlu0 %v422
      %v424 = vpop.xlane.xlu0 %423
      %v425 = vcvt.f32.s32 %v424
      %v426 = vcvt.f32.s32 %v420
      %v427 = vshll.u32 %v426, 16
      %v428 = vadd.s32 %v427, %v425
      %v429 = vsel %vm275, %v411, 2147483647
      %v430 = vand.u32 %v429, 65535
      %v431 = vshra.s32 %v429, 16
      %v432 = vcvt.s32.f32 %v430
      %v433 = vcvt.s32.f32 %v431
      %434 = vmin.xlane.f32.xlu0 %v433
      %v435 = vpop.xlane.xlu0 %434
      %vm436 = vcmp.eq.f32.partialorder %v433, %v435
      %v437 = vsel %vm436, %v432, inf
      %438 = vmin.xlane.f32.xlu0 %v437
      %v439 = vpop.xlane.xlu0 %438
      %v440 = vcvt.f32.s32 %v439
      %v441 = vcvt.f32.s32 %v435
      %v442 = vshll.u32 %v441, 16
      %v443 = vadd.s32 %v442, %v440
      %v444 = vsel %vm275, %v412, 2147483647
      %v445 = vand.u32 %v444, 65535
      %v446 = vshra.s32 %v444, 16
      %v447 = vcvt.s32.f32 %v445
      %v448 = vcvt.s32.f32 %v446
      %449 = vmin.xlane.f32.xlu0 %v448
      %v450 = vpop.xlane.xlu0 %449
      %vm451 = vcmp.eq.f32.partialorder %v448, %v450
      %v452 = vsel %vm451, %v447, inf
      %453 = vmin.xlane.f32.xlu0 %v452
      %v454 = vpop.xlane.xlu0 %453
      %v455 = vcvt.f32.s32 %v454
      %v456 = vcvt.f32.s32 %v450
      %v457 = vshll.u32 %v456, 16
      %v458 = vadd.s32 %v457, %v455
      %v459 = vsel %vm275, %v413, 2147483647
      %v460 = vand.u32 %v459, 65535
      %v461 = vshra.s32 %v459, 16
      %v462 = vcvt.s32.f32 %v460
      %v463 = vcvt.s32.f32 %v461
      %464 = vmin.xlane.f32.xlu0 %v463
      %v465 = vpop.xlane.xlu0 %464
      %vm466 = vcmp.eq.f32.partialorder %v463, %v465
      %v467 = vsel %vm466, %v462, inf
      %468 = vmin.xlane.f32.xlu0 %v467
      %v469 = vpop.xlane.xlu0 %468
      %v470 = vcvt.f32.s32 %v469
      %v471 = vcvt.f32.s32 %v465
      %v472 = vshll.u32 %v471, 16
      %v473 = vadd.s32 %v472, %v470
      %vm474 = vcmp.eq.s32.totalorder %v393, %v428
      %vm475 = vcmp.eq.s32.totalorder %v393, %v443
      %vm476 = vcmp.eq.s32.totalorder %v393, %v458
      %vm477 = vcmp.eq.s32.totalorder %v393, %v473
      %v478 = vadd.f32 %v396, 1e-08
      %v479 = vadd.f32 %v399, 1e-08
      %v480 = vadd.f32 %v402, 1e-08
      %v481 = vadd.f32 %v405, 1e-08
      %v482 = vrcp.pop %v478
      %v483 = vrcp.pop %v479
      %v484 = vrcp.pop %v480
      %v485 = vrcp.pop %v481
      %v486 = vsel %vm474, %v482, 0.0
      %v487 = vsel %vm475, %v483, 0.0
      %v488 = vsel %vm476, %v484, 0.0
      %v489 = vsel %vm477, %v485, 0.0
      %v490 = vadd.f32 %v486, 0.0
      %v491 = vadd.f32 %v487, 0.0
      %v492 = vadd.f32 %v488, 0.0
      %v493 = vadd.f32 %v489, 0.0
      %v494 = vadd.f32 %v482, 0.0
      %v495 = vadd.f32 %v483, 0.0
      %v496 = vadd.f32 %v484, 0.0
      %v497 = vadd.f32 %v485, 0.0
      %v498 = vsel %vm474, inf, %v388
      %v499 = vsel %vm475, inf, %v389
      %v500 = vsel %vm476, inf, %v390
      %v501 = vsel %vm477, inf, %v391
      %v502 = vsel %vm275, %v498, inf
      %503 = vmin.xlane.f32.xlu0 %v502
      %v504 = vpop.xlane.xlu0 %503
      %v505 = vsel %vm275, %v499, inf
      %506 = vmin.xlane.f32.xlu0 %v505
      %v507 = vpop.xlane.xlu0 %506
      %v508 = vsel %vm275, %v500, inf
      %509 = vmin.xlane.f32.xlu0 %v508
      %v510 = vpop.xlane.xlu0 %509
      %v511 = vsel %vm275, %v501, inf
      %512 = vmin.xlane.f32.xlu0 %v511
      %v513 = vpop.xlane.xlu0 %512
      %vm514 = vcmp.eq.f32.partialorder %v498, %v504
      %vm515 = vcmp.eq.f32.partialorder %v499, %v507
      %vm516 = vcmp.eq.f32.partialorder %v500, %v510
      %vm517 = vcmp.eq.f32.partialorder %v501, %v513
      %v518 = vsel %vm514, %v393, 16
      %v519 = vsel %vm515, %v393, 16
      %v520 = vsel %vm516, %v393, 16
      %v521 = vsel %vm517, %v393, 16
      %v522 = vsel %vm275, %v518, 2147483647
      %v523 = vand.u32 %v522, 65535
      %v524 = vshra.s32 %v522, 16
      %v525 = vcvt.s32.f32 %v523
      %v526 = vcvt.s32.f32 %v524
      %527 = vmin.xlane.f32.xlu0 %v526
      %v528 = vpop.xlane.xlu0 %527
      %vm529 = vcmp.eq.f32.partialorder %v526, %v528
      %v530 = vsel %vm529, %v525, inf
      %531 = vmin.xlane.f32.xlu0 %v530
      %v532 = vpop.xlane.xlu0 %531
      %v533 = vcvt.f32.s32 %v532
      %v534 = vcvt.f32.s32 %v528
      %v535 = vshll.u32 %v534, 16
      %v536 = vadd.s32 %v535, %v533
      %v537 = vsel %vm275, %v519, 2147483647
      %v538 = vand.u32 %v537, 65535
      %v539 = vshra.s32 %v537, 16
      %v540 = vcvt.s32.f32 %v538
      %v541 = vcvt.s32.f32 %v539
      %542 = vmin.xlane.f32.xlu0 %v541
      %v543 = vpop.xlane.xlu0 %542
      %vm544 = vcmp.eq.f32.partialorder %v541, %v543
      %v545 = vsel %vm544, %v540, inf
      %546 = vmin.xlane.f32.xlu0 %v545
      %v547 = vpop.xlane.xlu0 %546
      %v548 = vcvt.f32.s32 %v547
      %v549 = vcvt.f32.s32 %v543
      %v550 = vshll.u32 %v549, 16
      %v551 = vadd.s32 %v550, %v548
      %v552 = vsel %vm275, %v520, 2147483647
      %v553 = vand.u32 %v552, 65535
      %v554 = vshra.s32 %v552, 16
      %v555 = vcvt.s32.f32 %v553
      %v556 = vcvt.s32.f32 %v554
      %557 = vmin.xlane.f32.xlu0 %v556
      %v558 = vpop.xlane.xlu0 %557
      %vm559 = vcmp.eq.f32.partialorder %v556, %v558
      %v560 = vsel %vm559, %v555, inf
      %561 = vmin.xlane.f32.xlu0 %v560
      %v562 = vpop.xlane.xlu0 %561
      %v563 = vcvt.f32.s32 %v562
      %v564 = vcvt.f32.s32 %v558
      %v565 = vshll.u32 %v564, 16
      %v566 = vadd.s32 %v565, %v563
      %v567 = vsel %vm275, %v521, 2147483647
      %v568 = vand.u32 %v567, 65535
      %v569 = vshra.s32 %v567, 16
      %v570 = vcvt.s32.f32 %v568
      %v571 = vcvt.s32.f32 %v569
      %572 = vmin.xlane.f32.xlu0 %v571
      %v573 = vpop.xlane.xlu0 %572
      %vm574 = vcmp.eq.f32.partialorder %v571, %v573
      %v575 = vsel %vm574, %v570, inf
      %576 = vmin.xlane.f32.xlu0 %v575
      %v577 = vpop.xlane.xlu0 %576
      %v578 = vcvt.f32.s32 %v577
      %v579 = vcvt.f32.s32 %v573
      %v580 = vshll.u32 %v579, 16
      %v581 = vadd.s32 %v580, %v578
      %vm582 = vcmp.eq.s32.totalorder %v393, %v536
      %vm583 = vcmp.eq.s32.totalorder %v393, %v551
      %vm584 = vcmp.eq.s32.totalorder %v393, %v566
      %vm585 = vcmp.eq.s32.totalorder %v393, %v581
      %v586 = vadd.f32 %v504, 1e-08
      %v587 = vadd.f32 %v507, 1e-08
      %v588 = vadd.f32 %v510, 1e-08
      %v589 = vadd.f32 %v513, 1e-08
      %v590 = vrcp.pop %v586
      %v591 = vrcp.pop %v587
      %v592 = vrcp.pop %v588
      %v593 = vrcp.pop %v589
      %v594 = vsel %vm582, %v590, 0.0
      %v595 = vsel %vm583, %v591, 0.0
      %v596 = vsel %vm584, %v592, 0.0
      %v597 = vsel %vm585, %v593, 0.0
      %v598 = vadd.f32 %v490, %v594
      %v599 = vadd.f32 %v491, %v595
      %v600 = vadd.f32 %v492, %v596
      %v601 = vadd.f32 %v493, %v597
      %v602 = vadd.f32 %v494, %v590
      %v603 = vadd.f32 %v495, %v591
      %v604 = vadd.f32 %v496, %v592
      %v605 = vadd.f32 %v497, %v593
      %v606 = vsel %vm582, inf, %v498
      %v607 = vsel %vm583, inf, %v499
      %v608 = vsel %vm584, inf, %v500
      %v609 = vsel %vm585, inf, %v501
      %v610 = vsel %vm275, %v606, inf
      %611 = vmin.xlane.f32.xlu0 %v610
      %v612 = vpop.xlane.xlu0 %611
      %v613 = vsel %vm275, %v607, inf
      %614 = vmin.xlane.f32.xlu0 %v613
      %v615 = vpop.xlane.xlu0 %614
      %v616 = vsel %vm275, %v608, inf
      %617 = vmin.xlane.f32.xlu0 %v616
      %v618 = vpop.xlane.xlu0 %617
      %v619 = vsel %vm275, %v609, inf
      %620 = vmin.xlane.f32.xlu0 %v619
      %v621 = vpop.xlane.xlu0 %620
      %vm622 = vcmp.eq.f32.partialorder %v606, %v612
      %vm623 = vcmp.eq.f32.partialorder %v607, %v615
      %vm624 = vcmp.eq.f32.partialorder %v608, %v618
      %vm625 = vcmp.eq.f32.partialorder %v609, %v621
      %v626 = vsel %vm622, %v393, 16
      %v627 = vsel %vm623, %v393, 16
      %v628 = vsel %vm624, %v393, 16
      %v629 = vsel %vm625, %v393, 16
      %v630 = vsel %vm275, %v626, 2147483647
      %v631 = vand.u32 %v630, 65535
      %v632 = vshra.s32 %v630, 16
      %v633 = vcvt.s32.f32 %v631
      %v634 = vcvt.s32.f32 %v632
      %635 = vmin.xlane.f32.xlu0 %v634
      %v636 = vpop.xlane.xlu0 %635
      %vm637 = vcmp.eq.f32.partialorder %v634, %v636
      %v638 = vsel %vm637, %v633, inf
      %639 = vmin.xlane.f32.xlu0 %v638
      %v640 = vpop.xlane.xlu0 %639
      %v641 = vcvt.f32.s32 %v640
      %v642 = vcvt.f32.s32 %v636
      %v643 = vshll.u32 %v642, 16
      %v644 = vadd.s32 %v643, %v641
      %v645 = vsel %vm275, %v627, 2147483647
      %v646 = vand.u32 %v645, 65535
      %v647 = vshra.s32 %v645, 16
      %v648 = vcvt.s32.f32 %v646
      %v649 = vcvt.s32.f32 %v647
      %650 = vmin.xlane.f32.xlu0 %v649
      %v651 = vpop.xlane.xlu0 %650
      %vm652 = vcmp.eq.f32.partialorder %v649, %v651
      %v653 = vsel %vm652, %v648, inf
      %654 = vmin.xlane.f32.xlu0 %v653
      %v655 = vpop.xlane.xlu0 %654
      %v656 = vcvt.f32.s32 %v655
      %v657 = vcvt.f32.s32 %v651
      %v658 = vshll.u32 %v657, 16
      %v659 = vadd.s32 %v658, %v656
      %v660 = vsel %vm275, %v628, 2147483647
      %v661 = vand.u32 %v660, 65535
      %v662 = vshra.s32 %v660, 16
      %v663 = vcvt.s32.f32 %v661
      %v664 = vcvt.s32.f32 %v662
      %665 = vmin.xlane.f32.xlu0 %v664
      %v666 = vpop.xlane.xlu0 %665
      %vm667 = vcmp.eq.f32.partialorder %v664, %v666
      %v668 = vsel %vm667, %v663, inf
      %669 = vmin.xlane.f32.xlu0 %v668
      %v670 = vpop.xlane.xlu0 %669
      %v671 = vcvt.f32.s32 %v670
      %v672 = vcvt.f32.s32 %v666
      %v673 = vshll.u32 %v672, 16
      %v674 = vadd.s32 %v673, %v671
      %v675 = vsel %vm275, %v629, 2147483647
      %v676 = vand.u32 %v675, 65535
      %v677 = vshra.s32 %v675, 16
      %v678 = vcvt.s32.f32 %v676
      %v679 = vcvt.s32.f32 %v677
      %680 = vmin.xlane.f32.xlu0 %v679
      %v681 = vpop.xlane.xlu0 %680
      %vm682 = vcmp.eq.f32.partialorder %v679, %v681
      %v683 = vsel %vm682, %v678, inf
      %684 = vmin.xlane.f32.xlu0 %v683
      %v685 = vpop.xlane.xlu0 %684
      %v686 = vcvt.f32.s32 %v685
      %v687 = vcvt.f32.s32 %v681
      %v688 = vshll.u32 %v687, 16
      %v689 = vadd.s32 %v688, %v686
      %vm690 = vcmp.eq.s32.totalorder %v393, %v644
      %vm691 = vcmp.eq.s32.totalorder %v393, %v659
      %vm692 = vcmp.eq.s32.totalorder %v393, %v674
      %vm693 = vcmp.eq.s32.totalorder %v393, %v689
      %v694 = vadd.f32 %v612, 1e-08
      %v695 = vadd.f32 %v615, 1e-08
      %v696 = vadd.f32 %v618, 1e-08
      %v697 = vadd.f32 %v621, 1e-08
      %v698 = vrcp.pop %v694
      %v699 = vrcp.pop %v695
      %v700 = vrcp.pop %v696
      %v701 = vrcp.pop %v697
      %v702 = vsel %vm690, %v698, 0.0
      %v703 = vsel %vm691, %v699, 0.0
      %v704 = vsel %vm692, %v700, 0.0
      %v705 = vsel %vm693, %v701, 0.0
      %v706 = vadd.f32 %v598, %v702
      %v707 = vadd.f32 %v599, %v703
      %v708 = vadd.f32 %v600, %v704
      %v709 = vadd.f32 %v601, %v705
      %v710 = vadd.f32 %v602, %v698
      %v711 = vadd.f32 %v603, %v699
      %v712 = vadd.f32 %v604, %v700
      %v713 = vadd.f32 %v605, %v701
      %v714 = vpack.c.bf16 %v707, %v706
      %v715 = vpack.c.bf16 %v709, %v708
      %v718 = vunpack.c.l.b16 %v255
      %v719 = vunpack.c.h.b16 %v255
      %v720 = vunpack.c.l.b16 %v256
      %v721 = vunpack.c.h.b16 %v256
      %v722 = vpack.c.b16 %v720, %v718
      %v723 = vpack.c.b16 %v721, %v719
      %v727 = vsel %vm275, %v714, 0
      %v730 = vsel %vm275, %v715, 0
      %732 = vmatprep.subr.bf16.mxu0 %v723
      %733 = vmatpush1.bf16.msra.mxu0 %v722
      %734 = vmatprep.subr.bf16.mxu0 0
      %735 = vmatpush1.bf16.msra.mxu0 0
      %736 = vmatprep.subr.bf16.mxu0 0
      %737 = vmatpush1.bf16.msra.mxu0 0
      %738 = vmatprep.subr.bf16.mxu0 0
      %739 = vmatpush1.bf16.msra.mxu0 0
      %740 = vmatprep.subr.bf16.mxu0 0
      %741 = vmatpush1.bf16.msra.mxu0 0
      %742 = vmatprep.subr.bf16.mxu0 0
      %743 = vmatpush1.bf16.msra.mxu0 0
      %744 = vmatprep.subr.bf16.mxu0 0
      %745 = vmatpush1.bf16.msra.mxu0 0
      %746 = vmatprep.subr.bf16.mxu0 0
      %747 = vmatpush1.bf16.msra.mxu0 0
      %748 = vmatprep.subr.bf16.mxu0 0
      %749 = vmatpush1.bf16.msra.mxu0 0
      %750 = vmatprep.subr.bf16.mxu0 0
      %751 = vmatpush1.bf16.msra.mxu0 0
      %752 = vmatprep.subr.bf16.mxu0 0
      %753 = vmatpush1.bf16.msra.mxu0 0
      %754 = vmatprep.subr.bf16.mxu0 0
      %755 = vmatpush1.bf16.msra.mxu0 0
      %756 = vmatprep.subr.bf16.mxu0 0
      %757 = vmatpush1.bf16.msra.mxu0 0
      %758 = vmatprep.subr.bf16.mxu0 0
      %759 = vmatpush1.bf16.msra.mxu0 0
      %760 = vmatprep.subr.bf16.mxu0 0
      %761 = vmatpush1.bf16.msra.mxu0 0
      %762 = vmatprep.subr.bf16.mxu0 0
      %763 = vmatpush1.bf16.msra.mxu0 0
      %764 = vmatprep.mubr.bf16.mxu0 0
      %765 = vmatmul.mubr.bf16.gmra.mrb[0].mxu0 %v727
      %v766 = vpop.f32.mrb[0].mxu0
      %v767 = vadd.f32 0.0, %v766
      %v768 = vpop.f32.mrb[0].mxu0
      %v769 = vadd.f32 0.0, %v768
      %v770 = vpop.f32.mrb[0].mxu0
      %v771 = vadd.f32 0.0, %v770
      %v772 = vpop.f32.mrb[0].mxu0
      %v773 = vadd.f32 0.0, %v772
      %774 = vmatprep.mubr.bf16.mxu0 0
      %775 = vmatmul.mubr.bf16.gmra.mrb[0].mxu0 %v730
      %v776 = vpop.f32.mrb[0].mxu0
      %v777 = vadd.f32 0.0, %v776
      %v778 = vpop.f32.mrb[0].mxu0
      %v779 = vadd.f32 0.0, %v778
      %v780 = vpop.f32.mrb[0].mxu0
      %v781 = vadd.f32 0.0, %v780
      %v782 = vpop.f32.mrb[0].mxu0
      %v783 = vadd.f32 0.0, %v782
      %784 = vdwg.mxu0
      %v785 = vrcp.pop %v710
      %v786 = vrcp.pop %v711
      %v787 = vrcp.pop %v712
      %v788 = vrcp.pop %v713
      %v789 = vmul.f32 %v767, %v785
      %v790 = vmul.f32 %v769, %v785
      %v791 = vmul.f32 %v771, %v786
      %v792 = vmul.f32 %v773, %v786
      %v793 = vmul.f32 %v777, %v787
      %v794 = vmul.f32 %v779, %v787
      %v795 = vmul.f32 %v781, %v788
      %v796 = vmul.f32 %v783, %v788
      %v797 = vpack.c.bf16 %v791, %v789
      %v798 = vpack.c.bf16 %v792, %v790
      %v799 = vpack.c.bf16 %v795, %v793
      %v800 = vpack.c.bf16 %v796, %v794
      %v805 = vunpack.c.l.b16 %v797
      %v806 = vunpack.c.l.b16 %v798
      %v807 = vunpack.c.h.b16 %v797
      %v808 = vunpack.c.h.b16 %v798
      %v809 = vunpack.c.l.b16 %v799
      %v810 = vunpack.c.l.b16 %v800
      %v811 = vunpack.c.h.b16 %v799
      %v812 = vunpack.c.h.b16 %v800
      %v813 = vpack.c.b16 %v806, %v805
      %v814 = vpack.c.b16 %v808, %v807
      %v815 = vpack.c.b16 %v810, %v809
      %v816 = vpack.c.b16 %v812, %v811
      %821 = vst [vmem:[%s247] sm:$0xff] %v813
      %822 = vst [vmem:[%s247 + $0x8] sm:$0xff] %v814
      %823 = vst [vmem:[%s247 + $0x10] sm:$0xff] %v815
      %824 = vst [vmem:[%s247 + $0x18] sm:$0xff] %v816
      %s825 = smul.u32 4, %s19
      %p826 = scmp.lt.s32.totalorder %s18, 1
      %s827 = scalar_select %p826, %s18, 1
      %p828 = scmp.lt.s32.totalorder %s825, 3
      %s829 = scalar_select %p828, %s825, 3
      %s830 = smul.addr %s829, 2
      %s831 = smul.addr %s827, 8
      %s832 = sadd.s32 %s830, %s831
      %s833 = smul.addr %s832, 4
      %s834 = scalar_lea.vmem %s3, %s833
      // Predicated region
      $region33: #{pointnet2_decoder_without_cls_head.25} parent=31 // pred_check
        %p835 = pneg %p126
      $region34: #{pointnet2_decoder_without_cls_head.25} parent=31 // pred_check_branch
        %837 = sbr.rel (%p835) target = $region36
      $region35: #{pointnet2_decoder_without_cls_head.25} parent=31 // pred_region
        %s838 = smul.u32 4, %s19
      $region36: #{pointnet2_decoder_without_cls_head.25} parent=31 // pred_fallthru
        _
    $region32: #{pointnet2_decoder_without_cls_head.25} parent=5 // pred_fallthru
      _
    %p839 = scmp.le.s32.totalorder 2, %s9
    // Predicated region
    $region37: #{pointnet2_decoder_without_cls_head.25} parent=5 // pred_check
      %p840 = pneg %p839
    $region38: #{pointnet2_decoder_without_cls_head.25} parent=5 // pred_check_branch
      %842 = sbr.rel (%p840) target = $region40
    $region39: #{pointnet2_decoder_without_cls_head.25} parent=5 // pred_region
      %s843 = ssub.s32 %s9, 2
      // Predicated region
      $region41: #{pointnet2_decoder_without_cls_head.25} parent=39 // pred_check
        %p844 = pneg %p132
      $region42: #{pointnet2_decoder_without_cls_head.25} parent=39 // pred_check_branch
        %846 = sbr.rel (%p844) target = $region44
      $region43: #{pointnet2_decoder_without_cls_head.25} parent=39 // pred_region
        %s847 = smul.u32 4, %s21
        %p848 = scmp.lt.s32.totalorder %s20, 1
        %s849 = scalar_select %p848, %s20, 1
        %p850 = scmp.lt.s32.totalorder %s847, 3
        %s851 = scalar_select %p850, %s847, 3
        %s852 = smul.addr %s851, 2
        %s853 = smul.addr %s849, 8
        %s854 = sadd.s32 %s852, %s853
        %s855 = smul.addr %s854, 4
        %s856 = scalar_lea.vmem %s3, %s855
      $region44: #{pointnet2_decoder_without_cls_head.25} parent=39 // pred_fallthru
        _
    $region40: #{pointnet2_decoder_without_cls_head.25} parent=5 // pred_fallthru
      _
  $region6: #{pointnet2_decoder_without_cls_head.25} parent=0 // loop_footer
    %s13 = sadd.s32 1, %s9
  $region7: #{pointnet2_decoder_without_cls_head.25} parent=0 // loop_footer_branch
    %8 = sbr.rel target = $region3
  $region8: #{pointnet2_decoder_without_cls_head.25} parent=0 // loop_exit
    _

// kernel: pointnet2_decoder_without_cls_head.27
$region0: #{pointnet2_decoder_without_cls_head.27}
  #allocation0 [shape = 'u32[]', space=smem, size = 0x4, offset = 0x4, fixed_abs, tag = 'smem constant byte address 0x4 - core index']
  #allocation1 [shape = 'u32[144,128]{1,0:T(1,128)}', space=vmem, size = 0x12000, scoped, tag = 'internal scratch']
  %s0 = inlined_call_operand.vmem [shape: f32[64,256], index: 0, kind: input, shape index: {}]
  %s1 = inlined_call_operand.vmem [shape: f32[2,256], index: 1, kind: input, shape index: {}]
  %s2 = inlined_call_operand.vmem [shape: f32[1,256], index: 2, kind: input, shape index: {}]
  %s3 = inlined_call_operand.vmem [shape: f32[1,256], index: 3, kind: input, shape index: {}]
  %s4 = inlined_call_operand.vmem [shape: bf16[256,128], index: 4, kind: input, shape index: {}]
  %s5 = inlined_call_operand.vmem [shape: f32[64,128], index: 5, kind: output, shape index: {0}]
  %s6 = inlined_call_operand.vmem [shape: f32[2,128], index: 6, kind: output, shape index: {1}]
  %7 = xla_tuple %s5, %s6
  %s8 = sld [smem:[#allocation0]]
  $region42: #{pointnet2_decoder_without_cls_head.27} parent=0
    _
  %s10 = ssub.s32 1, %s8
  %s11 = scalar_select 0, %s10, %s8
  // Predicated region
  $region2: #{pointnet2_decoder_without_cls_head.27} parent=0 // pred_check
    _
  $region3: #{pointnet2_decoder_without_cls_head.27} parent=0 // pred_check_branch
    %13 = sbr.rel (0) target = $region5
  $region4: #{pointnet2_decoder_without_cls_head.27} parent=0 // pred_region
    _
  $region5: #{pointnet2_decoder_without_cls_head.27} parent=0 // pred_fallthru
    _
  // Predicated region
  $region6: #{pointnet2_decoder_without_cls_head.27} parent=0 // pred_check
    _
  $region7: #{pointnet2_decoder_without_cls_head.27} parent=0 // pred_check_branch
    %15 = sbr.rel (0) target = $region9
  $region8: #{pointnet2_decoder_without_cls_head.27} parent=0 // pred_region
    _
  $region9: #{pointnet2_decoder_without_cls_head.27} parent=0 // pred_fallthru
    _
  // Predicated region
  $region10: #{pointnet2_decoder_without_cls_head.27} parent=0 // pred_check
    _
  $region11: #{pointnet2_decoder_without_cls_head.27} parent=0 // pred_check_branch
    %17 = sbr.rel (0) target = $region13
  $region12: #{pointnet2_decoder_without_cls_head.27} parent=0 // pred_region
    _
  $region13: #{pointnet2_decoder_without_cls_head.27} parent=0 // pred_fallthru
    _
  // Predicated region
  $region14: #{pointnet2_decoder_without_cls_head.27} parent=0 // pred_check
    _
  $region15: #{pointnet2_decoder_without_cls_head.27} parent=0 // pred_check_branch
    %19 = sbr.rel (0) target = $region17
  $region16: #{pointnet2_decoder_without_cls_head.27} parent=0 // pred_region
    _
  $region17: #{pointnet2_decoder_without_cls_head.27} parent=0 // pred_fallthru
    _
  // Predicated region
  $region18: #{pointnet2_decoder_without_cls_head.27} parent=0 // pred_check
    _
  $region19: #{pointnet2_decoder_without_cls_head.27} parent=0 // pred_check_branch
    %21 = sbr.rel (0) target = $region21
  $region20: #{pointnet2_decoder_without_cls_head.27} parent=0 // pred_region
    _
  $region21: #{pointnet2_decoder_without_cls_head.27} parent=0 // pred_fallthru
    _
  %v23 = vld [vmem:[%s1] ss:$2 sm:$0x3]
  %v24 = vmul.f32 %v23, 0.015625
  %s25 = scalar_lea.vmem %s1, 1
  %v26 = vld [vmem:[%s25] ss:$2 sm:$0x3]
  %v27 = vmul.f32 %v26, 0.015625
  %v28 = vmul.f32 %v24, %v24
  %v29 = vsub.f32 %v27, %v28
  %v30 = vld [vmem:[%s0] sm:$0xff]
  %v31 = vld [vmem:[%s0 + $0x8] sm:$0xff]
  %v32 = vld [vmem:[%s0 + $0x10] sm:$0xff]
  %v33 = vld [vmem:[%s0 + $0x18] sm:$0xff]
  %v34 = vld [vmem:[%s0 + $0x20] sm:$0xff]
  %v35 = vld [vmem:[%s0 + $0x28] sm:$0xff]
  %v36 = vld [vmem:[%s0 + $0x30] sm:$0xff]
  %v37 = vld [vmem:[%s0 + $0x38] sm:$0xff]
  %v38 = vld [vmem:[%s0 + $0x40] sm:$0xff]
  %v39 = vld [vmem:[%s0 + $0x48] sm:$0xff]
  %v40 = vld [vmem:[%s0 + $0x50] sm:$0xff]
  %v41 = vld [vmem:[%s0 + $0x58] sm:$0xff]
  %v42 = vld [vmem:[%s0 + $0x60] sm:$0xff]
  %v43 = vld [vmem:[%s0 + $0x68] sm:$0xff]
  %v44 = vld [vmem:[%s0 + $0x70] sm:$0xff]
  %v45 = vld [vmem:[%s0 + $0x78] sm:$0xff]
  %v47 = vlaneseq
  %v48 = vshrl.u32 %v47, 7
  %v49 = vsub.s32 0, %v48
  %v50 = vrot.slane %v24, %v49
  %v51 = vlaneseq
  %v52 = vshrl.u32 %v51, 7
  %v53 = vsub.s32 1, %v52
  %v54 = vrot.slane %v24, %v53
  %v57 = vsub.f32 %v30, %v50
  %v58 = vsub.f32 %v31, %v54
  %v59 = vsub.f32 %v32, %v50
  %v60 = vsub.f32 %v33, %v54
  %v61 = vsub.f32 %v34, %v50
  %v62 = vsub.f32 %v35, %v54
  %v63 = vsub.f32 %v36, %v50
  %v64 = vsub.f32 %v37, %v54
  %v65 = vsub.f32 %v38, %v50
  %v66 = vsub.f32 %v39, %v54
  %v67 = vsub.f32 %v40, %v50
  %v68 = vsub.f32 %v41, %v54
  %v69 = vsub.f32 %v42, %v50
  %v70 = vsub.f32 %v43, %v54
  %v71 = vsub.f32 %v44, %v50
  %v72 = vsub.f32 %v45, %v54
  %v73 = vadd.f32 %v29, 1e-05
  %v74 = vrsqrt.pop %v73
  %v76 = vlaneseq
  %v77 = vshrl.u32 %v76, 7
  %v78 = vsub.s32 0, %v77
  %v79 = vrot.slane %v74, %v78
  %v80 = vlaneseq
  %v81 = vshrl.u32 %v80, 7
  %v82 = vsub.s32 1, %v81
  %v83 = vrot.slane %v74, %v82
  %v86 = vmul.f32 %v57, %v79
  %v87 = vmul.f32 %v58, %v83
  %v88 = vmul.f32 %v59, %v79
  %v89 = vmul.f32 %v60, %v83
  %v90 = vmul.f32 %v61, %v79
  %v91 = vmul.f32 %v62, %v83
  %v92 = vmul.f32 %v63, %v79
  %v93 = vmul.f32 %v64, %v83
  %v94 = vmul.f32 %v65, %v79
  %v95 = vmul.f32 %v66, %v83
  %v96 = vmul.f32 %v67, %v79
  %v97 = vmul.f32 %v68, %v83
  %v98 = vmul.f32 %v69, %v79
  %v99 = vmul.f32 %v70, %v83
  %v100 = vmul.f32 %v71, %v79
  %v101 = vmul.f32 %v72, %v83
  %v102 = vld [vmem:[%s2] sm:$0x3]
  %v104 = vlaneseq
  %v105 = vshrl.u32 %v104, 7
  %v106 = vsub.s32 0, %v105
  %v107 = vrot.slane %v102, %v106
  %v108 = vlaneseq
  %v109 = vshrl.u32 %v108, 7
  %v110 = vsub.s32 1, %v109
  %v111 = vrot.slane %v102, %v110
  %v114 = vmul.f32 %v86, %v107
  %v115 = vmul.f32 %v87, %v111
  %v116 = vmul.f32 %v88, %v107
  %v117 = vmul.f32 %v89, %v111
  %v118 = vmul.f32 %v90, %v107
  %v119 = vmul.f32 %v91, %v111
  %v120 = vmul.f32 %v92, %v107
  %v121 = vmul.f32 %v93, %v111
  %v122 = vmul.f32 %v94, %v107
  %v123 = vmul.f32 %v95, %v111
  %v124 = vmul.f32 %v96, %v107
  %v125 = vmul.f32 %v97, %v111
  %v126 = vmul.f32 %v98, %v107
  %v127 = vmul.f32 %v99, %v111
  %v128 = vmul.f32 %v100, %v107
  %v129 = vmul.f32 %v101, %v111
  %v130 = vld [vmem:[%s3] sm:$0x3]
  %v132 = vlaneseq
  %v133 = vshrl.u32 %v132, 7
  %v134 = vsub.s32 0, %v133
  %v135 = vrot.slane %v130, %v134
  %v136 = vlaneseq
  %v137 = vshrl.u32 %v136, 7
  %v138 = vsub.s32 1, %v137
  %v139 = vrot.slane %v130, %v138
  %v142 = vadd.f32 %v114, %v135
  %v143 = vadd.f32 %v115, %v139
  %v144 = vadd.f32 %v116, %v135
  %v145 = vadd.f32 %v117, %v139
  %v146 = vadd.f32 %v118, %v135
  %v147 = vadd.f32 %v119, %v139
  %v148 = vadd.f32 %v120, %v135
  %v149 = vadd.f32 %v121, %v139
  %v150 = vadd.f32 %v122, %v135
  %v151 = vadd.f32 %v123, %v139
  %v152 = vadd.f32 %v124, %v135
  %v153 = vadd.f32 %v125, %v139
  %v154 = vadd.f32 %v126, %v135
  %v155 = vadd.f32 %v127, %v139
  %v156 = vadd.f32 %v128, %v135
  %v157 = vadd.f32 %v129, %v139
  %v158 = vmax.f32 %v142, 0.0
  %v159 = vmax.f32 %v143, 0.0
  %v160 = vmax.f32 %v144, 0.0
  %v161 = vmax.f32 %v145, 0.0
  %v162 = vmax.f32 %v146, 0.0
  %v163 = vmax.f32 %v147, 0.0
  %v164 = vmax.f32 %v148, 0.0
  %v165 = vmax.f32 %v149, 0.0
  %v166 = vmax.f32 %v150, 0.0
  %v167 = vmax.f32 %v151, 0.0
  %v168 = vmax.f32 %v152, 0.0
  %v169 = vmax.f32 %v153, 0.0
  %v170 = vmax.f32 %v154, 0.0
  %v171 = vmax.f32 %v155, 0.0
  %v172 = vmax.f32 %v156, 0.0
  %v173 = vmax.f32 %v157, 0.0
  %v174 = vpack.c.bf16 %v160, %v158
  %v175 = vpack.c.bf16 %v161, %v159
  %v176 = vpack.c.bf16 %v164, %v162
  %v177 = vpack.c.bf16 %v165, %v163
  %v178 = vpack.c.bf16 %v168, %v166
  %v179 = vpack.c.bf16 %v169, %v167
  %v180 = vpack.c.bf16 %v172, %v170
  %v181 = vpack.c.bf16 %v173, %v171
  %v182 = vld [vmem:[%s4] sm:$0xf]
  %v183 = vld [vmem:[%s4 + $0x4] sm:$0xf]
  %v184 = vld [vmem:[%s4 + $0x8] sm:$0xf]
  %v185 = vld [vmem:[%s4 + $0xc] sm:$0xf]
  %v186 = vld [vmem:[%s4 + $0x10] sm:$0xf]
  %v187 = vld [vmem:[%s4 + $0x14] sm:$0xf]
  %v188 = vld [vmem:[%s4 + $0x18] sm:$0xf]
  %v189 = vld [vmem:[%s4 + $0x1c] sm:$0xf]
  %v190 = vld [vmem:[%s4 + $0x20] sm:$0xf]
  %v191 = vld [vmem:[%s4 + $0x24] sm:$0xf]
  %v192 = vld [vmem:[%s4 + $0x28] sm:$0xf]
  %v193 = vld [vmem:[%s4 + $0x2c] sm:$0xf]
  %v194 = vld [vmem:[%s4 + $0x30] sm:$0xf]
  %v195 = vld [vmem:[%s4 + $0x34] sm:$0xf]
  %v196 = vld [vmem:[%s4 + $0x38] sm:$0xf]
  %v197 = vld [vmem:[%s4 + $0x3c] sm:$0xf]
  %v198 = vld [vmem:[%s4 + $0x40] sm:$0xf]
  %v199 = vld [vmem:[%s4 + $0x44] sm:$0xf]
  %v200 = vld [vmem:[%s4 + $0x48] sm:$0xf]
  %v201 = vld [vmem:[%s4 + $0x4c] sm:$0xf]
  %v202 = vld [vmem:[%s4 + $0x50] sm:$0xf]
  %v203 = vld [vmem:[%s4 + $0x54] sm:$0xf]
  %v204 = vld [vmem:[%s4 + $0x58] sm:$0xf]
  %v205 = vld [vmem:[%s4 + $0x5c] sm:$0xf]
  %v206 = vld [vmem:[%s4 + $0x60] sm:$0xf]
  %v207 = vld [vmem:[%s4 + $0x64] sm:$0xf]
  %v208 = vld [vmem:[%s4 + $0x68] sm:$0xf]
  %v209 = vld [vmem:[%s4 + $0x6c] sm:$0xf]
  %v210 = vld [vmem:[%s4 + $0x70] sm:$0xf]
  %v211 = vld [vmem:[%s4 + $0x74] sm:$0xf]
  %v212 = vld [vmem:[%s4 + $0x78] sm:$0xf]
  %v213 = vld [vmem:[%s4 + $0x7c] sm:$0xf]
  %v246 = vunpack.c.l.b16 %v182
  %v247 = vunpack.c.l.b16 %v183
  %v248 = vunpack.c.l.b16 %v184
  %v249 = vunpack.c.l.b16 %v185
  %v250 = vunpack.c.l.b16 %v186
  %v251 = vunpack.c.l.b16 %v187
  %v252 = vunpack.c.l.b16 %v188
  %v253 = vunpack.c.l.b16 %v189
  %v254 = vunpack.c.l.b16 %v190
  %v255 = vunpack.c.l.b16 %v191
  %v256 = vunpack.c.l.b16 %v192
  %v257 = vunpack.c.l.b16 %v193
  %v258 = vunpack.c.l.b16 %v194
  %v259 = vunpack.c.l.b16 %v195
  %v260 = vunpack.c.l.b16 %v196
  %v261 = vunpack.c.l.b16 %v197
  %v262 = vunpack.c.l.b16 %v198
  %v263 = vunpack.c.l.b16 %v199
  %v264 = vunpack.c.l.b16 %v200
  %v265 = vunpack.c.l.b16 %v201
  %v266 = vunpack.c.l.b16 %v202
  %v267 = vunpack.c.l.b16 %v203
  %v268 = vunpack.c.l.b16 %v204
  %v269 = vunpack.c.l.b16 %v205
  %v270 = vunpack.c.l.b16 %v206
  %v271 = vunpack.c.l.b16 %v207
  %v272 = vunpack.c.l.b16 %v208
  %v273 = vunpack.c.l.b16 %v209
  %v274 = vunpack.c.l.b16 %v210
  %v275 = vunpack.c.l.b16 %v211
  %v276 = vunpack.c.l.b16 %v212
  %v277 = vunpack.c.l.b16 %v213
  %v278 = vpack.c.b16 %v247, %v246
  %v279 = vpack.c.b16 %v249, %v248
  %v280 = vpack.c.b16 %v251, %v250
  %v281 = vpack.c.b16 %v253, %v252
  %v282 = vpack.c.b16 %v255, %v254
  %v283 = vpack.c.b16 %v257, %v256
  %v284 = vpack.c.b16 %v259, %v258
  %v285 = vpack.c.b16 %v261, %v260
  %v286 = vpack.c.b16 %v263, %v262
  %v287 = vpack.c.b16 %v265, %v264
  %v288 = vpack.c.b16 %v267, %v266
  %v289 = vpack.c.b16 %v269, %v268
  %v290 = vpack.c.b16 %v271, %v270
  %v291 = vpack.c.b16 %v273, %v272
  %v292 = vpack.c.b16 %v275, %v274
  %v293 = vpack.c.b16 %v277, %v276
  %310 = vmatprep.subr.bf16.mxu0 0
  %311 = vmatpush1.bf16.msra.mxu0 %v278
  %312 = vmatprep.subr.bf16.mxu0 0
  %313 = vmatpush1.bf16.msra.mxu0 %v279
  %314 = vmatprep.subr.bf16.mxu0 0
  %315 = vmatpush1.bf16.msra.mxu0 %v280
  %316 = vmatprep.subr.bf16.mxu0 0
  %317 = vmatpush1.bf16.msra.mxu0 %v281
  %318 = vmatprep.subr.bf16.mxu0 0
  %319 = vmatpush1.bf16.msra.mxu0 %v282
  %320 = vmatprep.subr.bf16.mxu0 0
  %321 = vmatpush1.bf16.msra.mxu0 %v283
  %322 = vmatprep.subr.bf16.mxu0 0
  %323 = vmatpush1.bf16.msra.mxu0 %v284
  %324 = vmatprep.subr.bf16.mxu0 0
  %325 = vmatpush1.bf16.msra.mxu0 %v285
  %326 = vmatprep.subr.bf16.mxu0 0
  %327 = vmatpush1.bf16.msra.mxu0 %v286
  %328 = vmatprep.subr.bf16.mxu0 0
  %329 = vmatpush1.bf16.msra.mxu0 %v287
  %330 = vmatprep.subr.bf16.mxu0 0
  %331 = vmatpush1.bf16.msra.mxu0 %v288
  %332 = vmatprep.subr.bf16.mxu0 0
  %333 = vmatpush1.bf16.msra.mxu0 %v289
  %334 = vmatprep.subr.bf16.mxu0 0
  %335 = vmatpush1.bf16.msra.mxu0 %v290
  %336 = vmatprep.subr.bf16.mxu0 0
  %337 = vmatpush1.bf16.msra.mxu0 %v291
  %338 = vmatprep.subr.bf16.mxu0 0
  %339 = vmatpush1.bf16.msra.mxu0 %v292
  %340 = vmatprep.subr.bf16.mxu0 0
  %341 = vmatpush1.bf16.msra.mxu0 %v293
  %342 = vmatprep.mubr.bf16.mxu0 %v175
  %343 = vmatmul.mubr.bf16.gmra.mrb[0].mxu0 %v174
  %v344 = vpop.f32.mrb[0].mxu0
  %v345 = vadd.f32 0.0, %v344
  %v346 = vpop.f32.mrb[0].mxu0
  %v347 = vpop.f32.mrb[0].mxu0
  %v348 = vadd.f32 0.0, %v347
  %v349 = vpop.f32.mrb[0].mxu0
  %350 = vmatprep.mubr.bf16.mxu0 %v177
  %351 = vmatmul.mubr.bf16.gmra.mrb[0].mxu0 %v176
  %v352 = vpop.f32.mrb[0].mxu0
  %v353 = vadd.f32 0.0, %v352
  %v354 = vpop.f32.mrb[0].mxu0
  %v355 = vpop.f32.mrb[0].mxu0
  %v356 = vadd.f32 0.0, %v355
  %v357 = vpop.f32.mrb[0].mxu0
  %358 = vmatprep.mubr.bf16.mxu0 %v179
  %359 = vmatmul.mubr.bf16.gmra.mrb[0].mxu0 %v178
  %v360 = vpop.f32.mrb[0].mxu0
  %v361 = vadd.f32 0.0, %v360
  %v362 = vpop.f32.mrb[0].mxu0
  %v363 = vpop.f32.mrb[0].mxu0
  %v364 = vadd.f32 0.0, %v363
  %v365 = vpop.f32.mrb[0].mxu0
  %366 = vmatprep.mubr.bf16.mxu0 %v181
  %367 = vmatmul.mubr.bf16.gmra.mrb[0].mxu0 %v180
  %v368 = vpop.f32.mrb[0].mxu0
  %v369 = vadd.f32 0.0, %v368
  %v370 = vpop.f32.mrb[0].mxu0
  %v371 = vpop.f32.mrb[0].mxu0
  %v372 = vadd.f32 0.0, %v371
  %v373 = vpop.f32.mrb[0].mxu0
  %374 = vdwg.mxu0
  %375 = vst [vmem:[%s5] sm:$0xff] %v345
  %376 = vst [vmem:[%s5 + $0x8] sm:$0xff] %v348
  %377 = vst [vmem:[%s5 + $0x10] sm:$0xff] %v353
  %378 = vst [vmem:[%s5 + $0x18] sm:$0xff] %v356
  %379 = vst [vmem:[%s5 + $0x20] sm:$0xff] %v361
  %380 = vst [vmem:[%s5 + $0x28] sm:$0xff] %v364
  %381 = vst [vmem:[%s5 + $0x30] sm:$0xff] %v369
  %382 = vst [vmem:[%s5 + $0x38] sm:$0xff] %v372
  %p383 = scmp.eq.s32.totalorder 0, 0
  // Predicated region
  $region22: #{pointnet2_decoder_without_cls_head.27} parent=0 // pred_check
    %p384 = pneg %p383
  $region23: #{pointnet2_decoder_without_cls_head.27} parent=0 // pred_check_branch
    %386 = sbr.rel (%p384) target = $region25
  $region24: #{pointnet2_decoder_without_cls_head.27} parent=0 // pred_region
    %387 = vst [vmem:[%s6] sm:$0x3] 0.0
  $region25: #{pointnet2_decoder_without_cls_head.27} parent=0 // pred_fallthru
    _
  %v388 = vld [vmem:[%s6] sm:$0x1]
  %v389 = vadd.f32 %v345, %v348
  %v390 = vadd.f32 %v389, %v353
  %v391 = vadd.f32 %v390, %v356
  %v392 = vadd.f32 %v391, %v361
  %v393 = vadd.f32 %v392, %v364
  %v394 = vadd.f32 %v393, %v369
  %v395 = vadd.f32 %v394, %v372
  %v396 = vrot.slane %v395, 4
  %v397 = vadd.f32 %v395, %v396
  %v398 = vrot.slane %v397, 2
  %v399 = vadd.f32 %v397, %v398
  %v400 = vrot.slane %v399, 1
  %v401 = vadd.f32 %v399, %v400
  %v402 = vadd.f32 %v388, %v401
  %403 = vst [vmem:[%s6] sm:$0x1] %v402
  %v404 = vld [vmem:[%s6 + $0x1] sm:$0x1]
  %v405 = vmul.f32 %v345, %v345
  %v406 = vmul.f32 %v348, %v348
  %v407 = vmul.f32 %v353, %v353
  %v408 = vmul.f32 %v356, %v356
  %v409 = vmul.f32 %v361, %v361
  %v410 = vmul.f32 %v364, %v364
  %v411 = vmul.f32 %v369, %v369
  %v412 = vmul.f32 %v372, %v372
  %v413 = vadd.f32 %v405, %v406
  %v414 = vadd.f32 %v413, %v407
  %v415 = vadd.f32 %v414, %v408
  %v416 = vadd.f32 %v415, %v409
  %v417 = vadd.f32 %v416, %v410
  %v418 = vadd.f32 %v417, %v411
  %v419 = vadd.f32 %v418, %v412
  %v420 = vrot.slane %v419, 4
  %v421 = vadd.f32 %v419, %v420
  %v422 = vrot.slane %v421, 2
  %v423 = vadd.f32 %v421, %v422
  %v424 = vrot.slane %v423, 1
  %v425 = vadd.f32 %v423, %v424
  %v426 = vadd.f32 %v404, %v425
  %427 = vst [vmem:[%s6 + $0x1] sm:$0x1] %v426
  // Predicated region
  $region26: #{pointnet2_decoder_without_cls_head.27} parent=0 // pred_check
    _
  $region27: #{pointnet2_decoder_without_cls_head.27} parent=0 // pred_check_branch
    %429 = sbr.rel (0) target = $region29
  $region28: #{pointnet2_decoder_without_cls_head.27} parent=0 // pred_region
    _
  $region29: #{pointnet2_decoder_without_cls_head.27} parent=0 // pred_fallthru
    _
  // Predicated region
  $region30: #{pointnet2_decoder_without_cls_head.27} parent=0 // pred_check
    _
  $region31: #{pointnet2_decoder_without_cls_head.27} parent=0 // pred_check_branch
    %431 = sbr.rel (0) target = $region33
  $region32: #{pointnet2_decoder_without_cls_head.27} parent=0 // pred_region
    _
  $region33: #{pointnet2_decoder_without_cls_head.27} parent=0 // pred_fallthru
    _
  // Predicated region
  $region34: #{pointnet2_decoder_without_cls_head.27} parent=0 // pred_check
    _
  $region35: #{pointnet2_decoder_without_cls_head.27} parent=0 // pred_check_branch
    %433 = sbr.rel (0) target = $region37
  $region36: #{pointnet2_decoder_without_cls_head.27} parent=0 // pred_region
    _
  $region37: #{pointnet2_decoder_without_cls_head.27} parent=0 // pred_fallthru
    _
  // Predicated region
  $region38: #{pointnet2_decoder_without_cls_head.27} parent=0 // pred_check
    _
  $region39: #{pointnet2_decoder_without_cls_head.27} parent=0 // pred_check_branch
    %435 = sbr.rel (0) target = $region41
  $region40: #{pointnet2_decoder_without_cls_head.27} parent=0 // pred_region
    _
  $region41: #{pointnet2_decoder_without_cls_head.27} parent=0 // pred_fallthru
    _

// kernel: pointnet2_decoder_without_cls_head.26
$region0: #{pointnet2_decoder_without_cls_head.26}
  #allocation0 [shape = 'u32[]', space=smem, size = 0x4, offset = 0x4, fixed_abs, tag = 'smem constant byte address 0x4 - core index']
  #allocation1 [shape = 'u32[144,128]{1,0:T(1,128)}', space=vmem, size = 0x12000, scoped, tag = 'internal scratch']
  %s0 = inlined_call_operand.vmem [shape: bf16[64,64], index: 0, kind: input, shape index: {}]
  %s1 = inlined_call_operand.vmem [shape: bf16[64,256], index: 1, kind: input, shape index: {}]
  %s2 = inlined_call_operand.vmem [shape: bf16[64,256], index: 2, kind: input, shape index: {}]
  %s3 = inlined_call_operand.vmem [shape: bf16[256,256], index: 3, kind: input, shape index: {}]
  %s4 = inlined_call_operand.vmem [shape: f32[64,256], index: 4, kind: output, shape index: {0}]
  %s5 = inlined_call_operand.vmem [shape: f32[2,256], index: 5, kind: output, shape index: {1}]
  %6 = xla_tuple %s4, %s5
  %s7 = sld [smem:[#allocation0]]
  $region38: #{pointnet2_decoder_without_cls_head.26} parent=0
    _
  %s9 = ssub.s32 1, %s7
  %s10 = scalar_select 0, %s9, %s7
  // Predicated region
  $region2: #{pointnet2_decoder_without_cls_head.26} parent=0 // pred_check
    _
  $region3: #{pointnet2_decoder_without_cls_head.26} parent=0 // pred_check_branch
    %12 = sbr.rel (0) target = $region5
  $region4: #{pointnet2_decoder_without_cls_head.26} parent=0 // pred_region
    _
  $region5: #{pointnet2_decoder_without_cls_head.26} parent=0 // pred_fallthru
    _
  // Predicated region
  $region6: #{pointnet2_decoder_without_cls_head.26} parent=0 // pred_check
    _
  $region7: #{pointnet2_decoder_without_cls_head.26} parent=0 // pred_check_branch
    %14 = sbr.rel (0) target = $region9
  $region8: #{pointnet2_decoder_without_cls_head.26} parent=0 // pred_region
    _
  $region9: #{pointnet2_decoder_without_cls_head.26} parent=0 // pred_fallthru
    _
  // Predicated region
  $region10: #{pointnet2_decoder_without_cls_head.26} parent=0 // pred_check
    _
  $region11: #{pointnet2_decoder_without_cls_head.26} parent=0 // pred_check_branch
    %16 = sbr.rel (0) target = $region13
  $region12: #{pointnet2_decoder_without_cls_head.26} parent=0 // pred_region
    _
  $region13: #{pointnet2_decoder_without_cls_head.26} parent=0 // pred_fallthru
    _
  // Predicated region
  $region14: #{pointnet2_decoder_without_cls_head.26} parent=0 // pred_check
    _
  $region15: #{pointnet2_decoder_without_cls_head.26} parent=0 // pred_check_branch
    %18 = sbr.rel (0) target = $region17
  $region16: #{pointnet2_decoder_without_cls_head.26} parent=0 // pred_region
    _
  $region17: #{pointnet2_decoder_without_cls_head.26} parent=0 // pred_fallthru
    _
  %v20 = vld [vmem:[%s0] sm:$0xf]
  %v21 = vld [vmem:[%s0 + $0x4] sm:$0xf]
  %v22 = vld [vmem:[%s0 + $0x8] sm:$0xf]
  %v23 = vld [vmem:[%s0 + $0xc] sm:$0xf]
  %v24 = vld [vmem:[%s0 + $0x10] sm:$0xf]
  %v25 = vld [vmem:[%s0 + $0x14] sm:$0xf]
  %v26 = vld [vmem:[%s0 + $0x18] sm:$0xf]
  %v27 = vld [vmem:[%s0 + $0x1c] sm:$0xf]
  %v28 = vld [vmem:[%s2] sm:$0xff]
  %v29 = vld [vmem:[%s2 + $0x8] sm:$0xff]
  %v30 = vld [vmem:[%s2 + $0x10] sm:$0xff]
  %v31 = vld [vmem:[%s2 + $0x18] sm:$0xff]
  %v32 = vld [vmem:[%s2 + $0x20] sm:$0xff]
  %v33 = vld [vmem:[%s2 + $0x28] sm:$0xff]
  %v34 = vld [vmem:[%s2 + $0x30] sm:$0xff]
  %v35 = vld [vmem:[%s2 + $0x38] sm:$0xff]
  %v36 = vld [vmem:[%s1] sm:$0xff]
  %v37 = vld [vmem:[%s1 + $0x8] sm:$0xff]
  %v38 = vld [vmem:[%s1 + $0x10] sm:$0xff]
  %v39 = vld [vmem:[%s1 + $0x18] sm:$0xff]
  %v40 = vld [vmem:[%s1 + $0x20] sm:$0xff]
  %v41 = vld [vmem:[%s1 + $0x28] sm:$0xff]
  %v42 = vld [vmem:[%s1 + $0x30] sm:$0xff]
  %v43 = vld [vmem:[%s1 + $0x38] sm:$0xff]
  %v44 = vld [vmem:[%s3] sm:$0xff]
  %v45 = vld [vmem:[%s3 + $0x8] sm:$0xff]
  %v46 = vld [vmem:[%s3 + $0x10] sm:$0xff]
  %v47 = vld [vmem:[%s3 + $0x18] sm:$0xff]
  %v48 = vld [vmem:[%s3 + $0x20] sm:$0xff]
  %v49 = vld [vmem:[%s3 + $0x28] sm:$0xff]
  %v50 = vld [vmem:[%s3 + $0x30] sm:$0xff]
  %v51 = vld [vmem:[%s3 + $0x38] sm:$0xff]
  %v52 = vld [vmem:[%s3 + $0x40] sm:$0xff]
  %v53 = vld [vmem:[%s3 + $0x48] sm:$0xff]
  %v54 = vld [vmem:[%s3 + $0x50] sm:$0xff]
  %v55 = vld [vmem:[%s3 + $0x58] sm:$0xff]
  %v56 = vld [vmem:[%s3 + $0x60] sm:$0xff]
  %v57 = vld [vmem:[%s3 + $0x68] sm:$0xff]
  %v58 = vld [vmem:[%s3 + $0x70] sm:$0xff]
  %v59 = vld [vmem:[%s3 + $0x78] sm:$0xff]
  %v60 = vld [vmem:[%s3 + $0x80] sm:$0xff]
  %v61 = vld [vmem:[%s3 + $0x88] sm:$0xff]
  %v62 = vld [vmem:[%s3 + $0x90] sm:$0xff]
  %v63 = vld [vmem:[%s3 + $0x98] sm:$0xff]
  %v64 = vld [vmem:[%s3 + $0xa0] sm:$0xff]
  %v65 = vld [vmem:[%s3 + $0xa8] sm:$0xff]
  %v66 = vld [vmem:[%s3 + $0xb0] sm:$0xff]
  %v67 = vld [vmem:[%s3 + $0xb8] sm:$0xff]
  %v68 = vld [vmem:[%s3 + $0xc0] sm:$0xff]
  %v69 = vld [vmem:[%s3 + $0xc8] sm:$0xff]
  %v70 = vld [vmem:[%s3 + $0xd0] sm:$0xff]
  %v71 = vld [vmem:[%s3 + $0xd8] sm:$0xff]
  %v72 = vld [vmem:[%s3 + $0xe0] sm:$0xff]
  %v73 = vld [vmem:[%s3 + $0xe8] sm:$0xff]
  %v74 = vld [vmem:[%s3 + $0xf0] sm:$0xff]
  %v75 = vld [vmem:[%s3 + $0xf8] sm:$0xff]
  %v84 = vunpack.c.l.b16 %v36
  %v85 = vunpack.c.h.b16 %v36
  %v86 = vunpack.c.l.b16 %v37
  %v87 = vunpack.c.h.b16 %v37
  %v88 = vunpack.c.l.b16 %v38
  %v89 = vunpack.c.h.b16 %v38
  %v90 = vunpack.c.l.b16 %v39
  %v91 = vunpack.c.h.b16 %v39
  %v92 = vunpack.c.l.b16 %v40
  %v93 = vunpack.c.h.b16 %v40
  %v94 = vunpack.c.l.b16 %v41
  %v95 = vunpack.c.h.b16 %v41
  %v96 = vunpack.c.l.b16 %v42
  %v97 = vunpack.c.h.b16 %v42
  %v98 = vunpack.c.l.b16 %v43
  %v99 = vunpack.c.h.b16 %v43
  %v100 = vpack.c.b16 %v86, %v84
  %v101 = vpack.c.b16 %v87, %v85
  %v102 = vpack.c.b16 %v90, %v88
  %v103 = vpack.c.b16 %v91, %v89
  %v104 = vpack.c.b16 %v94, %v92
  %v105 = vpack.c.b16 %v95, %v93
  %v106 = vpack.c.b16 %v98, %v96
  %v107 = vpack.c.b16 %v99, %v97
  %v148 = vunpack.c.l.b16 %v44
  %v149 = vunpack.c.h.b16 %v44
  %v150 = vunpack.c.l.b16 %v45
  %v151 = vunpack.c.h.b16 %v45
  %v152 = vunpack.c.l.b16 %v46
  %v153 = vunpack.c.h.b16 %v46
  %v154 = vunpack.c.l.b16 %v47
  %v155 = vunpack.c.h.b16 %v47
  %v156 = vunpack.c.l.b16 %v48
  %v157 = vunpack.c.h.b16 %v48
  %v158 = vunpack.c.l.b16 %v49
  %v159 = vunpack.c.h.b16 %v49
  %v160 = vunpack.c.l.b16 %v50
  %v161 = vunpack.c.h.b16 %v50
  %v162 = vunpack.c.l.b16 %v51
  %v163 = vunpack.c.h.b16 %v51
  %v164 = vunpack.c.l.b16 %v52
  %v165 = vunpack.c.h.b16 %v52
  %v166 = vunpack.c.l.b16 %v53
  %v167 = vunpack.c.h.b16 %v53
  %v168 = vunpack.c.l.b16 %v54
  %v169 = vunpack.c.h.b16 %v54
  %v170 = vunpack.c.l.b16 %v55
  %v171 = vunpack.c.h.b16 %v55
  %v172 = vunpack.c.l.b16 %v56
  %v173 = vunpack.c.h.b16 %v56
  %v174 = vunpack.c.l.b16 %v57
  %v175 = vunpack.c.h.b16 %v57
  %v176 = vunpack.c.l.b16 %v58
  %v177 = vunpack.c.h.b16 %v58
  %v178 = vunpack.c.l.b16 %v59
  %v179 = vunpack.c.h.b16 %v59
  %v180 = vunpack.c.l.b16 %v60
  %v181 = vunpack.c.h.b16 %v60
  %v182 = vunpack.c.l.b16 %v61
  %v183 = vunpack.c.h.b16 %v61
  %v184 = vunpack.c.l.b16 %v62
  %v185 = vunpack.c.h.b16 %v62
  %v186 = vunpack.c.l.b16 %v63
  %v187 = vunpack.c.h.b16 %v63
  %v188 = vunpack.c.l.b16 %v64
  %v189 = vunpack.c.h.b16 %v64
  %v190 = vunpack.c.l.b16 %v65
  %v191 = vunpack.c.h.b16 %v65
  %v192 = vunpack.c.l.b16 %v66
  %v193 = vunpack.c.h.b16 %v66
  %v194 = vunpack.c.l.b16 %v67
  %v195 = vunpack.c.h.b16 %v67
  %v196 = vunpack.c.l.b16 %v68
  %v197 = vunpack.c.h.b16 %v68
  %v198 = vunpack.c.l.b16 %v69
  %v199 = vunpack.c.h.b16 %v69
  %v200 = vunpack.c.l.b16 %v70
  %v201 = vunpack.c.h.b16 %v70
  %v202 = vunpack.c.l.b16 %v71
  %v203 = vunpack.c.h.b16 %v71
  %v204 = vunpack.c.l.b16 %v72
  %v205 = vunpack.c.h.b16 %v72
  %v206 = vunpack.c.l.b16 %v73
  %v207 = vunpack.c.h.b16 %v73
  %v208 = vunpack.c.l.b16 %v74
  %v209 = vunpack.c.h.b16 %v74
  %v210 = vunpack.c.l.b16 %v75
  %v211 = vunpack.c.h.b16 %v75
  %v212 = vpack.c.b16 %v150, %v148
  %v213 = vpack.c.b16 %v151, %v149
  %v214 = vpack.c.b16 %v154, %v152
  %v215 = vpack.c.b16 %v155, %v153
  %v216 = vpack.c.b16 %v158, %v156
  %v217 = vpack.c.b16 %v159, %v157
  %v218 = vpack.c.b16 %v162, %v160
  %v219 = vpack.c.b16 %v163, %v161
  %v220 = vpack.c.b16 %v166, %v164
  %v221 = vpack.c.b16 %v167, %v165
  %v222 = vpack.c.b16 %v170, %v168
  %v223 = vpack.c.b16 %v171, %v169
  %v224 = vpack.c.b16 %v174, %v172
  %v225 = vpack.c.b16 %v175, %v173
  %v226 = vpack.c.b16 %v178, %v176
  %v227 = vpack.c.b16 %v179, %v177
  %v228 = vpack.c.b16 %v182, %v180
  %v229 = vpack.c.b16 %v183, %v181
  %v230 = vpack.c.b16 %v186, %v184
  %v231 = vpack.c.b16 %v187, %v185
  %v232 = vpack.c.b16 %v190, %v188
  %v233 = vpack.c.b16 %v191, %v189
  %v234 = vpack.c.b16 %v194, %v192
  %v235 = vpack.c.b16 %v195, %v193
  %v236 = vpack.c.b16 %v198, %v196
  %v237 = vpack.c.b16 %v199, %v197
  %v238 = vpack.c.b16 %v202, %v200
  %v239 = vpack.c.b16 %v203, %v201
  %v240 = vpack.c.b16 %v206, %v204
  %v241 = vpack.c.b16 %v207, %v205
  %v242 = vpack.c.b16 %v210, %v208
  %v243 = vpack.c.b16 %v211, %v209
  %276 = vmatprep.subr.bf16.mxu0 %v213
  %277 = vmatpush1.bf16.msra.mxu0 %v212
  %278 = vmatprep.subr.bf16.mxu0 %v215
  %279 = vmatpush1.bf16.msra.mxu0 %v214
  %280 = vmatprep.subr.bf16.mxu0 %v217
  %281 = vmatpush1.bf16.msra.mxu0 %v216
  %282 = vmatprep.subr.bf16.mxu0 %v219
  %283 = vmatpush1.bf16.msra.mxu0 %v218
  %284 = vmatprep.subr.bf16.mxu0 %v221
  %285 = vmatpush1.bf16.msra.mxu0 %v220
  %286 = vmatprep.subr.bf16.mxu0 %v223
  %287 = vmatpush1.bf16.msra.mxu0 %v222
  %288 = vmatprep.subr.bf16.mxu0 %v225
  %289 = vmatpush1.bf16.msra.mxu0 %v224
  %290 = vmatprep.subr.bf16.mxu0 %v227
  %291 = vmatpush1.bf16.msra.mxu0 %v226
  %292 = vmatprep.subr.bf16.mxu0 %v229
  %293 = vmatpush1.bf16.msra.mxu0 %v228
  %294 = vmatprep.subr.bf16.mxu0 %v231
  %295 = vmatpush1.bf16.msra.mxu0 %v230
  %296 = vmatprep.subr.bf16.mxu0 %v233
  %297 = vmatpush1.bf16.msra.mxu0 %v232
  %298 = vmatprep.subr.bf16.mxu0 %v235
  %299 = vmatpush1.bf16.msra.mxu0 %v234
  %300 = vmatprep.subr.bf16.mxu0 %v237
  %301 = vmatpush1.bf16.msra.mxu0 %v236
  %302 = vmatprep.subr.bf16.mxu0 %v239
  %303 = vmatpush1.bf16.msra.mxu0 %v238
  %304 = vmatprep.subr.bf16.mxu0 %v241
  %305 = vmatpush1.bf16.msra.mxu0 %v240
  %306 = vmatprep.subr.bf16.mxu0 %v243
  %307 = vmatpush1.bf16.msra.mxu0 %v242
  %308 = vmatprep.mubr.bf16.mxu0 %v101
  %309 = vmatmul.mubr.bf16.gmra.mrb[0].mxu0 %v100
  %v310 = vpop.f32.mrb[0].mxu0
  %v311 = vadd.f32 0.0, %v310
  %v312 = vpop.f32.mrb[0].mxu0
  %v313 = vadd.f32 0.0, %v312
  %v314 = vpop.f32.mrb[0].mxu0
  %v315 = vadd.f32 0.0, %v314
  %v316 = vpop.f32.mrb[0].mxu0
  %v317 = vadd.f32 0.0, %v316
  %318 = vmatprep.mubr.bf16.mxu0 %v103
  %319 = vmatmul.mubr.bf16.gmra.mrb[0].mxu0 %v102
  %v320 = vpop.f32.mrb[0].mxu0
  %v321 = vadd.f32 0.0, %v320
  %v322 = vpop.f32.mrb[0].mxu0
  %v323 = vadd.f32 0.0, %v322
  %v324 = vpop.f32.mrb[0].mxu0
  %v325 = vadd.f32 0.0, %v324
  %v326 = vpop.f32.mrb[0].mxu0
  %v327 = vadd.f32 0.0, %v326
  %328 = vmatprep.mubr.bf16.mxu0 %v105
  %329 = vmatmul.mubr.bf16.gmra.mrb[0].mxu0 %v104
  %v330 = vpop.f32.mrb[0].mxu0
  %v331 = vadd.f32 0.0, %v330
  %v332 = vpop.f32.mrb[0].mxu0
  %v333 = vadd.f32 0.0, %v332
  %v334 = vpop.f32.mrb[0].mxu0
  %v335 = vadd.f32 0.0, %v334
  %v336 = vpop.f32.mrb[0].mxu0
  %v337 = vadd.f32 0.0, %v336
  %338 = vmatprep.mubr.bf16.mxu0 %v107
  %339 = vmatmul.mubr.bf16.gmra.mrb[0].mxu0 %v106
  %v340 = vpop.f32.mrb[0].mxu0
  %v341 = vadd.f32 0.0, %v340
  %v342 = vpop.f32.mrb[0].mxu0
  %v343 = vadd.f32 0.0, %v342
  %v344 = vpop.f32.mrb[0].mxu0
  %v345 = vadd.f32 0.0, %v344
  %v346 = vpop.f32.mrb[0].mxu0
  %v347 = vadd.f32 0.0, %v346
  %348 = vdwg.mxu0
  %v357 = vunpack.c.l.b16 %v20
  %v358 = vunpack.c.l.b16 %v21
  %v359 = vunpack.c.l.b16 %v22
  %v360 = vunpack.c.l.b16 %v23
  %v361 = vunpack.c.l.b16 %v24
  %v362 = vunpack.c.l.b16 %v25
  %v363 = vunpack.c.l.b16 %v26
  %v364 = vunpack.c.l.b16 %v27
  %v365 = vpack.c.b16 %v358, %v357
  %v366 = vpack.c.b16 %v360, %v359
  %v367 = vpack.c.b16 %v362, %v361
  %v368 = vpack.c.b16 %v364, %v363
  %v377 = vunpack.c.l.b16 %v28
  %v378 = vunpack.c.h.b16 %v28
  %v379 = vunpack.c.l.b16 %v29
  %v380 = vunpack.c.h.b16 %v29
  %v381 = vunpack.c.l.b16 %v30
  %v382 = vunpack.c.h.b16 %v30
  %v383 = vunpack.c.l.b16 %v31
  %v384 = vunpack.c.h.b16 %v31
  %v385 = vunpack.c.l.b16 %v32
  %v386 = vunpack.c.h.b16 %v32
  %v387 = vunpack.c.l.b16 %v33
  %v388 = vunpack.c.h.b16 %v33
  %v389 = vunpack.c.l.b16 %v34
  %v390 = vunpack.c.h.b16 %v34
  %v391 = vunpack.c.l.b16 %v35
  %v392 = vunpack.c.h.b16 %v35
  %v393 = vpack.c.b16 %v379, %v377
  %v394 = vpack.c.b16 %v380, %v378
  %v395 = vpack.c.b16 %v383, %v381
  %v396 = vpack.c.b16 %v384, %v382
  %v397 = vpack.c.b16 %v387, %v385
  %v398 = vpack.c.b16 %v388, %v386
  %v399 = vpack.c.b16 %v391, %v389
  %v400 = vpack.c.b16 %v392, %v390
  %vm409 = vcmask 523264
  %v411 = vsel %vm409, %v365, 0
  %v414 = vsel %vm409, %v366, 0
  %v417 = vsel %vm409, %v367, 0
  %v420 = vsel %vm409, %v368, 0
  %422 = vmatprep.subr.bf16.mxu0 %v394
  %423 = vmatpush1.bf16.msra.mxu0 %v393
  %424 = vmatprep.subr.bf16.mxu0 %v396
  %425 = vmatpush1.bf16.msra.mxu0 %v395
  %426 = vmatprep.subr.bf16.mxu0 %v398
  %427 = vmatpush1.bf16.msra.mxu0 %v397
  %428 = vmatprep.subr.bf16.mxu0 %v400
  %429 = vmatpush1.bf16.msra.mxu0 %v399
  %430 = vmatprep.subr.bf16.mxu0 0
  %431 = vmatpush1.bf16.msra.mxu0 0
  %432 = vmatprep.subr.bf16.mxu0 0
  %433 = vmatpush1.bf16.msra.mxu0 0
  %434 = vmatprep.subr.bf16.mxu0 0
  %435 = vmatpush1.bf16.msra.mxu0 0
  %436 = vmatprep.subr.bf16.mxu0 0
  %437 = vmatpush1.bf16.msra.mxu0 0
  %438 = vmatprep.subr.bf16.mxu0 0
  %439 = vmatpush1.bf16.msra.mxu0 0
  %440 = vmatprep.subr.bf16.mxu0 0
  %441 = vmatpush1.bf16.msra.mxu0 0
  %442 = vmatprep.subr.bf16.mxu0 0
  %443 = vmatpush1.bf16.msra.mxu0 0
  %444 = vmatprep.subr.bf16.mxu0 0
  %445 = vmatpush1.bf16.msra.mxu0 0
  %446 = vmatprep.subr.bf16.mxu0 0
  %447 = vmatpush1.bf16.msra.mxu0 0
  %448 = vmatprep.subr.bf16.mxu0 0
  %449 = vmatpush1.bf16.msra.mxu0 0
  %450 = vmatprep.subr.bf16.mxu0 0
  %451 = vmatpush1.bf16.msra.mxu0 0
  %452 = vmatprep.subr.bf16.mxu0 0
  %453 = vmatpush1.bf16.msra.mxu0 0
  %454 = vmatprep.mubr.bf16.mxu0 0
  %455 = vmatmul.mubr.bf16.gmra.mrb[0].mxu0 %v411
  %v456 = vpop.f32.mrb[0].mxu0
  %v457 = vadd.f32 %v311, %v456
  %v458 = vpop.f32.mrb[0].mxu0
  %v459 = vadd.f32 %v313, %v458
  %v460 = vpop.f32.mrb[0].mxu0
  %v461 = vadd.f32 %v315, %v460
  %v462 = vpop.f32.mrb[0].mxu0
  %v463 = vadd.f32 %v317, %v462
  %464 = vmatprep.mubr.bf16.mxu0 0
  %465 = vmatmul.mubr.bf16.gmra.mrb[0].mxu0 %v414
  %v466 = vpop.f32.mrb[0].mxu0
  %v467 = vadd.f32 %v321, %v466
  %v468 = vpop.f32.mrb[0].mxu0
  %v469 = vadd.f32 %v323, %v468
  %v470 = vpop.f32.mrb[0].mxu0
  %v471 = vadd.f32 %v325, %v470
  %v472 = vpop.f32.mrb[0].mxu0
  %v473 = vadd.f32 %v327, %v472
  %474 = vmatprep.mubr.bf16.mxu0 0
  %475 = vmatmul.mubr.bf16.gmra.mrb[0].mxu0 %v417
  %v476 = vpop.f32.mrb[0].mxu0
  %v477 = vadd.f32 %v331, %v476
  %v478 = vpop.f32.mrb[0].mxu0
  %v479 = vadd.f32 %v333, %v478
  %v480 = vpop.f32.mrb[0].mxu0
  %v481 = vadd.f32 %v335, %v480
  %v482 = vpop.f32.mrb[0].mxu0
  %v483 = vadd.f32 %v337, %v482
  %484 = vmatprep.mubr.bf16.mxu0 0
  %485 = vmatmul.mubr.bf16.gmra.mrb[0].mxu0 %v420
  %v486 = vpop.f32.mrb[0].mxu0
  %v487 = vadd.f32 %v341, %v486
  %v488 = vpop.f32.mrb[0].mxu0
  %v489 = vadd.f32 %v343, %v488
  %v490 = vpop.f32.mrb[0].mxu0
  %v491 = vadd.f32 %v345, %v490
  %v492 = vpop.f32.mrb[0].mxu0
  %v493 = vadd.f32 %v347, %v492
  %494 = vdwg.mxu0
  %495 = vst [vmem:[%s4] sm:$0xff] %v457
  %496 = vst [vmem:[%s4 + $0x8] sm:$0xff] %v459
  %497 = vst [vmem:[%s4 + $0x10] sm:$0xff] %v461
  %498 = vst [vmem:[%s4 + $0x18] sm:$0xff] %v463
  %499 = vst [vmem:[%s4 + $0x20] sm:$0xff] %v467
  %500 = vst [vmem:[%s4 + $0x28] sm:$0xff] %v469
  %501 = vst [vmem:[%s4 + $0x30] sm:$0xff] %v471
  %502 = vst [vmem:[%s4 + $0x38] sm:$0xff] %v473
  %503 = vst [vmem:[%s4 + $0x40] sm:$0xff] %v477
  %504 = vst [vmem:[%s4 + $0x48] sm:$0xff] %v479
  %505 = vst [vmem:[%s4 + $0x50] sm:$0xff] %v481
  %506 = vst [vmem:[%s4 + $0x58] sm:$0xff] %v483
  %507 = vst [vmem:[%s4 + $0x60] sm:$0xff] %v487
  %508 = vst [vmem:[%s4 + $0x68] sm:$0xff] %v489
  %509 = vst [vmem:[%s4 + $0x70] sm:$0xff] %v491
  %510 = vst [vmem:[%s4 + $0x78] sm:$0xff] %v493
  %p511 = scmp.eq.s32.totalorder 0, 0
  // Predicated region
  $region18: #{pointnet2_decoder_without_cls_head.26} parent=0 // pred_check
    %p512 = pneg %p511
  $region19: #{pointnet2_decoder_without_cls_head.26} parent=0 // pred_check_branch
    %514 = sbr.rel (%p512) target = $region21
  $region20: #{pointnet2_decoder_without_cls_head.26} parent=0 // pred_region
    %515 = vst [vmem:[%s5] sm:$0xf] 0.0
  $region21: #{pointnet2_decoder_without_cls_head.26} parent=0 // pred_fallthru
    _
  %v516 = vld [vmem:[%s5] ss:$2 sm:$0x3]
  %v517 = vadd.f32 %v457, %v461
  %v518 = vadd.f32 %v517, %v467
  %v519 = vadd.f32 %v518, %v471
  %v520 = vadd.f32 %v519, %v477
  %v521 = vadd.f32 %v520, %v481
  %v522 = vadd.f32 %v521, %v487
  %v523 = vadd.f32 %v522, %v491
  %v524 = vrot.slane %v523, 4
  %v525 = vadd.f32 %v523, %v524
  %v526 = vrot.slane %v525, 2
  %v527 = vadd.f32 %v525, %v526
  %v528 = vrot.slane %v527, 1
  %v529 = vadd.f32 %v527, %v528
  %v530 = vadd.f32 %v459, %v463
  %v531 = vadd.f32 %v530, %v469
  %v532 = vadd.f32 %v531, %v473
  %v533 = vadd.f32 %v532, %v479
  %v534 = vadd.f32 %v533, %v483
  %v535 = vadd.f32 %v534, %v489
  %v536 = vadd.f32 %v535, %v493
  %v537 = vrot.slane %v536, 4
  %v538 = vadd.f32 %v536, %v537
  %v539 = vrot.slane %v538, 2
  %v540 = vadd.f32 %v538, %v539
  %v541 = vrot.slane %v540, 1
  %v542 = vadd.f32 %v540, %v541
  %v545 = vcombine.low %v529, %v542
  %v547 = vunpack.c.l.s4 1966171168
  %v548 = vunpack.c.0.s8 %v547
  %v549 = vlaneseq
  %v550 = vshrl.u32 %v549, 7
  %v551 = vsub.s32 %v548, %v550
  %v552 = vrot.slane %v545, %v551
  %v554 = vunpack.c.l.s4 1966171168
  %v555 = vunpack.c.0.s8 %v554
  %v556 = vlaneseq
  %v557 = vshrl.u32 %v556, 7
  %v558 = vsub.s32 %v555, %v557
  %v559 = vrot.slane %v552, %v558
  %v561 = vadd.f32 %v516, %v559
  %v562 = vlaneseq
  %vm563 = vcmp.ge.s32.totalorder %v562, 0
  %vm564 = vcmp.lt.s32.totalorder %v562, 256
  %vm565 = vmand %vm563, %vm564
  %566 = vst.msk [vmem:[%s5] ss:$2 sm:$0x3] %vm565, %v561
  %s567 = scalar_lea.vmem %s5, 1
  %v568 = vld [vmem:[%s567] ss:$2 sm:$0x3]
  %v569 = vmul.f32 %v457, %v457
  %v570 = vmul.f32 %v459, %v459
  %v571 = vmul.f32 %v461, %v461
  %v572 = vmul.f32 %v463, %v463
  %v573 = vmul.f32 %v467, %v467
  %v574 = vmul.f32 %v469, %v469
  %v575 = vmul.f32 %v471, %v471
  %v576 = vmul.f32 %v473, %v473
  %v577 = vmul.f32 %v477, %v477
  %v578 = vmul.f32 %v479, %v479
  %v579 = vmul.f32 %v481, %v481
  %v580 = vmul.f32 %v483, %v483
  %v581 = vmul.f32 %v487, %v487
  %v582 = vmul.f32 %v489, %v489
  %v583 = vmul.f32 %v491, %v491
  %v584 = vmul.f32 %v493, %v493
  %v585 = vadd.f32 %v569, %v571
  %v586 = vadd.f32 %v585, %v573
  %v587 = vadd.f32 %v586, %v575
  %v588 = vadd.f32 %v587, %v577
  %v589 = vadd.f32 %v588, %v579
  %v590 = vadd.f32 %v589, %v581
  %v591 = vadd.f32 %v590, %v583
  %v592 = vrot.slane %v591, 4
  %v593 = vadd.f32 %v591, %v592
  %v594 = vrot.slane %v593, 2
  %v595 = vadd.f32 %v593, %v594
  %v596 = vrot.slane %v595, 1
  %v597 = vadd.f32 %v595, %v596
  %v598 = vadd.f32 %v570, %v572
  %v599 = vadd.f32 %v598, %v574
  %v600 = vadd.f32 %v599, %v576
  %v601 = vadd.f32 %v600, %v578
  %v602 = vadd.f32 %v601, %v580
  %v603 = vadd.f32 %v602, %v582
  %v604 = vadd.f32 %v603, %v584
  %v605 = vrot.slane %v604, 4
  %v606 = vadd.f32 %v604, %v605
  %v607 = vrot.slane %v606, 2
  %v608 = vadd.f32 %v606, %v607
  %v609 = vrot.slane %v608, 1
  %v610 = vadd.f32 %v608, %v609
  %v613 = vcombine.low %v597, %v610
  %v615 = vunpack.c.l.s4 1966171168
  %v616 = vunpack.c.0.s8 %v615
  %v617 = vlaneseq
  %v618 = vshrl.u32 %v617, 7
  %v619 = vsub.s32 %v616, %v618
  %v620 = vrot.slane %v613, %v619
  %v622 = vunpack.c.l.s4 1966171168
  %v623 = vunpack.c.0.s8 %v622
  %v624 = vlaneseq
  %v625 = vshrl.u32 %v624, 7
  %v626 = vsub.s32 %v623, %v625
  %v627 = vrot.slane %v620, %v626
  %v629 = vadd.f32 %v568, %v627
  %630 = vst.msk [vmem:[%s567] ss:$2 sm:$0x3] %vm565, %v629
  // Predicated region
  $region22: #{pointnet2_decoder_without_cls_head.26} parent=0 // pred_check
    _
  $region23: #{pointnet2_decoder_without_cls_head.26} parent=0 // pred_check_branch
    %632 = sbr.rel (0) target = $region25
  $region24: #{pointnet2_decoder_without_cls_head.26} parent=0 // pred_region
    _
  $region25: #{pointnet2_decoder_without_cls_head.26} parent=0 // pred_fallthru
    _
  // Predicated region
  $region26: #{pointnet2_decoder_without_cls_head.26} parent=0 // pred_check
    _
  $region27: #{pointnet2_decoder_without_cls_head.26} parent=0 // pred_check_branch
    %634 = sbr.rel (0) target = $region29
  $region28: #{pointnet2_decoder_without_cls_head.26} parent=0 // pred_region
    _
  $region29: #{pointnet2_decoder_without_cls_head.26} parent=0 // pred_fallthru
    _
  // Predicated region
  $region30: #{pointnet2_decoder_without_cls_head.26} parent=0 // pred_check
    _
  $region31: #{pointnet2_decoder_without_cls_head.26} parent=0 // pred_check_branch
    %636 = sbr.rel (0) target = $region33
  $region32: #{pointnet2_decoder_without_cls_head.26} parent=0 // pred_region
    _
  $region33: #{pointnet2_decoder_without_cls_head.26} parent=0 // pred_fallthru
    _
  // Predicated region
  $region34: #{pointnet2_decoder_without_cls_head.26} parent=0 // pred_check
    _
  $region35: #{pointnet2_decoder_without_cls_head.26} parent=0 // pred_check_branch
    %638 = sbr.rel (0) target = $region37
  $region36: #{pointnet2_decoder_without_cls_head.26} parent=0 // pred_region
    _
  $region37: #{pointnet2_decoder_without_cls_head.26} parent=0 // pred_fallthru
    _

// kernel: pointnet2_decoder_without_cls_head.33
$region0: #{pointnet2_decoder_without_cls_head.33}
  #allocation0 [shape = 'u32[]', space=smem, size = 0x4, offset = 0x4, fixed_abs, tag = 'smem constant byte address 0x4 - core index']
  #allocation1 [shape = 'u32[144,128]{1,0:T(1,128)}', space=vmem, size = 0x12000, scoped, tag = 'internal scratch']
  %s0 = inlined_call_operand.vmem [shape: f32[128,128], index: 0, kind: input, shape index: {}]
  %s1 = inlined_call_operand.vmem [shape: f32[2,128], index: 1, kind: input, shape index: {}]
  %s2 = inlined_call_operand.vmem [shape: f32[1,128], index: 2, kind: input, shape index: {}]
  %s3 = inlined_call_operand.vmem [shape: f32[1,128], index: 3, kind: input, shape index: {}]
  %s4 = inlined_call_operand.hbm [shape: f32[128,128], index: 4, kind: output, shape index: {}]
  %s5 = sld [smem:[#allocation0]]
  $region26: #{pointnet2_decoder_without_cls_head.33} parent=0
    _
  %s7 = ssub.s32 1, %s5
  %s8 = scalar_select 0, %s7, %s5
  $region1: #{pointnet2_decoder_without_cls_head.33} parent=0
    #allocation2 [shape = 'u8[65536]{0}', space=vmem, size = 0x10000, scoped, tag = 'output window, operand 0, single buffered']
    #allocation3 [shape = 's32[1]{0}', space=sflag, size = 0x4, scoped, tag = 'scoped memory for pointnet2_decoder_without_cls_head.33']
    %9 = vsyncpa [#allocation3], 0
    // Predicated region
    $region2: #{pointnet2_decoder_without_cls_head.33} parent=1 // pred_check
      _
    $region3: #{pointnet2_decoder_without_cls_head.33} parent=1 // pred_check_branch
      %11 = sbr.rel (0) target = $region5
    $region4: #{pointnet2_decoder_without_cls_head.33} parent=1 // pred_region
      _
    $region5: #{pointnet2_decoder_without_cls_head.33} parent=1 // pred_fallthru
      _
    // Predicated region
    $region6: #{pointnet2_decoder_without_cls_head.33} parent=1 // pred_check
      _
    $region7: #{pointnet2_decoder_without_cls_head.33} parent=1 // pred_check_branch
      %13 = sbr.rel (0) target = $region9
    $region8: #{pointnet2_decoder_without_cls_head.33} parent=1 // pred_region
      _
    $region9: #{pointnet2_decoder_without_cls_head.33} parent=1 // pred_fallthru
      _
    // Predicated region
    $region10: #{pointnet2_decoder_without_cls_head.33} parent=1 // pred_check
      _
    $region11: #{pointnet2_decoder_without_cls_head.33} parent=1 // pred_check_branch
      %15 = sbr.rel (0) target = $region13
    $region12: #{pointnet2_decoder_without_cls_head.33} parent=1 // pred_region
      _
    $region13: #{pointnet2_decoder_without_cls_head.33} parent=1 // pred_fallthru
      _
    // Predicated region
    $region14: #{pointnet2_decoder_without_cls_head.33} parent=1 // pred_check
      _
    $region15: #{pointnet2_decoder_without_cls_head.33} parent=1 // pred_check_branch
      %17 = sbr.rel (0) target = $region17
    $region16: #{pointnet2_decoder_without_cls_head.33} parent=1 // pred_region
      _
    $region17: #{pointnet2_decoder_without_cls_head.33} parent=1 // pred_fallthru
      _
    %v18 = vld [vmem:[%s1] sm:$0x1]
    %v19 = vmul.f32 %v18, 0.0078125
    %v20 = vld [vmem:[%s1 + $0x1] sm:$0x1]
    %v21 = vmul.f32 %v20, 0.0078125
    %v22 = vmul.f32 %v19, %v19
    %v23 = vsub.f32 %v21, %v22
    %v24 = vld [vmem:[%s0] sm:$0xff]
    %v25 = vld [vmem:[%s0 + $0x8] sm:$0xff]
    %v26 = vld [vmem:[%s0 + $0x10] sm:$0xff]
    %v27 = vld [vmem:[%s0 + $0x18] sm:$0xff]
    %v28 = vld [vmem:[%s0 + $0x20] sm:$0xff]
    %v29 = vld [vmem:[%s0 + $0x28] sm:$0xff]
    %v30 = vld [vmem:[%s0 + $0x30] sm:$0xff]
    %v31 = vld [vmem:[%s0 + $0x38] sm:$0xff]
    %v32 = vld [vmem:[%s0 + $0x40] sm:$0xff]
    %v33 = vld [vmem:[%s0 + $0x48] sm:$0xff]
    %v34 = vld [vmem:[%s0 + $0x50] sm:$0xff]
    %v35 = vld [vmem:[%s0 + $0x58] sm:$0xff]
    %v36 = vld [vmem:[%s0 + $0x60] sm:$0xff]
    %v37 = vld [vmem:[%s0 + $0x68] sm:$0xff]
    %v38 = vld [vmem:[%s0 + $0x70] sm:$0xff]
    %v39 = vld [vmem:[%s0 + $0x78] sm:$0xff]
    %v40 = vlaneseq
    %v41 = vshrl.u32 %v40, 7
    %v42 = vsub.s32 0, %v41
    %v43 = vrot.slane %v19, %v42
    %v44 = vsub.f32 %v24, %v43
    %v45 = vsub.f32 %v25, %v43
    %v46 = vsub.f32 %v26, %v43
    %v47 = vsub.f32 %v27, %v43
    %v48 = vsub.f32 %v28, %v43
    %v49 = vsub.f32 %v29, %v43
    %v50 = vsub.f32 %v30, %v43
    %v51 = vsub.f32 %v31, %v43
    %v52 = vsub.f32 %v32, %v43
    %v53 = vsub.f32 %v33, %v43
    %v54 = vsub.f32 %v34, %v43
    %v55 = vsub.f32 %v35, %v43
    %v56 = vsub.f32 %v36, %v43
    %v57 = vsub.f32 %v37, %v43
    %v58 = vsub.f32 %v38, %v43
    %v59 = vsub.f32 %v39, %v43
    %v60 = vadd.f32 %v23, 1e-05
    %v61 = vrsqrt.pop %v60
    %v62 = vlaneseq
    %v63 = vshrl.u32 %v62, 7
    %v64 = vsub.s32 0, %v63
    %v65 = vrot.slane %v61, %v64
    %v66 = vmul.f32 %v44, %v65
    %v67 = vmul.f32 %v45, %v65
    %v68 = vmul.f32 %v46, %v65
    %v69 = vmul.f32 %v47, %v65
    %v70 = vmul.f32 %v48, %v65
    %v71 = vmul.f32 %v49, %v65
    %v72 = vmul.f32 %v50, %v65
    %v73 = vmul.f32 %v51, %v65
    %v74 = vmul.f32 %v52, %v65
    %v75 = vmul.f32 %v53, %v65
    %v76 = vmul.f32 %v54, %v65
    %v77 = vmul.f32 %v55, %v65
    %v78 = vmul.f32 %v56, %v65
    %v79 = vmul.f32 %v57, %v65
    %v80 = vmul.f32 %v58, %v65
    %v81 = vmul.f32 %v59, %v65
    %v82 = vld [vmem:[%s2] sm:$0x1]
    %v84 = vlaneseq
    %v85 = vshrl.u32 %v84, 7
    %v86 = vsub.s32 0, %v85
    %v87 = vrot.slane %v82, %v86
    %v89 = vmul.f32 %v66, %v87
    %v90 = vmul.f32 %v67, %v87
    %v91 = vmul.f32 %v68, %v87
    %v92 = vmul.f32 %v69, %v87
    %v93 = vmul.f32 %v70, %v87
    %v94 = vmul.f32 %v71, %v87
    %v95 = vmul.f32 %v72, %v87
    %v96 = vmul.f32 %v73, %v87
    %v97 = vmul.f32 %v74, %v87
    %v98 = vmul.f32 %v75, %v87
    %v99 = vmul.f32 %v76, %v87
    %v100 = vmul.f32 %v77, %v87
    %v101 = vmul.f32 %v78, %v87
    %v102 = vmul.f32 %v79, %v87
    %v103 = vmul.f32 %v80, %v87
    %v104 = vmul.f32 %v81, %v87
    %v105 = vld [vmem:[%s3] sm:$0x1]
    %v107 = vlaneseq
    %v108 = vshrl.u32 %v107, 7
    %v109 = vsub.s32 0, %v108
    %v110 = vrot.slane %v105, %v109
    %v112 = vadd.f32 %v89, %v110
    %v113 = vadd.f32 %v90, %v110
    %v114 = vadd.f32 %v91, %v110
    %v115 = vadd.f32 %v92, %v110
    %v116 = vadd.f32 %v93, %v110
    %v117 = vadd.f32 %v94, %v110
    %v118 = vadd.f32 %v95, %v110
    %v119 = vadd.f32 %v96, %v110
    %v120 = vadd.f32 %v97, %v110
    %v121 = vadd.f32 %v98, %v110
    %v122 = vadd.f32 %v99, %v110
    %v123 = vadd.f32 %v100, %v110
    %v124 = vadd.f32 %v101, %v110
    %v125 = vadd.f32 %v102, %v110
    %v126 = vadd.f32 %v103, %v110
    %v127 = vadd.f32 %v104, %v110
    %v128 = vmax.f32 %v112, 0.0
    %v129 = vmax.f32 %v113, 0.0
    %v130 = vmax.f32 %v114, 0.0
    %v131 = vmax.f32 %v115, 0.0
    %v132 = vmax.f32 %v116, 0.0
    %v133 = vmax.f32 %v117, 0.0
    %v134 = vmax.f32 %v118, 0.0
    %v135 = vmax.f32 %v119, 0.0
    %v136 = vmax.f32 %v120, 0.0
    %v137 = vmax.f32 %v121, 0.0
    %v138 = vmax.f32 %v122, 0.0
    %v139 = vmax.f32 %v123, 0.0
    %v140 = vmax.f32 %v124, 0.0
    %v141 = vmax.f32 %v125, 0.0
    %v142 = vmax.f32 %v126, 0.0
    %v143 = vmax.f32 %v127, 0.0
    %144 = vst [vmem:[#allocation2] sm:$0xff] %v128
    %145 = vst [vmem:[#allocation2 + $0x8] sm:$0xff] %v129
    %146 = vst [vmem:[#allocation2 + $0x10] sm:$0xff] %v130
    %147 = vst [vmem:[#allocation2 + $0x18] sm:$0xff] %v131
    %148 = vst [vmem:[#allocation2 + $0x20] sm:$0xff] %v132
    %149 = vst [vmem:[#allocation2 + $0x28] sm:$0xff] %v133
    %150 = vst [vmem:[#allocation2 + $0x30] sm:$0xff] %v134
    %151 = vst [vmem:[#allocation2 + $0x38] sm:$0xff] %v135
    %152 = vst [vmem:[#allocation2 + $0x40] sm:$0xff] %v136
    %153 = vst [vmem:[#allocation2 + $0x48] sm:$0xff] %v137
    %154 = vst [vmem:[#allocation2 + $0x50] sm:$0xff] %v138
    %155 = vst [vmem:[#allocation2 + $0x58] sm:$0xff] %v139
    %156 = vst [vmem:[#allocation2 + $0x60] sm:$0xff] %v140
    %157 = vst [vmem:[#allocation2 + $0x68] sm:$0xff] %v141
    %158 = vst [vmem:[#allocation2 + $0x70] sm:$0xff] %v142
    %159 = vst [vmem:[#allocation2 + $0x78] sm:$0xff] %v143
    // Predicated region
    $region18: #{pointnet2_decoder_without_cls_head.33} parent=1 // pred_check
      _
    $region19: #{pointnet2_decoder_without_cls_head.33} parent=1 // pred_check_branch
      %161 = sbr.rel (0) target = $region21
    $region20: #{pointnet2_decoder_without_cls_head.33} parent=1 // pred_region
      %s163 = ssub.s32 2048, 2048
      %164 = vsyncadd [#allocation3], %s163
      %s165 = sshll.u32 [#allocation2], 4
      %s166 = int_to_ptr.vmem [resolvable:$true] %s165
      %171 = dma.vmem_to_hbm [thread:$0]  %s166, 2048, %s4, [#allocation3], 128, 128, 8
    $region21: #{pointnet2_decoder_without_cls_head.33} parent=1 // pred_fallthru
      _
    // Predicated region
    $region22: #{pointnet2_decoder_without_cls_head.33} parent=1 // pred_check
      _
    $region23: #{pointnet2_decoder_without_cls_head.33} parent=1 // pred_check_branch
      %173 = sbr.rel (0) target = $region25
    $region24: #{pointnet2_decoder_without_cls_head.33} parent=1 // pred_region
      %174 = dma.done [#allocation3], 2048
    $region25: #{pointnet2_decoder_without_cls_head.33} parent=1 // pred_fallthru
      _
    %175 = vsyncpa [#allocation3], 1

// kernel: pointnet2_decoder_without_cls_head.30
$region0: #{pointnet2_decoder_without_cls_head.30}
  #allocation0 [shape = 'u32[]', space=smem, size = 0x4, offset = 0x4, fixed_abs, tag = 'smem constant byte address 0x4 - core index']
  #allocation1 [shape = 'u32[144,128]{1,0:T(1,128)}', space=vmem, size = 0x12000, scoped, tag = 'internal scratch']
  %s0 = inlined_call_operand.vmem [shape: bf16[128,128], index: 0, kind: input, shape index: {}]
  %s1 = inlined_call_operand.vmem [shape: bf16[128,128], index: 1, kind: input, shape index: {}]
  %s2 = inlined_call_operand.vmem [shape: f32[128,128], index: 2, kind: output, shape index: {0}]
  %s3 = inlined_call_operand.vmem [shape: f32[2,128], index: 3, kind: output, shape index: {1}]
  %4 = xla_tuple %s2, %s3
  %s5 = sld [smem:[#allocation0]]
  $region30: #{pointnet2_decoder_without_cls_head.30} parent=0
    _
  %s7 = ssub.s32 1, %s5
  %s8 = scalar_select 0, %s7, %s5
  // Predicated region
  $region2: #{pointnet2_decoder_without_cls_head.30} parent=0 // pred_check
    _
  $region3: #{pointnet2_decoder_without_cls_head.30} parent=0 // pred_check_branch
    %10 = sbr.rel (0) target = $region5
  $region4: #{pointnet2_decoder_without_cls_head.30} parent=0 // pred_region
    _
  $region5: #{pointnet2_decoder_without_cls_head.30} parent=0 // pred_fallthru
    _
  // Predicated region
  $region6: #{pointnet2_decoder_without_cls_head.30} parent=0 // pred_check
    _
  $region7: #{pointnet2_decoder_without_cls_head.30} parent=0 // pred_check_branch
    %12 = sbr.rel (0) target = $region9
  $region8: #{pointnet2_decoder_without_cls_head.30} parent=0 // pred_region
    _
  $region9: #{pointnet2_decoder_without_cls_head.30} parent=0 // pred_fallthru
    _
  %v14 = vld [vmem:[%s0] sm:$0xf]
  %v15 = vld [vmem:[%s0 + $0x4] sm:$0xf]
  %v16 = vld [vmem:[%s0 + $0x8] sm:$0xf]
  %v17 = vld [vmem:[%s0 + $0xc] sm:$0xf]
  %v18 = vld [vmem:[%s0 + $0x10] sm:$0xf]
  %v19 = vld [vmem:[%s0 + $0x14] sm:$0xf]
  %v20 = vld [vmem:[%s0 + $0x18] sm:$0xf]
  %v21 = vld [vmem:[%s0 + $0x1c] sm:$0xf]
  %v22 = vld [vmem:[%s0 + $0x20] sm:$0xf]
  %v23 = vld [vmem:[%s0 + $0x24] sm:$0xf]
  %v24 = vld [vmem:[%s0 + $0x28] sm:$0xf]
  %v25 = vld [vmem:[%s0 + $0x2c] sm:$0xf]
  %v26 = vld [vmem:[%s0 + $0x30] sm:$0xf]
  %v27 = vld [vmem:[%s0 + $0x34] sm:$0xf]
  %v28 = vld [vmem:[%s0 + $0x38] sm:$0xf]
  %v29 = vld [vmem:[%s0 + $0x3c] sm:$0xf]
  %v30 = vld [vmem:[%s1] sm:$0xf]
  %v31 = vld [vmem:[%s1 + $0x4] sm:$0xf]
  %v32 = vld [vmem:[%s1 + $0x8] sm:$0xf]
  %v33 = vld [vmem:[%s1 + $0xc] sm:$0xf]
  %v34 = vld [vmem:[%s1 + $0x10] sm:$0xf]
  %v35 = vld [vmem:[%s1 + $0x14] sm:$0xf]
  %v36 = vld [vmem:[%s1 + $0x18] sm:$0xf]
  %v37 = vld [vmem:[%s1 + $0x1c] sm:$0xf]
  %v38 = vld [vmem:[%s1 + $0x20] sm:$0xf]
  %v39 = vld [vmem:[%s1 + $0x24] sm:$0xf]
  %v40 = vld [vmem:[%s1 + $0x28] sm:$0xf]
  %v41 = vld [vmem:[%s1 + $0x2c] sm:$0xf]
  %v42 = vld [vmem:[%s1 + $0x30] sm:$0xf]
  %v43 = vld [vmem:[%s1 + $0x34] sm:$0xf]
  %v44 = vld [vmem:[%s1 + $0x38] sm:$0xf]
  %v45 = vld [vmem:[%s1 + $0x3c] sm:$0xf]
  %v62 = vunpack.c.l.b16 %v14
  %v63 = vunpack.c.l.b16 %v15
  %v64 = vunpack.c.l.b16 %v16
  %v65 = vunpack.c.l.b16 %v17
  %v66 = vunpack.c.l.b16 %v18
  %v67 = vunpack.c.l.b16 %v19
  %v68 = vunpack.c.l.b16 %v20
  %v69 = vunpack.c.l.b16 %v21
  %v70 = vunpack.c.l.b16 %v22
  %v71 = vunpack.c.l.b16 %v23
  %v72 = vunpack.c.l.b16 %v24
  %v73 = vunpack.c.l.b16 %v25
  %v74 = vunpack.c.l.b16 %v26
  %v75 = vunpack.c.l.b16 %v27
  %v76 = vunpack.c.l.b16 %v28
  %v77 = vunpack.c.l.b16 %v29
  %v78 = vpack.c.b16 %v63, %v62
  %v79 = vpack.c.b16 %v65, %v64
  %v80 = vpack.c.b16 %v67, %v66
  %v81 = vpack.c.b16 %v69, %v68
  %v82 = vpack.c.b16 %v71, %v70
  %v83 = vpack.c.b16 %v73, %v72
  %v84 = vpack.c.b16 %v75, %v74
  %v85 = vpack.c.b16 %v77, %v76
  %v110 = vunpack.c.l.b16 %v30
  %v111 = vunpack.c.l.b16 %v31
  %v112 = vunpack.c.l.b16 %v32
  %v113 = vunpack.c.l.b16 %v33
  %v114 = vunpack.c.l.b16 %v34
  %v115 = vunpack.c.l.b16 %v35
  %v116 = vunpack.c.l.b16 %v36
  %v117 = vunpack.c.l.b16 %v37
  %v118 = vunpack.c.l.b16 %v38
  %v119 = vunpack.c.l.b16 %v39
  %v120 = vunpack.c.l.b16 %v40
  %v121 = vunpack.c.l.b16 %v41
  %v122 = vunpack.c.l.b16 %v42
  %v123 = vunpack.c.l.b16 %v43
  %v124 = vunpack.c.l.b16 %v44
  %v125 = vunpack.c.l.b16 %v45
  %v126 = vpack.c.b16 %v111, %v110
  %v127 = vpack.c.b16 %v113, %v112
  %v128 = vpack.c.b16 %v115, %v114
  %v129 = vpack.c.b16 %v117, %v116
  %v130 = vpack.c.b16 %v119, %v118
  %v131 = vpack.c.b16 %v121, %v120
  %v132 = vpack.c.b16 %v123, %v122
  %v133 = vpack.c.b16 %v125, %v124
  %142 = vmatprep.subr.bf16.mxu0 0
  %143 = vmatpush1.bf16.msra.mxu0 %v126
  %144 = vmatprep.subr.bf16.mxu0 0
  %145 = vmatpush1.bf16.msra.mxu0 %v127
  %146 = vmatprep.subr.bf16.mxu0 0
  %147 = vmatpush1.bf16.msra.mxu0 %v128
  %148 = vmatprep.subr.bf16.mxu0 0
  %149 = vmatpush1.bf16.msra.mxu0 %v129
  %150 = vmatprep.subr.bf16.mxu0 0
  %151 = vmatpush1.bf16.msra.mxu0 %v130
  %152 = vmatprep.subr.bf16.mxu0 0
  %153 = vmatpush1.bf16.msra.mxu0 %v131
  %154 = vmatprep.subr.bf16.mxu0 0
  %155 = vmatpush1.bf16.msra.mxu0 %v132
  %156 = vmatprep.subr.bf16.mxu0 0
  %157 = vmatpush1.bf16.msra.mxu0 %v133
  %158 = vmatprep.subr.bf16.mxu0 0
  %159 = vmatpush1.bf16.msra.mxu0 0
  %160 = vmatprep.subr.bf16.mxu0 0
  %161 = vmatpush1.bf16.msra.mxu0 0
  %162 = vmatprep.subr.bf16.mxu0 0
  %163 = vmatpush1.bf16.msra.mxu0 0
  %164 = vmatprep.subr.bf16.mxu0 0
  %165 = vmatpush1.bf16.msra.mxu0 0
  %166 = vmatprep.subr.bf16.mxu0 0
  %167 = vmatpush1.bf16.msra.mxu0 0
  %168 = vmatprep.subr.bf16.mxu0 0
  %169 = vmatpush1.bf16.msra.mxu0 0
  %170 = vmatprep.subr.bf16.mxu0 0
  %171 = vmatpush1.bf16.msra.mxu0 0
  %172 = vmatprep.subr.bf16.mxu0 0
  %173 = vmatpush1.bf16.msra.mxu0 0
  %174 = vmatprep.mubr.bf16.mxu0 0
  %175 = vmatmul.mubr.bf16.gmra.mrb[0].mxu0 %v78
  %v176 = vpop.f32.mrb[0].mxu0
  %v177 = vadd.f32 0.0, %v176
  %v178 = vpop.f32.mrb[0].mxu0
  %v179 = vpop.f32.mrb[0].mxu0
  %v180 = vadd.f32 0.0, %v179
  %v181 = vpop.f32.mrb[0].mxu0
  %182 = vmatprep.mubr.bf16.mxu0 0
  %183 = vmatmul.mubr.bf16.gmra.mrb[0].mxu0 %v79
  %v184 = vpop.f32.mrb[0].mxu0
  %v185 = vadd.f32 0.0, %v184
  %v186 = vpop.f32.mrb[0].mxu0
  %v187 = vpop.f32.mrb[0].mxu0
  %v188 = vadd.f32 0.0, %v187
  %v189 = vpop.f32.mrb[0].mxu0
  %190 = vmatprep.mubr.bf16.mxu0 0
  %191 = vmatmul.mubr.bf16.gmra.mrb[0].mxu0 %v80
  %v192 = vpop.f32.mrb[0].mxu0
  %v193 = vadd.f32 0.0, %v192
  %v194 = vpop.f32.mrb[0].mxu0
  %v195 = vpop.f32.mrb[0].mxu0
  %v196 = vadd.f32 0.0, %v195
  %v197 = vpop.f32.mrb[0].mxu0
  %198 = vmatprep.mubr.bf16.mxu0 0
  %199 = vmatmul.mubr.bf16.gmra.mrb[0].mxu0 %v81
  %v200 = vpop.f32.mrb[0].mxu0
  %v201 = vadd.f32 0.0, %v200
  %v202 = vpop.f32.mrb[0].mxu0
  %v203 = vpop.f32.mrb[0].mxu0
  %v204 = vadd.f32 0.0, %v203
  %v205 = vpop.f32.mrb[0].mxu0
  %206 = vmatprep.mubr.bf16.mxu0 0
  %207 = vmatmul.mubr.bf16.gmra.mrb[0].mxu0 %v82
  %v208 = vpop.f32.mrb[0].mxu0
  %v209 = vadd.f32 0.0, %v208
  %v210 = vpop.f32.mrb[0].mxu0
  %v211 = vpop.f32.mrb[0].mxu0
  %v212 = vadd.f32 0.0, %v211
  %v213 = vpop.f32.mrb[0].mxu0
  %214 = vmatprep.mubr.bf16.mxu0 0
  %215 = vmatmul.mubr.bf16.gmra.mrb[0].mxu0 %v83
  %v216 = vpop.f32.mrb[0].mxu0
  %v217 = vadd.f32 0.0, %v216
  %v218 = vpop.f32.mrb[0].mxu0
  %v219 = vpop.f32.mrb[0].mxu0
  %v220 = vadd.f32 0.0, %v219
  %v221 = vpop.f32.mrb[0].mxu0
  %222 = vmatprep.mubr.bf16.mxu0 0
  %223 = vmatmul.mubr.bf16.gmra.mrb[0].mxu0 %v84
  %v224 = vpop.f32.mrb[0].mxu0
  %v225 = vadd.f32 0.0, %v224
  %v226 = vpop.f32.mrb[0].mxu0
  %v227 = vpop.f32.mrb[0].mxu0
  %v228 = vadd.f32 0.0, %v227
  %v229 = vpop.f32.mrb[0].mxu0
  %230 = vmatprep.mubr.bf16.mxu0 0
  %231 = vmatmul.mubr.bf16.gmra.mrb[0].mxu0 %v85
  %v232 = vpop.f32.mrb[0].mxu0
  %v233 = vadd.f32 0.0, %v232
  %v234 = vpop.f32.mrb[0].mxu0
  %v235 = vpop.f32.mrb[0].mxu0
  %v236 = vadd.f32 0.0, %v235
  %v237 = vpop.f32.mrb[0].mxu0
  %238 = vdwg.mxu0
  %239 = vst [vmem:[%s2] sm:$0xff] %v177
  %240 = vst [vmem:[%s2 + $0x8] sm:$0xff] %v180
  %241 = vst [vmem:[%s2 + $0x10] sm:$0xff] %v185
  %242 = vst [vmem:[%s2 + $0x18] sm:$0xff] %v188
  %243 = vst [vmem:[%s2 + $0x20] sm:$0xff] %v193
  %244 = vst [vmem:[%s2 + $0x28] sm:$0xff] %v196
  %245 = vst [vmem:[%s2 + $0x30] sm:$0xff] %v201
  %246 = vst [vmem:[%s2 + $0x38] sm:$0xff] %v204
  %247 = vst [vmem:[%s2 + $0x40] sm:$0xff] %v209
  %248 = vst [vmem:[%s2 + $0x48] sm:$0xff] %v212
  %249 = vst [vmem:[%s2 + $0x50] sm:$0xff] %v217
  %250 = vst [vmem:[%s2 + $0x58] sm:$0xff] %v220
  %251 = vst [vmem:[%s2 + $0x60] sm:$0xff] %v225
  %252 = vst [vmem:[%s2 + $0x68] sm:$0xff] %v228
  %253 = vst [vmem:[%s2 + $0x70] sm:$0xff] %v233
  %254 = vst [vmem:[%s2 + $0x78] sm:$0xff] %v236
  %p255 = scmp.eq.s32.totalorder 0, 0
  // Predicated region
  $region10: #{pointnet2_decoder_without_cls_head.30} parent=0 // pred_check
    %p256 = pneg %p255
  $region11: #{pointnet2_decoder_without_cls_head.30} parent=0 // pred_check_branch
    %258 = sbr.rel (%p256) target = $region13
  $region12: #{pointnet2_decoder_without_cls_head.30} parent=0 // pred_region
    %259 = vst [vmem:[%s3] sm:$0x3] 0.0
  $region13: #{pointnet2_decoder_without_cls_head.30} parent=0 // pred_fallthru
    _
  %v260 = vld [vmem:[%s3] sm:$0x1]
  %v261 = vadd.f32 %v177, %v180
  %v262 = vadd.f32 %v261, %v185
  %v263 = vadd.f32 %v262, %v188
  %v264 = vadd.f32 %v263, %v193
  %v265 = vadd.f32 %v264, %v196
  %v266 = vadd.f32 %v265, %v201
  %v267 = vadd.f32 %v266, %v204
  %v268 = vadd.f32 %v267, %v209
  %v269 = vadd.f32 %v268, %v212
  %v270 = vadd.f32 %v269, %v217
  %v271 = vadd.f32 %v270, %v220
  %v272 = vadd.f32 %v271, %v225
  %v273 = vadd.f32 %v272, %v228
  %v274 = vadd.f32 %v273, %v233
  %v275 = vadd.f32 %v274, %v236
  %v276 = vrot.slane %v275, 4
  %v277 = vadd.f32 %v275, %v276
  %v278 = vrot.slane %v277, 2
  %v279 = vadd.f32 %v277, %v278
  %v280 = vrot.slane %v279, 1
  %v281 = vadd.f32 %v279, %v280
  %v282 = vadd.f32 %v260, %v281
  %283 = vst [vmem:[%s3] sm:$0x1] %v282
  %v284 = vld [vmem:[%s3 + $0x1] sm:$0x1]
  %v285 = vmul.f32 %v177, %v177
  %v286 = vmul.f32 %v180, %v180
  %v287 = vmul.f32 %v185, %v185
  %v288 = vmul.f32 %v188, %v188
  %v289 = vmul.f32 %v193, %v193
  %v290 = vmul.f32 %v196, %v196
  %v291 = vmul.f32 %v201, %v201
  %v292 = vmul.f32 %v204, %v204
  %v293 = vmul.f32 %v209, %v209
  %v294 = vmul.f32 %v212, %v212
  %v295 = vmul.f32 %v217, %v217
  %v296 = vmul.f32 %v220, %v220
  %v297 = vmul.f32 %v225, %v225
  %v298 = vmul.f32 %v228, %v228
  %v299 = vmul.f32 %v233, %v233
  %v300 = vmul.f32 %v236, %v236
  %v301 = vadd.f32 %v285, %v286
  %v302 = vadd.f32 %v301, %v287
  %v303 = vadd.f32 %v302, %v288
  %v304 = vadd.f32 %v303, %v289
  %v305 = vadd.f32 %v304, %v290
  %v306 = vadd.f32 %v305, %v291
  %v307 = vadd.f32 %v306, %v292
  %v308 = vadd.f32 %v307, %v293
  %v309 = vadd.f32 %v308, %v294
  %v310 = vadd.f32 %v309, %v295
  %v311 = vadd.f32 %v310, %v296
  %v312 = vadd.f32 %v311, %v297
  %v313 = vadd.f32 %v312, %v298
  %v314 = vadd.f32 %v313, %v299
  %v315 = vadd.f32 %v314, %v300
  %v316 = vrot.slane %v315, 4
  %v317 = vadd.f32 %v315, %v316
  %v318 = vrot.slane %v317, 2
  %v319 = vadd.f32 %v317, %v318
  %v320 = vrot.slane %v319, 1
  %v321 = vadd.f32 %v319, %v320
  %v322 = vadd.f32 %v284, %v321
  %323 = vst [vmem:[%s3 + $0x1] sm:$0x1] %v322
  // Predicated region
  $region14: #{pointnet2_decoder_without_cls_head.30} parent=0 // pred_check
    _
  $region15: #{pointnet2_decoder_without_cls_head.30} parent=0 // pred_check_branch
    %325 = sbr.rel (0) target = $region17
  $region16: #{pointnet2_decoder_without_cls_head.30} parent=0 // pred_region
    _
  $region17: #{pointnet2_decoder_without_cls_head.30} parent=0 // pred_fallthru
    _
  // Predicated region
  $region18: #{pointnet2_decoder_without_cls_head.30} parent=0 // pred_check
    _
  $region19: #{pointnet2_decoder_without_cls_head.30} parent=0 // pred_check_branch
    %327 = sbr.rel (0) target = $region21
  $region20: #{pointnet2_decoder_without_cls_head.30} parent=0 // pred_region
    _
  $region21: #{pointnet2_decoder_without_cls_head.30} parent=0 // pred_fallthru
    _
  // Predicated region
  $region22: #{pointnet2_decoder_without_cls_head.30} parent=0 // pred_check
    _
  $region23: #{pointnet2_decoder_without_cls_head.30} parent=0 // pred_check_branch
    %329 = sbr.rel (0) target = $region25
  $region24: #{pointnet2_decoder_without_cls_head.30} parent=0 // pred_region
    _
  $region25: #{pointnet2_decoder_without_cls_head.30} parent=0 // pred_fallthru
    _
  // Predicated region
  $region26: #{pointnet2_decoder_without_cls_head.30} parent=0 // pred_check
    _
  $region27: #{pointnet2_decoder_without_cls_head.30} parent=0 // pred_check_branch
    %331 = sbr.rel (0) target = $region29
  $region28: #{pointnet2_decoder_without_cls_head.30} parent=0 // pred_region
    _
  $region29: #{pointnet2_decoder_without_cls_head.30} parent=0 // pred_fallthru
    _

// kernel: pointnet2_decoder_without_cls_head.31
$region0: #{pointnet2_decoder_without_cls_head.31}
  #allocation0 [shape = 'u32[]', space=smem, size = 0x4, offset = 0x4, fixed_abs, tag = 'smem constant byte address 0x4 - core index']
  #allocation1 [shape = 'u32[144,128]{1,0:T(1,128)}', space=vmem, size = 0x12000, scoped, tag = 'internal scratch']
  %s0 = inlined_call_operand.vmem [shape: f32[128,128], index: 0, kind: input, shape index: {}]
  %s1 = inlined_call_operand.vmem [shape: f32[2,128], index: 1, kind: input, shape index: {}]
  %s2 = inlined_call_operand.vmem [shape: f32[1,128], index: 2, kind: input, shape index: {}]
  %s3 = inlined_call_operand.vmem [shape: f32[1,128], index: 3, kind: input, shape index: {}]
  %s4 = inlined_call_operand.vmem [shape: bf16[128,128], index: 4, kind: input, shape index: {}]
  %s5 = inlined_call_operand.vmem [shape: f32[128,128], index: 5, kind: output, shape index: {0}]
  %s6 = inlined_call_operand.vmem [shape: f32[2,128], index: 6, kind: output, shape index: {1}]
  %7 = xla_tuple %s5, %s6
  %s8 = sld [smem:[#allocation0]]
  $region42: #{pointnet2_decoder_without_cls_head.31} parent=0
    _
  %s10 = ssub.s32 1, %s8
  %s11 = scalar_select 0, %s10, %s8
  // Predicated region
  $region2: #{pointnet2_decoder_without_cls_head.31} parent=0 // pred_check
    _
  $region3: #{pointnet2_decoder_without_cls_head.31} parent=0 // pred_check_branch
    %13 = sbr.rel (0) target = $region5
  $region4: #{pointnet2_decoder_without_cls_head.31} parent=0 // pred_region
    _
  $region5: #{pointnet2_decoder_without_cls_head.31} parent=0 // pred_fallthru
    _
  // Predicated region
  $region6: #{pointnet2_decoder_without_cls_head.31} parent=0 // pred_check
    _
  $region7: #{pointnet2_decoder_without_cls_head.31} parent=0 // pred_check_branch
    %15 = sbr.rel (0) target = $region9
  $region8: #{pointnet2_decoder_without_cls_head.31} parent=0 // pred_region
    _
  $region9: #{pointnet2_decoder_without_cls_head.31} parent=0 // pred_fallthru
    _
  // Predicated region
  $region10: #{pointnet2_decoder_without_cls_head.31} parent=0 // pred_check
    _
  $region11: #{pointnet2_decoder_without_cls_head.31} parent=0 // pred_check_branch
    %17 = sbr.rel (0) target = $region13
  $region12: #{pointnet2_decoder_without_cls_head.31} parent=0 // pred_region
    _
  $region13: #{pointnet2_decoder_without_cls_head.31} parent=0 // pred_fallthru
    _
  // Predicated region
  $region14: #{pointnet2_decoder_without_cls_head.31} parent=0 // pred_check
    _
  $region15: #{pointnet2_decoder_without_cls_head.31} parent=0 // pred_check_branch
    %19 = sbr.rel (0) target = $region17
  $region16: #{pointnet2_decoder_without_cls_head.31} parent=0 // pred_region
    _
  $region17: #{pointnet2_decoder_without_cls_head.31} parent=0 // pred_fallthru
    _
  // Predicated region
  $region18: #{pointnet2_decoder_without_cls_head.31} parent=0 // pred_check
    _
  $region19: #{pointnet2_decoder_without_cls_head.31} parent=0 // pred_check_branch
    %21 = sbr.rel (0) target = $region21
  $region20: #{pointnet2_decoder_without_cls_head.31} parent=0 // pred_region
    _
  $region21: #{pointnet2_decoder_without_cls_head.31} parent=0 // pred_fallthru
    _
  %v23 = vld [vmem:[%s1] sm:$0x1]
  %v24 = vmul.f32 %v23, 0.0078125
  %v25 = vld [vmem:[%s1 + $0x1] sm:$0x1]
  %v26 = vmul.f32 %v25, 0.0078125
  %v27 = vmul.f32 %v24, %v24
  %v28 = vsub.f32 %v26, %v27
  %v29 = vld [vmem:[%s0] sm:$0xff]
  %v30 = vld [vmem:[%s0 + $0x8] sm:$0xff]
  %v31 = vld [vmem:[%s0 + $0x10] sm:$0xff]
  %v32 = vld [vmem:[%s0 + $0x18] sm:$0xff]
  %v33 = vld [vmem:[%s0 + $0x20] sm:$0xff]
  %v34 = vld [vmem:[%s0 + $0x28] sm:$0xff]
  %v35 = vld [vmem:[%s0 + $0x30] sm:$0xff]
  %v36 = vld [vmem:[%s0 + $0x38] sm:$0xff]
  %v37 = vld [vmem:[%s0 + $0x40] sm:$0xff]
  %v38 = vld [vmem:[%s0 + $0x48] sm:$0xff]
  %v39 = vld [vmem:[%s0 + $0x50] sm:$0xff]
  %v40 = vld [vmem:[%s0 + $0x58] sm:$0xff]
  %v41 = vld [vmem:[%s0 + $0x60] sm:$0xff]
  %v42 = vld [vmem:[%s0 + $0x68] sm:$0xff]
  %v43 = vld [vmem:[%s0 + $0x70] sm:$0xff]
  %v44 = vld [vmem:[%s0 + $0x78] sm:$0xff]
  %v45 = vlaneseq
  %v46 = vshrl.u32 %v45, 7
  %v47 = vsub.s32 0, %v46
  %v48 = vrot.slane %v24, %v47
  %v49 = vsub.f32 %v29, %v48
  %v50 = vsub.f32 %v30, %v48
  %v51 = vsub.f32 %v31, %v48
  %v52 = vsub.f32 %v32, %v48
  %v53 = vsub.f32 %v33, %v48
  %v54 = vsub.f32 %v34, %v48
  %v55 = vsub.f32 %v35, %v48
  %v56 = vsub.f32 %v36, %v48
  %v57 = vsub.f32 %v37, %v48
  %v58 = vsub.f32 %v38, %v48
  %v59 = vsub.f32 %v39, %v48
  %v60 = vsub.f32 %v40, %v48
  %v61 = vsub.f32 %v41, %v48
  %v62 = vsub.f32 %v42, %v48
  %v63 = vsub.f32 %v43, %v48
  %v64 = vsub.f32 %v44, %v48
  %v65 = vadd.f32 %v28, 1e-05
  %v66 = vrsqrt.pop %v65
  %v67 = vlaneseq
  %v68 = vshrl.u32 %v67, 7
  %v69 = vsub.s32 0, %v68
  %v70 = vrot.slane %v66, %v69
  %v71 = vmul.f32 %v49, %v70
  %v72 = vmul.f32 %v50, %v70
  %v73 = vmul.f32 %v51, %v70
  %v74 = vmul.f32 %v52, %v70
  %v75 = vmul.f32 %v53, %v70
  %v76 = vmul.f32 %v54, %v70
  %v77 = vmul.f32 %v55, %v70
  %v78 = vmul.f32 %v56, %v70
  %v79 = vmul.f32 %v57, %v70
  %v80 = vmul.f32 %v58, %v70
  %v81 = vmul.f32 %v59, %v70
  %v82 = vmul.f32 %v60, %v70
  %v83 = vmul.f32 %v61, %v70
  %v84 = vmul.f32 %v62, %v70
  %v85 = vmul.f32 %v63, %v70
  %v86 = vmul.f32 %v64, %v70
  %v87 = vld [vmem:[%s2] sm:$0x1]
  %v89 = vlaneseq
  %v90 = vshrl.u32 %v89, 7
  %v91 = vsub.s32 0, %v90
  %v92 = vrot.slane %v87, %v91
  %v94 = vmul.f32 %v71, %v92
  %v95 = vmul.f32 %v72, %v92
  %v96 = vmul.f32 %v73, %v92
  %v97 = vmul.f32 %v74, %v92
  %v98 = vmul.f32 %v75, %v92
  %v99 = vmul.f32 %v76, %v92
  %v100 = vmul.f32 %v77, %v92
  %v101 = vmul.f32 %v78, %v92
  %v102 = vmul.f32 %v79, %v92
  %v103 = vmul.f32 %v80, %v92
  %v104 = vmul.f32 %v81, %v92
  %v105 = vmul.f32 %v82, %v92
  %v106 = vmul.f32 %v83, %v92
  %v107 = vmul.f32 %v84, %v92
  %v108 = vmul.f32 %v85, %v92
  %v109 = vmul.f32 %v86, %v92
  %v110 = vld [vmem:[%s3] sm:$0x1]
  %v112 = vlaneseq
  %v113 = vshrl.u32 %v112, 7
  %v114 = vsub.s32 0, %v113
  %v115 = vrot.slane %v110, %v114
  %v117 = vadd.f32 %v94, %v115
  %v118 = vadd.f32 %v95, %v115
  %v119 = vadd.f32 %v96, %v115
  %v120 = vadd.f32 %v97, %v115
  %v121 = vadd.f32 %v98, %v115
  %v122 = vadd.f32 %v99, %v115
  %v123 = vadd.f32 %v100, %v115
  %v124 = vadd.f32 %v101, %v115
  %v125 = vadd.f32 %v102, %v115
  %v126 = vadd.f32 %v103, %v115
  %v127 = vadd.f32 %v104, %v115
  %v128 = vadd.f32 %v105, %v115
  %v129 = vadd.f32 %v106, %v115
  %v130 = vadd.f32 %v107, %v115
  %v131 = vadd.f32 %v108, %v115
  %v132 = vadd.f32 %v109, %v115
  %v133 = vmax.f32 %v117, 0.0
  %v134 = vmax.f32 %v118, 0.0
  %v135 = vmax.f32 %v119, 0.0
  %v136 = vmax.f32 %v120, 0.0
  %v137 = vmax.f32 %v121, 0.0
  %v138 = vmax.f32 %v122, 0.0
  %v139 = vmax.f32 %v123, 0.0
  %v140 = vmax.f32 %v124, 0.0
  %v141 = vmax.f32 %v125, 0.0
  %v142 = vmax.f32 %v126, 0.0
  %v143 = vmax.f32 %v127, 0.0
  %v144 = vmax.f32 %v128, 0.0
  %v145 = vmax.f32 %v129, 0.0
  %v146 = vmax.f32 %v130, 0.0
  %v147 = vmax.f32 %v131, 0.0
  %v148 = vmax.f32 %v132, 0.0
  %v149 = vpack.c.bf16 %v134, %v133
  %v150 = vpack.c.bf16 %v136, %v135
  %v151 = vpack.c.bf16 %v138, %v137
  %v152 = vpack.c.bf16 %v140, %v139
  %v153 = vpack.c.bf16 %v142, %v141
  %v154 = vpack.c.bf16 %v144, %v143
  %v155 = vpack.c.bf16 %v146, %v145
  %v156 = vpack.c.bf16 %v148, %v147
  %v157 = vld [vmem:[%s4] sm:$0xf]
  %v158 = vld [vmem:[%s4 + $0x4] sm:$0xf]
  %v159 = vld [vmem:[%s4 + $0x8] sm:$0xf]
  %v160 = vld [vmem:[%s4 + $0xc] sm:$0xf]
  %v161 = vld [vmem:[%s4 + $0x10] sm:$0xf]
  %v162 = vld [vmem:[%s4 + $0x14] sm:$0xf]
  %v163 = vld [vmem:[%s4 + $0x18] sm:$0xf]
  %v164 = vld [vmem:[%s4 + $0x1c] sm:$0xf]
  %v165 = vld [vmem:[%s4 + $0x20] sm:$0xf]
  %v166 = vld [vmem:[%s4 + $0x24] sm:$0xf]
  %v167 = vld [vmem:[%s4 + $0x28] sm:$0xf]
  %v168 = vld [vmem:[%s4 + $0x2c] sm:$0xf]
  %v169 = vld [vmem:[%s4 + $0x30] sm:$0xf]
  %v170 = vld [vmem:[%s4 + $0x34] sm:$0xf]
  %v171 = vld [vmem:[%s4 + $0x38] sm:$0xf]
  %v172 = vld [vmem:[%s4 + $0x3c] sm:$0xf]
  %v189 = vunpack.c.l.b16 %v157
  %v190 = vunpack.c.l.b16 %v158
  %v191 = vunpack.c.l.b16 %v159
  %v192 = vunpack.c.l.b16 %v160
  %v193 = vunpack.c.l.b16 %v161
  %v194 = vunpack.c.l.b16 %v162
  %v195 = vunpack.c.l.b16 %v163
  %v196 = vunpack.c.l.b16 %v164
  %v197 = vunpack.c.l.b16 %v165
  %v198 = vunpack.c.l.b16 %v166
  %v199 = vunpack.c.l.b16 %v167
  %v200 = vunpack.c.l.b16 %v168
  %v201 = vunpack.c.l.b16 %v169
  %v202 = vunpack.c.l.b16 %v170
  %v203 = vunpack.c.l.b16 %v171
  %v204 = vunpack.c.l.b16 %v172
  %v205 = vpack.c.b16 %v190, %v189
  %v206 = vpack.c.b16 %v192, %v191
  %v207 = vpack.c.b16 %v194, %v193
  %v208 = vpack.c.b16 %v196, %v195
  %v209 = vpack.c.b16 %v198, %v197
  %v210 = vpack.c.b16 %v200, %v199
  %v211 = vpack.c.b16 %v202, %v201
  %v212 = vpack.c.b16 %v204, %v203
  %221 = vmatprep.subr.bf16.mxu0 0
  %222 = vmatpush1.bf16.msra.mxu0 %v205
  %223 = vmatprep.subr.bf16.mxu0 0
  %224 = vmatpush1.bf16.msra.mxu0 %v206
  %225 = vmatprep.subr.bf16.mxu0 0
  %226 = vmatpush1.bf16.msra.mxu0 %v207
  %227 = vmatprep.subr.bf16.mxu0 0
  %228 = vmatpush1.bf16.msra.mxu0 %v208
  %229 = vmatprep.subr.bf16.mxu0 0
  %230 = vmatpush1.bf16.msra.mxu0 %v209
  %231 = vmatprep.subr.bf16.mxu0 0
  %232 = vmatpush1.bf16.msra.mxu0 %v210
  %233 = vmatprep.subr.bf16.mxu0 0
  %234 = vmatpush1.bf16.msra.mxu0 %v211
  %235 = vmatprep.subr.bf16.mxu0 0
  %236 = vmatpush1.bf16.msra.mxu0 %v212
  %237 = vmatprep.subr.bf16.mxu0 0
  %238 = vmatpush1.bf16.msra.mxu0 0
  %239 = vmatprep.subr.bf16.mxu0 0
  %240 = vmatpush1.bf16.msra.mxu0 0
  %241 = vmatprep.subr.bf16.mxu0 0
  %242 = vmatpush1.bf16.msra.mxu0 0
  %243 = vmatprep.subr.bf16.mxu0 0
  %244 = vmatpush1.bf16.msra.mxu0 0
  %245 = vmatprep.subr.bf16.mxu0 0
  %246 = vmatpush1.bf16.msra.mxu0 0
  %247 = vmatprep.subr.bf16.mxu0 0
  %248 = vmatpush1.bf16.msra.mxu0 0
  %249 = vmatprep.subr.bf16.mxu0 0
  %250 = vmatpush1.bf16.msra.mxu0 0
  %251 = vmatprep.subr.bf16.mxu0 0
  %252 = vmatpush1.bf16.msra.mxu0 0
  %253 = vmatprep.mubr.bf16.mxu0 0
  %254 = vmatmul.mubr.bf16.gmra.mrb[0].mxu0 %v149
  %v255 = vpop.f32.mrb[0].mxu0
  %v256 = vadd.f32 0.0, %v255
  %v257 = vpop.f32.mrb[0].mxu0
  %v258 = vpop.f32.mrb[0].mxu0
  %v259 = vadd.f32 0.0, %v258
  %v260 = vpop.f32.mrb[0].mxu0
  %261 = vmatprep.mubr.bf16.mxu0 0
  %262 = vmatmul.mubr.bf16.gmra.mrb[0].mxu0 %v150
  %v263 = vpop.f32.mrb[0].mxu0
  %v264 = vadd.f32 0.0, %v263
  %v265 = vpop.f32.mrb[0].mxu0
  %v266 = vpop.f32.mrb[0].mxu0
  %v267 = vadd.f32 0.0, %v266
  %v268 = vpop.f32.mrb[0].mxu0
  %269 = vmatprep.mubr.bf16.mxu0 0
  %270 = vmatmul.mubr.bf16.gmra.mrb[0].mxu0 %v151
  %v271 = vpop.f32.mrb[0].mxu0
  %v272 = vadd.f32 0.0, %v271
  %v273 = vpop.f32.mrb[0].mxu0
  %v274 = vpop.f32.mrb[0].mxu0
  %v275 = vadd.f32 0.0, %v274
  %v276 = vpop.f32.mrb[0].mxu0
  %277 = vmatprep.mubr.bf16.mxu0 0
  %278 = vmatmul.mubr.bf16.gmra.mrb[0].mxu0 %v152
  %v279 = vpop.f32.mrb[0].mxu0
  %v280 = vadd.f32 0.0, %v279
  %v281 = vpop.f32.mrb[0].mxu0
  %v282 = vpop.f32.mrb[0].mxu0
  %v283 = vadd.f32 0.0, %v282
  %v284 = vpop.f32.mrb[0].mxu0
  %285 = vmatprep.mubr.bf16.mxu0 0
  %286 = vmatmul.mubr.bf16.gmra.mrb[0].mxu0 %v153
  %v287 = vpop.f32.mrb[0].mxu0
  %v288 = vadd.f32 0.0, %v287
  %v289 = vpop.f32.mrb[0].mxu0
  %v290 = vpop.f32.mrb[0].mxu0
  %v291 = vadd.f32 0.0, %v290
  %v292 = vpop.f32.mrb[0].mxu0
  %293 = vmatprep.mubr.bf16.mxu0 0
  %294 = vmatmul.mubr.bf16.gmra.mrb[0].mxu0 %v154
  %v295 = vpop.f32.mrb[0].mxu0
  %v296 = vadd.f32 0.0, %v295
  %v297 = vpop.f32.mrb[0].mxu0
  %v298 = vpop.f32.mrb[0].mxu0
  %v299 = vadd.f32 0.0, %v298
  %v300 = vpop.f32.mrb[0].mxu0
  %301 = vmatprep.mubr.bf16.mxu0 0
  %302 = vmatmul.mubr.bf16.gmra.mrb[0].mxu0 %v155
  %v303 = vpop.f32.mrb[0].mxu0
  %v304 = vadd.f32 0.0, %v303
  %v305 = vpop.f32.mrb[0].mxu0
  %v306 = vpop.f32.mrb[0].mxu0
  %v307 = vadd.f32 0.0, %v306
  %v308 = vpop.f32.mrb[0].mxu0
  %309 = vmatprep.mubr.bf16.mxu0 0
  %310 = vmatmul.mubr.bf16.gmra.mrb[0].mxu0 %v156
  %v311 = vpop.f32.mrb[0].mxu0
  %v312 = vadd.f32 0.0, %v311
  %v313 = vpop.f32.mrb[0].mxu0
  %v314 = vpop.f32.mrb[0].mxu0
  %v315 = vadd.f32 0.0, %v314
  %v316 = vpop.f32.mrb[0].mxu0
  %317 = vdwg.mxu0
  %318 = vst [vmem:[%s5] sm:$0xff] %v256
  %319 = vst [vmem:[%s5 + $0x8] sm:$0xff] %v259
  %320 = vst [vmem:[%s5 + $0x10] sm:$0xff] %v264
  %321 = vst [vmem:[%s5 + $0x18] sm:$0xff] %v267
  %322 = vst [vmem:[%s5 + $0x20] sm:$0xff] %v272
  %323 = vst [vmem:[%s5 + $0x28] sm:$0xff] %v275
  %324 = vst [vmem:[%s5 + $0x30] sm:$0xff] %v280
  %325 = vst [vmem:[%s5 + $0x38] sm:$0xff] %v283
  %326 = vst [vmem:[%s5 + $0x40] sm:$0xff] %v288
  %327 = vst [vmem:[%s5 + $0x48] sm:$0xff] %v291
  %328 = vst [vmem:[%s5 + $0x50] sm:$0xff] %v296
  %329 = vst [vmem:[%s5 + $0x58] sm:$0xff] %v299
  %330 = vst [vmem:[%s5 + $0x60] sm:$0xff] %v304
  %331 = vst [vmem:[%s5 + $0x68] sm:$0xff] %v307
  %332 = vst [vmem:[%s5 + $0x70] sm:$0xff] %v312
  %333 = vst [vmem:[%s5 + $0x78] sm:$0xff] %v315
  %p334 = scmp.eq.s32.totalorder 0, 0
  // Predicated region
  $region22: #{pointnet2_decoder_without_cls_head.31} parent=0 // pred_check
    %p335 = pneg %p334
  $region23: #{pointnet2_decoder_without_cls_head.31} parent=0 // pred_check_branch
    %337 = sbr.rel (%p335) target = $region25
  $region24: #{pointnet2_decoder_without_cls_head.31} parent=0 // pred_region
    %338 = vst [vmem:[%s6] sm:$0x3] 0.0
  $region25: #{pointnet2_decoder_without_cls_head.31} parent=0 // pred_fallthru
    _
  %v339 = vld [vmem:[%s6] sm:$0x1]
  %v340 = vadd.f32 %v256, %v259
  %v341 = vadd.f32 %v340, %v264
  %v342 = vadd.f32 %v341, %v267
  %v343 = vadd.f32 %v342, %v272
  %v344 = vadd.f32 %v343, %v275
  %v345 = vadd.f32 %v344, %v280
  %v346 = vadd.f32 %v345, %v283
  %v347 = vadd.f32 %v346, %v288
  %v348 = vadd.f32 %v347, %v291
  %v349 = vadd.f32 %v348, %v296
  %v350 = vadd.f32 %v349, %v299
  %v351 = vadd.f32 %v350, %v304
  %v352 = vadd.f32 %v351, %v307
  %v353 = vadd.f32 %v352, %v312
  %v354 = vadd.f32 %v353, %v315
  %v355 = vrot.slane %v354, 4
  %v356 = vadd.f32 %v354, %v355
  %v357 = vrot.slane %v356, 2
  %v358 = vadd.f32 %v356, %v357
  %v359 = vrot.slane %v358, 1
  %v360 = vadd.f32 %v358, %v359
  %v361 = vadd.f32 %v339, %v360
  %362 = vst [vmem:[%s6] sm:$0x1] %v361
  %v363 = vld [vmem:[%s6 + $0x1] sm:$0x1]
  %v364 = vmul.f32 %v256, %v256
  %v365 = vmul.f32 %v259, %v259
  %v366 = vmul.f32 %v264, %v264
  %v367 = vmul.f32 %v267, %v267
  %v368 = vmul.f32 %v272, %v272
  %v369 = vmul.f32 %v275, %v275
  %v370 = vmul.f32 %v280, %v280
  %v371 = vmul.f32 %v283, %v283
  %v372 = vmul.f32 %v288, %v288
  %v373 = vmul.f32 %v291, %v291
  %v374 = vmul.f32 %v296, %v296
  %v375 = vmul.f32 %v299, %v299
  %v376 = vmul.f32 %v304, %v304
  %v377 = vmul.f32 %v307, %v307
  %v378 = vmul.f32 %v312, %v312
  %v379 = vmul.f32 %v315, %v315
  %v380 = vadd.f32 %v364, %v365
  %v381 = vadd.f32 %v380, %v366
  %v382 = vadd.f32 %v381, %v367
  %v383 = vadd.f32 %v382, %v368
  %v384 = vadd.f32 %v383, %v369
  %v385 = vadd.f32 %v384, %v370
  %v386 = vadd.f32 %v385, %v371
  %v387 = vadd.f32 %v386, %v372
  %v388 = vadd.f32 %v387, %v373
  %v389 = vadd.f32 %v388, %v374
  %v390 = vadd.f32 %v389, %v375
  %v391 = vadd.f32 %v390, %v376
  %v392 = vadd.f32 %v391, %v377
  %v393 = vadd.f32 %v392, %v378
  %v394 = vadd.f32 %v393, %v379
  %v395 = vrot.slane %v394, 4
  %v396 = vadd.f32 %v394, %v395
  %v397 = vrot.slane %v396, 2
  %v398 = vadd.f32 %v396, %v397
  %v399 = vrot.slane %v398, 1
  %v400 = vadd.f32 %v398, %v399
  %v401 = vadd.f32 %v363, %v400
  %402 = vst [vmem:[%s6 + $0x1] sm:$0x1] %v401
  // Predicated region
  $region26: #{pointnet2_decoder_without_cls_head.31} parent=0 // pred_check
    _
  $region27: #{pointnet2_decoder_without_cls_head.31} parent=0 // pred_check_branch
    %404 = sbr.rel (0) target = $region29
  $region28: #{pointnet2_decoder_without_cls_head.31} parent=0 // pred_region
    _
  $region29: #{pointnet2_decoder_without_cls_head.31} parent=0 // pred_fallthru
    _
  // Predicated region
  $region30: #{pointnet2_decoder_without_cls_head.31} parent=0 // pred_check
    _
  $region31: #{pointnet2_decoder_without_cls_head.31} parent=0 // pred_check_branch
    %406 = sbr.rel (0) target = $region33
  $region32: #{pointnet2_decoder_without_cls_head.31} parent=0 // pred_region
    _
  $region33: #{pointnet2_decoder_without_cls_head.31} parent=0 // pred_fallthru
    _
  // Predicated region
  $region34: #{pointnet2_decoder_without_cls_head.31} parent=0 // pred_check
    _
  $region35: #{pointnet2_decoder_without_cls_head.31} parent=0 // pred_check_branch
    %408 = sbr.rel (0) target = $region37
  $region36: #{pointnet2_decoder_without_cls_head.31} parent=0 // pred_region
    _
  $region37: #{pointnet2_decoder_without_cls_head.31} parent=0 // pred_fallthru
    _
  // Predicated region
  $region38: #{pointnet2_decoder_without_cls_head.31} parent=0 // pred_check
    _
  $region39: #{pointnet2_decoder_without_cls_head.31} parent=0 // pred_check_branch
    %410 = sbr.rel (0) target = $region41
  $region40: #{pointnet2_decoder_without_cls_head.31} parent=0 // pred_region
    _
  $region41: #{pointnet2_decoder_without_cls_head.31} parent=0 // pred_fallthru
    _

// kernel: pointnet2_decoder_without_cls_head.29
$region0: #{pointnet2_decoder_without_cls_head.29}
  #allocation0 [shape = 'u32[]', space=smem, size = 0x4, offset = 0x4, fixed_abs, tag = 'smem constant byte address 0x4 - core index']
  #allocation1 [shape = 'u32[144,128]{1,0:T(1,128)}', space=vmem, size = 0x12000, scoped, tag = 'internal scratch']
  %s0 = inlined_call_operand.vmem [shape: f32[2,64,8], index: 0, kind: input, shape index: {}]
  %s1 = inlined_call_operand.vmem [shape: f32[2,8,32], index: 1, kind: input, shape index: {}]
  %s2 = inlined_call_operand.vmem [shape: bf16[2,32,128], index: 2, kind: input, shape index: {}]
  %s3 = inlined_call_operand.vmem [shape: bf16[2,64,128], index: 3, kind: output, shape index: {}]
  %s4 = sld [smem:[#allocation0]]
  $region45: #{pointnet2_decoder_without_cls_head.29} parent=0
    _
  %s6 = ssub.s32 1, %s4
  %s7 = scalar_select 0, %s6, %s4
  loop: start=0, step=1, limit=4
  $region2: #{pointnet2_decoder_without_cls_head.29} parent=0 // loop_pre_header
    _
  $region3: #{pointnet2_decoder_without_cls_head.29} parent=0 // loop_header
    %s9 = sphi 0, %s13
    %p10 = scmp.ge.s32.totalorder %s9, 4
    %s16 = sphi 0, %s28
    %s17 = sphi 0, %s24
    %s18 = sphi 0, %s16
    %s19 = sphi 0, %s17
    %s20 = sphi 0, %s18
    %s21 = sphi 0, %s19
    %s33 = sphi 0, %s35
    %s36 = sphi 0, %s33
    %s37 = sphi 0, %s36
    %s53 = sphi 0, %s37
    %s59 = sphi 0, %s61
    %s62 = sphi 0, %s59
    %s63 = sphi 0, %s62
    %s79 = sphi 0, %s63
    %s85 = sphi 0, %s87
    %s88 = sphi 0, %s85
    %s89 = sphi 0, %s88
    %s105 = sphi 0, %s89
    %s113 = sphi 0, %s115
    %s116 = sphi 0, %s113
    %s117 = sphi 0, %s116
    %s133 = sphi 0, %s117
  $region4: #{pointnet2_decoder_without_cls_head.29} parent=0 // loop_header_branch
    %12 = sbr.rel (%p10) target = $region8
  $region5: #{pointnet2_decoder_without_cls_head.29} parent=0 // loop_body
    %s14 = ssub.s32 %s9, 1
    %s15 = ssub.s32 %s9, 2
    %s22 = sadd.s32 1, %s17
    %p23 = scmp.ge.s32.totalorder %s22, 1
    %s24 = scalar_select %p23, 0, %s22
    %s25 = sadd.s32 1, %s16
    %s26 = scalar_select %p23, %s25, %s16
    %p27 = scmp.ge.s32.totalorder %s26, 2
    %s28 = scalar_select %p27, 0, %s26
    %s29 = ssub.s32 %s16, %s28
    %s30 = ssub.s32 %s17, %s24
    %s31 = sor.u32 %s29, %s30
    %p32 = scmp.eq.s32.totalorder %s31, 0
    %s34 = sadd.s32 %s33, 1
    %s35 = scalar_select %p32, %s33, %s34
    %p38 = pneg %p32
    %p39 = scmp.eq.s32.totalorder %s9, 1
    %p40 = por %p38, %p39
    %p41 = scmp.ne.s32.totalorder %s33, %s36
    %p42 = scmp.eq.s32.totalorder %s9, 0
    %p43 = por %p41, %p42
    %p44 = scmp.ne.s32.totalorder %s33, %s36
    %p45 = scmp.eq.s32.totalorder %s14, 1
    %p46 = por %p44, %p45
    %p47 = scmp.ne.s32.totalorder %s36, %s37
    %p48 = scmp.eq.s32.totalorder %s14, 0
    %p49 = por %p47, %p48
    %p50 = scmp.ne.s32.totalorder %s36, %s37
    %p51 = scmp.eq.s32.totalorder %s15, 1
    %p52 = por %p50, %p51
    %p54 = scmp.ne.s32.totalorder %s37, %s53
    %p55 = scmp.eq.s32.totalorder %s15, 0
    %p56 = por %p54, %p55
    %s57 = ssub.s32 %s16, %s28
    %p58 = scmp.eq.s32.totalorder %s57, 0
    %s60 = sadd.s32 %s59, 1
    %s61 = scalar_select %p58, %s59, %s60
    %p64 = pneg %p58
    %p65 = scmp.eq.s32.totalorder %s9, 1
    %p66 = por %p64, %p65
    %p67 = scmp.ne.s32.totalorder %s59, %s62
    %p68 = scmp.eq.s32.totalorder %s9, 0
    %p69 = por %p67, %p68
    %p70 = scmp.ne.s32.totalorder %s59, %s62
    %p71 = scmp.eq.s32.totalorder %s14, 1
    %p72 = por %p70, %p71
    %p73 = scmp.ne.s32.totalorder %s62, %s63
    %p74 = scmp.eq.s32.totalorder %s14, 0
    %p75 = por %p73, %p74
    %p76 = scmp.ne.s32.totalorder %s62, %s63
    %p77 = scmp.eq.s32.totalorder %s15, 1
    %p78 = por %p76, %p77
    %p80 = scmp.ne.s32.totalorder %s63, %s79
    %p81 = scmp.eq.s32.totalorder %s15, 0
    %p82 = por %p80, %p81
    %s83 = ssub.s32 %s16, %s28
    %p84 = scmp.eq.s32.totalorder %s83, 0
    %s86 = sadd.s32 %s85, 1
    %s87 = scalar_select %p84, %s85, %s86
    %p90 = pneg %p84
    %p91 = scmp.eq.s32.totalorder %s9, 1
    %p92 = por %p90, %p91
    %p93 = scmp.ne.s32.totalorder %s85, %s88
    %p94 = scmp.eq.s32.totalorder %s9, 0
    %p95 = por %p93, %p94
    %p96 = scmp.ne.s32.totalorder %s85, %s88
    %p97 = scmp.eq.s32.totalorder %s14, 1
    %p98 = por %p96, %p97
    %p99 = scmp.ne.s32.totalorder %s88, %s89
    %p100 = scmp.eq.s32.totalorder %s14, 0
    %p101 = por %p99, %p100
    %p102 = scmp.ne.s32.totalorder %s88, %s89
    %p103 = scmp.eq.s32.totalorder %s15, 1
    %p104 = por %p102, %p103
    %p106 = scmp.ne.s32.totalorder %s89, %s105
    %p107 = scmp.eq.s32.totalorder %s15, 0
    %p108 = por %p106, %p107
    %s109 = ssub.s32 %s16, %s28
    %s110 = ssub.s32 %s17, %s24
    %s111 = sor.u32 %s109, %s110
    %p112 = scmp.eq.s32.totalorder %s111, 0
    %s114 = sadd.s32 %s113, 1
    %s115 = scalar_select %p112, %s113, %s114
    %p118 = pneg %p112
    %p119 = scmp.eq.s32.totalorder %s9, 1
    %p120 = por %p118, %p119
    %p121 = scmp.ne.s32.totalorder %s113, %s116
    %p122 = scmp.eq.s32.totalorder %s9, 0
    %p123 = por %p121, %p122
    %p124 = scmp.ne.s32.totalorder %s113, %s116
    %p125 = scmp.eq.s32.totalorder %s14, 1
    %p126 = por %p124, %p125
    %p127 = scmp.ne.s32.totalorder %s116, %s117
    %p128 = scmp.eq.s32.totalorder %s14, 0
    %p129 = por %p127, %p128
    %p130 = scmp.ne.s32.totalorder %s116, %s117
    %p131 = scmp.eq.s32.totalorder %s15, 1
    %p132 = por %p130, %p131
    %p134 = scmp.ne.s32.totalorder %s117, %s133
    %p135 = scmp.eq.s32.totalorder %s15, 0
    %p136 = por %p134, %p135
    %p137 = scmp.le.s32.totalorder 1, %s9
    %p138 = scmp.lt.s32.totalorder %s9, 3
    %p139 = pnand %p137, %p138
    %p140 = pneg %p139
    // Predicated region
    $region9: #{pointnet2_decoder_without_cls_head.29} parent=5 // pred_check
      _
    $region10: #{pointnet2_decoder_without_cls_head.29} parent=5 // pred_check_branch
      %142 = sbr.rel (%p139) target = $region12
    $region11: #{pointnet2_decoder_without_cls_head.29} parent=5 // pred_region
      %s143 = ssub.s32 %s9, 1
    $region12: #{pointnet2_decoder_without_cls_head.29} parent=5 // pred_fallthru
      _
    %p144 = scmp.lt.s32.totalorder %s9, 2
    // Predicated region
    $region13: #{pointnet2_decoder_without_cls_head.29} parent=5 // pred_check
      %p145 = pneg %p144
    $region14: #{pointnet2_decoder_without_cls_head.29} parent=5 // pred_check_branch
      %147 = sbr.rel (%p145) target = $region16
    $region15: #{pointnet2_decoder_without_cls_head.29} parent=5 // pred_region
      // Predicated region
      $region17: #{pointnet2_decoder_without_cls_head.29} parent=15 // pred_check
        %p148 = pneg %p43
      $region18: #{pointnet2_decoder_without_cls_head.29} parent=15 // pred_check_branch
        %150 = sbr.rel (%p148) target = $region20
      $region19: #{pointnet2_decoder_without_cls_head.29} parent=15 // pred_region
        %s151 = smul.u32 8, %s17
        %p152 = scmp.lt.s32.totalorder %s16, 1
        %s153 = scalar_select %p152, %s16, 1
        %p154 = scmp.lt.s32.totalorder %s151, 7
        %s155 = scalar_select %p154, %s151, 7
        %s156 = smul.addr %s153, 8
        %s157 = sadd.s32 %s155, %s156
        %s158 = smul.addr %s157, 8
        %s159 = scalar_lea.vmem %s0, %s158
        %s160 = smul.u32 8, %s17
      $region20: #{pointnet2_decoder_without_cls_head.29} parent=15 // pred_fallthru
        _
      // Predicated region
      $region21: #{pointnet2_decoder_without_cls_head.29} parent=15 // pred_check
        %p161 = pneg %p69
      $region22: #{pointnet2_decoder_without_cls_head.29} parent=15 // pred_check_branch
        %163 = sbr.rel (%p161) target = $region24
      $region23: #{pointnet2_decoder_without_cls_head.29} parent=15 // pred_region
        %p164 = scmp.lt.s32.totalorder %s16, 1
        %s165 = scalar_select %p164, %s16, 1
        %s166 = smul.addr %s165, 8
        %s167 = scalar_lea.vmem %s1, %s166
      $region24: #{pointnet2_decoder_without_cls_head.29} parent=15 // pred_fallthru
        _
      // Predicated region
      $region25: #{pointnet2_decoder_without_cls_head.29} parent=15 // pred_check
        %p168 = pneg %p95
      $region26: #{pointnet2_decoder_without_cls_head.29} parent=15 // pred_check_branch
        %170 = sbr.rel (%p168) target = $region28
      $region27: #{pointnet2_decoder_without_cls_head.29} parent=15 // pred_region
        %p171 = scmp.lt.s32.totalorder %s16, 1
        %s172 = scalar_select %p171, %s16, 1
        %s173 = smul.addr %s172, 4
        %s174 = smul.addr %s173, 4
        %s175 = scalar_lea.vmem %s2, %s174
      $region28: #{pointnet2_decoder_without_cls_head.29} parent=15 // pred_fallthru
        _
    $region16: #{pointnet2_decoder_without_cls_head.29} parent=5 // pred_fallthru
      _
    %p176 = scmp.le.s32.totalorder 1, %s9
    %p177 = scmp.lt.s32.totalorder %s9, 3
    %p178 = pnand %p176, %p177
    %p179 = pneg %p178
    // Predicated region
    $region29: #{pointnet2_decoder_without_cls_head.29} parent=5 // pred_check
      _
    $region30: #{pointnet2_decoder_without_cls_head.29} parent=5 // pred_check_branch
      %181 = sbr.rel (%p178) target = $region32
    $region31: #{pointnet2_decoder_without_cls_head.29} parent=5 // pred_region
      %s182 = ssub.s32 %s9, 1
      %s183 = smul.u32 8, %s19
      %p184 = scmp.lt.s32.totalorder %s18, 1
      %s185 = scalar_select %p184, %s18, 1
      %p186 = scmp.lt.s32.totalorder %s183, 7
      %s187 = scalar_select %p186, %s183, 7
      %s188 = smul.addr %s185, 8
      %s189 = sadd.s32 %s187, %s188
      %s190 = smul.addr %s189, 8
      %s191 = scalar_lea.vmem %s0, %s190
      %p192 = pneg %p49
      %p193 = pneg %p46
      %p194 = scmp.lt.s32.totalorder %s18, 1
      %s195 = scalar_select %p194, %s18, 1
      %s196 = smul.addr %s195, 8
      %s197 = scalar_lea.vmem %s1, %s196
      %p198 = pneg %p75
      %p199 = pneg %p72
      %p200 = scmp.lt.s32.totalorder %s18, 1
      %s201 = scalar_select %p200, %s18, 1
      %s202 = smul.addr %s201, 4
      %s203 = smul.addr %s202, 4
      %s204 = scalar_lea.vmem %s2, %s203
      %p205 = pneg %p101
      %p206 = pneg %p98
      %p207 = pneg %p129
      %p208 = pneg %p126
      %s209 = smul.u32 8, %s19
      %p210 = scmp.lt.s32.totalorder %s18, 1
      %s211 = scalar_select %p210, %s18, 1
      %p212 = scmp.lt.s32.totalorder %s209, 7
      %s213 = scalar_select %p212, %s209, 7
      %s214 = smul.addr %s211, 8
      %s215 = sadd.s32 %s213, %s214
      %s216 = smul.addr %s215, 4
      %s217 = scalar_lea.vmem %s3, %s216
      %s218 = smul.u32 8, %s19
      %p219 = scmp.lt.s32.totalorder %s18, 1
      %s220 = scalar_select %p219, %s18, 1
      %p221 = scmp.lt.s32.totalorder %s218, 7
      %s222 = scalar_select %p221, %s218, 7
      %s223 = smul.addr %s220, 8
      %s224 = sadd.s32 %s222, %s223
      %s225 = smul.addr %s224, 8
      %s226 = scalar_lea.vmem %s0, %s225
      %s227 = smul.u32 8, %s19
      %p228 = scmp.lt.s32.totalorder %s18, 1
      %s229 = scalar_select %p228, %s18, 1
      %s230 = smul.addr %s229, 8
      %s231 = scalar_lea.vmem %s1, %s230
      %p232 = scmp.lt.s32.totalorder %s18, 1
      %s233 = scalar_select %p232, %s18, 1
      %s234 = smul.addr %s233, 4
      %s235 = smul.addr %s234, 4
      %s236 = scalar_lea.vmem %s2, %s235
      %s237 = smul.u32 8, %s19
      %p238 = scmp.lt.s32.totalorder %s18, 1
      %s239 = scalar_select %p238, %s18, 1
      %p240 = scmp.lt.s32.totalorder %s237, 7
      %s241 = scalar_select %p240, %s237, 7
      %s242 = smul.addr %s239, 8
      %s243 = sadd.s32 %s241, %s242
      %s244 = smul.addr %s243, 4
      %s245 = scalar_lea.vmem %s3, %s244
      %s246 = smul.u32 8, %s19
      %v248 = vld [vmem:[%s226] sm:$0xff]
      %v249 = vld [vmem:[%s226 + $0x8] sm:$0xff]
      %v250 = vld [vmem:[%s226 + $0x10] sm:$0xff]
      %v251 = vld [vmem:[%s226 + $0x18] sm:$0xff]
      %v252 = vld [vmem:[%s226 + $0x20] sm:$0xff]
      %v253 = vld [vmem:[%s226 + $0x28] sm:$0xff]
      %v254 = vld [vmem:[%s226 + $0x30] sm:$0xff]
      %v255 = vld [vmem:[%s226 + $0x38] sm:$0xff]
      %v256 = vld [vmem:[%s231] sm:$0xff]
      %v257 = vld [vmem:[%s236] sm:$0xf]
      %v258 = vld [vmem:[%s236 + $0x4] sm:$0xf]
      %v259 = vld [vmem:[%s236 + $0x8] sm:$0xf]
      %v260 = vld [vmem:[%s236 + $0xc] sm:$0xf]
      %v261 = vmul.f32 %v248, %v248
      %v262 = vmul.f32 %v249, %v249
      %v263 = vmul.f32 %v250, %v250
      %v264 = vmul.f32 %v251, %v251
      %v265 = vmul.f32 %v252, %v252
      %v266 = vmul.f32 %v253, %v253
      %v267 = vmul.f32 %v254, %v254
      %v268 = vmul.f32 %v255, %v255
      %vm269 = vcmask 64512
      %v270 = vsel %vm269, %v261, 0.0
      %271 = vadd.xlane.f32.xlu0 %v270
      %v272 = vpop.xlane.xlu0 %271
      %v273 = vsel %vm269, %v262, 0.0
      %274 = vadd.xlane.f32.xlu0 %v273
      %v275 = vpop.xlane.xlu0 %274
      %v276 = vsel %vm269, %v263, 0.0
      %277 = vadd.xlane.f32.xlu0 %v276
      %v278 = vpop.xlane.xlu0 %277
      %v279 = vsel %vm269, %v264, 0.0
      %280 = vadd.xlane.f32.xlu0 %v279
      %v281 = vpop.xlane.xlu0 %280
      %v282 = vsel %vm269, %v265, 0.0
      %283 = vadd.xlane.f32.xlu0 %v282
      %v284 = vpop.xlane.xlu0 %283
      %v285 = vsel %vm269, %v266, 0.0
      %286 = vadd.xlane.f32.xlu0 %v285
      %v287 = vpop.xlane.xlu0 %286
      %v288 = vsel %vm269, %v267, 0.0
      %289 = vadd.xlane.f32.xlu0 %v288
      %v290 = vpop.xlane.xlu0 %289
      %v291 = vsel %vm269, %v268, 0.0
      %292 = vadd.xlane.f32.xlu0 %v291
      %v293 = vpop.xlane.xlu0 %292
      %v294 = vmul.f32 %v256, %v256
      %vm295 = vcmask 261120
      %v296 = vsel %vm295, %v294, 0.0
      %v297 = vrot.slane %v296, 4
      %v298 = vadd.f32 %v296, %v297
      %v299 = vrot.slane %v298, 2
      %v300 = vadd.f32 %v298, %v299
      %v301 = vrot.slane %v300, 1
      %v302 = vadd.f32 %v300, %v301
      %v304 = vsel %vm269, %v248, 0
      %v307 = vsel %vm269, %v249, 0
      %v310 = vsel %vm269, %v250, 0
      %v313 = vsel %vm269, %v251, 0
      %v316 = vsel %vm269, %v252, 0
      %v319 = vsel %vm269, %v253, 0
      %v322 = vsel %vm269, %v254, 0
      %v325 = vsel %vm269, %v255, 0
      %327 = vmatprep.subr.mxu0 0.0
      %328 = vmatpush1.msra.mxu0 %v256
      %329 = vmatprep.subr.mxu0 0.0
      %330 = vmatpush1.msra.mxu0 0.0
      %331 = vmatprep.subr.mxu0 0.0
      %332 = vmatpush1.msra.mxu0 0.0
      %333 = vmatprep.subr.mxu0 0.0
      %334 = vmatpush1.msra.mxu0 0.0
      %335 = vmatprep.subr.mxu0 0.0
      %336 = vmatpush1.msra.mxu0 0.0
      %337 = vmatprep.subr.mxu0 0.0
      %338 = vmatpush1.msra.mxu0 0.0
      %339 = vmatprep.subr.mxu0 0.0
      %340 = vmatpush1.msra.mxu0 0.0
      %341 = vmatprep.subr.mxu0 0.0
      %342 = vmatpush1.msra.mxu0 0.0
      %343 = vmatprep.subr.mxu0 0.0
      %344 = vmatpush1.msra.mxu0 0.0
      %345 = vmatprep.subr.mxu0 0.0
      %346 = vmatpush1.msra.mxu0 0.0
      %347 = vmatprep.subr.mxu0 0.0
      %348 = vmatpush1.msra.mxu0 0.0
      %349 = vmatprep.subr.mxu0 0.0
      %350 = vmatpush1.msra.mxu0 0.0
      %351 = vmatprep.subr.mxu0 0.0
      %352 = vmatpush1.msra.mxu0 0.0
      %353 = vmatprep.subr.mxu0 0.0
      %354 = vmatpush1.msra.mxu0 0.0
      %355 = vmatprep.subr.mxu0 0.0
      %356 = vmatpush1.msra.mxu0 0.0
      %357 = vmatprep.subr.mxu0 0.0
      %358 = vmatpush1.msra.mxu0 0.0
      %359 = vmatprep.subr.mxu0 0.0
      %360 = vmatpush1.msra.mxu0 0.0
      %361 = vmatprep.subr.mxu0 0.0
      %362 = vmatpush1.msra.mxu0 0.0
      %363 = vmatprep.subr.mxu0 0.0
      %364 = vmatpush1.msra.mxu0 0.0
      %365 = vmatprep.subr.mxu0 0.0
      %366 = vmatpush1.msra.mxu0 0.0
      %367 = vmatprep.subr.mxu0 0.0
      %368 = vmatpush1.msra.mxu0 0.0
      %369 = vmatprep.subr.mxu0 0.0
      %370 = vmatpush1.msra.mxu0 0.0
      %371 = vmatprep.subr.mxu0 0.0
      %372 = vmatpush1.msra.mxu0 0.0
      %373 = vmatprep.subr.mxu0 0.0
      %374 = vmatpush1.msra.mxu0 0.0
      %375 = vmatprep.subr.mxu0 0.0
      %376 = vmatpush1.msra.mxu0 0.0
      %377 = vmatprep.subr.mxu0 0.0
      %378 = vmatpush1.msra.mxu0 0.0
      %379 = vmatprep.subr.mxu0 0.0
      %380 = vmatpush1.msra.mxu0 0.0
      %381 = vmatprep.subr.mxu0 0.0
      %382 = vmatpush1.msra.mxu0 0.0
      %383 = vmatprep.subr.mxu0 0.0
      %384 = vmatpush1.msra.mxu0 0.0
      %385 = vmatprep.subr.mxu0 0.0
      %386 = vmatpush1.msra.mxu0 0.0
      %387 = vmatprep.subr.mxu0 0.0
      %388 = vmatpush1.msra.mxu0 0.0
      %389 = vmatprep.subr.mxu0 0.0
      %390 = vmatpush1.msra.mxu0 0.0
      %391 = vmatprep.mubr.f32.mxu0 0.0
      %392 = vmatmul.mubr.f32.gmra.mrb[0].mxu0 %v304
      %v393 = vpop.f32.mrb[0].mxu0
      %v394 = vadd.f32 0.0, %v393
      %v395 = vpop.f32.mrb[0].mxu0
      %396 = vmatprep.mubr.f32.mxu0 0.0
      %397 = vmatmul.mubr.f32.gmra.mrb[0].mxu0 %v307
      %v398 = vpop.f32.mrb[0].mxu0
      %v399 = vadd.f32 0.0, %v398
      %v400 = vpop.f32.mrb[0].mxu0
      %401 = vmatprep.mubr.f32.mxu0 0.0
      %402 = vmatmul.mubr.f32.gmra.mrb[0].mxu0 %v310
      %v403 = vpop.f32.mrb[0].mxu0
      %v404 = vadd.f32 0.0, %v403
      %v405 = vpop.f32.mrb[0].mxu0
      %406 = vmatprep.mubr.f32.mxu0 0.0
      %407 = vmatmul.mubr.f32.gmra.mrb[0].mxu0 %v313
      %v408 = vpop.f32.mrb[0].mxu0
      %v409 = vadd.f32 0.0, %v408
      %v410 = vpop.f32.mrb[0].mxu0
      %411 = vmatprep.mubr.f32.mxu0 0.0
      %412 = vmatmul.mubr.f32.gmra.mrb[0].mxu0 %v316
      %v413 = vpop.f32.mrb[0].mxu0
      %v414 = vadd.f32 0.0, %v413
      %v415 = vpop.f32.mrb[0].mxu0
      %416 = vmatprep.mubr.f32.mxu0 0.0
      %417 = vmatmul.mubr.f32.gmra.mrb[0].mxu0 %v319
      %v418 = vpop.f32.mrb[0].mxu0
      %v419 = vadd.f32 0.0, %v418
      %v420 = vpop.f32.mrb[0].mxu0
      %421 = vmatprep.mubr.f32.mxu0 0.0
      %422 = vmatmul.mubr.f32.gmra.mrb[0].mxu0 %v322
      %v423 = vpop.f32.mrb[0].mxu0
      %v424 = vadd.f32 0.0, %v423
      %v425 = vpop.f32.mrb[0].mxu0
      %426 = vmatprep.mubr.f32.mxu0 0.0
      %427 = vmatmul.mubr.f32.gmra.mrb[0].mxu0 %v325
      %v428 = vpop.f32.mrb[0].mxu0
      %v429 = vadd.f32 0.0, %v428
      %v430 = vpop.f32.mrb[0].mxu0
      %431 = vdwg.mxu0
      %v432 = vadd.f32 %v272, %v302
      %v433 = vadd.f32 %v275, %v302
      %v434 = vadd.f32 %v278, %v302
      %v435 = vadd.f32 %v281, %v302
      %v436 = vadd.f32 %v284, %v302
      %v437 = vadd.f32 %v287, %v302
      %v438 = vadd.f32 %v290, %v302
      %v439 = vadd.f32 %v293, %v302
      %v440 = vmul.f32 %v394, 2.0
      %v441 = vmul.f32 %v399, 2.0
      %v442 = vmul.f32 %v404, 2.0
      %v443 = vmul.f32 %v409, 2.0
      %v444 = vmul.f32 %v414, 2.0
      %v445 = vmul.f32 %v419, 2.0
      %v446 = vmul.f32 %v424, 2.0
      %v447 = vmul.f32 %v429, 2.0
      %v448 = vsub.f32 %v432, %v440
      %v449 = vsub.f32 %v433, %v441
      %v450 = vsub.f32 %v434, %v442
      %v451 = vsub.f32 %v435, %v443
      %v452 = vsub.f32 %v436, %v444
      %v453 = vsub.f32 %v437, %v445
      %v454 = vsub.f32 %v438, %v446
      %v455 = vsub.f32 %v439, %v447
      %v456 = vlaneseq
      %v457 = vand.u32 %v456, 127
      %v458 = vsel %vm295, %v448, inf
      %459 = vmin.xlane.f32.xlu0 %v458
      %v460 = vpop.xlane.xlu0 %459
      %v461 = vsel %vm295, %v449, inf
      %462 = vmin.xlane.f32.xlu0 %v461
      %v463 = vpop.xlane.xlu0 %462
      %v464 = vsel %vm295, %v450, inf
      %465 = vmin.xlane.f32.xlu0 %v464
      %v466 = vpop.xlane.xlu0 %465
      %v467 = vsel %vm295, %v451, inf
      %468 = vmin.xlane.f32.xlu0 %v467
      %v469 = vpop.xlane.xlu0 %468
      %v470 = vsel %vm295, %v452, inf
      %471 = vmin.xlane.f32.xlu0 %v470
      %v472 = vpop.xlane.xlu0 %471
      %v473 = vsel %vm295, %v453, inf
      %474 = vmin.xlane.f32.xlu0 %v473
      %v475 = vpop.xlane.xlu0 %474
      %v476 = vsel %vm295, %v454, inf
      %477 = vmin.xlane.f32.xlu0 %v476
      %v478 = vpop.xlane.xlu0 %477
      %v479 = vsel %vm295, %v455, inf
      %480 = vmin.xlane.f32.xlu0 %v479
      %v481 = vpop.xlane.xlu0 %480
      %vm482 = vcmp.eq.f32.partialorder %v448, %v460
      %vm483 = vcmp.eq.f32.partialorder %v449, %v463
      %vm484 = vcmp.eq.f32.partialorder %v450, %v466
      %vm485 = vcmp.eq.f32.partialorder %v451, %v469
      %vm486 = vcmp.eq.f32.partialorder %v452, %v472
      %vm487 = vcmp.eq.f32.partialorder %v453, %v475
      %vm488 = vcmp.eq.f32.partialorder %v454, %v478
      %vm489 = vcmp.eq.f32.partialorder %v455, %v481
      %v490 = vsel %vm482, %v457, 32
      %v491 = vsel %vm483, %v457, 32
      %v492 = vsel %vm484, %v457, 32
      %v493 = vsel %vm485, %v457, 32
      %v494 = vsel %vm486, %v457, 32
      %v495 = vsel %vm487, %v457, 32
      %v496 = vsel %vm488, %v457, 32
      %v497 = vsel %vm489, %v457, 32
      %v498 = vsel %vm295, %v490, 2147483647
      %v499 = vand.u32 %v498, 65535
      %v500 = vshra.s32 %v498, 16
      %v501 = vcvt.s32.f32 %v499
      %v502 = vcvt.s32.f32 %v500
      %503 = vmin.xlane.f32.xlu0 %v502
      %v504 = vpop.xlane.xlu0 %503
      %vm505 = vcmp.eq.f32.partialorder %v502, %v504
      %v506 = vsel %vm505, %v501, inf
      %507 = vmin.xlane.f32.xlu0 %v506
      %v508 = vpop.xlane.xlu0 %507
      %v509 = vcvt.f32.s32 %v508
      %v510 = vcvt.f32.s32 %v504
      %v511 = vshll.u32 %v510, 16
      %v512 = vadd.s32 %v511, %v509
      %v513 = vsel %vm295, %v491, 2147483647
      %v514 = vand.u32 %v513, 65535
      %v515 = vshra.s32 %v513, 16
      %v516 = vcvt.s32.f32 %v514
      %v517 = vcvt.s32.f32 %v515
      %518 = vmin.xlane.f32.xlu0 %v517
      %v519 = vpop.xlane.xlu0 %518
      %vm520 = vcmp.eq.f32.partialorder %v517, %v519
      %v521 = vsel %vm520, %v516, inf
      %522 = vmin.xlane.f32.xlu0 %v521
      %v523 = vpop.xlane.xlu0 %522
      %v524 = vcvt.f32.s32 %v523
      %v525 = vcvt.f32.s32 %v519
      %v526 = vshll.u32 %v525, 16
      %v527 = vadd.s32 %v526, %v524
      %v528 = vsel %vm295, %v492, 2147483647
      %v529 = vand.u32 %v528, 65535
      %v530 = vshra.s32 %v528, 16
      %v531 = vcvt.s32.f32 %v529
      %v532 = vcvt.s32.f32 %v530
      %533 = vmin.xlane.f32.xlu0 %v532
      %v534 = vpop.xlane.xlu0 %533
      %vm535 = vcmp.eq.f32.partialorder %v532, %v534
      %v536 = vsel %vm535, %v531, inf
      %537 = vmin.xlane.f32.xlu0 %v536
      %v538 = vpop.xlane.xlu0 %537
      %v539 = vcvt.f32.s32 %v538
      %v540 = vcvt.f32.s32 %v534
      %v541 = vshll.u32 %v540, 16
      %v542 = vadd.s32 %v541, %v539
      %v543 = vsel %vm295, %v493, 2147483647
      %v544 = vand.u32 %v543, 65535
      %v545 = vshra.s32 %v543, 16
      %v546 = vcvt.s32.f32 %v544
      %v547 = vcvt.s32.f32 %v545
      %548 = vmin.xlane.f32.xlu0 %v547
      %v549 = vpop.xlane.xlu0 %548
      %vm550 = vcmp.eq.f32.partialorder %v547, %v549
      %v551 = vsel %vm550, %v546, inf
      %552 = vmin.xlane.f32.xlu0 %v551
      %v553 = vpop.xlane.xlu0 %552
      %v554 = vcvt.f32.s32 %v553
      %v555 = vcvt.f32.s32 %v549
      %v556 = vshll.u32 %v555, 16
      %v557 = vadd.s32 %v556, %v554
      %v558 = vsel %vm295, %v494, 2147483647
      %v559 = vand.u32 %v558, 65535
      %v560 = vshra.s32 %v558, 16
      %v561 = vcvt.s32.f32 %v559
      %v562 = vcvt.s32.f32 %v560
      %563 = vmin.xlane.f32.xlu0 %v562
      %v564 = vpop.xlane.xlu0 %563
      %vm565 = vcmp.eq.f32.partialorder %v562, %v564
      %v566 = vsel %vm565, %v561, inf
      %567 = vmin.xlane.f32.xlu0 %v566
      %v568 = vpop.xlane.xlu0 %567
      %v569 = vcvt.f32.s32 %v568
      %v570 = vcvt.f32.s32 %v564
      %v571 = vshll.u32 %v570, 16
      %v572 = vadd.s32 %v571, %v569
      %v573 = vsel %vm295, %v495, 2147483647
      %v574 = vand.u32 %v573, 65535
      %v575 = vshra.s32 %v573, 16
      %v576 = vcvt.s32.f32 %v574
      %v577 = vcvt.s32.f32 %v575
      %578 = vmin.xlane.f32.xlu0 %v577
      %v579 = vpop.xlane.xlu0 %578
      %vm580 = vcmp.eq.f32.partialorder %v577, %v579
      %v581 = vsel %vm580, %v576, inf
      %582 = vmin.xlane.f32.xlu0 %v581
      %v583 = vpop.xlane.xlu0 %582
      %v584 = vcvt.f32.s32 %v583
      %v585 = vcvt.f32.s32 %v579
      %v586 = vshll.u32 %v585, 16
      %v587 = vadd.s32 %v586, %v584
      %v588 = vsel %vm295, %v496, 2147483647
      %v589 = vand.u32 %v588, 65535
      %v590 = vshra.s32 %v588, 16
      %v591 = vcvt.s32.f32 %v589
      %v592 = vcvt.s32.f32 %v590
      %593 = vmin.xlane.f32.xlu0 %v592
      %v594 = vpop.xlane.xlu0 %593
      %vm595 = vcmp.eq.f32.partialorder %v592, %v594
      %v596 = vsel %vm595, %v591, inf
      %597 = vmin.xlane.f32.xlu0 %v596
      %v598 = vpop.xlane.xlu0 %597
      %v599 = vcvt.f32.s32 %v598
      %v600 = vcvt.f32.s32 %v594
      %v601 = vshll.u32 %v600, 16
      %v602 = vadd.s32 %v601, %v599
      %v603 = vsel %vm295, %v497, 2147483647
      %v604 = vand.u32 %v603, 65535
      %v605 = vshra.s32 %v603, 16
      %v606 = vcvt.s32.f32 %v604
      %v607 = vcvt.s32.f32 %v605
      %608 = vmin.xlane.f32.xlu0 %v607
      %v609 = vpop.xlane.xlu0 %608
      %vm610 = vcmp.eq.f32.partialorder %v607, %v609
      %v611 = vsel %vm610, %v606, inf
      %612 = vmin.xlane.f32.xlu0 %v611
      %v613 = vpop.xlane.xlu0 %612
      %v614 = vcvt.f32.s32 %v613
      %v615 = vcvt.f32.s32 %v609
      %v616 = vshll.u32 %v615, 16
      %v617 = vadd.s32 %v616, %v614
      %vm618 = vcmp.eq.s32.totalorder %v457, %v512
      %vm619 = vcmp.eq.s32.totalorder %v457, %v527
      %vm620 = vcmp.eq.s32.totalorder %v457, %v542
      %vm621 = vcmp.eq.s32.totalorder %v457, %v557
      %vm622 = vcmp.eq.s32.totalorder %v457, %v572
      %vm623 = vcmp.eq.s32.totalorder %v457, %v587
      %vm624 = vcmp.eq.s32.totalorder %v457, %v602
      %vm625 = vcmp.eq.s32.totalorder %v457, %v617
      %v626 = vadd.f32 %v460, 1e-08
      %v627 = vadd.f32 %v463, 1e-08
      %v628 = vadd.f32 %v466, 1e-08
      %v629 = vadd.f32 %v469, 1e-08
      %v630 = vadd.f32 %v472, 1e-08
      %v631 = vadd.f32 %v475, 1e-08
      %v632 = vadd.f32 %v478, 1e-08
      %v633 = vadd.f32 %v481, 1e-08
      %v634 = vrcp.pop %v626
      %v635 = vrcp.pop %v627
      %v636 = vrcp.pop %v628
      %v637 = vrcp.pop %v629
      %v638 = vrcp.pop %v630
      %v639 = vrcp.pop %v631
      %v640 = vrcp.pop %v632
      %v641 = vrcp.pop %v633
      %v642 = vsel %vm618, %v634, 0.0
      %v643 = vsel %vm619, %v635, 0.0
      %v644 = vsel %vm620, %v636, 0.0
      %v645 = vsel %vm621, %v637, 0.0
      %v646 = vsel %vm622, %v638, 0.0
      %v647 = vsel %vm623, %v639, 0.0
      %v648 = vsel %vm624, %v640, 0.0
      %v649 = vsel %vm625, %v641, 0.0
      %v650 = vadd.f32 %v642, 0.0
      %v651 = vadd.f32 %v643, 0.0
      %v652 = vadd.f32 %v644, 0.0
      %v653 = vadd.f32 %v645, 0.0
      %v654 = vadd.f32 %v646, 0.0
      %v655 = vadd.f32 %v647, 0.0
      %v656 = vadd.f32 %v648, 0.0
      %v657 = vadd.f32 %v649, 0.0
      %v658 = vadd.f32 %v634, 0.0
      %v659 = vadd.f32 %v635, 0.0
      %v660 = vadd.f32 %v636, 0.0
      %v661 = vadd.f32 %v637, 0.0
      %v662 = vadd.f32 %v638, 0.0
      %v663 = vadd.f32 %v639, 0.0
      %v664 = vadd.f32 %v640, 0.0
      %v665 = vadd.f32 %v641, 0.0
      %v666 = vsel %vm618, inf, %v448
      %v667 = vsel %vm619, inf, %v449
      %v668 = vsel %vm620, inf, %v450
      %v669 = vsel %vm621, inf, %v451
      %v670 = vsel %vm622, inf, %v452
      %v671 = vsel %vm623, inf, %v453
      %v672 = vsel %vm624, inf, %v454
      %v673 = vsel %vm625, inf, %v455
      %v674 = vsel %vm295, %v666, inf
      %675 = vmin.xlane.f32.xlu0 %v674
      %v676 = vpop.xlane.xlu0 %675
      %v677 = vsel %vm295, %v667, inf
      %678 = vmin.xlane.f32.xlu0 %v677
      %v679 = vpop.xlane.xlu0 %678
      %v680 = vsel %vm295, %v668, inf
      %681 = vmin.xlane.f32.xlu0 %v680
      %v682 = vpop.xlane.xlu0 %681
      %v683 = vsel %vm295, %v669, inf
      %684 = vmin.xlane.f32.xlu0 %v683
      %v685 = vpop.xlane.xlu0 %684
      %v686 = vsel %vm295, %v670, inf
      %687 = vmin.xlane.f32.xlu0 %v686
      %v688 = vpop.xlane.xlu0 %687
      %v689 = vsel %vm295, %v671, inf
      %690 = vmin.xlane.f32.xlu0 %v689
      %v691 = vpop.xlane.xlu0 %690
      %v692 = vsel %vm295, %v672, inf
      %693 = vmin.xlane.f32.xlu0 %v692
      %v694 = vpop.xlane.xlu0 %693
      %v695 = vsel %vm295, %v673, inf
      %696 = vmin.xlane.f32.xlu0 %v695
      %v697 = vpop.xlane.xlu0 %696
      %vm698 = vcmp.eq.f32.partialorder %v666, %v676
      %vm699 = vcmp.eq.f32.partialorder %v667, %v679
      %vm700 = vcmp.eq.f32.partialorder %v668, %v682
      %vm701 = vcmp.eq.f32.partialorder %v669, %v685
      %vm702 = vcmp.eq.f32.partialorder %v670, %v688
      %vm703 = vcmp.eq.f32.partialorder %v671, %v691
      %vm704 = vcmp.eq.f32.partialorder %v672, %v694
      %vm705 = vcmp.eq.f32.partialorder %v673, %v697
      %v706 = vsel %vm698, %v457, 32
      %v707 = vsel %vm699, %v457, 32
      %v708 = vsel %vm700, %v457, 32
      %v709 = vsel %vm701, %v457, 32
      %v710 = vsel %vm702, %v457, 32
      %v711 = vsel %vm703, %v457, 32
      %v712 = vsel %vm704, %v457, 32
      %v713 = vsel %vm705, %v457, 32
      %v714 = vsel %vm295, %v706, 2147483647
      %v715 = vand.u32 %v714, 65535
      %v716 = vshra.s32 %v714, 16
      %v717 = vcvt.s32.f32 %v715
      %v718 = vcvt.s32.f32 %v716
      %719 = vmin.xlane.f32.xlu0 %v718
      %v720 = vpop.xlane.xlu0 %719
      %vm721 = vcmp.eq.f32.partialorder %v718, %v720
      %v722 = vsel %vm721, %v717, inf
      %723 = vmin.xlane.f32.xlu0 %v722
      %v724 = vpop.xlane.xlu0 %723
      %v725 = vcvt.f32.s32 %v724
      %v726 = vcvt.f32.s32 %v720
      %v727 = vshll.u32 %v726, 16
      %v728 = vadd.s32 %v727, %v725
      %v729 = vsel %vm295, %v707, 2147483647
      %v730 = vand.u32 %v729, 65535
      %v731 = vshra.s32 %v729, 16
      %v732 = vcvt.s32.f32 %v730
      %v733 = vcvt.s32.f32 %v731
      %734 = vmin.xlane.f32.xlu0 %v733
      %v735 = vpop.xlane.xlu0 %734
      %vm736 = vcmp.eq.f32.partialorder %v733, %v735
      %v737 = vsel %vm736, %v732, inf
      %738 = vmin.xlane.f32.xlu0 %v737
      %v739 = vpop.xlane.xlu0 %738
      %v740 = vcvt.f32.s32 %v739
      %v741 = vcvt.f32.s32 %v735
      %v742 = vshll.u32 %v741, 16
      %v743 = vadd.s32 %v742, %v740
      %v744 = vsel %vm295, %v708, 2147483647
      %v745 = vand.u32 %v744, 65535
      %v746 = vshra.s32 %v744, 16
      %v747 = vcvt.s32.f32 %v745
      %v748 = vcvt.s32.f32 %v746
      %749 = vmin.xlane.f32.xlu0 %v748
      %v750 = vpop.xlane.xlu0 %749
      %vm751 = vcmp.eq.f32.partialorder %v748, %v750
      %v752 = vsel %vm751, %v747, inf
      %753 = vmin.xlane.f32.xlu0 %v752
      %v754 = vpop.xlane.xlu0 %753
      %v755 = vcvt.f32.s32 %v754
      %v756 = vcvt.f32.s32 %v750
      %v757 = vshll.u32 %v756, 16
      %v758 = vadd.s32 %v757, %v755
      %v759 = vsel %vm295, %v709, 2147483647
      %v760 = vand.u32 %v759, 65535
      %v761 = vshra.s32 %v759, 16
      %v762 = vcvt.s32.f32 %v760
      %v763 = vcvt.s32.f32 %v761
      %764 = vmin.xlane.f32.xlu0 %v763
      %v765 = vpop.xlane.xlu0 %764
      %vm766 = vcmp.eq.f32.partialorder %v763, %v765
      %v767 = vsel %vm766, %v762, inf
      %768 = vmin.xlane.f32.xlu0 %v767
      %v769 = vpop.xlane.xlu0 %768
      %v770 = vcvt.f32.s32 %v769
      %v771 = vcvt.f32.s32 %v765
      %v772 = vshll.u32 %v771, 16
      %v773 = vadd.s32 %v772, %v770
      %v774 = vsel %vm295, %v710, 2147483647
      %v775 = vand.u32 %v774, 65535
      %v776 = vshra.s32 %v774, 16
      %v777 = vcvt.s32.f32 %v775
      %v778 = vcvt.s32.f32 %v776
      %779 = vmin.xlane.f32.xlu0 %v778
      %v780 = vpop.xlane.xlu0 %779
      %vm781 = vcmp.eq.f32.partialorder %v778, %v780
      %v782 = vsel %vm781, %v777, inf
      %783 = vmin.xlane.f32.xlu0 %v782
      %v784 = vpop.xlane.xlu0 %783
      %v785 = vcvt.f32.s32 %v784
      %v786 = vcvt.f32.s32 %v780
      %v787 = vshll.u32 %v786, 16
      %v788 = vadd.s32 %v787, %v785
      %v789 = vsel %vm295, %v711, 2147483647
      %v790 = vand.u32 %v789, 65535
      %v791 = vshra.s32 %v789, 16
      %v792 = vcvt.s32.f32 %v790
      %v793 = vcvt.s32.f32 %v791
      %794 = vmin.xlane.f32.xlu0 %v793
      %v795 = vpop.xlane.xlu0 %794
      %vm796 = vcmp.eq.f32.partialorder %v793, %v795
      %v797 = vsel %vm796, %v792, inf
      %798 = vmin.xlane.f32.xlu0 %v797
      %v799 = vpop.xlane.xlu0 %798
      %v800 = vcvt.f32.s32 %v799
      %v801 = vcvt.f32.s32 %v795
      %v802 = vshll.u32 %v801, 16
      %v803 = vadd.s32 %v802, %v800
      %v804 = vsel %vm295, %v712, 2147483647
      %v805 = vand.u32 %v804, 65535
      %v806 = vshra.s32 %v804, 16
      %v807 = vcvt.s32.f32 %v805
      %v808 = vcvt.s32.f32 %v806
      %809 = vmin.xlane.f32.xlu0 %v808
      %v810 = vpop.xlane.xlu0 %809
      %vm811 = vcmp.eq.f32.partialorder %v808, %v810
      %v812 = vsel %vm811, %v807, inf
      %813 = vmin.xlane.f32.xlu0 %v812
      %v814 = vpop.xlane.xlu0 %813
      %v815 = vcvt.f32.s32 %v814
      %v816 = vcvt.f32.s32 %v810
      %v817 = vshll.u32 %v816, 16
      %v818 = vadd.s32 %v817, %v815
      %v819 = vsel %vm295, %v713, 2147483647
      %v820 = vand.u32 %v819, 65535
      %v821 = vshra.s32 %v819, 16
      %v822 = vcvt.s32.f32 %v820
      %v823 = vcvt.s32.f32 %v821
      %824 = vmin.xlane.f32.xlu0 %v823
      %v825 = vpop.xlane.xlu0 %824
      %vm826 = vcmp.eq.f32.partialorder %v823, %v825
      %v827 = vsel %vm826, %v822, inf
      %828 = vmin.xlane.f32.xlu0 %v827
      %v829 = vpop.xlane.xlu0 %828
      %v830 = vcvt.f32.s32 %v829
      %v831 = vcvt.f32.s32 %v825
      %v832 = vshll.u32 %v831, 16
      %v833 = vadd.s32 %v832, %v830
      %vm834 = vcmp.eq.s32.totalorder %v457, %v728
      %vm835 = vcmp.eq.s32.totalorder %v457, %v743
      %vm836 = vcmp.eq.s32.totalorder %v457, %v758
      %vm837 = vcmp.eq.s32.totalorder %v457, %v773
      %vm838 = vcmp.eq.s32.totalorder %v457, %v788
      %vm839 = vcmp.eq.s32.totalorder %v457, %v803
      %vm840 = vcmp.eq.s32.totalorder %v457, %v818
      %vm841 = vcmp.eq.s32.totalorder %v457, %v833
      %v842 = vadd.f32 %v676, 1e-08
      %v843 = vadd.f32 %v679, 1e-08
      %v844 = vadd.f32 %v682, 1e-08
      %v845 = vadd.f32 %v685, 1e-08
      %v846 = vadd.f32 %v688, 1e-08
      %v847 = vadd.f32 %v691, 1e-08
      %v848 = vadd.f32 %v694, 1e-08
      %v849 = vadd.f32 %v697, 1e-08
      %v850 = vrcp.pop %v842
      %v851 = vrcp.pop %v843
      %v852 = vrcp.pop %v844
      %v853 = vrcp.pop %v845
      %v854 = vrcp.pop %v846
      %v855 = vrcp.pop %v847
      %v856 = vrcp.pop %v848
      %v857 = vrcp.pop %v849
      %v858 = vsel %vm834, %v850, 0.0
      %v859 = vsel %vm835, %v851, 0.0
      %v860 = vsel %vm836, %v852, 0.0
      %v861 = vsel %vm837, %v853, 0.0
      %v862 = vsel %vm838, %v854, 0.0
      %v863 = vsel %vm839, %v855, 0.0
      %v864 = vsel %vm840, %v856, 0.0
      %v865 = vsel %vm841, %v857, 0.0
      %v866 = vadd.f32 %v650, %v858
      %v867 = vadd.f32 %v651, %v859
      %v868 = vadd.f32 %v652, %v860
      %v869 = vadd.f32 %v653, %v861
      %v870 = vadd.f32 %v654, %v862
      %v871 = vadd.f32 %v655, %v863
      %v872 = vadd.f32 %v656, %v864
      %v873 = vadd.f32 %v657, %v865
      %v874 = vadd.f32 %v658, %v850
      %v875 = vadd.f32 %v659, %v851
      %v876 = vadd.f32 %v660, %v852
      %v877 = vadd.f32 %v661, %v853
      %v878 = vadd.f32 %v662, %v854
      %v879 = vadd.f32 %v663, %v855
      %v880 = vadd.f32 %v664, %v856
      %v881 = vadd.f32 %v665, %v857
      %v882 = vsel %vm834, inf, %v666
      %v883 = vsel %vm835, inf, %v667
      %v884 = vsel %vm836, inf, %v668
      %v885 = vsel %vm837, inf, %v669
      %v886 = vsel %vm838, inf, %v670
      %v887 = vsel %vm839, inf, %v671
      %v888 = vsel %vm840, inf, %v672
      %v889 = vsel %vm841, inf, %v673
      %v890 = vsel %vm295, %v882, inf
      %891 = vmin.xlane.f32.xlu0 %v890
      %v892 = vpop.xlane.xlu0 %891
      %v893 = vsel %vm295, %v883, inf
      %894 = vmin.xlane.f32.xlu0 %v893
      %v895 = vpop.xlane.xlu0 %894
      %v896 = vsel %vm295, %v884, inf
      %897 = vmin.xlane.f32.xlu0 %v896
      %v898 = vpop.xlane.xlu0 %897
      %v899 = vsel %vm295, %v885, inf
      %900 = vmin.xlane.f32.xlu0 %v899
      %v901 = vpop.xlane.xlu0 %900
      %v902 = vsel %vm295, %v886, inf
      %903 = vmin.xlane.f32.xlu0 %v902
      %v904 = vpop.xlane.xlu0 %903
      %v905 = vsel %vm295, %v887, inf
      %906 = vmin.xlane.f32.xlu0 %v905
      %v907 = vpop.xlane.xlu0 %906
      %v908 = vsel %vm295, %v888, inf
      %909 = vmin.xlane.f32.xlu0 %v908
      %v910 = vpop.xlane.xlu0 %909
      %v911 = vsel %vm295, %v889, inf
      %912 = vmin.xlane.f32.xlu0 %v911
      %v913 = vpop.xlane.xlu0 %912
      %vm914 = vcmp.eq.f32.partialorder %v882, %v892
      %vm915 = vcmp.eq.f32.partialorder %v883, %v895
      %vm916 = vcmp.eq.f32.partialorder %v884, %v898
      %vm917 = vcmp.eq.f32.partialorder %v885, %v901
      %vm918 = vcmp.eq.f32.partialorder %v886, %v904
      %vm919 = vcmp.eq.f32.partialorder %v887, %v907
      %vm920 = vcmp.eq.f32.partialorder %v888, %v910
      %vm921 = vcmp.eq.f32.partialorder %v889, %v913
      %v922 = vsel %vm914, %v457, 32
      %v923 = vsel %vm915, %v457, 32
      %v924 = vsel %vm916, %v457, 32
      %v925 = vsel %vm917, %v457, 32
      %v926 = vsel %vm918, %v457, 32
      %v927 = vsel %vm919, %v457, 32
      %v928 = vsel %vm920, %v457, 32
      %v929 = vsel %vm921, %v457, 32
      %v930 = vsel %vm295, %v922, 2147483647
      %v931 = vand.u32 %v930, 65535
      %v932 = vshra.s32 %v930, 16
      %v933 = vcvt.s32.f32 %v931
      %v934 = vcvt.s32.f32 %v932
      %935 = vmin.xlane.f32.xlu0 %v934
      %v936 = vpop.xlane.xlu0 %935
      %vm937 = vcmp.eq.f32.partialorder %v934, %v936
      %v938 = vsel %vm937, %v933, inf
      %939 = vmin.xlane.f32.xlu0 %v938
      %v940 = vpop.xlane.xlu0 %939
      %v941 = vcvt.f32.s32 %v940
      %v942 = vcvt.f32.s32 %v936
      %v943 = vshll.u32 %v942, 16
      %v944 = vadd.s32 %v943, %v941
      %v945 = vsel %vm295, %v923, 2147483647
      %v946 = vand.u32 %v945, 65535
      %v947 = vshra.s32 %v945, 16
      %v948 = vcvt.s32.f32 %v946
      %v949 = vcvt.s32.f32 %v947
      %950 = vmin.xlane.f32.xlu0 %v949
      %v951 = vpop.xlane.xlu0 %950
      %vm952 = vcmp.eq.f32.partialorder %v949, %v951
      %v953 = vsel %vm952, %v948, inf
      %954 = vmin.xlane.f32.xlu0 %v953
      %v955 = vpop.xlane.xlu0 %954
      %v956 = vcvt.f32.s32 %v955
      %v957 = vcvt.f32.s32 %v951
      %v958 = vshll.u32 %v957, 16
      %v959 = vadd.s32 %v958, %v956
      %v960 = vsel %vm295, %v924, 2147483647
      %v961 = vand.u32 %v960, 65535
      %v962 = vshra.s32 %v960, 16
      %v963 = vcvt.s32.f32 %v961
      %v964 = vcvt.s32.f32 %v962
      %965 = vmin.xlane.f32.xlu0 %v964
      %v966 = vpop.xlane.xlu0 %965
      %vm967 = vcmp.eq.f32.partialorder %v964, %v966
      %v968 = vsel %vm967, %v963, inf
      %969 = vmin.xlane.f32.xlu0 %v968
      %v970 = vpop.xlane.xlu0 %969
      %v971 = vcvt.f32.s32 %v970
      %v972 = vcvt.f32.s32 %v966
      %v973 = vshll.u32 %v972, 16
      %v974 = vadd.s32 %v973, %v971
      %v975 = vsel %vm295, %v925, 2147483647
      %v976 = vand.u32 %v975, 65535
      %v977 = vshra.s32 %v975, 16
      %v978 = vcvt.s32.f32 %v976
      %v979 = vcvt.s32.f32 %v977
      %980 = vmin.xlane.f32.xlu0 %v979
      %v981 = vpop.xlane.xlu0 %980
      %vm982 = vcmp.eq.f32.partialorder %v979, %v981
      %v983 = vsel %vm982, %v978, inf
      %984 = vmin.xlane.f32.xlu0 %v983
      %v985 = vpop.xlane.xlu0 %984
      %v986 = vcvt.f32.s32 %v985
      %v987 = vcvt.f32.s32 %v981
      %v988 = vshll.u32 %v987, 16
      %v989 = vadd.s32 %v988, %v986
      %v990 = vsel %vm295, %v926, 2147483647
      %v991 = vand.u32 %v990, 65535
      %v992 = vshra.s32 %v990, 16
      %v993 = vcvt.s32.f32 %v991
      %v994 = vcvt.s32.f32 %v992
      %995 = vmin.xlane.f32.xlu0 %v994
      %v996 = vpop.xlane.xlu0 %995
      %vm997 = vcmp.eq.f32.partialorder %v994, %v996
      %v998 = vsel %vm997, %v993, inf
      %999 = vmin.xlane.f32.xlu0 %v998
      %v1000 = vpop.xlane.xlu0 %999
      %v1001 = vcvt.f32.s32 %v1000
      %v1002 = vcvt.f32.s32 %v996
      %v1003 = vshll.u32 %v1002, 16
      %v1004 = vadd.s32 %v1003, %v1001
      %v1005 = vsel %vm295, %v927, 2147483647
      %v1006 = vand.u32 %v1005, 65535
      %v1007 = vshra.s32 %v1005, 16
      %v1008 = vcvt.s32.f32 %v1006
      %v1009 = vcvt.s32.f32 %v1007
      %1010 = vmin.xlane.f32.xlu0 %v1009
      %v1011 = vpop.xlane.xlu0 %1010
      %vm1012 = vcmp.eq.f32.partialorder %v1009, %v1011
      %v1013 = vsel %vm1012, %v1008, inf
      %1014 = vmin.xlane.f32.xlu0 %v1013
      %v1015 = vpop.xlane.xlu0 %1014
      %v1016 = vcvt.f32.s32 %v1015
      %v1017 = vcvt.f32.s32 %v1011
      %v1018 = vshll.u32 %v1017, 16
      %v1019 = vadd.s32 %v1018, %v1016
      %v1020 = vsel %vm295, %v928, 2147483647
      %v1021 = vand.u32 %v1020, 65535
      %v1022 = vshra.s32 %v1020, 16
      %v1023 = vcvt.s32.f32 %v1021
      %v1024 = vcvt.s32.f32 %v1022
      %1025 = vmin.xlane.f32.xlu0 %v1024
      %v1026 = vpop.xlane.xlu0 %1025
      %vm1027 = vcmp.eq.f32.partialorder %v1024, %v1026
      %v1028 = vsel %vm1027, %v1023, inf
      %1029 = vmin.xlane.f32.xlu0 %v1028
      %v1030 = vpop.xlane.xlu0 %1029
      %v1031 = vcvt.f32.s32 %v1030
      %v1032 = vcvt.f32.s32 %v1026
      %v1033 = vshll.u32 %v1032, 16
      %v1034 = vadd.s32 %v1033, %v1031
      %v1035 = vsel %vm295, %v929, 2147483647
      %v1036 = vand.u32 %v1035, 65535
      %v1037 = vshra.s32 %v1035, 16
      %v1038 = vcvt.s32.f32 %v1036
      %v1039 = vcvt.s32.f32 %v1037
      %1040 = vmin.xlane.f32.xlu0 %v1039
      %v1041 = vpop.xlane.xlu0 %1040
      %vm1042 = vcmp.eq.f32.partialorder %v1039, %v1041
      %v1043 = vsel %vm1042, %v1038, inf
      %1044 = vmin.xlane.f32.xlu0 %v1043
      %v1045 = vpop.xlane.xlu0 %1044
      %v1046 = vcvt.f32.s32 %v1045
      %v1047 = vcvt.f32.s32 %v1041
      %v1048 = vshll.u32 %v1047, 16
      %v1049 = vadd.s32 %v1048, %v1046
      %vm1050 = vcmp.eq.s32.totalorder %v457, %v944
      %vm1051 = vcmp.eq.s32.totalorder %v457, %v959
      %vm1052 = vcmp.eq.s32.totalorder %v457, %v974
      %vm1053 = vcmp.eq.s32.totalorder %v457, %v989
      %vm1054 = vcmp.eq.s32.totalorder %v457, %v1004
      %vm1055 = vcmp.eq.s32.totalorder %v457, %v1019
      %vm1056 = vcmp.eq.s32.totalorder %v457, %v1034
      %vm1057 = vcmp.eq.s32.totalorder %v457, %v1049
      %v1058 = vadd.f32 %v892, 1e-08
      %v1059 = vadd.f32 %v895, 1e-08
      %v1060 = vadd.f32 %v898, 1e-08
      %v1061 = vadd.f32 %v901, 1e-08
      %v1062 = vadd.f32 %v904, 1e-08
      %v1063 = vadd.f32 %v907, 1e-08
      %v1064 = vadd.f32 %v910, 1e-08
      %v1065 = vadd.f32 %v913, 1e-08
      %v1066 = vrcp.pop %v1058
      %v1067 = vrcp.pop %v1059
      %v1068 = vrcp.pop %v1060
      %v1069 = vrcp.pop %v1061
      %v1070 = vrcp.pop %v1062
      %v1071 = vrcp.pop %v1063
      %v1072 = vrcp.pop %v1064
      %v1073 = vrcp.pop %v1065
      %v1074 = vsel %vm1050, %v1066, 0.0
      %v1075 = vsel %vm1051, %v1067, 0.0
      %v1076 = vsel %vm1052, %v1068, 0.0
      %v1077 = vsel %vm1053, %v1069, 0.0
      %v1078 = vsel %vm1054, %v1070, 0.0
      %v1079 = vsel %vm1055, %v1071, 0.0
      %v1080 = vsel %vm1056, %v1072, 0.0
      %v1081 = vsel %vm1057, %v1073, 0.0
      %v1082 = vadd.f32 %v866, %v1074
      %v1083 = vadd.f32 %v867, %v1075
      %v1084 = vadd.f32 %v868, %v1076
      %v1085 = vadd.f32 %v869, %v1077
      %v1086 = vadd.f32 %v870, %v1078
      %v1087 = vadd.f32 %v871, %v1079
      %v1088 = vadd.f32 %v872, %v1080
      %v1089 = vadd.f32 %v873, %v1081
      %v1090 = vadd.f32 %v874, %v1066
      %v1091 = vadd.f32 %v875, %v1067
      %v1092 = vadd.f32 %v876, %v1068
      %v1093 = vadd.f32 %v877, %v1069
      %v1094 = vadd.f32 %v878, %v1070
      %v1095 = vadd.f32 %v879, %v1071
      %v1096 = vadd.f32 %v880, %v1072
      %v1097 = vadd.f32 %v881, %v1073
      %v1098 = vpack.c.bf16 %v1083, %v1082
      %v1099 = vpack.c.bf16 %v1085, %v1084
      %v1100 = vpack.c.bf16 %v1087, %v1086
      %v1101 = vpack.c.bf16 %v1089, %v1088
      %v1106 = vunpack.c.l.b16 %v257
      %v1107 = vunpack.c.l.b16 %v258
      %v1108 = vunpack.c.l.b16 %v259
      %v1109 = vunpack.c.l.b16 %v260
      %v1110 = vpack.c.b16 %v1107, %v1106
      %v1111 = vpack.c.b16 %v1109, %v1108
      %v1115 = vsel %vm295, %v1098, 0
      %v1118 = vsel %vm295, %v1099, 0
      %v1121 = vsel %vm295, %v1100, 0
      %v1124 = vsel %vm295, %v1101, 0
      %1126 = vmatprep.subr.bf16.mxu0 0
      %1127 = vmatpush1.bf16.msra.mxu0 %v1110
      %1128 = vmatprep.subr.bf16.mxu0 0
      %1129 = vmatpush1.bf16.msra.mxu0 %v1111
      %1130 = vmatprep.subr.bf16.mxu0 0
      %1131 = vmatpush1.bf16.msra.mxu0 0
      %1132 = vmatprep.subr.bf16.mxu0 0
      %1133 = vmatpush1.bf16.msra.mxu0 0
      %1134 = vmatprep.subr.bf16.mxu0 0
      %1135 = vmatpush1.bf16.msra.mxu0 0
      %1136 = vmatprep.subr.bf16.mxu0 0
      %1137 = vmatpush1.bf16.msra.mxu0 0
      %1138 = vmatprep.subr.bf16.mxu0 0
      %1139 = vmatpush1.bf16.msra.mxu0 0
      %1140 = vmatprep.subr.bf16.mxu0 0
      %1141 = vmatpush1.bf16.msra.mxu0 0
      %1142 = vmatprep.subr.bf16.mxu0 0
      %1143 = vmatpush1.bf16.msra.mxu0 0
      %1144 = vmatprep.subr.bf16.mxu0 0
      %1145 = vmatpush1.bf16.msra.mxu0 0
      %1146 = vmatprep.subr.bf16.mxu0 0
      %1147 = vmatpush1.bf16.msra.mxu0 0
      %1148 = vmatprep.subr.bf16.mxu0 0
      %1149 = vmatpush1.bf16.msra.mxu0 0
      %1150 = vmatprep.subr.bf16.mxu0 0
      %1151 = vmatpush1.bf16.msra.mxu0 0
      %1152 = vmatprep.subr.bf16.mxu0 0
      %1153 = vmatpush1.bf16.msra.mxu0 0
      %1154 = vmatprep.subr.bf16.mxu0 0
      %1155 = vmatpush1.bf16.msra.mxu0 0
      %1156 = vmatprep.subr.bf16.mxu0 0
      %1157 = vmatpush1.bf16.msra.mxu0 0
      %1158 = vmatprep.mubr.bf16.mxu0 0
      %1159 = vmatmul.mubr.bf16.gmra.mrb[0].mxu0 %v1115
      %v1160 = vpop.f32.mrb[0].mxu0
      %v1161 = vadd.f32 0.0, %v1160
      %v1162 = vpop.f32.mrb[0].mxu0
      %v1163 = vpop.f32.mrb[0].mxu0
      %v1164 = vadd.f32 0.0, %v1163
      %v1165 = vpop.f32.mrb[0].mxu0
      %1166 = vmatprep.mubr.bf16.mxu0 0
      %1167 = vmatmul.mubr.bf16.gmra.mrb[0].mxu0 %v1118
      %v1168 = vpop.f32.mrb[0].mxu0
      %v1169 = vadd.f32 0.0, %v1168
      %v1170 = vpop.f32.mrb[0].mxu0
      %v1171 = vpop.f32.mrb[0].mxu0
      %v1172 = vadd.f32 0.0, %v1171
      %v1173 = vpop.f32.mrb[0].mxu0
      %1174 = vmatprep.mubr.bf16.mxu0 0
      %1175 = vmatmul.mubr.bf16.gmra.mrb[0].mxu0 %v1121
      %v1176 = vpop.f32.mrb[0].mxu0
      %v1177 = vadd.f32 0.0, %v1176
      %v1178 = vpop.f32.mrb[0].mxu0
      %v1179 = vpop.f32.mrb[0].mxu0
      %v1180 = vadd.f32 0.0, %v1179
      %v1181 = vpop.f32.mrb[0].mxu0
      %1182 = vmatprep.mubr.bf16.mxu0 0
      %1183 = vmatmul.mubr.bf16.gmra.mrb[0].mxu0 %v1124
      %v1184 = vpop.f32.mrb[0].mxu0
      %v1185 = vadd.f32 0.0, %v1184
      %v1186 = vpop.f32.mrb[0].mxu0
      %v1187 = vpop.f32.mrb[0].mxu0
      %v1188 = vadd.f32 0.0, %v1187
      %v1189 = vpop.f32.mrb[0].mxu0
      %1190 = vdwg.mxu0
      %v1191 = vrcp.pop %v1090
      %v1192 = vrcp.pop %v1091
      %v1193 = vrcp.pop %v1092
      %v1194 = vrcp.pop %v1093
      %v1195 = vrcp.pop %v1094
      %v1196 = vrcp.pop %v1095
      %v1197 = vrcp.pop %v1096
      %v1198 = vrcp.pop %v1097
      %v1199 = vmul.f32 %v1161, %v1191
      %v1200 = vmul.f32 %v1164, %v1192
      %v1201 = vmul.f32 %v1169, %v1193
      %v1202 = vmul.f32 %v1172, %v1194
      %v1203 = vmul.f32 %v1177, %v1195
      %v1204 = vmul.f32 %v1180, %v1196
      %v1205 = vmul.f32 %v1185, %v1197
      %v1206 = vmul.f32 %v1188, %v1198
      %v1207 = vpack.c.bf16 %v1200, %v1199
      %v1208 = vpack.c.bf16 %v1202, %v1201
      %v1209 = vpack.c.bf16 %v1204, %v1203
      %v1210 = vpack.c.bf16 %v1206, %v1205
      %v1215 = vunpack.c.l.b16 %v1207
      %v1216 = vunpack.c.h.b16 %v1207
      %v1217 = vunpack.c.l.b16 %v1208
      %v1218 = vunpack.c.h.b16 %v1208
      %v1219 = vunpack.c.l.b16 %v1209
      %v1220 = vunpack.c.h.b16 %v1209
      %v1221 = vunpack.c.l.b16 %v1210
      %v1222 = vunpack.c.h.b16 %v1210
      %v1223 = vpack.c.b16 %v1215, %v1215
      %v1224 = vpack.c.b16 %v1216, %v1216
      %v1225 = vpack.c.b16 %v1217, %v1217
      %v1226 = vpack.c.b16 %v1218, %v1218
      %v1227 = vpack.c.b16 %v1219, %v1219
      %v1228 = vpack.c.b16 %v1220, %v1220
      %v1229 = vpack.c.b16 %v1221, %v1221
      %v1230 = vpack.c.b16 %v1222, %v1222
      %1239 = vst [vmem:[%s245] sm:$0xf] %v1223
      %1240 = vst [vmem:[%s245 + $0x4] sm:$0xf] %v1224
      %1241 = vst [vmem:[%s245 + $0x8] sm:$0xf] %v1225
      %1242 = vst [vmem:[%s245 + $0xc] sm:$0xf] %v1226
      %1243 = vst [vmem:[%s245 + $0x10] sm:$0xf] %v1227
      %1244 = vst [vmem:[%s245 + $0x14] sm:$0xf] %v1228
      %1245 = vst [vmem:[%s245 + $0x18] sm:$0xf] %v1229
      %1246 = vst [vmem:[%s245 + $0x1c] sm:$0xf] %v1230
      %s1247 = smul.u32 8, %s19
      %p1248 = scmp.lt.s32.totalorder %s18, 1
      %s1249 = scalar_select %p1248, %s18, 1
      %p1250 = scmp.lt.s32.totalorder %s1247, 7
      %s1251 = scalar_select %p1250, %s1247, 7
      %s1252 = smul.addr %s1249, 8
      %s1253 = sadd.s32 %s1251, %s1252
      %s1254 = smul.addr %s1253, 4
      %s1255 = scalar_lea.vmem %s3, %s1254
      // Predicated region
      $region33: #{pointnet2_decoder_without_cls_head.29} parent=31 // pred_check
        %p1256 = pneg %p126
      $region34: #{pointnet2_decoder_without_cls_head.29} parent=31 // pred_check_branch
        %1258 = sbr.rel (%p1256) target = $region36
      $region35: #{pointnet2_decoder_without_cls_head.29} parent=31 // pred_region
        %s1259 = smul.u32 8, %s19
      $region36: #{pointnet2_decoder_without_cls_head.29} parent=31 // pred_fallthru
        _
    $region32: #{pointnet2_decoder_without_cls_head.29} parent=5 // pred_fallthru
      _
    %p1260 = scmp.le.s32.totalorder 2, %s9
    // Predicated region
    $region37: #{pointnet2_decoder_without_cls_head.29} parent=5 // pred_check
      %p1261 = pneg %p1260
    $region38: #{pointnet2_decoder_without_cls_head.29} parent=5 // pred_check_branch
      %1263 = sbr.rel (%p1261) target = $region40
    $region39: #{pointnet2_decoder_without_cls_head.29} parent=5 // pred_region
      %s1264 = ssub.s32 %s9, 2
      // Predicated region
      $region41: #{pointnet2_decoder_without_cls_head.29} parent=39 // pred_check
        %p1265 = pneg %p132
      $region42: #{pointnet2_decoder_without_cls_head.29} parent=39 // pred_check_branch
        %1267 = sbr.rel (%p1265) target = $region44
      $region43: #{pointnet2_decoder_without_cls_head.29} parent=39 // pred_region
        %s1268 = smul.u32 8, %s21
        %p1269 = scmp.lt.s32.totalorder %s20, 1
        %s1270 = scalar_select %p1269, %s20, 1
        %p1271 = scmp.lt.s32.totalorder %s1268, 7
        %s1272 = scalar_select %p1271, %s1268, 7
        %s1273 = smul.addr %s1270, 8
        %s1274 = sadd.s32 %s1272, %s1273
        %s1275 = smul.addr %s1274, 4
        %s1276 = scalar_lea.vmem %s3, %s1275
      $region44: #{pointnet2_decoder_without_cls_head.29} parent=39 // pred_fallthru
        _
    $region40: #{pointnet2_decoder_without_cls_head.29} parent=5 // pred_fallthru
      _
  $region6: #{pointnet2_decoder_without_cls_head.29} parent=0 // loop_footer
    %s13 = sadd.s32 1, %s9
  $region7: #{pointnet2_decoder_without_cls_head.29} parent=0 // loop_footer_branch
    %8 = sbr.rel target = $region3
  $region8: #{pointnet2_decoder_without_cls_head.29} parent=0 // loop_exit
    _

</llo_original>
